<compile_context>
chip_gen: v6e
topology: v6e:2x2x1
jax: 0.10.0
libtpu: 0.0.40
codegen_flags: <defaults>
</compile_context>

<pallas_src>
import functools

import jax
import jax.numpy as jnp
from jax.experimental import pallas as pl
from jax.experimental.pallas import tpu as pltpu


# ---------------------------------------------------------------------------
# Fused generator kernel (single invocation, everything VMEM-resident)
# ---------------------------------------------------------------------------
def generator_kernel(x_ref, w_in_ref, b_in_ref,
                     g1_ref, be1_ref, w1m_ref, b1m_ref,
                     g2_ref, be2_ref, w2m_ref, b2m_ref,
                     g3_ref, be3_ref, w3t_ref, b3t_ref,
                     o_ref, *, B, d, out_channels, eps):
    f32, bf16 = jnp.float32, jnp.bfloat16
    C1, C2, C3 = 8 * d, 4 * d, 2 * d

    # ---------------- helpers ----------------
    def bn_relu(x2d, gamma, beta, groups):
        # Training-mode BatchNorm2d (+ReLU) on (rows, groups*C), where the lane axis
        # holds `groups` sub-pixel-phase copies of the same C channels.
        # One pass: sum & sum-of-squares; scale/shift folded into a single FMA.
        rows, gc = x2d.shape
        C = gc // groups
        s1 = jnp.sum(x2d, axis=0, keepdims=True)
        s2 = jnp.sum(x2d * x2d, axis=0, keepdims=True)
        if groups > 1:                                 # fold the phase groups per channel
            s1 = sum(s1[:, g * C:(g + 1) * C] for g in range(groups))
            s2 = sum(s2[:, g * C:(g + 1) * C] for g in range(groups))
        inv_n = 1.0 / float(rows * groups)
        mean = s1 * inv_n
        var = s2 * inv_n - mean * mean                 # biased batch variance (torch training)
        scale = gamma * jax.lax.rsqrt(var + eps)
        shift = beta - mean * scale
        if groups > 1:                                 # tile back over the phase groups
            scale = jnp.concatenate([scale] * groups, axis=1)
            shift = jnp.concatenate([shift] * groups, axis=1)
        return jnp.maximum(x2d * scale + shift, 0.0)

    def pad_hw1(x):
        # zero-pad H and W by 1 on each side (concat along non-minor dims)
        bq, hh, ww, c = x.shape
        zr = jnp.zeros((bq, 1, ww, c), x.dtype)
        x = jnp.concatenate([zr, x, zr], axis=1)
        zc = jnp.zeros((bq, hh + 2, 1, c), x.dtype)
        return jnp.concatenate([zc, x, zc], axis=2)

    def im2col3x3(xpad, hh, ww):
        # (B, hh+2, ww+2, C) -> (B*hh*ww, 9*C); tap order (a, b) row-major.
        # TODO(synk): for Cin < 128 the tap chunks could be zero-padded to 128 lanes
        # (with matching zero rows in the merged weight) for fully aligned concats.
        bq, _, _, c = xpad.shape
        cols = [xpad[:, a:a + hh, b:b + ww, :].reshape(bq * hh * ww, c)
                for a in range(3) for b in range(3)]
        return jnp.concatenate(cols, axis=1)

    def phase_patches(planes, hh, ww):
        # planes[ph*2+pw]: padded (B, hh+2, ww+2, C) half-res phase planes of a
        # (2*hh, 2*ww) image:  plane[ph,pw][b, M, N, c] = img[b, 2M+ph, 2N+pw, c].
        # Returns the merged im2col matrix for the next ConvT: (4*B*hh*ww, 9*C),
        # rows grouped by the ConvT-input parity (pi, pj).  Neighbours are read
        # straight across phase planes -> no full-res interleave needed.
        bq = planes[0].shape[0]
        c = planes[0].shape[3]
        groups = []
        for pi in (0, 1):
            for pj in (0, 1):
                cols = []
                for a in range(3):
                    dm, ph = divmod(pi + a - 1, 2)     # img row 2m+pi+a-1 = 2(m+dm)+ph
                    for b in range(3):
                        dn, pw = divmod(pj + b - 1, 2)
                        src = planes[ph * 2 + pw]
                        cols.append(
                            src[:, 1 + dm:1 + dm + hh, 1 + dn:1 + dn + ww, :]
                            .reshape(bq * hh * ww, c))
                groups.append(jnp.concatenate(cols, axis=1))
        return jnp.concatenate(groups, axis=0)

    def interleave2x2(p00, p01, p10, p11, hh, ww, c):
        # out[b, 2m+i, 2n+j, :] = p_ij[b, m, n, :]
        r0 = jnp.stack([p00, p01], axis=3).reshape(B, hh, 2 * ww, c)
        r1 = jnp.stack([p10, p11], axis=3).reshape(B, hh, 2 * ww, c)
        return jnp.stack([r0, r1], axis=2).reshape(B, 2 * hh, 2 * ww, c)

    # ---------------- Linear: (B, K) @ (K, 16*C1)  (bf16 x bf16 -> f32 acc) -----------
    h = jnp.dot(x_ref[...], w_in_ref[...], preferred_element_type=f32) + b_in_ref[...]
    # Columns of w_in were pre-permuted to (h, w, c) order, so a plain reshape IS
    # torch's x.view(B, C1, 4, 4) expressed in NHWC (no 16-slice stack).
    a0 = h.reshape(B, 4, 4, C1)

    # ---------------- BN1 + ReLU ----------------
    a0 = bn_relu(a0.reshape(B * 16, C1), g1_ref[...], be1_ref[...], 1)
    a0 = a0.astype(bf16).reshape(B, 4, 4, C1)

    # ---------------- ConvT1: one merged (9*C1 -> 4*C2) matmul ----------------
    p1 = im2col3x3(pad_hw1(a0), 4, 4)                                      # (B*16, 9*C1)
    y1 = jnp.dot(p1, w1m_ref[...], preferred_element_type=f32) + b1m_ref[...]  # (B*16, 4*C2)

    # BN2 + ReLU directly in phase-packed lanes, then split into half-res phase planes.
    y1 = bn_relu(y1, g2_ref[...], be2_ref[...], 4).astype(bf16)
    planes1 = [pad_hw1(y1[:, g * C2:(g + 1) * C2].reshape(B, 4, 4, C2)) for g in range(4)]

    # ---------------- ConvT2: one matmul over all 4 input parities ----------------
    p2 = phase_patches(planes1, 4, 4)                                      # (4*B*16, 9*C2)
    y2 = jnp.dot(p2, w2m_ref[...], preferred_element_type=f32) + b2m_ref[...]  # (4*B*16, 4*C3)

    # BN3 + ReLU (phase-packed lanes).
    y2 = bn_relu(y2, g3_ref[...], be3_ref[...], 4).astype(bf16)

    # Rows of y2 are (pi, pj, b, m, n); build the 16x16 image's half-res phase planes
    # for ConvT3.  This is the single remaining in-kernel 2x2 interleave (half-res,
    # C3 lanes); the final full-res interleave is the tiny XLA epilogue.
    R = B * 16
    planes2 = []
    for g in range(4):                       # g = ph*2 + pw  (parity of the 16x16 coord)
        ch = y2[:, g * C3:(g + 1) * C3]
        q = [ch[i * R:(i + 1) * R, :].reshape(B, 4, 4, C3) for i in range(4)]
        planes2.append(pad_hw1(interleave2x2(q[0], q[1], q[2], q[3], 4, 4, C3)))

    # ---------------- ConvT3 + Tanh: lane-dense transposed output ----------------
    # LHS = merged weight transposed (4*Cout, 9*C3); output (4*Cout, 4*B*64) is
    # lane-dense (no 3/128-lane masked stores), stored in one shot.
    p3 = phase_patches(planes2, 8, 8)                                      # (4*B*64, 9*C3)
    y3 = jax.lax.dot_general(w3t_ref[...], p3,
                             dimension_numbers=(((1,), (1,)), ((), ())),
                             preferred_element_type=f32)                   # (4*Cout, 4*B*64)
    o_ref[...] = jnp.tanh(y3 + b3t_ref[...])


# ---------------------------------------------------------------------------
# One-time parameter packing (hoisted out of the forward path)
# ---------------------------------------------------------------------------
def _pack_convt_merged(w):
    """PyTorch ConvTranspose2d weight (Cin, Cout, 4, 4) -> merged (9*Cin, 4*Cout).

    Row block (a, b) of the 3x3 im2col window, output column block = phase (ph, pw):
      entry = W[ci, co, 3+ph-2a, 3+pw-2b]  if (a-ph) in {0,1} and (b-pw) in {0,1}, else 0.
    """
    cin, cout = w.shape[0], w.shape[1]
    blocks = []
    for a in range(3):
        for b in range(3):
            row = []
            for ph in range(2):
                for pw in range(2):
                    dh, dw = a - ph, b - pw
                    if dh in (0, 1) and dw in (0, 1):
                        row.append(w[:, :, 3 - ph - 2 * dh, 3 - pw - 2 * dw])  # (Cin, Cout)
                    else:
                        row.append(jnp.zeros((cin, cout), w.dtype))
            blocks.append(jnp.concatenate(row, axis=1))                        # (Cin, 4*Cout)
    return jnp.concatenate(blocks, axis=0)                                     # (9*Cin, 4*Cout)


def pack_params(raw, *, d, out_channels):
    C1 = d * 8
    bf16 = jnp.bfloat16
    p = {"emb": raw["emb"]}
    # Linear: torch W is (out, in) with out index = c*16 + h*4 + w.  Permute the output
    # columns to (h, w, c) order so the kernel's reshape lands directly in NHWC.
    w = raw["w_in"].T.reshape(-1, C1, 4, 4).transpose(0, 2, 3, 1)
    p["w_in"] = w.reshape(-1, 16 * C1).astype(bf16)
    p["b_in"] = raw["b_in"].reshape(C1, 4, 4).transpose(1, 2, 0).reshape(1, 16 * C1)
    for i in (1, 2, 3):
        p[f"bn{i}_g"] = raw[f"bn{i}_g"].reshape(1, -1)
        p[f"bn{i}_b"] = raw[f"bn{i}_b"].reshape(1, -1)
    p["w1m"] = _pack_convt_merged(raw["wt1"]).astype(bf16)        # (9*d*8, 4*d*4)
    p["b1m"] = jnp.tile(raw["bt1"].reshape(1, -1), (1, 4))        # (1, 4*d*4)
    p["w2m"] = _pack_convt_merged(raw["wt2"]).astype(bf16)        # (9*d*4, 4*d*2)
    p["b2m"] = jnp.tile(raw["bt2"].reshape(1, -1), (1, 4))        # (1, 4*d*2)
    # Last layer kept transposed: (4*Cout, 9*d*2), bias (4*Cout, 1).
    p["w3t"] = _pack_convt_merged(raw["wt3"]).T.astype(bf16)
    p["b3t"] = jnp.tile(raw["bt3"].reshape(1, -1), (1, 4)).reshape(-1, 1)
    return p


def init_params(key, latent_dim, num_classes, d, out_channels):
    """Raw parameters in PyTorch layouts."""
    ks = jax.random.split(key, 6)
    fan_in = latent_dim + num_classes
    p = {
        "emb": jax.random.normal(ks[0], (num_classes, num_classes), jnp.float32),
        "w_in": jax.random.normal(ks[1], (d * 8 * 4 * 4, fan_in), jnp.float32) * 0.05,
        "b_in": jnp.zeros((d * 8 * 4 * 4,), jnp.float32),
        "wt1": jax.random.normal(ks[2], (d * 8, d * 4, 4, 4), jnp.float32) * 0.05,
        "bt1": jnp.zeros((d * 4,), jnp.float32),
        "wt2": jax.random.normal(ks[3], (d * 4, d * 2, 4, 4), jnp.float32) * 0.05,
        "bt2": jnp.zeros((d * 2,), jnp.float32),
        "wt3": jax.random.normal(ks[4], (d * 2, out_channels, 4, 4), jnp.float32) * 0.05,
        "bt3": jnp.zeros((out_channels,), jnp.float32),
    }
    for name, c in (("bn1", d * 8), ("bn2", d * 4), ("bn3", d * 2)):
        p[f"{name}_g"] = jnp.ones((c,), jnp.float32)
        p[f"{name}_b"] = jnp.zeros((c,), jnp.float32)
    return p


# ---------------------------------------------------------------------------
# Forward (one fused pallas_call + tiny XLA prologue/epilogue)
# ---------------------------------------------------------------------------
def conditional_generator_forward(packed, noise, labels, *, d, out_channels=3):
    # glue: embedding gather + concat (tiny; no Pallas gather needed)
    emb = packed["emb"][labels]                                        # (B, num_classes)
    x = jnp.concatenate([noise, emb], axis=1).astype(jnp.bfloat16)     # (B, latent+classes)
    B = x.shape[0]

    args = (x, packed["w_in"], packed["b_in"],
            packed["bn1_g"], packed["bn1_b"], packed["w1m"], packed["b1m"],
            packed["bn2_g"], packed["bn2_b"], packed["w2m"], packed["b2m"],
            packed["bn3_g"], packed["bn3_b"], packed["w3t"], packed["b3t"])

    vmem = pltpu.MemorySpace.VMEM
    out = pl.pallas_call(
        functools.partial(generator_kernel, B=B, d=d,
                          out_channels=out_channels, eps=1e-5),
        out_shape=jax.ShapeDtypeStruct((4 * out_channels, 4 * B * 8 * 8), jnp.float32),
        in_specs=[pl.BlockSpec(memory_space=vmem)] * len(args),
        out_specs=pl.BlockSpec(memory_space=vmem),
    )(*args)

    # pixel-shuffle epilogue (tiny): rows (ph3, pw3, co), cols (pi3, pj3, b, m, n)
    #   output row = 4m + 2*pi3 + ph3, output col = 4n + 2*pj3 + pw3
    y = out.reshape(2, 2, out_channels, 2, 2, B, 8, 8)
    y = jnp.transpose(y, (5, 2, 6, 3, 0, 7, 4, 1))
    return y.reshape(B, out_channels, 32, 32)                          # NCHW, matches torch


# ---------------------------------------------------------------------------
# Pure-JAX reference of the torch module (training-mode BN)
# ---------------------------------------------------------------------------
def reference_forward(raw, noise, labels, *, d, eps=1e-5):
    emb = raw["emb"][labels]
    x = jnp.concatenate([noise, emb], axis=1)
    x = x @ raw["w_in"].T + raw["b_in"]
    B = x.shape[0]
    x = x.reshape(B, d * 8, 4, 4)

    def bn_relu(x, g, b):
        m = jnp.mean(x, axis=(0, 2, 3), keepdims=True)
        v = jnp.mean((x - m) ** 2, axis=(0, 2, 3), keepdims=True)
        y = (x - m) * jax.lax.rsqrt(v + eps) * g.reshape(1, -1, 1, 1) + b.reshape(1, -1, 1, 1)
        return jnp.maximum(y, 0.0)

    def convT(x, w, b):
        # ConvTranspose2d(4,2,1) == lhs-dilated conv with flipped / channel-swapped kernel
        w_oihw = jnp.transpose(jnp.flip(w, (2, 3)), (1, 0, 2, 3))
        y = jax.lax.conv_general_dilated(
            x, w_oihw, window_strides=(1, 1), padding=((2, 2), (2, 2)),
            lhs_dilation=(2, 2), rhs_dilation=(1, 1),
            dimension_numbers=("NCHW", "OIHW", "NCHW"),
            precision=jax.lax.Precision.HIGHEST)
        return y + b.reshape(1, -1, 1, 1)

    x = convT(bn_relu(x, raw["bn1_g"], raw["bn1_b"]), raw["wt1"], raw["bt1"])
    x = convT(bn_relu(x, raw["bn2_g"], raw["bn2_b"]), raw["wt2"], raw["bt2"])
    x = convT(bn_relu(x, raw["bn3_g"], raw["bn3_b"]), raw["wt3"], raw["bt3"])
    return jnp.tanh(x)


if __name__ == "__main__":
    # Small, module-consistent sizes
    latent_dim, num_classes, d, out_channels = 16, 10, 16, 3
    batch = 2

    key = jax.random.PRNGKey(0)
    kp, kn, kl = jax.random.split(key, 3)
    raw = init_params(kp, latent_dim, num_classes, d, out_channels)
    packed = pack_params(raw, d=d, out_channels=out_channels)   # one-time weight prep

    noise = jax.random.normal(kn, (batch, latent_dim), jnp.float32)
    labels = jax.random.randint(kl, (batch,), 0, num_classes, jnp.int32)

    fwd = jax.jit(functools.partial(conditional_generator_forward,
                                    d=d, out_channels=out_channels))
    out = jax.block_until_ready(fwd(packed, noise, labels))

    assert out.shape == (batch, out_channels, 32, 32), out.shape
    assert bool(jnp.all(jnp.isfinite(out)))
    assert bool(jnp.all(jnp.abs(out) <= 1.0 + 1e-6))            # tanh output range

    # correctness vs pure-JAX reference of the torch module (bf16 MXU operands -> loose tol)
    ref = jax.jit(functools.partial(reference_forward, d=d))(raw, noise, labels)
    err = float(jnp.max(jnp.abs(out - ref)))
    assert err < 5e-2, f"max abs err vs reference: {err}"

    print("KERNEL_OK")
</pallas_src>

<mosaic_0001>
module attributes {stable_mosaic.version = 11 : i64} {
  func.func @generator_kernel(%arg0: memref<2x26xbf16, #tpu.memory_space<vmem>>, %arg1: memref<26x2048xbf16, #tpu.memory_space<vmem>>, %arg2: memref<1x2048xf32, #tpu.memory_space<vmem>>, %arg3: memref<1x128xf32, #tpu.memory_space<vmem>>, %arg4: memref<1x128xf32, #tpu.memory_space<vmem>>, %arg5: memref<1152x256xbf16, #tpu.memory_space<vmem>>, %arg6: memref<1x256xf32, #tpu.memory_space<vmem>>, %arg7: memref<1x64xf32, #tpu.memory_space<vmem>>, %arg8: memref<1x64xf32, #tpu.memory_space<vmem>>, %arg9: memref<576x128xbf16, #tpu.memory_space<vmem>>, %arg10: memref<1x128xf32, #tpu.memory_space<vmem>>, %arg11: memref<1x32xf32, #tpu.memory_space<vmem>>, %arg12: memref<1x32xf32, #tpu.memory_space<vmem>>, %arg13: memref<12x288xbf16, #tpu.memory_space<vmem>>, %arg14: memref<12x1xf32, #tpu.memory_space<vmem>>, %arg15: memref<12x512xf32, #tpu.memory_space<vmem>>) attributes {dimension_semantics = [], scalar_prefetch = 0 : i64, scratch_operands = 0 : i64, tpu.core_type = #tpu.core_type<tc>} {
    %c0 = arith.constant 0 : index
    %c0_0 = arith.constant 0 : index
    %0 = vector.load %arg0[%c0, %c0_0] : memref<2x26xbf16, #tpu.memory_space<vmem>>, vector<2x26xbf16>
    %c0_1 = arith.constant 0 : index
    %c0_2 = arith.constant 0 : index
    %1 = vector.load %arg1[%c0_1, %c0_2] : memref<26x2048xbf16, #tpu.memory_space<vmem>>, vector<26x2048xbf16>
    %cst = arith.constant dense<0.000000e+00> : vector<2x2048xf32>
    %2 = tpu.matmul %0, %1, %cst {dimension_numbers = #tpu.dot_dimension_numbers<[1], [0], [0], [1], [0, 0, 1, 1], [], []>} : vector<2x26xbf16>, vector<26x2048xbf16>, vector<2x2048xf32> -> vector<2x2048xf32>
    %c0_3 = arith.constant 0 : index
    %c0_4 = arith.constant 0 : index
    %3 = vector.load %arg2[%c0_3, %c0_4] : memref<1x2048xf32, #tpu.memory_space<vmem>>, vector<1x2048xf32>
    %4 = vector.broadcast %3 : vector<1x2048xf32> to vector<2x2048xf32>
    %5 = arith.addf %2, %4 : vector<2x2048xf32>
    %6 = vector.shape_cast %5 : vector<2x2048xf32> to vector<2x4x4x128xf32>
    %7 = vector.shape_cast %6 : vector<2x4x4x128xf32> to vector<32x128xf32>
    %c0_5 = arith.constant 0 : index
    %c0_6 = arith.constant 0 : index
    %8 = vector.load %arg3[%c0_5, %c0_6] : memref<1x128xf32, #tpu.memory_space<vmem>>, vector<1x128xf32>
    %c0_7 = arith.constant 0 : index
    %c0_8 = arith.constant 0 : index
    %9 = vector.load %arg4[%c0_7, %c0_8] : memref<1x128xf32, #tpu.memory_space<vmem>>, vector<1x128xf32>
    %cst_9 = arith.constant dense<0.000000e+00> : vector<128xf32>
    %10 = vector.multi_reduction <add>, %7, %cst_9 [0] : vector<32x128xf32> to vector<128xf32>
    %11 = vector.shape_cast %10 : vector<128xf32> to vector<1x128xf32>
    %12 = arith.mulf %7, %7 : vector<32x128xf32>
    %cst_10 = arith.constant dense<0.000000e+00> : vector<128xf32>
    %13 = vector.multi_reduction <add>, %12, %cst_10 [0] : vector<32x128xf32> to vector<128xf32>
    %14 = vector.shape_cast %13 : vector<128xf32> to vector<1x128xf32>
    %cst_11 = arith.constant 3.125000e-02 : f32
    %15 = vector.broadcast %cst_11 : f32 to vector<1x128xf32>
    %16 = arith.mulf %11, %15 : vector<1x128xf32>
    %cst_12 = arith.constant 3.125000e-02 : f32
    %17 = vector.broadcast %cst_12 : f32 to vector<1x128xf32>
    %18 = arith.mulf %14, %17 : vector<1x128xf32>
    %19 = arith.mulf %16, %16 : vector<1x128xf32>
    %20 = arith.subf %18, %19 : vector<1x128xf32>
    %cst_13 = arith.constant 9.99999974E-6 : f32
    %21 = vector.broadcast %cst_13 : f32 to vector<1x128xf32>
    %22 = arith.addf %20, %21 : vector<1x128xf32>
    %23 = math.rsqrt %22 : vector<1x128xf32>
    %24 = arith.mulf %8, %23 : vector<1x128xf32>
    %25 = arith.mulf %16, %24 : vector<1x128xf32>
    %26 = arith.subf %9, %25 : vector<1x128xf32>
    %27 = vector.broadcast %24 : vector<1x128xf32> to vector<32x128xf32>
    %28 = arith.mulf %7, %27 : vector<32x128xf32>
    %29 = vector.broadcast %26 : vector<1x128xf32> to vector<32x128xf32>
    %30 = arith.addf %28, %29 : vector<32x128xf32>
    %cst_14 = arith.constant 0.000000e+00 : f32
    %31 = vector.broadcast %cst_14 : f32 to vector<32x128xf32>
    %32 = arith.maximumf %30, %31 : vector<32x128xf32>
    %33 = arith.truncf %32 : vector<32x128xf32> to vector<32x128xbf16>
    %34 = vector.shape_cast %33 : vector<32x128xbf16> to vector<2x4x4x128xbf16>
    %cst_15 = arith.constant 0.000000e+00 : bf16
    %35 = vector.broadcast %cst_15 : bf16 to vector<2x1x4x128xbf16>
    %36 = tpu.concatenate %35, %34, %35 in 1 : vector<2x1x4x128xbf16>, vector<2x4x4x128xbf16>, vector<2x1x4x128xbf16> -> vector<2x6x4x128xbf16>
    %cst_16 = arith.constant 0.000000e+00 : bf16
    %37 = vector.broadcast %cst_16 : bf16 to vector<2x6x1x128xbf16>
    %38 = tpu.concatenate %37, %36, %37 in 2 : vector<2x6x1x128xbf16>, vector<2x6x4x128xbf16>, vector<2x6x1x128xbf16> -> vector<2x6x6x128xbf16>
    %39 = vector.extract_strided_slice %38 {offsets = [0, 0, 0, 0], sizes = [2, 4, 4, 128], strides = [1, 1, 1, 1]} : vector<2x6x6x128xbf16> to vector<2x4x4x128xbf16>
    %40 = vector.shape_cast %39 : vector<2x4x4x128xbf16> to vector<32x128xbf16>
    %41 = vector.extract_strided_slice %38 {offsets = [0, 0, 1, 0], sizes = [2, 4, 4, 128], strides = [1, 1, 1, 1]} : vector<2x6x6x128xbf16> to vector<2x4x4x128xbf16>
    %42 = vector.shape_cast %41 : vector<2x4x4x128xbf16> to vector<32x128xbf16>
    %43 = vector.extract_strided_slice %38 {offsets = [0, 0, 2, 0], sizes = [2, 4, 4, 128], strides = [1, 1, 1, 1]} : vector<2x6x6x128xbf16> to vector<2x4x4x128xbf16>
    %44 = vector.shape_cast %43 : vector<2x4x4x128xbf16> to vector<32x128xbf16>
    %45 = vector.extract_strided_slice %38 {offsets = [0, 1, 0, 0], sizes = [2, 4, 4, 128], strides = [1, 1, 1, 1]} : vector<2x6x6x128xbf16> to vector<2x4x4x128xbf16>
    %46 = vector.shape_cast %45 : vector<2x4x4x128xbf16> to vector<32x128xbf16>
    %47 = vector.extract_strided_slice %38 {offsets = [0, 1, 1, 0], sizes = [2, 4, 4, 128], strides = [1, 1, 1, 1]} : vector<2x6x6x128xbf16> to vector<2x4x4x128xbf16>
    %48 = vector.shape_cast %47 : vector<2x4x4x128xbf16> to vector<32x128xbf16>
    %49 = vector.extract_strided_slice %38 {offsets = [0, 1, 2, 0], sizes = [2, 4, 4, 128], strides = [1, 1, 1, 1]} : vector<2x6x6x128xbf16> to vector<2x4x4x128xbf16>
    %50 = vector.shape_cast %49 : vector<2x4x4x128xbf16> to vector<32x128xbf16>
    %51 = vector.extract_strided_slice %38 {offsets = [0, 2, 0, 0], sizes = [2, 4, 4, 128], strides = [1, 1, 1, 1]} : vector<2x6x6x128xbf16> to vector<2x4x4x128xbf16>
    %52 = vector.shape_cast %51 : vector<2x4x4x128xbf16> to vector<32x128xbf16>
    %53 = vector.extract_strided_slice %38 {offsets = [0, 2, 1, 0], sizes = [2, 4, 4, 128], strides = [1, 1, 1, 1]} : vector<2x6x6x128xbf16> to vector<2x4x4x128xbf16>
    %54 = vector.shape_cast %53 : vector<2x4x4x128xbf16> to vector<32x128xbf16>
    %55 = vector.extract_strided_slice %38 {offsets = [0, 2, 2, 0], sizes = [2, 4, 4, 128], strides = [1, 1, 1, 1]} : vector<2x6x6x128xbf16> to vector<2x4x4x128xbf16>
    %56 = vector.shape_cast %55 : vector<2x4x4x128xbf16> to vector<32x128xbf16>
    %57 = tpu.concatenate %40, %42, %44, %46, %48, %50, %52, %54, %56 in 1 : vector<32x128xbf16>, vector<32x128xbf16>, vector<32x128xbf16>, vector<32x128xbf16>, vector<32x128xbf16>, vector<32x128xbf16>, vector<32x128xbf16>, vector<32x128xbf16>, vector<32x128xbf16> -> vector<32x1152xbf16>
    %c0_17 = arith.constant 0 : index
    %c0_18 = arith.constant 0 : index
    %58 = vector.load %arg5[%c0_17, %c0_18] : memref<1152x256xbf16, #tpu.memory_space<vmem>>, vector<1152x256xbf16>
    %cst_19 = arith.constant dense<0.000000e+00> : vector<32x256xf32>
    %59 = tpu.matmul %57, %58, %cst_19 {dimension_numbers = #tpu.dot_dimension_numbers<[1], [0], [0], [1], [0, 0, 1, 1], [], []>} : vector<32x1152xbf16>, vector<1152x256xbf16>, vector<32x256xf32> -> vector<32x256xf32>
    %c0_20 = arith.constant 0 : index
    %c0_21 = arith.constant 0 : index
    %60 = vector.load %arg6[%c0_20, %c0_21] : memref<1x256xf32, #tpu.memory_space<vmem>>, vector<1x256xf32>
    %61 = vector.broadcast %60 : vector<1x256xf32> to vector<32x256xf32>
    %62 = arith.addf %59, %61 : vector<32x256xf32>
    %c0_22 = arith.constant 0 : index
    %c0_23 = arith.constant 0 : index
    %63 = vector.load %arg7[%c0_22, %c0_23] : memref<1x64xf32, #tpu.memory_space<vmem>>, vector<1x64xf32>
    %c0_24 = arith.constant 0 : index
    %c0_25 = arith.constant 0 : index
    %64 = vector.load %arg8[%c0_24, %c0_25] : memref<1x64xf32, #tpu.memory_space<vmem>>, vector<1x64xf32>
    %cst_26 = arith.constant dense<0.000000e+00> : vector<256xf32>
    %65 = vector.multi_reduction <add>, %62, %cst_26 [0] : vector<32x256xf32> to vector<256xf32>
    %66 = vector.shape_cast %65 : vector<256xf32> to vector<1x256xf32>
    %67 = arith.mulf %62, %62 : vector<32x256xf32>
    %cst_27 = arith.constant dense<0.000000e+00> : vector<256xf32>
    %68 = vector.multi_reduction <add>, %67, %cst_27 [0] : vector<32x256xf32> to vector<256xf32>
    %69 = vector.shape_cast %68 : vector<256xf32> to vector<1x256xf32>
    %70 = vector.extract_strided_slice %66 {offsets = [0, 0], sizes = [1, 64], strides = [1, 1]} : vector<1x256xf32> to vector<1x64xf32>
    %cst_28 = arith.constant 0.000000e+00 : f32
    %71 = vector.broadcast %cst_28 : f32 to vector<1x64xf32>
    %72 = arith.addf %71, %70 : vector<1x64xf32>
    %73 = vector.extract_strided_slice %66 {offsets = [0, 64], sizes = [1, 64], strides = [1, 1]} : vector<1x256xf32> to vector<1x64xf32>
    %74 = arith.addf %72, %73 : vector<1x64xf32>
    %75 = vector.extract_strided_slice %66 {offsets = [0, 128], sizes = [1, 64], strides = [1, 1]} : vector<1x256xf32> to vector<1x64xf32>
    %76 = arith.addf %74, %75 : vector<1x64xf32>
    %77 = vector.extract_strided_slice %66 {offsets = [0, 192], sizes = [1, 64], strides = [1, 1]} : vector<1x256xf32> to vector<1x64xf32>
    %78 = arith.addf %76, %77 : vector<1x64xf32>
    %79 = vector.extract_strided_slice %69 {offsets = [0, 0], sizes = [1, 64], strides = [1, 1]} : vector<1x256xf32> to vector<1x64xf32>
    %cst_29 = arith.constant 0.000000e+00 : f32
    %80 = vector.broadcast %cst_29 : f32 to vector<1x64xf32>
    %81 = arith.addf %80, %79 : vector<1x64xf32>
    %82 = vector.extract_strided_slice %69 {offsets = [0, 64], sizes = [1, 64], strides = [1, 1]} : vector<1x256xf32> to vector<1x64xf32>
    %83 = arith.addf %81, %82 : vector<1x64xf32>
    %84 = vector.extract_strided_slice %69 {offsets = [0, 128], sizes = [1, 64], strides = [1, 1]} : vector<1x256xf32> to vector<1x64xf32>
    %85 = arith.addf %83, %84 : vector<1x64xf32>
    %86 = vector.extract_strided_slice %69 {offsets = [0, 192], sizes = [1, 64], strides = [1, 1]} : vector<1x256xf32> to vector<1x64xf32>
    %87 = arith.addf %85, %86 : vector<1x64xf32>
    %cst_30 = arith.constant 7.812500e-03 : f32
    %88 = vector.broadcast %cst_30 : f32 to vector<1x64xf32>
    %89 = arith.mulf %78, %88 : vector<1x64xf32>
    %cst_31 = arith.constant 7.812500e-03 : f32
    %90 = vector.broadcast %cst_31 : f32 to vector<1x64xf32>
    %91 = arith.mulf %87, %90 : vector<1x64xf32>
    %92 = arith.mulf %89, %89 : vector<1x64xf32>
    %93 = arith.subf %91, %92 : vector<1x64xf32>
    %cst_32 = arith.constant 9.99999974E-6 : f32
    %94 = vector.broadcast %cst_32 : f32 to vector<1x64xf32>
    %95 = arith.addf %93, %94 : vector<1x64xf32>
    %96 = math.rsqrt %95 : vector<1x64xf32>
    %97 = arith.mulf %63, %96 : vector<1x64xf32>
    %98 = arith.mulf %89, %97 : vector<1x64xf32>
    %99 = arith.subf %64, %98 : vector<1x64xf32>
    %100 = tpu.concatenate %97, %97, %97, %97 in 1 : vector<1x64xf32>, vector<1x64xf32>, vector<1x64xf32>, vector<1x64xf32> -> vector<1x256xf32>
    %101 = tpu.concatenate %99, %99, %99, %99 in 1 : vector<1x64xf32>, vector<1x64xf32>, vector<1x64xf32>, vector<1x64xf32> -> vector<1x256xf32>
    %102 = vector.broadcast %100 : vector<1x256xf32> to vector<32x256xf32>
    %103 = arith.mulf %62, %102 : vector<32x256xf32>
    %104 = vector.broadcast %101 : vector<1x256xf32> to vector<32x256xf32>
    %105 = arith.addf %103, %104 : vector<32x256xf32>
    %cst_33 = arith.constant 0.000000e+00 : f32
    %106 = vector.broadcast %cst_33 : f32 to vector<32x256xf32>
    %107 = arith.maximumf %105, %106 : vector<32x256xf32>
    %108 = arith.truncf %107 : vector<32x256xf32> to vector<32x256xbf16>
    %109 = vector.extract_strided_slice %108 {offsets = [0, 0], sizes = [32, 64], strides = [1, 1]} : vector<32x256xbf16> to vector<32x64xbf16>
    %110 = vector.shape_cast %109 : vector<32x64xbf16> to vector<2x4x4x64xbf16>
    %cst_34 = arith.constant 0.000000e+00 : bf16
    %111 = vector.broadcast %cst_34 : bf16 to vector<2x1x4x64xbf16>
    %112 = tpu.concatenate %111, %110, %111 in 1 : vector<2x1x4x64xbf16>, vector<2x4x4x64xbf16>, vector<2x1x4x64xbf16> -> vector<2x6x4x64xbf16>
    %cst_35 = arith.constant 0.000000e+00 : bf16
    %113 = vector.broadcast %cst_35 : bf16 to vector<2x6x1x64xbf16>
    %114 = tpu.concatenate %113, %112, %113 in 2 : vector<2x6x1x64xbf16>, vector<2x6x4x64xbf16>, vector<2x6x1x64xbf16> -> vector<2x6x6x64xbf16>
    %115 = vector.extract_strided_slice %108 {offsets = [0, 64], sizes = [32, 64], strides = [1, 1]} : vector<32x256xbf16> to vector<32x64xbf16>
    %116 = vector.shape_cast %115 : vector<32x64xbf16> to vector<2x4x4x64xbf16>
    %cst_36 = arith.constant 0.000000e+00 : bf16
    %117 = vector.broadcast %cst_36 : bf16 to vector<2x1x4x64xbf16>
    %118 = tpu.concatenate %117, %116, %117 in 1 : vector<2x1x4x64xbf16>, vector<2x4x4x64xbf16>, vector<2x1x4x64xbf16> -> vector<2x6x4x64xbf16>
    %cst_37 = arith.constant 0.000000e+00 : bf16
    %119 = vector.broadcast %cst_37 : bf16 to vector<2x6x1x64xbf16>
    %120 = tpu.concatenate %119, %118, %119 in 2 : vector<2x6x1x64xbf16>, vector<2x6x4x64xbf16>, vector<2x6x1x64xbf16> -> vector<2x6x6x64xbf16>
    %121 = vector.extract_strided_slice %108 {offsets = [0, 128], sizes = [32, 64], strides = [1, 1]} : vector<32x256xbf16> to vector<32x64xbf16>
    %122 = vector.shape_cast %121 : vector<32x64xbf16> to vector<2x4x4x64xbf16>
    %cst_38 = arith.constant 0.000000e+00 : bf16
    %123 = vector.broadcast %cst_38 : bf16 to vector<2x1x4x64xbf16>
    %124 = tpu.concatenate %123, %122, %123 in 1 : vector<2x1x4x64xbf16>, vector<2x4x4x64xbf16>, vector<2x1x4x64xbf16> -> vector<2x6x4x64xbf16>
    %cst_39 = arith.constant 0.000000e+00 : bf16
    %125 = vector.broadcast %cst_39 : bf16 to vector<2x6x1x64xbf16>
    %126 = tpu.concatenate %125, %124, %125 in 2 : vector<2x6x1x64xbf16>, vector<2x6x4x64xbf16>, vector<2x6x1x64xbf16> -> vector<2x6x6x64xbf16>
    %127 = vector.extract_strided_slice %108 {offsets = [0, 192], sizes = [32, 64], strides = [1, 1]} : vector<32x256xbf16> to vector<32x64xbf16>
    %128 = vector.shape_cast %127 : vector<32x64xbf16> to vector<2x4x4x64xbf16>
    %cst_40 = arith.constant 0.000000e+00 : bf16
    %129 = vector.broadcast %cst_40 : bf16 to vector<2x1x4x64xbf16>
    %130 = tpu.concatenate %129, %128, %129 in 1 : vector<2x1x4x64xbf16>, vector<2x4x4x64xbf16>, vector<2x1x4x64xbf16> -> vector<2x6x4x64xbf16>
    %cst_41 = arith.constant 0.000000e+00 : bf16
    %131 = vector.broadcast %cst_41 : bf16 to vector<2x6x1x64xbf16>
    %132 = tpu.concatenate %131, %130, %131 in 2 : vector<2x6x1x64xbf16>, vector<2x6x4x64xbf16>, vector<2x6x1x64xbf16> -> vector<2x6x6x64xbf16>
    %133 = vector.extract_strided_slice %132 {offsets = [0, 0, 0, 0], sizes = [2, 4, 4, 64], strides = [1, 1, 1, 1]} : vector<2x6x6x64xbf16> to vector<2x4x4x64xbf16>
    %134 = vector.shape_cast %133 : vector<2x4x4x64xbf16> to vector<32x64xbf16>
    %135 = vector.extract_strided_slice %126 {offsets = [0, 0, 1, 0], sizes = [2, 4, 4, 64], strides = [1, 1, 1, 1]} : vector<2x6x6x64xbf16> to vector<2x4x4x64xbf16>
    %136 = vector.shape_cast %135 : vector<2x4x4x64xbf16> to vector<32x64xbf16>
    %137 = vector.extract_strided_slice %132 {offsets = [0, 0, 1, 0], sizes = [2, 4, 4, 64], strides = [1, 1, 1, 1]} : vector<2x6x6x64xbf16> to vector<2x4x4x64xbf16>
    %138 = vector.shape_cast %137 : vector<2x4x4x64xbf16> to vector<32x64xbf16>
    %139 = vector.extract_strided_slice %120 {offsets = [0, 1, 0, 0], sizes = [2, 4, 4, 64], strides = [1, 1, 1, 1]} : vector<2x6x6x64xbf16> to vector<2x4x4x64xbf16>
    %140 = vector.shape_cast %139 : vector<2x4x4x64xbf16> to vector<32x64xbf16>
    %141 = vector.extract_strided_slice %114 {offsets = [0, 1, 1, 0], sizes = [2, 4, 4, 64], strides = [1, 1, 1, 1]} : vector<2x6x6x64xbf16> to vector<2x4x4x64xbf16>
    %142 = vector.shape_cast %141 : vector<2x4x4x64xbf16> to vector<32x64xbf16>
    %143 = vector.extract_strided_slice %120 {offsets = [0, 1, 1, 0], sizes = [2, 4, 4, 64], strides = [1, 1, 1, 1]} : vector<2x6x6x64xbf16> to vector<2x4x4x64xbf16>
    %144 = vector.shape_cast %143 : vector<2x4x4x64xbf16> to vector<32x64xbf16>
    %145 = vector.extract_strided_slice %132 {offsets = [0, 1, 0, 0], sizes = [2, 4, 4, 64], strides = [1, 1, 1, 1]} : vector<2x6x6x64xbf16> to vector<2x4x4x64xbf16>
    %146 = vector.shape_cast %145 : vector<2x4x4x64xbf16> to vector<32x64xbf16>
    %147 = vector.extract_strided_slice %126 {offsets = [0, 1, 1, 0], sizes = [2, 4, 4, 64], strides = [1, 1, 1, 1]} : vector<2x6x6x64xbf16> to vector<2x4x4x64xbf16>
    %148 = vector.shape_cast %147 : vector<2x4x4x64xbf16> to vector<32x64xbf16>
    %149 = vector.extract_strided_slice %132 {offsets = [0, 1, 1, 0], sizes = [2, 4, 4, 64], strides = [1, 1, 1, 1]} : vector<2x6x6x64xbf16> to vector<2x4x4x64xbf16>
    %150 = vector.shape_cast %149 : vector<2x4x4x64xbf16> to vector<32x64xbf16>
    %151 = tpu.concatenate %134, %136, %138, %140, %142, %144, %146, %148, %150 in 1 : vector<32x64xbf16>, vector<32x64xbf16>, vector<32x64xbf16>, vector<32x64xbf16>, vector<32x64xbf16>, vector<32x64xbf16>, vector<32x64xbf16>, vector<32x64xbf16>, vector<32x64xbf16> -> vector<32x576xbf16>
    %152 = vector.extract_strided_slice %126 {offsets = [0, 0, 1, 0], sizes = [2, 4, 4, 64], strides = [1, 1, 1, 1]} : vector<2x6x6x64xbf16> to vector<2x4x4x64xbf16>
    %153 = vector.shape_cast %152 : vector<2x4x4x64xbf16> to vector<32x64xbf16>
    %154 = vector.extract_strided_slice %132 {offsets = [0, 0, 1, 0], sizes = [2, 4, 4, 64], strides = [1, 1, 1, 1]} : vector<2x6x6x64xbf16> to vector<2x4x4x64xbf16>
    %155 = vector.shape_cast %154 : vector<2x4x4x64xbf16> to vector<32x64xbf16>
    %156 = vector.extract_strided_slice %126 {offsets = [0, 0, 2, 0], sizes = [2, 4, 4, 64], strides = [1, 1, 1, 1]} : vector<2x6x6x64xbf16> to vector<2x4x4x64xbf16>
    %157 = vector.shape_cast %156 : vector<2x4x4x64xbf16> to vector<32x64xbf16>
    %158 = vector.extract_strided_slice %114 {offsets = [0, 1, 1, 0], sizes = [2, 4, 4, 64], strides = [1, 1, 1, 1]} : vector<2x6x6x64xbf16> to vector<2x4x4x64xbf16>
    %159 = vector.shape_cast %158 : vector<2x4x4x64xbf16> to vector<32x64xbf16>
    %160 = vector.extract_strided_slice %120 {offsets = [0, 1, 1, 0], sizes = [2, 4, 4, 64], strides = [1, 1, 1, 1]} : vector<2x6x6x64xbf16> to vector<2x4x4x64xbf16>
    %161 = vector.shape_cast %160 : vector<2x4x4x64xbf16> to vector<32x64xbf16>
    %162 = vector.extract_strided_slice %114 {offsets = [0, 1, 2, 0], sizes = [2, 4, 4, 64], strides = [1, 1, 1, 1]} : vector<2x6x6x64xbf16> to vector<2x4x4x64xbf16>
    %163 = vector.shape_cast %162 : vector<2x4x4x64xbf16> to vector<32x64xbf16>
    %164 = vector.extract_strided_slice %126 {offsets = [0, 1, 1, 0], sizes = [2, 4, 4, 64], strides = [1, 1, 1, 1]} : vector<2x6x6x64xbf16> to vector<2x4x4x64xbf16>
    %165 = vector.shape_cast %164 : vector<2x4x4x64xbf16> to vector<32x64xbf16>
    %166 = vector.extract_strided_slice %132 {offsets = [0, 1, 1, 0], sizes = [2, 4, 4, 64], strides = [1, 1, 1, 1]} : vector<2x6x6x64xbf16> to vector<2x4x4x64xbf16>
    %167 = vector.shape_cast %166 : vector<2x4x4x64xbf16> to vector<32x64xbf16>
    %168 = vector.extract_strided_slice %126 {offsets = [0, 1, 2, 0], sizes = [2, 4, 4, 64], strides = [1, 1, 1, 1]} : vector<2x6x6x64xbf16> to vector<2x4x4x64xbf16>
    %169 = vector.shape_cast %168 : vector<2x4x4x64xbf16> to vector<32x64xbf16>
    %170 = tpu.concatenate %153, %155, %157, %159, %161, %163, %165, %167, %169 in 1 : vector<32x64xbf16>, vector<32x64xbf16>, vector<32x64xbf16>, vector<32x64xbf16>, vector<32x64xbf16>, vector<32x64xbf16>, vector<32x64xbf16>, vector<32x64xbf16>, vector<32x64xbf16> -> vector<32x576xbf16>
    %171 = vector.extract_strided_slice %120 {offsets = [0, 1, 0, 0], sizes = [2, 4, 4, 64], strides = [1, 1, 1, 1]} : vector<2x6x6x64xbf16> to vector<2x4x4x64xbf16>
    %172 = vector.shape_cast %171 : vector<2x4x4x64xbf16> to vector<32x64xbf16>
    %173 = vector.extract_strided_slice %114 {offsets = [0, 1, 1, 0], sizes = [2, 4, 4, 64], strides = [1, 1, 1, 1]} : vector<2x6x6x64xbf16> to vector<2x4x4x64xbf16>
    %174 = vector.shape_cast %173 : vector<2x4x4x64xbf16> to vector<32x64xbf16>
    %175 = vector.extract_strided_slice %120 {offsets = [0, 1, 1, 0], sizes = [2, 4, 4, 64], strides = [1, 1, 1, 1]} : vector<2x6x6x64xbf16> to vector<2x4x4x64xbf16>
    %176 = vector.shape_cast %175 : vector<2x4x4x64xbf16> to vector<32x64xbf16>
    %177 = vector.extract_strided_slice %132 {offsets = [0, 1, 0, 0], sizes = [2, 4, 4, 64], strides = [1, 1, 1, 1]} : vector<2x6x6x64xbf16> to vector<2x4x4x64xbf16>
    %178 = vector.shape_cast %177 : vector<2x4x4x64xbf16> to vector<32x64xbf16>
    %179 = vector.extract_strided_slice %126 {offsets = [0, 1, 1, 0], sizes = [2, 4, 4, 64], strides = [1, 1, 1, 1]} : vector<2x6x6x64xbf16> to vector<2x4x4x64xbf16>
    %180 = vector.shape_cast %179 : vector<2x4x4x64xbf16> to vector<32x64xbf16>
    %181 = vector.extract_strided_slice %132 {offsets = [0, 1, 1, 0], sizes = [2, 4, 4, 64], strides = [1, 1, 1, 1]} : vector<2x6x6x64xbf16> to vector<2x4x4x64xbf16>
    %182 = vector.shape_cast %181 : vector<2x4x4x64xbf16> to vector<32x64xbf16>
    %183 = vector.extract_strided_slice %120 {offsets = [0, 2, 0, 0], sizes = [2, 4, 4, 64], strides = [1, 1, 1, 1]} : vector<2x6x6x64xbf16> to vector<2x4x4x64xbf16>
    %184 = vector.shape_cast %183 : vector<2x4x4x64xbf16> to vector<32x64xbf16>
    %185 = vector.extract_strided_slice %114 {offsets = [0, 2, 1, 0], sizes = [2, 4, 4, 64], strides = [1, 1, 1, 1]} : vector<2x6x6x64xbf16> to vector<2x4x4x64xbf16>
    %186 = vector.shape_cast %185 : vector<2x4x4x64xbf16> to vector<32x64xbf16>
    %187 = vector.extract_strided_slice %120 {offsets = [0, 2, 1, 0], sizes = [2, 4, 4, 64], strides = [1, 1, 1, 1]} : vector<2x6x6x64xbf16> to vector<2x4x4x64xbf16>
    %188 = vector.shape_cast %187 : vector<2x4x4x64xbf16> to vector<32x64xbf16>
    %189 = tpu.concatenate %172, %174, %176, %178, %180, %182, %184, %186, %188 in 1 : vector<32x64xbf16>, vector<32x64xbf16>, vector<32x64xbf16>, vector<32x64xbf16>, vector<32x64xbf16>, vector<32x64xbf16>, vector<32x64xbf16>, vector<32x64xbf16>, vector<32x64xbf16> -> vector<32x576xbf16>
    %190 = vector.extract_strided_slice %114 {offsets = [0, 1, 1, 0], sizes = [2, 4, 4, 64], strides = [1, 1, 1, 1]} : vector<2x6x6x64xbf16> to vector<2x4x4x64xbf16>
    %191 = vector.shape_cast %190 : vector<2x4x4x64xbf16> to vector<32x64xbf16>
    %192 = vector.extract_strided_slice %120 {offsets = [0, 1, 1, 0], sizes = [2, 4, 4, 64], strides = [1, 1, 1, 1]} : vector<2x6x6x64xbf16> to vector<2x4x4x64xbf16>
    %193 = vector.shape_cast %192 : vector<2x4x4x64xbf16> to vector<32x64xbf16>
    %194 = vector.extract_strided_slice %114 {offsets = [0, 1, 2, 0], sizes = [2, 4, 4, 64], strides = [1, 1, 1, 1]} : vector<2x6x6x64xbf16> to vector<2x4x4x64xbf16>
    %195 = vector.shape_cast %194 : vector<2x4x4x64xbf16> to vector<32x64xbf16>
    %196 = vector.extract_strided_slice %126 {offsets = [0, 1, 1, 0], sizes = [2, 4, 4, 64], strides = [1, 1, 1, 1]} : vector<2x6x6x64xbf16> to vector<2x4x4x64xbf16>
    %197 = vector.shape_cast %196 : vector<2x4x4x64xbf16> to vector<32x64xbf16>
    %198 = vector.extract_strided_slice %132 {offsets = [0, 1, 1, 0], sizes = [2, 4, 4, 64], strides = [1, 1, 1, 1]} : vector<2x6x6x64xbf16> to vector<2x4x4x64xbf16>
    %199 = vector.shape_cast %198 : vector<2x4x4x64xbf16> to vector<32x64xbf16>
    %200 = vector.extract_strided_slice %126 {offsets = [0, 1, 2, 0], sizes = [2, 4, 4, 64], strides = [1, 1, 1, 1]} : vector<2x6x6x64xbf16> to vector<2x4x4x64xbf16>
    %201 = vector.shape_cast %200 : vector<2x4x4x64xbf16> to vector<32x64xbf16>
    %202 = vector.extract_strided_slice %114 {offsets = [0, 2, 1, 0], sizes = [2, 4, 4, 64], strides = [1, 1, 1, 1]} : vector<2x6x6x64xbf16> to vector<2x4x4x64xbf16>
    %203 = vector.shape_cast %202 : vector<2x4x4x64xbf16> to vector<32x64xbf16>
    %204 = vector.extract_strided_slice %120 {offsets = [0, 2, 1, 0], sizes = [2, 4, 4, 64], strides = [1, 1, 1, 1]} : vector<2x6x6x64xbf16> to vector<2x4x4x64xbf16>
    %205 = vector.shape_cast %204 : vector<2x4x4x64xbf16> to vector<32x64xbf16>
    %206 = vector.extract_strided_slice %114 {offsets = [0, 2, 2, 0], sizes = [2, 4, 4, 64], strides = [1, 1, 1, 1]} : vector<2x6x6x64xbf16> to vector<2x4x4x64xbf16>
    %207 = vector.shape_cast %206 : vector<2x4x4x64xbf16> to vector<32x64xbf16>
    %208 = tpu.concatenate %191, %193, %195, %197, %199, %201, %203, %205, %207 in 1 : vector<32x64xbf16>, vector<32x64xbf16>, vector<32x64xbf16>, vector<32x64xbf16>, vector<32x64xbf16>, vector<32x64xbf16>, vector<32x64xbf16>, vector<32x64xbf16>, vector<32x64xbf16> -> vector<32x576xbf16>
    %209 = tpu.concatenate %151, %170, %189, %208 in 0 : vector<32x576xbf16>, vector<32x576xbf16>, vector<32x576xbf16>, vector<32x576xbf16> -> vector<128x576xbf16>
    %c0_42 = arith.constant 0 : index
    %c0_43 = arith.constant 0 : index
    %210 = vector.load %arg9[%c0_42, %c0_43] : memref<576x128xbf16, #tpu.memory_space<vmem>>, vector<576x128xbf16>
    %cst_44 = arith.constant dense<0.000000e+00> : vector<128x128xf32>
    %211 = tpu.matmul %209, %210, %cst_44 {dimension_numbers = #tpu.dot_dimension_numbers<[1], [0], [0], [1], [0, 0, 1, 1], [], []>} : vector<128x576xbf16>, vector<576x128xbf16>, vector<128x128xf32> -> vector<128x128xf32>
    %c0_45 = arith.constant 0 : index
    %c0_46 = arith.constant 0 : index
    %212 = vector.load %arg10[%c0_45, %c0_46] : memref<1x128xf32, #tpu.memory_space<vmem>>, vector<1x128xf32>
    %213 = vector.broadcast %212 : vector<1x128xf32> to vector<128x128xf32>
    %214 = arith.addf %211, %213 : vector<128x128xf32>
    %c0_47 = arith.constant 0 : index
    %c0_48 = arith.constant 0 : index
    %215 = vector.load %arg11[%c0_47, %c0_48] : memref<1x32xf32, #tpu.memory_space<vmem>>, vector<1x32xf32>
    %c0_49 = arith.constant 0 : index
    %c0_50 = arith.constant 0 : index
    %216 = vector.load %arg12[%c0_49, %c0_50] : memref<1x32xf32, #tpu.memory_space<vmem>>, vector<1x32xf32>
    %cst_51 = arith.constant dense<0.000000e+00> : vector<128xf32>
    %217 = vector.multi_reduction <add>, %214, %cst_51 [0] : vector<128x128xf32> to vector<128xf32>
    %218 = vector.shape_cast %217 : vector<128xf32> to vector<1x128xf32>
    %219 = arith.mulf %214, %214 : vector<128x128xf32>
    %cst_52 = arith.constant dense<0.000000e+00> : vector<128xf32>
    %220 = vector.multi_reduction <add>, %219, %cst_52 [0] : vector<128x128xf32> to vector<128xf32>
    %221 = vector.shape_cast %220 : vector<128xf32> to vector<1x128xf32>
    %222 = vector.extract_strided_slice %218 {offsets = [0, 0], sizes = [1, 32], strides = [1, 1]} : vector<1x128xf32> to vector<1x32xf32>
    %cst_53 = arith.constant 0.000000e+00 : f32
    %223 = vector.broadcast %cst_53 : f32 to vector<1x32xf32>
    %224 = arith.addf %223, %222 : vector<1x32xf32>
    %225 = vector.extract_strided_slice %218 {offsets = [0, 32], sizes = [1, 32], strides = [1, 1]} : vector<1x128xf32> to vector<1x32xf32>
    %226 = arith.addf %224, %225 : vector<1x32xf32>
    %227 = vector.extract_strided_slice %218 {offsets = [0, 64], sizes = [1, 32], strides = [1, 1]} : vector<1x128xf32> to vector<1x32xf32>
    %228 = arith.addf %226, %227 : vector<1x32xf32>
    %229 = vector.extract_strided_slice %218 {offsets = [0, 96], sizes = [1, 32], strides = [1, 1]} : vector<1x128xf32> to vector<1x32xf32>
    %230 = arith.addf %228, %229 : vector<1x32xf32>
    %231 = vector.extract_strided_slice %221 {offsets = [0, 0], sizes = [1, 32], strides = [1, 1]} : vector<1x128xf32> to vector<1x32xf32>
    %cst_54 = arith.constant 0.000000e+00 : f32
    %232 = vector.broadcast %cst_54 : f32 to vector<1x32xf32>
    %233 = arith.addf %232, %231 : vector<1x32xf32>
    %234 = vector.extract_strided_slice %221 {offsets = [0, 32], sizes = [1, 32], strides = [1, 1]} : vector<1x128xf32> to vector<1x32xf32>
    %235 = arith.addf %233, %234 : vector<1x32xf32>
    %236 = vector.extract_strided_slice %221 {offsets = [0, 64], sizes = [1, 32], strides = [1, 1]} : vector<1x128xf32> to vector<1x32xf32>
    %237 = arith.addf %235, %236 : vector<1x32xf32>
    %238 = vector.extract_strided_slice %221 {offsets = [0, 96], sizes = [1, 32], strides = [1, 1]} : vector<1x128xf32> to vector<1x32xf32>
    %239 = arith.addf %237, %238 : vector<1x32xf32>
    %cst_55 = arith.constant 0.001953125 : f32
    %240 = vector.broadcast %cst_55 : f32 to vector<1x32xf32>
    %241 = arith.mulf %230, %240 : vector<1x32xf32>
    %cst_56 = arith.constant 0.001953125 : f32
    %242 = vector.broadcast %cst_56 : f32 to vector<1x32xf32>
    %243 = arith.mulf %239, %242 : vector<1x32xf32>
    %244 = arith.mulf %241, %241 : vector<1x32xf32>
    %245 = arith.subf %243, %244 : vector<1x32xf32>
    %cst_57 = arith.constant 9.99999974E-6 : f32
    %246 = vector.broadcast %cst_57 : f32 to vector<1x32xf32>
    %247 = arith.addf %245, %246 : vector<1x32xf32>
    %248 = math.rsqrt %247 : vector<1x32xf32>
    %249 = arith.mulf %215, %248 : vector<1x32xf32>
    %250 = arith.mulf %241, %249 : vector<1x32xf32>
    %251 = arith.subf %216, %250 : vector<1x32xf32>
    %252 = tpu.concatenate %249, %249, %249, %249 in 1 : vector<1x32xf32>, vector<1x32xf32>, vector<1x32xf32>, vector<1x32xf32> -> vector<1x128xf32>
    %253 = tpu.concatenate %251, %251, %251, %251 in 1 : vector<1x32xf32>, vector<1x32xf32>, vector<1x32xf32>, vector<1x32xf32> -> vector<1x128xf32>
    %254 = vector.broadcast %252 : vector<1x128xf32> to vector<128x128xf32>
    %255 = arith.mulf %214, %254 : vector<128x128xf32>
    %256 = vector.broadcast %253 : vector<1x128xf32> to vector<128x128xf32>
    %257 = arith.addf %255, %256 : vector<128x128xf32>
    %cst_58 = arith.constant 0.000000e+00 : f32
    %258 = vector.broadcast %cst_58 : f32 to vector<128x128xf32>
    %259 = arith.maximumf %257, %258 : vector<128x128xf32>
    %260 = arith.truncf %259 : vector<128x128xf32> to vector<128x128xbf16>
    %261 = vector.extract_strided_slice %260 {offsets = [0, 0], sizes = [128, 32], strides = [1, 1]} : vector<128x128xbf16> to vector<128x32xbf16>
    %262 = vector.extract_strided_slice %261 {offsets = [0, 0], sizes = [32, 32], strides = [1, 1]} : vector<128x32xbf16> to vector<32x32xbf16>
    %263 = vector.shape_cast %262 : vector<32x32xbf16> to vector<2x4x4x32xbf16>
    %264 = vector.extract_strided_slice %261 {offsets = [32, 0], sizes = [32, 32], strides = [1, 1]} : vector<128x32xbf16> to vector<32x32xbf16>
    %265 = vector.shape_cast %264 : vector<32x32xbf16> to vector<2x4x4x32xbf16>
    %266 = vector.extract_strided_slice %261 {offsets = [64, 0], sizes = [32, 32], strides = [1, 1]} : vector<128x32xbf16> to vector<32x32xbf16>
    %267 = vector.shape_cast %266 : vector<32x32xbf16> to vector<2x4x4x32xbf16>
    %268 = vector.extract_strided_slice %261 {offsets = [96, 0], sizes = [32, 32], strides = [1, 1]} : vector<128x32xbf16> to vector<32x32xbf16>
    %269 = vector.shape_cast %268 : vector<32x32xbf16> to vector<2x4x4x32xbf16>
    %270 = vector.shape_cast %263 : vector<2x4x4x32xbf16> to vector<2x4x4x1x32xbf16>
    %271 = vector.shape_cast %265 : vector<2x4x4x32xbf16> to vector<2x4x4x1x32xbf16>
    %272 = tpu.concatenate %270, %271 in 3 : vector<2x4x4x1x32xbf16>, vector<2x4x4x1x32xbf16> -> vector<2x4x4x2x32xbf16>
    %273 = vector.shape_cast %272 : vector<2x4x4x2x32xbf16> to vector<2x4x8x32xbf16>
    %274 = vector.shape_cast %267 : vector<2x4x4x32xbf16> to vector<2x4x4x1x32xbf16>
    %275 = vector.shape_cast %269 : vector<2x4x4x32xbf16> to vector<2x4x4x1x32xbf16>
    %276 = tpu.concatenate %274, %275 in 3 : vector<2x4x4x1x32xbf16>, vector<2x4x4x1x32xbf16> -> vector<2x4x4x2x32xbf16>
    %277 = vector.shape_cast %276 : vector<2x4x4x2x32xbf16> to vector<2x4x8x32xbf16>
    %278 = vector.shape_cast %273 : vector<2x4x8x32xbf16> to vector<2x4x1x8x32xbf16>
    %279 = vector.shape_cast %277 : vector<2x4x8x32xbf16> to vector<2x4x1x8x32xbf16>
    %280 = tpu.concatenate %278, %279 in 2 : vector<2x4x1x8x32xbf16>, vector<2x4x1x8x32xbf16> -> vector<2x4x2x8x32xbf16>
    %281 = vector.shape_cast %280 : vector<2x4x2x8x32xbf16> to vector<2x8x8x32xbf16>
    %cst_59 = arith.constant 0.000000e+00 : bf16
    %282 = vector.broadcast %cst_59 : bf16 to vector<2x1x8x32xbf16>
    %283 = tpu.concatenate %282, %281, %282 in 1 : vector<2x1x8x32xbf16>, vector<2x8x8x32xbf16>, vector<2x1x8x32xbf16> -> vector<2x10x8x32xbf16>
    %cst_60 = arith.constant 0.000000e+00 : bf16
    %284 = vector.broadcast %cst_60 : bf16 to vector<2x10x1x32xbf16>
    %285 = tpu.concatenate %284, %283, %284 in 2 : vector<2x10x1x32xbf16>, vector<2x10x8x32xbf16>, vector<2x10x1x32xbf16> -> vector<2x10x10x32xbf16>
    %286 = vector.extract_strided_slice %260 {offsets = [0, 32], sizes = [128, 32], strides = [1, 1]} : vector<128x128xbf16> to vector<128x32xbf16>
    %287 = vector.extract_strided_slice %286 {offsets = [0, 0], sizes = [32, 32], strides = [1, 1]} : vector<128x32xbf16> to vector<32x32xbf16>
    %288 = vector.shape_cast %287 : vector<32x32xbf16> to vector<2x4x4x32xbf16>
    %289 = vector.extract_strided_slice %286 {offsets = [32, 0], sizes = [32, 32], strides = [1, 1]} : vector<128x32xbf16> to vector<32x32xbf16>
    %290 = vector.shape_cast %289 : vector<32x32xbf16> to vector<2x4x4x32xbf16>
    %291 = vector.extract_strided_slice %286 {offsets = [64, 0], sizes = [32, 32], strides = [1, 1]} : vector<128x32xbf16> to vector<32x32xbf16>
    %292 = vector.shape_cast %291 : vector<32x32xbf16> to vector<2x4x4x32xbf16>
    %293 = vector.extract_strided_slice %286 {offsets = [96, 0], sizes = [32, 32], strides = [1, 1]} : vector<128x32xbf16> to vector<32x32xbf16>
    %294 = vector.shape_cast %293 : vector<32x32xbf16> to vector<2x4x4x32xbf16>
    %295 = vector.shape_cast %288 : vector<2x4x4x32xbf16> to vector<2x4x4x1x32xbf16>
    %296 = vector.shape_cast %290 : vector<2x4x4x32xbf16> to vector<2x4x4x1x32xbf16>
    %297 = tpu.concatenate %295, %296 in 3 : vector<2x4x4x1x32xbf16>, vector<2x4x4x1x32xbf16> -> vector<2x4x4x2x32xbf16>
    %298 = vector.shape_cast %297 : vector<2x4x4x2x32xbf16> to vector<2x4x8x32xbf16>
    %299 = vector.shape_cast %292 : vector<2x4x4x32xbf16> to vector<2x4x4x1x32xbf16>
    %300 = vector.shape_cast %294 : vector<2x4x4x32xbf16> to vector<2x4x4x1x32xbf16>
    %301 = tpu.concatenate %299, %300 in 3 : vector<2x4x4x1x32xbf16>, vector<2x4x4x1x32xbf16> -> vector<2x4x4x2x32xbf16>
    %302 = vector.shape_cast %301 : vector<2x4x4x2x32xbf16> to vector<2x4x8x32xbf16>
    %303 = vector.shape_cast %298 : vector<2x4x8x32xbf16> to vector<2x4x1x8x32xbf16>
    %304 = vector.shape_cast %302 : vector<2x4x8x32xbf16> to vector<2x4x1x8x32xbf16>
    %305 = tpu.concatenate %303, %304 in 2 : vector<2x4x1x8x32xbf16>, vector<2x4x1x8x32xbf16> -> vector<2x4x2x8x32xbf16>
    %306 = vector.shape_cast %305 : vector<2x4x2x8x32xbf16> to vector<2x8x8x32xbf16>
    %cst_61 = arith.constant 0.000000e+00 : bf16
    %307 = vector.broadcast %cst_61 : bf16 to vector<2x1x8x32xbf16>
    %308 = tpu.concatenate %307, %306, %307 in 1 : vector<2x1x8x32xbf16>, vector<2x8x8x32xbf16>, vector<2x1x8x32xbf16> -> vector<2x10x8x32xbf16>
    %cst_62 = arith.constant 0.000000e+00 : bf16
    %309 = vector.broadcast %cst_62 : bf16 to vector<2x10x1x32xbf16>
    %310 = tpu.concatenate %309, %308, %309 in 2 : vector<2x10x1x32xbf16>, vector<2x10x8x32xbf16>, vector<2x10x1x32xbf16> -> vector<2x10x10x32xbf16>
    %311 = vector.extract_strided_slice %260 {offsets = [0, 64], sizes = [128, 32], strides = [1, 1]} : vector<128x128xbf16> to vector<128x32xbf16>
    %312 = vector.extract_strided_slice %311 {offsets = [0, 0], sizes = [32, 32], strides = [1, 1]} : vector<128x32xbf16> to vector<32x32xbf16>
    %313 = vector.shape_cast %312 : vector<32x32xbf16> to vector<2x4x4x32xbf16>
    %314 = vector.extract_strided_slice %311 {offsets = [32, 0], sizes = [32, 32], strides = [1, 1]} : vector<128x32xbf16> to vector<32x32xbf16>
    %315 = vector.shape_cast %314 : vector<32x32xbf16> to vector<2x4x4x32xbf16>
    %316 = vector.extract_strided_slice %311 {offsets = [64, 0], sizes = [32, 32], strides = [1, 1]} : vector<128x32xbf16> to vector<32x32xbf16>
    %317 = vector.shape_cast %316 : vector<32x32xbf16> to vector<2x4x4x32xbf16>
    %318 = vector.extract_strided_slice %311 {offsets = [96, 0], sizes = [32, 32], strides = [1, 1]} : vector<128x32xbf16> to vector<32x32xbf16>
    %319 = vector.shape_cast %318 : vector<32x32xbf16> to vector<2x4x4x32xbf16>
    %320 = vector.shape_cast %313 : vector<2x4x4x32xbf16> to vector<2x4x4x1x32xbf16>
    %321 = vector.shape_cast %315 : vector<2x4x4x32xbf16> to vector<2x4x4x1x32xbf16>
    %322 = tpu.concatenate %320, %321 in 3 : vector<2x4x4x1x32xbf16>, vector<2x4x4x1x32xbf16> -> vector<2x4x4x2x32xbf16>
    %323 = vector.shape_cast %322 : vector<2x4x4x2x32xbf16> to vector<2x4x8x32xbf16>
    %324 = vector.shape_cast %317 : vector<2x4x4x32xbf16> to vector<2x4x4x1x32xbf16>
    %325 = vector.shape_cast %319 : vector<2x4x4x32xbf16> to vector<2x4x4x1x32xbf16>
    %326 = tpu.concatenate %324, %325 in 3 : vector<2x4x4x1x32xbf16>, vector<2x4x4x1x32xbf16> -> vector<2x4x4x2x32xbf16>
    %327 = vector.shape_cast %326 : vector<2x4x4x2x32xbf16> to vector<2x4x8x32xbf16>
    %328 = vector.shape_cast %323 : vector<2x4x8x32xbf16> to vector<2x4x1x8x32xbf16>
    %329 = vector.shape_cast %327 : vector<2x4x8x32xbf16> to vector<2x4x1x8x32xbf16>
    %330 = tpu.concatenate %328, %329 in 2 : vector<2x4x1x8x32xbf16>, vector<2x4x1x8x32xbf16> -> vector<2x4x2x8x32xbf16>
    %331 = vector.shape_cast %330 : vector<2x4x2x8x32xbf16> to vector<2x8x8x32xbf16>
    %cst_63 = arith.constant 0.000000e+00 : bf16
    %332 = vector.broadcast %cst_63 : bf16 to vector<2x1x8x32xbf16>
    %333 = tpu.concatenate %332, %331, %332 in 1 : vector<2x1x8x32xbf16>, vector<2x8x8x32xbf16>, vector<2x1x8x32xbf16> -> vector<2x10x8x32xbf16>
    %cst_64 = arith.constant 0.000000e+00 : bf16
    %334 = vector.broadcast %cst_64 : bf16 to vector<2x10x1x32xbf16>
    %335 = tpu.concatenate %334, %333, %334 in 2 : vector<2x10x1x32xbf16>, vector<2x10x8x32xbf16>, vector<2x10x1x32xbf16> -> vector<2x10x10x32xbf16>
    %336 = vector.extract_strided_slice %260 {offsets = [0, 96], sizes = [128, 32], strides = [1, 1]} : vector<128x128xbf16> to vector<128x32xbf16>
    %337 = vector.extract_strided_slice %336 {offsets = [0, 0], sizes = [32, 32], strides = [1, 1]} : vector<128x32xbf16> to vector<32x32xbf16>
    %338 = vector.shape_cast %337 : vector<32x32xbf16> to vector<2x4x4x32xbf16>
    %339 = vector.extract_strided_slice %336 {offsets = [32, 0], sizes = [32, 32], strides = [1, 1]} : vector<128x32xbf16> to vector<32x32xbf16>
    %340 = vector.shape_cast %339 : vector<32x32xbf16> to vector<2x4x4x32xbf16>
    %341 = vector.extract_strided_slice %336 {offsets = [64, 0], sizes = [32, 32], strides = [1, 1]} : vector<128x32xbf16> to vector<32x32xbf16>
    %342 = vector.shape_cast %341 : vector<32x32xbf16> to vector<2x4x4x32xbf16>
    %343 = vector.extract_strided_slice %336 {offsets = [96, 0], sizes = [32, 32], strides = [1, 1]} : vector<128x32xbf16> to vector<32x32xbf16>
    %344 = vector.shape_cast %343 : vector<32x32xbf16> to vector<2x4x4x32xbf16>
    %345 = vector.shape_cast %338 : vector<2x4x4x32xbf16> to vector<2x4x4x1x32xbf16>
    %346 = vector.shape_cast %340 : vector<2x4x4x32xbf16> to vector<2x4x4x1x32xbf16>
    %347 = tpu.concatenate %345, %346 in 3 : vector<2x4x4x1x32xbf16>, vector<2x4x4x1x32xbf16> -> vector<2x4x4x2x32xbf16>
    %348 = vector.shape_cast %347 : vector<2x4x4x2x32xbf16> to vector<2x4x8x32xbf16>
    %349 = vector.shape_cast %342 : vector<2x4x4x32xbf16> to vector<2x4x4x1x32xbf16>
    %350 = vector.shape_cast %344 : vector<2x4x4x32xbf16> to vector<2x4x4x1x32xbf16>
    %351 = tpu.concatenate %349, %350 in 3 : vector<2x4x4x1x32xbf16>, vector<2x4x4x1x32xbf16> -> vector<2x4x4x2x32xbf16>
    %352 = vector.shape_cast %351 : vector<2x4x4x2x32xbf16> to vector<2x4x8x32xbf16>
    %353 = vector.shape_cast %348 : vector<2x4x8x32xbf16> to vector<2x4x1x8x32xbf16>
    %354 = vector.shape_cast %352 : vector<2x4x8x32xbf16> to vector<2x4x1x8x32xbf16>
    %355 = tpu.concatenate %353, %354 in 2 : vector<2x4x1x8x32xbf16>, vector<2x4x1x8x32xbf16> -> vector<2x4x2x8x32xbf16>
    %356 = vector.shape_cast %355 : vector<2x4x2x8x32xbf16> to vector<2x8x8x32xbf16>
    %cst_65 = arith.constant 0.000000e+00 : bf16
    %357 = vector.broadcast %cst_65 : bf16 to vector<2x1x8x32xbf16>
    %358 = tpu.concatenate %357, %356, %357 in 1 : vector<2x1x8x32xbf16>, vector<2x8x8x32xbf16>, vector<2x1x8x32xbf16> -> vector<2x10x8x32xbf16>
    %cst_66 = arith.constant 0.000000e+00 : bf16
    %359 = vector.broadcast %cst_66 : bf16 to vector<2x10x1x32xbf16>
    %360 = tpu.concatenate %359, %358, %359 in 2 : vector<2x10x1x32xbf16>, vector<2x10x8x32xbf16>, vector<2x10x1x32xbf16> -> vector<2x10x10x32xbf16>
    %361 = vector.extract_strided_slice %360 {offsets = [0, 0, 0, 0], sizes = [2, 8, 8, 32], strides = [1, 1, 1, 1]} : vector<2x10x10x32xbf16> to vector<2x8x8x32xbf16>
    %362 = vector.shape_cast %361 : vector<2x8x8x32xbf16> to vector<128x32xbf16>
    %363 = vector.extract_strided_slice %335 {offsets = [0, 0, 1, 0], sizes = [2, 8, 8, 32], strides = [1, 1, 1, 1]} : vector<2x10x10x32xbf16> to vector<2x8x8x32xbf16>
    %364 = vector.shape_cast %363 : vector<2x8x8x32xbf16> to vector<128x32xbf16>
    %365 = vector.extract_strided_slice %360 {offsets = [0, 0, 1, 0], sizes = [2, 8, 8, 32], strides = [1, 1, 1, 1]} : vector<2x10x10x32xbf16> to vector<2x8x8x32xbf16>
    %366 = vector.shape_cast %365 : vector<2x8x8x32xbf16> to vector<128x32xbf16>
    %367 = vector.extract_strided_slice %310 {offsets = [0, 1, 0, 0], sizes = [2, 8, 8, 32], strides = [1, 1, 1, 1]} : vector<2x10x10x32xbf16> to vector<2x8x8x32xbf16>
    %368 = vector.shape_cast %367 : vector<2x8x8x32xbf16> to vector<128x32xbf16>
    %369 = vector.extract_strided_slice %285 {offsets = [0, 1, 1, 0], sizes = [2, 8, 8, 32], strides = [1, 1, 1, 1]} : vector<2x10x10x32xbf16> to vector<2x8x8x32xbf16>
    %370 = vector.shape_cast %369 : vector<2x8x8x32xbf16> to vector<128x32xbf16>
    %371 = vector.extract_strided_slice %310 {offsets = [0, 1, 1, 0], sizes = [2, 8, 8, 32], strides = [1, 1, 1, 1]} : vector<2x10x10x32xbf16> to vector<2x8x8x32xbf16>
    %372 = vector.shape_cast %371 : vector<2x8x8x32xbf16> to vector<128x32xbf16>
    %373 = vector.extract_strided_slice %360 {offsets = [0, 1, 0, 0], sizes = [2, 8, 8, 32], strides = [1, 1, 1, 1]} : vector<2x10x10x32xbf16> to vector<2x8x8x32xbf16>
    %374 = vector.shape_cast %373 : vector<2x8x8x32xbf16> to vector<128x32xbf16>
    %375 = vector.extract_strided_slice %335 {offsets = [0, 1, 1, 0], sizes = [2, 8, 8, 32], strides = [1, 1, 1, 1]} : vector<2x10x10x32xbf16> to vector<2x8x8x32xbf16>
    %376 = vector.shape_cast %375 : vector<2x8x8x32xbf16> to vector<128x32xbf16>
    %377 = vector.extract_strided_slice %360 {offsets = [0, 1, 1, 0], sizes = [2, 8, 8, 32], strides = [1, 1, 1, 1]} : vector<2x10x10x32xbf16> to vector<2x8x8x32xbf16>
    %378 = vector.shape_cast %377 : vector<2x8x8x32xbf16> to vector<128x32xbf16>
    %379 = tpu.concatenate %362, %364, %366, %368, %370, %372, %374, %376, %378 in 1 : vector<128x32xbf16>, vector<128x32xbf16>, vector<128x32xbf16>, vector<128x32xbf16>, vector<128x32xbf16>, vector<128x32xbf16>, vector<128x32xbf16>, vector<128x32xbf16>, vector<128x32xbf16> -> vector<128x288xbf16>
    %380 = vector.extract_strided_slice %335 {offsets = [0, 0, 1, 0], sizes = [2, 8, 8, 32], strides = [1, 1, 1, 1]} : vector<2x10x10x32xbf16> to vector<2x8x8x32xbf16>
    %381 = vector.shape_cast %380 : vector<2x8x8x32xbf16> to vector<128x32xbf16>
    %382 = vector.extract_strided_slice %360 {offsets = [0, 0, 1, 0], sizes = [2, 8, 8, 32], strides = [1, 1, 1, 1]} : vector<2x10x10x32xbf16> to vector<2x8x8x32xbf16>
    %383 = vector.shape_cast %382 : vector<2x8x8x32xbf16> to vector<128x32xbf16>
    %384 = vector.extract_strided_slice %335 {offsets = [0, 0, 2, 0], sizes = [2, 8, 8, 32], strides = [1, 1, 1, 1]} : vector<2x10x10x32xbf16> to vector<2x8x8x32xbf16>
    %385 = vector.shape_cast %384 : vector<2x8x8x32xbf16> to vector<128x32xbf16>
    %386 = vector.extract_strided_slice %285 {offsets = [0, 1, 1, 0], sizes = [2, 8, 8, 32], strides = [1, 1, 1, 1]} : vector<2x10x10x32xbf16> to vector<2x8x8x32xbf16>
    %387 = vector.shape_cast %386 : vector<2x8x8x32xbf16> to vector<128x32xbf16>
    %388 = vector.extract_strided_slice %310 {offsets = [0, 1, 1, 0], sizes = [2, 8, 8, 32], strides = [1, 1, 1, 1]} : vector<2x10x10x32xbf16> to vector<2x8x8x32xbf16>
    %389 = vector.shape_cast %388 : vector<2x8x8x32xbf16> to vector<128x32xbf16>
    %390 = vector.extract_strided_slice %285 {offsets = [0, 1, 2, 0], sizes = [2, 8, 8, 32], strides = [1, 1, 1, 1]} : vector<2x10x10x32xbf16> to vector<2x8x8x32xbf16>
    %391 = vector.shape_cast %390 : vector<2x8x8x32xbf16> to vector<128x32xbf16>
    %392 = vector.extract_strided_slice %335 {offsets = [0, 1, 1, 0], sizes = [2, 8, 8, 32], strides = [1, 1, 1, 1]} : vector<2x10x10x32xbf16> to vector<2x8x8x32xbf16>
    %393 = vector.shape_cast %392 : vector<2x8x8x32xbf16> to vector<128x32xbf16>
    %394 = vector.extract_strided_slice %360 {offsets = [0, 1, 1, 0], sizes = [2, 8, 8, 32], strides = [1, 1, 1, 1]} : vector<2x10x10x32xbf16> to vector<2x8x8x32xbf16>
    %395 = vector.shape_cast %394 : vector<2x8x8x32xbf16> to vector<128x32xbf16>
    %396 = vector.extract_strided_slice %335 {offsets = [0, 1, 2, 0], sizes = [2, 8, 8, 32], strides = [1, 1, 1, 1]} : vector<2x10x10x32xbf16> to vector<2x8x8x32xbf16>
    %397 = vector.shape_cast %396 : vector<2x8x8x32xbf16> to vector<128x32xbf16>
    %398 = tpu.concatenate %381, %383, %385, %387, %389, %391, %393, %395, %397 in 1 : vector<128x32xbf16>, vector<128x32xbf16>, vector<128x32xbf16>, vector<128x32xbf16>, vector<128x32xbf16>, vector<128x32xbf16>, vector<128x32xbf16>, vector<128x32xbf16>, vector<128x32xbf16> -> vector<128x288xbf16>
    %399 = vector.extract_strided_slice %310 {offsets = [0, 1, 0, 0], sizes = [2, 8, 8, 32], strides = [1, 1, 1, 1]} : vector<2x10x10x32xbf16> to vector<2x8x8x32xbf16>
    %400 = vector.shape_cast %399 : vector<2x8x8x32xbf16> to vector<128x32xbf16>
    %401 = vector.extract_strided_slice %285 {offsets = [0, 1, 1, 0], sizes = [2, 8, 8, 32], strides = [1, 1, 1, 1]} : vector<2x10x10x32xbf16> to vector<2x8x8x32xbf16>
    %402 = vector.shape_cast %401 : vector<2x8x8x32xbf16> to vector<128x32xbf16>
    %403 = vector.extract_strided_slice %310 {offsets = [0, 1, 1, 0], sizes = [2, 8, 8, 32], strides = [1, 1, 1, 1]} : vector<2x10x10x32xbf16> to vector<2x8x8x32xbf16>
    %404 = vector.shape_cast %403 : vector<2x8x8x32xbf16> to vector<128x32xbf16>
    %405 = vector.extract_strided_slice %360 {offsets = [0, 1, 0, 0], sizes = [2, 8, 8, 32], strides = [1, 1, 1, 1]} : vector<2x10x10x32xbf16> to vector<2x8x8x32xbf16>
    %406 = vector.shape_cast %405 : vector<2x8x8x32xbf16> to vector<128x32xbf16>
    %407 = vector.extract_strided_slice %335 {offsets = [0, 1, 1, 0], sizes = [2, 8, 8, 32], strides = [1, 1, 1, 1]} : vector<2x10x10x32xbf16> to vector<2x8x8x32xbf16>
    %408 = vector.shape_cast %407 : vector<2x8x8x32xbf16> to vector<128x32xbf16>
    %409 = vector.extract_strided_slice %360 {offsets = [0, 1, 1, 0], sizes = [2, 8, 8, 32], strides = [1, 1, 1, 1]} : vector<2x10x10x32xbf16> to vector<2x8x8x32xbf16>
    %410 = vector.shape_cast %409 : vector<2x8x8x32xbf16> to vector<128x32xbf16>
    %411 = vector.extract_strided_slice %310 {offsets = [0, 2, 0, 0], sizes = [2, 8, 8, 32], strides = [1, 1, 1, 1]} : vector<2x10x10x32xbf16> to vector<2x8x8x32xbf16>
    %412 = vector.shape_cast %411 : vector<2x8x8x32xbf16> to vector<128x32xbf16>
    %413 = vector.extract_strided_slice %285 {offsets = [0, 2, 1, 0], sizes = [2, 8, 8, 32], strides = [1, 1, 1, 1]} : vector<2x10x10x32xbf16> to vector<2x8x8x32xbf16>
    %414 = vector.shape_cast %413 : vector<2x8x8x32xbf16> to vector<128x32xbf16>
    %415 = vector.extract_strided_slice %310 {offsets = [0, 2, 1, 0], sizes = [2, 8, 8, 32], strides = [1, 1, 1, 1]} : vector<2x10x10x32xbf16> to vector<2x8x8x32xbf16>
    %416 = vector.shape_cast %415 : vector<2x8x8x32xbf16> to vector<128x32xbf16>
    %417 = tpu.concatenate %400, %402, %404, %406, %408, %410, %412, %414, %416 in 1 : vector<128x32xbf16>, vector<128x32xbf16>, vector<128x32xbf16>, vector<128x32xbf16>, vector<128x32xbf16>, vector<128x32xbf16>, vector<128x32xbf16>, vector<128x32xbf16>, vector<128x32xbf16> -> vector<128x288xbf16>
    %418 = vector.extract_strided_slice %285 {offsets = [0, 1, 1, 0], sizes = [2, 8, 8, 32], strides = [1, 1, 1, 1]} : vector<2x10x10x32xbf16> to vector<2x8x8x32xbf16>
    %419 = vector.shape_cast %418 : vector<2x8x8x32xbf16> to vector<128x32xbf16>
    %420 = vector.extract_strided_slice %310 {offsets = [0, 1, 1, 0], sizes = [2, 8, 8, 32], strides = [1, 1, 1, 1]} : vector<2x10x10x32xbf16> to vector<2x8x8x32xbf16>
    %421 = vector.shape_cast %420 : vector<2x8x8x32xbf16> to vector<128x32xbf16>
    %422 = vector.extract_strided_slice %285 {offsets = [0, 1, 2, 0], sizes = [2, 8, 8, 32], strides = [1, 1, 1, 1]} : vector<2x10x10x32xbf16> to vector<2x8x8x32xbf16>
    %423 = vector.shape_cast %422 : vector<2x8x8x32xbf16> to vector<128x32xbf16>
    %424 = vector.extract_strided_slice %335 {offsets = [0, 1, 1, 0], sizes = [2, 8, 8, 32], strides = [1, 1, 1, 1]} : vector<2x10x10x32xbf16> to vector<2x8x8x32xbf16>
    %425 = vector.shape_cast %424 : vector<2x8x8x32xbf16> to vector<128x32xbf16>
    %426 = vector.extract_strided_slice %360 {offsets = [0, 1, 1, 0], sizes = [2, 8, 8, 32], strides = [1, 1, 1, 1]} : vector<2x10x10x32xbf16> to vector<2x8x8x32xbf16>
    %427 = vector.shape_cast %426 : vector<2x8x8x32xbf16> to vector<128x32xbf16>
    %428 = vector.extract_strided_slice %335 {offsets = [0, 1, 2, 0], sizes = [2, 8, 8, 32], strides = [1, 1, 1, 1]} : vector<2x10x10x32xbf16> to vector<2x8x8x32xbf16>
    %429 = vector.shape_cast %428 : vector<2x8x8x32xbf16> to vector<128x32xbf16>
    %430 = vector.extract_strided_slice %285 {offsets = [0, 2, 1, 0], sizes = [2, 8, 8, 32], strides = [1, 1, 1, 1]} : vector<2x10x10x32xbf16> to vector<2x8x8x32xbf16>
    %431 = vector.shape_cast %430 : vector<2x8x8x32xbf16> to vector<128x32xbf16>
    %432 = vector.extract_strided_slice %310 {offsets = [0, 2, 1, 0], sizes = [2, 8, 8, 32], strides = [1, 1, 1, 1]} : vector<2x10x10x32xbf16> to vector<2x8x8x32xbf16>
    %433 = vector.shape_cast %432 : vector<2x8x8x32xbf16> to vector<128x32xbf16>
    %434 = vector.extract_strided_slice %285 {offsets = [0, 2, 2, 0], sizes = [2, 8, 8, 32], strides = [1, 1, 1, 1]} : vector<2x10x10x32xbf16> to vector<2x8x8x32xbf16>
    %435 = vector.shape_cast %434 : vector<2x8x8x32xbf16> to vector<128x32xbf16>
    %436 = tpu.concatenate %419, %421, %423, %425, %427, %429, %431, %433, %435 in 1 : vector<128x32xbf16>, vector<128x32xbf16>, vector<128x32xbf16>, vector<128x32xbf16>, vector<128x32xbf16>, vector<128x32xbf16>, vector<128x32xbf16>, vector<128x32xbf16>, vector<128x32xbf16> -> vector<128x288xbf16>
    %437 = tpu.concatenate %379, %398, %417, %436 in 0 : vector<128x288xbf16>, vector<128x288xbf16>, vector<128x288xbf16>, vector<128x288xbf16> -> vector<512x288xbf16>
    %c0_67 = arith.constant 0 : index
    %c0_68 = arith.constant 0 : index
    %438 = vector.load %arg13[%c0_67, %c0_68] : memref<12x288xbf16, #tpu.memory_space<vmem>>, vector<12x288xbf16>
    %cst_69 = arith.constant dense<0.000000e+00> : vector<12x512xf32>
    %439 = tpu.matmul %438, %437, %cst_69 {dimension_numbers = #tpu.dot_dimension_numbers<[1], [1], [0], [0], [0, 0, 1, 0], [], []>} : vector<12x288xbf16>, vector<512x288xbf16>, vector<12x512xf32> -> vector<12x512xf32>
    %c0_70 = arith.constant 0 : index
    %c0_71 = arith.constant 0 : index
    %440 = vector.load %arg14[%c0_70, %c0_71] : memref<12x1xf32, #tpu.memory_space<vmem>>, vector<12x1xf32>
    %441 = vector.broadcast %440 : vector<12x1xf32> to vector<12x512xf32>
    %442 = arith.addf %439, %441 : vector<12x512xf32>
    %443 = math.tanh %442 : vector<12x512xf32>
    %c0_72 = arith.constant 0 : index
    %c0_73 = arith.constant 0 : index
    %444 = vector.load %arg15[%c0_72, %c0_73] : memref<12x512xf32, #tpu.memory_space<vmem>>, vector<12x512xf32>
    tpu.vector_store %arg15[%c0_72, %c0_73], %443 {strides = array<i32>} : memref<12x512xf32, #tpu.memory_space<vmem>>, vector<12x512xf32>,
    return
  }
}

</mosaic_0001>

<llo_original>
// kernel: conditional_generator_forward.1
$region0: #{conditional_generator_forward.1}
  #allocation0 [shape = 'u32[]', space=smem, size = 0x4, offset = 0x4, fixed_abs, tag = 'smem constant byte address 0x4 - core index']
  #allocation1 [shape = 'u32[144,128]{1,0:T(1,128)}', space=vmem, size = 0x12000, scoped, tag = 'internal scratch']
  %s0 = inlined_call_operand.vmem [shape: bf16[2,26], index: 0, kind: input, shape index: {}]
  %s1 = inlined_call_operand.hbm [shape: bf16[26,2048], index: 1, kind: input, shape index: {}]
  %s2 = inlined_call_operand.hbm [shape: f32[1,2048], index: 2, kind: input, shape index: {}]
  %s3 = inlined_call_operand.hbm [shape: f32[1,128], index: 3, kind: input, shape index: {}]
  %s4 = inlined_call_operand.hbm [shape: f32[1,128], index: 4, kind: input, shape index: {}]
  %s5 = inlined_call_operand.hbm [shape: bf16[1152,256], index: 5, kind: input, shape index: {}]
  %s6 = inlined_call_operand.hbm [shape: f32[1,256], index: 6, kind: input, shape index: {}]
  %s7 = inlined_call_operand.hbm [shape: f32[1,64], index: 7, kind: input, shape index: {}]
  %s8 = inlined_call_operand.hbm [shape: f32[1,64], index: 8, kind: input, shape index: {}]
  %s9 = inlined_call_operand.hbm [shape: bf16[576,128], index: 9, kind: input, shape index: {}]
  %s10 = inlined_call_operand.hbm [shape: f32[1,128], index: 10, kind: input, shape index: {}]
  %s11 = inlined_call_operand.hbm [shape: f32[1,32], index: 11, kind: input, shape index: {}]
  %s12 = inlined_call_operand.hbm [shape: f32[1,32], index: 12, kind: input, shape index: {}]
  %s13 = inlined_call_operand.hbm [shape: bf16[12,288], index: 13, kind: input, shape index: {}]
  %s14 = inlined_call_operand.vmem [shape: f32[12,1], index: 14, kind: input, shape index: {}]
  %s15 = inlined_call_operand.vmem [shape: f32[12,512], index: 15, kind: output, shape index: {}]
  %s16 = sld [smem:[#allocation0]]
  $region122: #{conditional_generator_forward.1} parent=0
    _
  %s18 = ssub.s32 1, %s16
  %s19 = scalar_select 0, %s18, %s16
  $region1: #{conditional_generator_forward.1} parent=0
    #allocation2 [shape = 'u8[131072]{0}', space=vmem, size = 0x20000, scoped, tag = 'input window, operand 1, single buffered']
    #allocation3 [shape = 's32[1]{0}', space=sflag, size = 0x4, scoped, tag = 'scoped memory for conditional_generator_forward.1']
    #allocation4 [shape = 'u8[8192]{0}', space=vmem, size = 0x2000, scoped, tag = 'input window, operand 2, single buffered']
    #allocation5 [shape = 's32[1]{0}', space=sflag, size = 0x4, scoped, tag = 'scoped memory for conditional_generator_forward.1']
    #allocation6 [shape = 'u8[512]{0}', space=vmem, size = 0x400, scoped, tag = 'input window, operand 3, single buffered']
    #allocation7 [shape = 'u8[512]{0}', space=vmem, size = 0x400, scoped, tag = 'input window, operand 4, single buffered']
    #allocation8 [shape = 's32[1]{0}', space=sflag, size = 0x4, scoped, tag = 'scoped memory for conditional_generator_forward.1']
    #allocation9 [shape = 'u8[589824]{0}', space=vmem, size = 0x90000, scoped, tag = 'input window, operand 5, single buffered']
    #allocation10 [shape = 'u8[1024]{0}', space=vmem, size = 0x400, scoped, tag = 'input window, operand 6, single buffered']
    #allocation11 [shape = 's32[1]{0}', space=sflag, size = 0x4, scoped, tag = 'scoped memory for conditional_generator_forward.1']
    #allocation12 [shape = 'u8[512]{0}', space=vmem, size = 0x400, scoped, tag = 'input window, operand 7, single buffered']
    #allocation13 [shape = 'u8[512]{0}', space=vmem, size = 0x400, scoped, tag = 'input window, operand 8, single buffered']
    #allocation14 [shape = 's32[1]{0}', space=sflag, size = 0x4, scoped, tag = 'scoped memory for conditional_generator_forward.1']
    #allocation15 [shape = 'u8[147456]{0}', space=vmem, size = 0x24000, scoped, tag = 'input window, operand 9, single buffered']
    #allocation16 [shape = 'u8[512]{0}', space=vmem, size = 0x400, scoped, tag = 'input window, operand 10, single buffered']
    #allocation17 [shape = 's32[1]{0}', space=sflag, size = 0x4, scoped, tag = 'scoped memory for conditional_generator_forward.1']
    #allocation18 [shape = 'u8[512]{0}', space=vmem, size = 0x400, scoped, tag = 'input window, operand 11, single buffered']
    #allocation19 [shape = 'u8[512]{0}', space=vmem, size = 0x400, scoped, tag = 'input window, operand 12, single buffered']
    #allocation20 [shape = 's32[1]{0}', space=sflag, size = 0x4, scoped, tag = 'scoped memory for conditional_generator_forward.1']
    #allocation21 [shape = 'u8[12288]{0}', space=vmem, size = 0x3000, scoped, tag = 'input window, operand 13, single buffered']
    %20 = vsyncpa [#allocation3], 0
    %21 = vsyncpa [#allocation5], 0
    %22 = vsyncpa [#allocation8], 0
    %23 = vsyncpa [#allocation11], 0
    %24 = vsyncpa [#allocation14], 0
    %25 = vsyncpa [#allocation17], 0
    %26 = vsyncpa [#allocation20], 0
    // Predicated region
    $region2: #{conditional_generator_forward.1} parent=1 // pred_check
      _
    $region3: #{conditional_generator_forward.1} parent=1 // pred_check_branch
      %28 = sbr.rel (0) target = $region5
    $region4: #{conditional_generator_forward.1} parent=1 // pred_region
      _
    $region5: #{conditional_generator_forward.1} parent=1 // pred_fallthru
      _
    // Predicated region
    $region6: #{conditional_generator_forward.1} parent=1 // pred_check
      _
    $region7: #{conditional_generator_forward.1} parent=1 // pred_check_branch
      %30 = sbr.rel (0) target = $region9
    $region8: #{conditional_generator_forward.1} parent=1 // pred_region
      %s32 = ssub.s32 4096, 4096
      %33 = vsyncadd [#allocation3], %s32
      %s34 = sshll.u32 [#allocation2], 4
      %s35 = int_to_ptr.vmem [resolvable:$true] %s34
      %40 = dma.hbm_to_vmem [thread:$0]  %s1, 4096, %s35, [#allocation3], 1024, 1024, 64
    $region9: #{conditional_generator_forward.1} parent=1 // pred_fallthru
      _
    // Predicated region
    $region10: #{conditional_generator_forward.1} parent=1 // pred_check
      _
    $region11: #{conditional_generator_forward.1} parent=1 // pred_check_branch
      %42 = sbr.rel (0) target = $region13
    $region12: #{conditional_generator_forward.1} parent=1 // pred_region
      %s44 = ssub.s32 256, 256
      %45 = vsyncadd [#allocation5], %s44
      %s47 = sshll.u32 [#allocation4], 4
      %s48 = int_to_ptr.vmem [resolvable:$true] %s47
      %50 = dma.hbm_to_vmem [thread:$0]  %s2, 256, %s48, [#allocation5]
    $region13: #{conditional_generator_forward.1} parent=1 // pred_fallthru
      _
    // Predicated region
    $region14: #{conditional_generator_forward.1} parent=1 // pred_check
      _
    $region15: #{conditional_generator_forward.1} parent=1 // pred_check_branch
      %52 = sbr.rel (0) target = $region17
    $region16: #{conditional_generator_forward.1} parent=1 // pred_region
      %s54 = ssub.s32 16, 16
      %55 = vsyncadd [#allocation5], %s54
      %s57 = sshll.u32 [#allocation6], 4
      %s58 = int_to_ptr.vmem [resolvable:$true] %s57
      %60 = dma.hbm_to_vmem [thread:$0]  %s3, 16, %s58, [#allocation5]
    $region17: #{conditional_generator_forward.1} parent=1 // pred_fallthru
      _
    // Predicated region
    $region18: #{conditional_generator_forward.1} parent=1 // pred_check
      _
    $region19: #{conditional_generator_forward.1} parent=1 // pred_check_branch
      %62 = sbr.rel (0) target = $region21
    $region20: #{conditional_generator_forward.1} parent=1 // pred_region
      %s64 = ssub.s32 16, 16
      %65 = vsyncadd [#allocation8], %s64
      %s67 = sshll.u32 [#allocation7], 4
      %s68 = int_to_ptr.vmem [resolvable:$true] %s67
      %70 = dma.hbm_to_vmem [thread:$0]  %s4, 16, %s68, [#allocation8]
    $region21: #{conditional_generator_forward.1} parent=1 // pred_fallthru
      _
    // Predicated region
    $region22: #{conditional_generator_forward.1} parent=1 // pred_check
      _
    $region23: #{conditional_generator_forward.1} parent=1 // pred_check_branch
      %72 = sbr.rel (0) target = $region25
    $region24: #{conditional_generator_forward.1} parent=1 // pred_region
      %s74 = ssub.s32 18432, 18432
      %75 = vsyncadd [#allocation8], %s74
      %s76 = sshll.u32 [#allocation9], 4
      %s77 = int_to_ptr.vmem [resolvable:$true] %s76
      %82 = dma.hbm_to_vmem [thread:$0]  %s5, 18432, %s77, [#allocation8], 128, 128, 8
    $region25: #{conditional_generator_forward.1} parent=1 // pred_fallthru
      _
    // Predicated region
    $region26: #{conditional_generator_forward.1} parent=1 // pred_check
      _
    $region27: #{conditional_generator_forward.1} parent=1 // pred_check_branch
      %84 = sbr.rel (0) target = $region29
    $region28: #{conditional_generator_forward.1} parent=1 // pred_region
      %s86 = ssub.s32 32, 32
      %87 = vsyncadd [#allocation11], %s86
      %s89 = sshll.u32 [#allocation10], 4
      %s90 = int_to_ptr.vmem [resolvable:$true] %s89
      %92 = dma.hbm_to_vmem [thread:$0]  %s6, 32, %s90, [#allocation11]
    $region29: #{conditional_generator_forward.1} parent=1 // pred_fallthru
      _
    // Predicated region
    $region30: #{conditional_generator_forward.1} parent=1 // pred_check
      _
    $region31: #{conditional_generator_forward.1} parent=1 // pred_check_branch
      %94 = sbr.rel (0) target = $region33
    $region32: #{conditional_generator_forward.1} parent=1 // pred_region
      %s96 = ssub.s32 16, 16
      %97 = vsyncadd [#allocation11], %s96
      %s99 = sshll.u32 [#allocation12], 4
      %s100 = int_to_ptr.vmem [resolvable:$true] %s99
      %102 = dma.hbm_to_vmem [thread:$0]  %s7, 16, %s100, [#allocation11]
    $region33: #{conditional_generator_forward.1} parent=1 // pred_fallthru
      _
    // Predicated region
    $region34: #{conditional_generator_forward.1} parent=1 // pred_check
      _
    $region35: #{conditional_generator_forward.1} parent=1 // pred_check_branch
      %104 = sbr.rel (0) target = $region37
    $region36: #{conditional_generator_forward.1} parent=1 // pred_region
      %s106 = ssub.s32 16, 16
      %107 = vsyncadd [#allocation14], %s106
      %s109 = sshll.u32 [#allocation13], 4
      %s110 = int_to_ptr.vmem [resolvable:$true] %s109
      %112 = dma.hbm_to_vmem [thread:$0]  %s8, 16, %s110, [#allocation14]
    $region37: #{conditional_generator_forward.1} parent=1 // pred_fallthru
      _
    // Predicated region
    $region38: #{conditional_generator_forward.1} parent=1 // pred_check
      _
    $region39: #{conditional_generator_forward.1} parent=1 // pred_check_branch
      %114 = sbr.rel (0) target = $region41
    $region40: #{conditional_generator_forward.1} parent=1 // pred_region
      %s116 = ssub.s32 4608, 4608
      %117 = vsyncadd [#allocation14], %s116
      %s118 = sshll.u32 [#allocation15], 4
      %s119 = int_to_ptr.vmem [resolvable:$true] %s118
      %124 = dma.hbm_to_vmem [thread:$0]  %s9, 4608, %s119, [#allocation14], 64, 64, 4
    $region41: #{conditional_generator_forward.1} parent=1 // pred_fallthru
      _
    // Predicated region
    $region42: #{conditional_generator_forward.1} parent=1 // pred_check
      _
    $region43: #{conditional_generator_forward.1} parent=1 // pred_check_branch
      %126 = sbr.rel (0) target = $region45
    $region44: #{conditional_generator_forward.1} parent=1 // pred_region
      %s128 = ssub.s32 16, 16
      %129 = vsyncadd [#allocation17], %s128
      %s131 = sshll.u32 [#allocation16], 4
      %s132 = int_to_ptr.vmem [resolvable:$true] %s131
      %134 = dma.hbm_to_vmem [thread:$0]  %s10, 16, %s132, [#allocation17]
    $region45: #{conditional_generator_forward.1} parent=1 // pred_fallthru
      _
    // Predicated region
    $region46: #{conditional_generator_forward.1} parent=1 // pred_check
      _
    $region47: #{conditional_generator_forward.1} parent=1 // pred_check_branch
      %136 = sbr.rel (0) target = $region49
    $region48: #{conditional_generator_forward.1} parent=1 // pred_region
      %s138 = ssub.s32 16, 16
      %139 = vsyncadd [#allocation17], %s138
      %s141 = sshll.u32 [#allocation18], 4
      %s142 = int_to_ptr.vmem [resolvable:$true] %s141
      %144 = dma.hbm_to_vmem [thread:$0]  %s11, 16, %s142, [#allocation17]
    $region49: #{conditional_generator_forward.1} parent=1 // pred_fallthru
      _
    // Predicated region
    $region50: #{conditional_generator_forward.1} parent=1 // pred_check
      _
    $region51: #{conditional_generator_forward.1} parent=1 // pred_check_branch
      %146 = sbr.rel (0) target = $region53
    $region52: #{conditional_generator_forward.1} parent=1 // pred_region
      %s148 = ssub.s32 16, 16
      %149 = vsyncadd [#allocation20], %s148
      %s151 = sshll.u32 [#allocation19], 4
      %s152 = int_to_ptr.vmem [resolvable:$true] %s151
      %154 = dma.hbm_to_vmem [thread:$0]  %s12, 16, %s152, [#allocation20]
    $region53: #{conditional_generator_forward.1} parent=1 // pred_fallthru
      _
    // Predicated region
    $region54: #{conditional_generator_forward.1} parent=1 // pred_check
      _
    $region55: #{conditional_generator_forward.1} parent=1 // pred_check_branch
      %156 = sbr.rel (0) target = $region57
    $region56: #{conditional_generator_forward.1} parent=1 // pred_region
      %s158 = ssub.s32 384, 384
      %159 = vsyncadd [#allocation20], %s158
      %s160 = sshll.u32 [#allocation21], 4
      %s161 = int_to_ptr.vmem [resolvable:$true] %s160
      %166 = dma.hbm_to_vmem [thread:$0]  %s13, 384, %s161, [#allocation20], 192, 192, 12
    $region57: #{conditional_generator_forward.1} parent=1 // pred_fallthru
      _
    // Predicated region
    $region58: #{conditional_generator_forward.1} parent=1 // pred_check
      _
    $region59: #{conditional_generator_forward.1} parent=1 // pred_check_branch
      %168 = sbr.rel (0) target = $region61
    $region60: #{conditional_generator_forward.1} parent=1 // pred_region
      _
    $region61: #{conditional_generator_forward.1} parent=1 // pred_fallthru
      _
    // Predicated region
    $region62: #{conditional_generator_forward.1} parent=1 // pred_check
      _
    $region63: #{conditional_generator_forward.1} parent=1 // pred_check_branch
      %170 = sbr.rel (0) target = $region65
    $region64: #{conditional_generator_forward.1} parent=1 // pred_region
      %171 = dma.done [#allocation3], 4096
    $region65: #{conditional_generator_forward.1} parent=1 // pred_fallthru
      _
    // Predicated region
    $region66: #{conditional_generator_forward.1} parent=1 // pred_check
      _
    $region67: #{conditional_generator_forward.1} parent=1 // pred_check_branch
      %173 = sbr.rel (0) target = $region69
    $region68: #{conditional_generator_forward.1} parent=1 // pred_region
      %174 = dma.done [#allocation5], 256
    $region69: #{conditional_generator_forward.1} parent=1 // pred_fallthru
      _
    // Predicated region
    $region70: #{conditional_generator_forward.1} parent=1 // pred_check
      _
    $region71: #{conditional_generator_forward.1} parent=1 // pred_check_branch
      %176 = sbr.rel (0) target = $region73
    $region72: #{conditional_generator_forward.1} parent=1 // pred_region
      %177 = dma.done [#allocation5], 16
    $region73: #{conditional_generator_forward.1} parent=1 // pred_fallthru
      _
    // Predicated region
    $region74: #{conditional_generator_forward.1} parent=1 // pred_check
      _
    $region75: #{conditional_generator_forward.1} parent=1 // pred_check_branch
      %179 = sbr.rel (0) target = $region77
    $region76: #{conditional_generator_forward.1} parent=1 // pred_region
      %180 = dma.done [#allocation8], 16
    $region77: #{conditional_generator_forward.1} parent=1 // pred_fallthru
      _
    // Predicated region
    $region78: #{conditional_generator_forward.1} parent=1 // pred_check
      _
    $region79: #{conditional_generator_forward.1} parent=1 // pred_check_branch
      %182 = sbr.rel (0) target = $region81
    $region80: #{conditional_generator_forward.1} parent=1 // pred_region
      %183 = dma.done [#allocation8], 18432
    $region81: #{conditional_generator_forward.1} parent=1 // pred_fallthru
      _
    // Predicated region
    $region82: #{conditional_generator_forward.1} parent=1 // pred_check
      _
    $region83: #{conditional_generator_forward.1} parent=1 // pred_check_branch
      %185 = sbr.rel (0) target = $region85
    $region84: #{conditional_generator_forward.1} parent=1 // pred_region
      %186 = dma.done [#allocation11], 32
    $region85: #{conditional_generator_forward.1} parent=1 // pred_fallthru
      _
    // Predicated region
    $region86: #{conditional_generator_forward.1} parent=1 // pred_check
      _
    $region87: #{conditional_generator_forward.1} parent=1 // pred_check_branch
      %188 = sbr.rel (0) target = $region89
    $region88: #{conditional_generator_forward.1} parent=1 // pred_region
      %189 = dma.done [#allocation11], 16
    $region89: #{conditional_generator_forward.1} parent=1 // pred_fallthru
      _
    // Predicated region
    $region90: #{conditional_generator_forward.1} parent=1 // pred_check
      _
    $region91: #{conditional_generator_forward.1} parent=1 // pred_check_branch
      %191 = sbr.rel (0) target = $region93
    $region92: #{conditional_generator_forward.1} parent=1 // pred_region
      %192 = dma.done [#allocation14], 16
    $region93: #{conditional_generator_forward.1} parent=1 // pred_fallthru
      _
    // Predicated region
    $region94: #{conditional_generator_forward.1} parent=1 // pred_check
      _
    $region95: #{conditional_generator_forward.1} parent=1 // pred_check_branch
      %194 = sbr.rel (0) target = $region97
    $region96: #{conditional_generator_forward.1} parent=1 // pred_region
      %195 = dma.done [#allocation14], 4608
    $region97: #{conditional_generator_forward.1} parent=1 // pred_fallthru
      _
    // Predicated region
    $region98: #{conditional_generator_forward.1} parent=1 // pred_check
      _
    $region99: #{conditional_generator_forward.1} parent=1 // pred_check_branch
      %197 = sbr.rel (0) target = $region101
    $region100: #{conditional_generator_forward.1} parent=1 // pred_region
      %198 = dma.done [#allocation17], 16
    $region101: #{conditional_generator_forward.1} parent=1 // pred_fallthru
      _
    // Predicated region
    $region102: #{conditional_generator_forward.1} parent=1 // pred_check
      _
    $region103: #{conditional_generator_forward.1} parent=1 // pred_check_branch
      %200 = sbr.rel (0) target = $region105
    $region104: #{conditional_generator_forward.1} parent=1 // pred_region
      %201 = dma.done [#allocation17], 16
    $region105: #{conditional_generator_forward.1} parent=1 // pred_fallthru
      _
    // Predicated region
    $region106: #{conditional_generator_forward.1} parent=1 // pred_check
      _
    $region107: #{conditional_generator_forward.1} parent=1 // pred_check_branch
      %203 = sbr.rel (0) target = $region109
    $region108: #{conditional_generator_forward.1} parent=1 // pred_region
      %204 = dma.done [#allocation20], 16
    $region109: #{conditional_generator_forward.1} parent=1 // pred_fallthru
      _
    // Predicated region
    $region110: #{conditional_generator_forward.1} parent=1 // pred_check
      _
    $region111: #{conditional_generator_forward.1} parent=1 // pred_check_branch
      %206 = sbr.rel (0) target = $region113
    $region112: #{conditional_generator_forward.1} parent=1 // pred_region
      %207 = dma.done [#allocation20], 384
    $region113: #{conditional_generator_forward.1} parent=1 // pred_fallthru
      _
    %v209 = vld [vmem:[%s0] sm:$0x1]
    %v210 = vld [vmem:[#allocation2] sm:$0xff]
    %v211 = vld [vmem:[#allocation2 + $0x8] sm:$0xff]
    %v212 = vld [vmem:[#allocation2 + $0x10] sm:$0xff]
    %v213 = vld [vmem:[#allocation2 + $0x18] sm:$0xff]
    %v214 = vld [vmem:[#allocation2 + $0x20] sm:$0xff]
    %v215 = vld [vmem:[#allocation2 + $0x28] sm:$0xff]
    %v216 = vld [vmem:[#allocation2 + $0x30] sm:$0xff]
    %v217 = vld [vmem:[#allocation2 + $0x38] sm:$0xff]
    %v218 = vld [vmem:[#allocation2 + $0x40] sm:$0xff]
    %v219 = vld [vmem:[#allocation2 + $0x48] sm:$0xff]
    %v220 = vld [vmem:[#allocation2 + $0x50] sm:$0xff]
    %v221 = vld [vmem:[#allocation2 + $0x58] sm:$0xff]
    %v222 = vld [vmem:[#allocation2 + $0x60] sm:$0xff]
    %v223 = vld [vmem:[#allocation2 + $0x68] sm:$0xff]
    %v224 = vld [vmem:[#allocation2 + $0x70] sm:$0xff]
    %v225 = vld [vmem:[#allocation2 + $0x78] sm:$0xff]
    %v226 = vld [vmem:[#allocation2 + $0x80] sm:$0xff]
    %v227 = vld [vmem:[#allocation2 + $0x88] sm:$0xff]
    %v228 = vld [vmem:[#allocation2 + $0x90] sm:$0xff]
    %v229 = vld [vmem:[#allocation2 + $0x98] sm:$0xff]
    %v230 = vld [vmem:[#allocation2 + $0xa0] sm:$0xff]
    %v231 = vld [vmem:[#allocation2 + $0xa8] sm:$0xff]
    %v232 = vld [vmem:[#allocation2 + $0xb0] sm:$0xff]
    %v233 = vld [vmem:[#allocation2 + $0xb8] sm:$0xff]
    %v234 = vld [vmem:[#allocation2 + $0xc0] sm:$0x11]
    %v235 = vld [vmem:[#allocation2 + $0xc8] sm:$0x11]
    %v236 = vld [vmem:[#allocation2 + $0xd0] sm:$0x11]
    %v237 = vld [vmem:[#allocation2 + $0xd8] sm:$0x11]
    %v238 = vld [vmem:[#allocation2 + $0xe0] sm:$0x11]
    %v239 = vld [vmem:[#allocation2 + $0xe8] sm:$0x11]
    %v240 = vld [vmem:[#allocation2 + $0xf0] sm:$0x11]
    %v241 = vld [vmem:[#allocation2 + $0xf8] sm:$0x11]
    %v242 = vld [vmem:[#allocation4] sm:$0xff]
    %v243 = vld [vmem:[#allocation4 + $0x8] sm:$0xff]
    %v246 = vlaneseq
    %v247 = vshrl.u32 %v246, 7
    %v248 = vsub.s32 0, %v247
    %v249 = vrot.slane %v242, %v248
    %v250 = vlaneseq
    %v251 = vshrl.u32 %v250, 7
    %v252 = vsub.s32 1, %v251
    %v253 = vrot.slane %v242, %v252
    %v254 = vlaneseq
    %v255 = vshrl.u32 %v254, 7
    %v256 = vsub.s32 2, %v255
    %v257 = vrot.slane %v242, %v256
    %v258 = vlaneseq
    %v259 = vshrl.u32 %v258, 7
    %v260 = vsub.s32 3, %v259
    %v261 = vrot.slane %v242, %v260
    %v262 = vlaneseq
    %v263 = vshrl.u32 %v262, 7
    %v264 = vsub.s32 4, %v263
    %v265 = vrot.slane %v242, %v264
    %v266 = vlaneseq
    %v267 = vshrl.u32 %v266, 7
    %v268 = vsub.s32 5, %v267
    %v269 = vrot.slane %v242, %v268
    %v270 = vlaneseq
    %v271 = vshrl.u32 %v270, 7
    %v272 = vsub.s32 6, %v271
    %v273 = vrot.slane %v242, %v272
    %v274 = vlaneseq
    %v275 = vshrl.u32 %v274, 7
    %v276 = vsub.s32 7, %v275
    %v277 = vrot.slane %v242, %v276
    %v278 = vlaneseq
    %v279 = vshrl.u32 %v278, 7
    %v280 = vsub.s32 0, %v279
    %v281 = vrot.slane %v243, %v280
    %v282 = vlaneseq
    %v283 = vshrl.u32 %v282, 7
    %v284 = vsub.s32 1, %v283
    %v285 = vrot.slane %v243, %v284
    %v286 = vlaneseq
    %v287 = vshrl.u32 %v286, 7
    %v288 = vsub.s32 2, %v287
    %v289 = vrot.slane %v243, %v288
    %v290 = vlaneseq
    %v291 = vshrl.u32 %v290, 7
    %v292 = vsub.s32 3, %v291
    %v293 = vrot.slane %v243, %v292
    %v294 = vlaneseq
    %v295 = vshrl.u32 %v294, 7
    %v296 = vsub.s32 4, %v295
    %v297 = vrot.slane %v243, %v296
    %v298 = vlaneseq
    %v299 = vshrl.u32 %v298, 7
    %v300 = vsub.s32 5, %v299
    %v301 = vrot.slane %v243, %v300
    %v302 = vlaneseq
    %v303 = vshrl.u32 %v302, 7
    %v304 = vsub.s32 6, %v303
    %v305 = vrot.slane %v243, %v304
    %v306 = vlaneseq
    %v307 = vshrl.u32 %v306, 7
    %v308 = vsub.s32 7, %v307
    %v309 = vrot.slane %v243, %v308
    %v358 = vunpack.c.l.b16 %v210
    %v359 = vunpack.c.h.b16 %v210
    %v360 = vunpack.c.l.b16 %v211
    %v361 = vunpack.c.h.b16 %v211
    %v362 = vunpack.c.l.b16 %v212
    %v363 = vunpack.c.h.b16 %v212
    %v364 = vunpack.c.l.b16 %v213
    %v365 = vunpack.c.h.b16 %v213
    %v366 = vunpack.c.l.b16 %v214
    %v367 = vunpack.c.h.b16 %v214
    %v368 = vunpack.c.l.b16 %v215
    %v369 = vunpack.c.h.b16 %v215
    %v370 = vunpack.c.l.b16 %v216
    %v371 = vunpack.c.h.b16 %v216
    %v372 = vunpack.c.l.b16 %v217
    %v373 = vunpack.c.h.b16 %v217
    %v374 = vunpack.c.l.b16 %v218
    %v375 = vunpack.c.h.b16 %v218
    %v376 = vunpack.c.l.b16 %v219
    %v377 = vunpack.c.h.b16 %v219
    %v378 = vunpack.c.l.b16 %v220
    %v379 = vunpack.c.h.b16 %v220
    %v380 = vunpack.c.l.b16 %v221
    %v381 = vunpack.c.h.b16 %v221
    %v382 = vunpack.c.l.b16 %v222
    %v383 = vunpack.c.h.b16 %v222
    %v384 = vunpack.c.l.b16 %v223
    %v385 = vunpack.c.h.b16 %v223
    %v386 = vunpack.c.l.b16 %v224
    %v387 = vunpack.c.h.b16 %v224
    %v388 = vunpack.c.l.b16 %v225
    %v389 = vunpack.c.h.b16 %v225
    %v390 = vunpack.c.l.b16 %v226
    %v391 = vunpack.c.h.b16 %v226
    %v392 = vunpack.c.l.b16 %v227
    %v393 = vunpack.c.h.b16 %v227
    %v394 = vunpack.c.l.b16 %v228
    %v395 = vunpack.c.h.b16 %v228
    %v396 = vunpack.c.l.b16 %v229
    %v397 = vunpack.c.h.b16 %v229
    %v398 = vunpack.c.l.b16 %v230
    %v399 = vunpack.c.h.b16 %v230
    %v400 = vunpack.c.l.b16 %v231
    %v401 = vunpack.c.h.b16 %v231
    %v402 = vunpack.c.l.b16 %v232
    %v403 = vunpack.c.h.b16 %v232
    %v404 = vunpack.c.l.b16 %v233
    %v405 = vunpack.c.h.b16 %v233
    %v406 = vunpack.c.l.b16 %v234
    %v407 = vunpack.c.h.b16 %v234
    %v408 = vunpack.c.l.b16 %v235
    %v409 = vunpack.c.h.b16 %v235
    %v410 = vunpack.c.l.b16 %v236
    %v411 = vunpack.c.h.b16 %v236
    %v412 = vunpack.c.l.b16 %v237
    %v413 = vunpack.c.h.b16 %v237
    %v414 = vunpack.c.l.b16 %v238
    %v415 = vunpack.c.h.b16 %v238
    %v416 = vunpack.c.l.b16 %v239
    %v417 = vunpack.c.h.b16 %v239
    %v418 = vunpack.c.l.b16 %v240
    %v419 = vunpack.c.h.b16 %v240
    %v420 = vunpack.c.l.b16 %v241
    %v421 = vunpack.c.h.b16 %v241
    %v422 = vpack.c.b16 %v374, %v358
    %v423 = vpack.c.b16 %v375, %v359
    %v424 = vpack.c.b16 %v376, %v360
    %v425 = vpack.c.b16 %v377, %v361
    %v426 = vpack.c.b16 %v378, %v362
    %v427 = vpack.c.b16 %v379, %v363
    %v428 = vpack.c.b16 %v380, %v364
    %v429 = vpack.c.b16 %v381, %v365
    %v430 = vpack.c.b16 %v382, %v366
    %v431 = vpack.c.b16 %v383, %v367
    %v432 = vpack.c.b16 %v384, %v368
    %v433 = vpack.c.b16 %v385, %v369
    %v434 = vpack.c.b16 %v386, %v370
    %v435 = vpack.c.b16 %v387, %v371
    %v436 = vpack.c.b16 %v388, %v372
    %v437 = vpack.c.b16 %v389, %v373
    %v438 = vpack.c.b16 %v406, %v390
    %v439 = vpack.c.b16 %v407, %v391
    %v440 = vpack.c.b16 %v408, %v392
    %v441 = vpack.c.b16 %v409, %v393
    %v442 = vpack.c.b16 %v410, %v394
    %v443 = vpack.c.b16 %v411, %v395
    %v444 = vpack.c.b16 %v412, %v396
    %v445 = vpack.c.b16 %v413, %v397
    %v446 = vpack.c.b16 %v414, %v398
    %v447 = vpack.c.b16 %v415, %v399
    %v448 = vpack.c.b16 %v416, %v400
    %v449 = vpack.c.b16 %v417, %v401
    %v450 = vpack.c.b16 %v418, %v402
    %v451 = vpack.c.b16 %v419, %v403
    %v452 = vpack.c.b16 %v420, %v404
    %v453 = vpack.c.b16 %v421, %v405
    %vm470 = vcmask 211968
    %v472 = vsel %vm470, %v209, 0
    %vm474 = vcmask 1044480
    %v476 = vsel %vm474, %v438, 0
    %v479 = vsel %vm474, %v439, 0
    %v482 = vsel %vm474, %v440, 0
    %v485 = vsel %vm474, %v441, 0
    %v488 = vsel %vm474, %v442, 0
    %v491 = vsel %vm474, %v443, 0
    %v494 = vsel %vm474, %v444, 0
    %v497 = vsel %vm474, %v445, 0
    %v500 = vsel %vm474, %v446, 0
    %v503 = vsel %vm474, %v447, 0
    %v506 = vsel %vm474, %v448, 0
    %v509 = vsel %vm474, %v449, 0
    %v512 = vsel %vm474, %v450, 0
    %v515 = vsel %vm474, %v451, 0
    %v518 = vsel %vm474, %v452, 0
    %v521 = vsel %vm474, %v453, 0
    %523 = vmatprep.subr.bf16.mxu0 0
    %524 = vmatpush1.bf16.msra.mxu0 0
    %525 = vmatprep.subr.bf16.mxu0 0
    %526 = vmatpush1.bf16.msra.mxu0 0
    %527 = vmatprep.subr.bf16.mxu0 0
    %528 = vmatpush1.bf16.msra.mxu0 0
    %529 = vmatprep.subr.bf16.mxu0 0
    %530 = vmatpush1.bf16.msra.mxu0 0
    %531 = vmatprep.subr.bf16.mxu0 0
    %532 = vmatpush1.bf16.msra.mxu0 0
    %533 = vmatprep.subr.bf16.mxu0 0
    %534 = vmatpush1.bf16.msra.mxu0 0
    %535 = vmatprep.subr.bf16.mxu0 %v479
    %536 = vmatpush1.bf16.msra.mxu0 %v476
    %537 = vmatprep.subr.bf16.mxu0 %v423
    %538 = vmatpush1.bf16.msra.mxu0 %v422
    %539 = vmatprep.subr.bf16.mxu0 0
    %540 = vmatpush2.bf16.msra.mxu0 0
    %541 = vmatprep.subr.bf16.mxu0 0
    %542 = vmatpush2.bf16.msra.mxu0 0
    %543 = vmatprep.subr.bf16.mxu0 0
    %544 = vmatpush2.bf16.msra.mxu0 0
    %545 = vmatprep.subr.bf16.mxu0 0
    %546 = vmatpush2.bf16.msra.mxu0 0
    %547 = vmatprep.subr.bf16.mxu0 0
    %548 = vmatpush2.bf16.msra.mxu0 0
    %549 = vmatprep.subr.bf16.mxu0 0
    %550 = vmatpush2.bf16.msra.mxu0 0
    %551 = vmatprep.subr.bf16.mxu0 0
    %552 = vmatpush2.bf16.msra.mxu0 0
    %553 = vmatprep.subr.bf16.mxu0 0
    %554 = vmatpush2.bf16.msra.mxu0 0
    %555 = vmatprep.mubr.bf16.mxu0 0
    %556 = vmatmul.mubr.bf16.gmra.mxu0 %v472
    %v557 = vpop.f32.mrf.mxu0
    %v558 = vadd.f32 %v249, %v557
    %v559 = vpop.f32.mrf.mxu0
    %v560 = vadd.f32 %v253, %v559
    %v561 = vpop.f32.mrf.mxu0
    %v562 = vpop.f32.mrf.mxu0
    %563 = vdwg.mxu0
    %564 = vmatprep.subr.bf16.mxu0 0
    %565 = vmatpush1.bf16.msra.mxu0 0
    %566 = vmatprep.subr.bf16.mxu0 0
    %567 = vmatpush1.bf16.msra.mxu0 0
    %568 = vmatprep.subr.bf16.mxu0 0
    %569 = vmatpush1.bf16.msra.mxu0 0
    %570 = vmatprep.subr.bf16.mxu0 0
    %571 = vmatpush1.bf16.msra.mxu0 0
    %572 = vmatprep.subr.bf16.mxu0 0
    %573 = vmatpush1.bf16.msra.mxu0 0
    %574 = vmatprep.subr.bf16.mxu0 0
    %575 = vmatpush1.bf16.msra.mxu0 0
    %576 = vmatprep.subr.bf16.mxu0 %v485
    %577 = vmatpush1.bf16.msra.mxu0 %v482
    %578 = vmatprep.subr.bf16.mxu0 %v425
    %579 = vmatpush1.bf16.msra.mxu0 %v424
    %580 = vmatprep.subr.bf16.mxu0 0
    %581 = vmatpush2.bf16.msra.mxu0 0
    %582 = vmatprep.subr.bf16.mxu0 0
    %583 = vmatpush2.bf16.msra.mxu0 0
    %584 = vmatprep.subr.bf16.mxu0 0
    %585 = vmatpush2.bf16.msra.mxu0 0
    %586 = vmatprep.subr.bf16.mxu0 0
    %587 = vmatpush2.bf16.msra.mxu0 0
    %588 = vmatprep.subr.bf16.mxu0 0
    %589 = vmatpush2.bf16.msra.mxu0 0
    %590 = vmatprep.subr.bf16.mxu0 0
    %591 = vmatpush2.bf16.msra.mxu0 0
    %592 = vmatprep.subr.bf16.mxu0 0
    %593 = vmatpush2.bf16.msra.mxu0 0
    %594 = vmatprep.subr.bf16.mxu0 0
    %595 = vmatpush2.bf16.msra.mxu0 0
    %596 = vmatprep.mubr.bf16.mxu0 0
    %597 = vmatmul.mubr.bf16.gmra.mxu0 %v472
    %v598 = vpop.f32.mrf.mxu0
    %v599 = vadd.f32 %v257, %v598
    %v600 = vpop.f32.mrf.mxu0
    %v601 = vadd.f32 %v261, %v600
    %v602 = vpop.f32.mrf.mxu0
    %v603 = vpop.f32.mrf.mxu0
    %604 = vdwg.mxu0
    %605 = vmatprep.subr.bf16.mxu0 0
    %606 = vmatpush1.bf16.msra.mxu0 0
    %607 = vmatprep.subr.bf16.mxu0 0
    %608 = vmatpush1.bf16.msra.mxu0 0
    %609 = vmatprep.subr.bf16.mxu0 0
    %610 = vmatpush1.bf16.msra.mxu0 0
    %611 = vmatprep.subr.bf16.mxu0 0
    %612 = vmatpush1.bf16.msra.mxu0 0
    %613 = vmatprep.subr.bf16.mxu0 0
    %614 = vmatpush1.bf16.msra.mxu0 0
    %615 = vmatprep.subr.bf16.mxu0 0
    %616 = vmatpush1.bf16.msra.mxu0 0
    %617 = vmatprep.subr.bf16.mxu0 %v491
    %618 = vmatpush1.bf16.msra.mxu0 %v488
    %619 = vmatprep.subr.bf16.mxu0 %v427
    %620 = vmatpush1.bf16.msra.mxu0 %v426
    %621 = vmatprep.subr.bf16.mxu0 0
    %622 = vmatpush2.bf16.msra.mxu0 0
    %623 = vmatprep.subr.bf16.mxu0 0
    %624 = vmatpush2.bf16.msra.mxu0 0
    %625 = vmatprep.subr.bf16.mxu0 0
    %626 = vmatpush2.bf16.msra.mxu0 0
    %627 = vmatprep.subr.bf16.mxu0 0
    %628 = vmatpush2.bf16.msra.mxu0 0
    %629 = vmatprep.subr.bf16.mxu0 0
    %630 = vmatpush2.bf16.msra.mxu0 0
    %631 = vmatprep.subr.bf16.mxu0 0
    %632 = vmatpush2.bf16.msra.mxu0 0
    %633 = vmatprep.subr.bf16.mxu0 0
    %634 = vmatpush2.bf16.msra.mxu0 0
    %635 = vmatprep.subr.bf16.mxu0 0
    %636 = vmatpush2.bf16.msra.mxu0 0
    %637 = vmatprep.mubr.bf16.mxu0 0
    %638 = vmatmul.mubr.bf16.gmra.mxu0 %v472
    %v639 = vpop.f32.mrf.mxu0
    %v640 = vadd.f32 %v265, %v639
    %v641 = vpop.f32.mrf.mxu0
    %v642 = vadd.f32 %v269, %v641
    %v643 = vpop.f32.mrf.mxu0
    %v644 = vpop.f32.mrf.mxu0
    %645 = vdwg.mxu0
    %646 = vmatprep.subr.bf16.mxu0 0
    %647 = vmatpush1.bf16.msra.mxu0 0
    %648 = vmatprep.subr.bf16.mxu0 0
    %649 = vmatpush1.bf16.msra.mxu0 0
    %650 = vmatprep.subr.bf16.mxu0 0
    %651 = vmatpush1.bf16.msra.mxu0 0
    %652 = vmatprep.subr.bf16.mxu0 0
    %653 = vmatpush1.bf16.msra.mxu0 0
    %654 = vmatprep.subr.bf16.mxu0 0
    %655 = vmatpush1.bf16.msra.mxu0 0
    %656 = vmatprep.subr.bf16.mxu0 0
    %657 = vmatpush1.bf16.msra.mxu0 0
    %658 = vmatprep.subr.bf16.mxu0 %v497
    %659 = vmatpush1.bf16.msra.mxu0 %v494
    %660 = vmatprep.subr.bf16.mxu0 %v429
    %661 = vmatpush1.bf16.msra.mxu0 %v428
    %662 = vmatprep.subr.bf16.mxu0 0
    %663 = vmatpush2.bf16.msra.mxu0 0
    %664 = vmatprep.subr.bf16.mxu0 0
    %665 = vmatpush2.bf16.msra.mxu0 0
    %666 = vmatprep.subr.bf16.mxu0 0
    %667 = vmatpush2.bf16.msra.mxu0 0
    %668 = vmatprep.subr.bf16.mxu0 0
    %669 = vmatpush2.bf16.msra.mxu0 0
    %670 = vmatprep.subr.bf16.mxu0 0
    %671 = vmatpush2.bf16.msra.mxu0 0
    %672 = vmatprep.subr.bf16.mxu0 0
    %673 = vmatpush2.bf16.msra.mxu0 0
    %674 = vmatprep.subr.bf16.mxu0 0
    %675 = vmatpush2.bf16.msra.mxu0 0
    %676 = vmatprep.subr.bf16.mxu0 0
    %677 = vmatpush2.bf16.msra.mxu0 0
    %678 = vmatprep.mubr.bf16.mxu0 0
    %679 = vmatmul.mubr.bf16.gmra.mxu0 %v472
    %v680 = vpop.f32.mrf.mxu0
    %v681 = vadd.f32 %v273, %v680
    %v682 = vpop.f32.mrf.mxu0
    %v683 = vadd.f32 %v277, %v682
    %v684 = vpop.f32.mrf.mxu0
    %v685 = vpop.f32.mrf.mxu0
    %686 = vdwg.mxu0
    %687 = vmatprep.subr.bf16.mxu0 0
    %688 = vmatpush1.bf16.msra.mxu0 0
    %689 = vmatprep.subr.bf16.mxu0 0
    %690 = vmatpush1.bf16.msra.mxu0 0
    %691 = vmatprep.subr.bf16.mxu0 0
    %692 = vmatpush1.bf16.msra.mxu0 0
    %693 = vmatprep.subr.bf16.mxu0 0
    %694 = vmatpush1.bf16.msra.mxu0 0
    %695 = vmatprep.subr.bf16.mxu0 0
    %696 = vmatpush1.bf16.msra.mxu0 0
    %697 = vmatprep.subr.bf16.mxu0 0
    %698 = vmatpush1.bf16.msra.mxu0 0
    %699 = vmatprep.subr.bf16.mxu0 %v503
    %700 = vmatpush1.bf16.msra.mxu0 %v500
    %701 = vmatprep.subr.bf16.mxu0 %v431
    %702 = vmatpush1.bf16.msra.mxu0 %v430
    %703 = vmatprep.subr.bf16.mxu0 0
    %704 = vmatpush2.bf16.msra.mxu0 0
    %705 = vmatprep.subr.bf16.mxu0 0
    %706 = vmatpush2.bf16.msra.mxu0 0
    %707 = vmatprep.subr.bf16.mxu0 0
    %708 = vmatpush2.bf16.msra.mxu0 0
    %709 = vmatprep.subr.bf16.mxu0 0
    %710 = vmatpush2.bf16.msra.mxu0 0
    %711 = vmatprep.subr.bf16.mxu0 0
    %712 = vmatpush2.bf16.msra.mxu0 0
    %713 = vmatprep.subr.bf16.mxu0 0
    %714 = vmatpush2.bf16.msra.mxu0 0
    %715 = vmatprep.subr.bf16.mxu0 0
    %716 = vmatpush2.bf16.msra.mxu0 0
    %717 = vmatprep.subr.bf16.mxu0 0
    %718 = vmatpush2.bf16.msra.mxu0 0
    %719 = vmatprep.mubr.bf16.mxu0 0
    %720 = vmatmul.mubr.bf16.gmra.mxu0 %v472
    %v721 = vpop.f32.mrf.mxu0
    %v722 = vadd.f32 %v281, %v721
    %v723 = vpop.f32.mrf.mxu0
    %v724 = vadd.f32 %v285, %v723
    %v725 = vpop.f32.mrf.mxu0
    %v726 = vpop.f32.mrf.mxu0
    %727 = vdwg.mxu0
    %728 = vmatprep.subr.bf16.mxu0 0
    %729 = vmatpush1.bf16.msra.mxu0 0
    %730 = vmatprep.subr.bf16.mxu0 0
    %731 = vmatpush1.bf16.msra.mxu0 0
    %732 = vmatprep.subr.bf16.mxu0 0
    %733 = vmatpush1.bf16.msra.mxu0 0
    %734 = vmatprep.subr.bf16.mxu0 0
    %735 = vmatpush1.bf16.msra.mxu0 0
    %736 = vmatprep.subr.bf16.mxu0 0
    %737 = vmatpush1.bf16.msra.mxu0 0
    %738 = vmatprep.subr.bf16.mxu0 0
    %739 = vmatpush1.bf16.msra.mxu0 0
    %740 = vmatprep.subr.bf16.mxu0 %v509
    %741 = vmatpush1.bf16.msra.mxu0 %v506
    %742 = vmatprep.subr.bf16.mxu0 %v433
    %743 = vmatpush1.bf16.msra.mxu0 %v432
    %744 = vmatprep.subr.bf16.mxu0 0
    %745 = vmatpush2.bf16.msra.mxu0 0
    %746 = vmatprep.subr.bf16.mxu0 0
    %747 = vmatpush2.bf16.msra.mxu0 0
    %748 = vmatprep.subr.bf16.mxu0 0
    %749 = vmatpush2.bf16.msra.mxu0 0
    %750 = vmatprep.subr.bf16.mxu0 0
    %751 = vmatpush2.bf16.msra.mxu0 0
    %752 = vmatprep.subr.bf16.mxu0 0
    %753 = vmatpush2.bf16.msra.mxu0 0
    %754 = vmatprep.subr.bf16.mxu0 0
    %755 = vmatpush2.bf16.msra.mxu0 0
    %756 = vmatprep.subr.bf16.mxu0 0
    %757 = vmatpush2.bf16.msra.mxu0 0
    %758 = vmatprep.subr.bf16.mxu0 0
    %759 = vmatpush2.bf16.msra.mxu0 0
    %760 = vmatprep.mubr.bf16.mxu0 0
    %761 = vmatmul.mubr.bf16.gmra.mxu0 %v472
    %v762 = vpop.f32.mrf.mxu0
    %v763 = vadd.f32 %v289, %v762
    %v764 = vpop.f32.mrf.mxu0
    %v765 = vadd.f32 %v293, %v764
    %v766 = vpop.f32.mrf.mxu0
    %v767 = vpop.f32.mrf.mxu0
    %768 = vdwg.mxu0
    %769 = vmatprep.subr.bf16.mxu0 0
    %770 = vmatpush1.bf16.msra.mxu0 0
    %771 = vmatprep.subr.bf16.mxu0 0
    %772 = vmatpush1.bf16.msra.mxu0 0
    %773 = vmatprep.subr.bf16.mxu0 0
    %774 = vmatpush1.bf16.msra.mxu0 0
    %775 = vmatprep.subr.bf16.mxu0 0
    %776 = vmatpush1.bf16.msra.mxu0 0
    %777 = vmatprep.subr.bf16.mxu0 0
    %778 = vmatpush1.bf16.msra.mxu0 0
    %779 = vmatprep.subr.bf16.mxu0 0
    %780 = vmatpush1.bf16.msra.mxu0 0
    %781 = vmatprep.subr.bf16.mxu0 %v515
    %782 = vmatpush1.bf16.msra.mxu0 %v512
    %783 = vmatprep.subr.bf16.mxu0 %v435
    %784 = vmatpush1.bf16.msra.mxu0 %v434
    %785 = vmatprep.subr.bf16.mxu0 0
    %786 = vmatpush2.bf16.msra.mxu0 0
    %787 = vmatprep.subr.bf16.mxu0 0
    %788 = vmatpush2.bf16.msra.mxu0 0
    %789 = vmatprep.subr.bf16.mxu0 0
    %790 = vmatpush2.bf16.msra.mxu0 0
    %791 = vmatprep.subr.bf16.mxu0 0
    %792 = vmatpush2.bf16.msra.mxu0 0
    %793 = vmatprep.subr.bf16.mxu0 0
    %794 = vmatpush2.bf16.msra.mxu0 0
    %795 = vmatprep.subr.bf16.mxu0 0
    %796 = vmatpush2.bf16.msra.mxu0 0
    %797 = vmatprep.subr.bf16.mxu0 0
    %798 = vmatpush2.bf16.msra.mxu0 0
    %799 = vmatprep.subr.bf16.mxu0 0
    %800 = vmatpush2.bf16.msra.mxu0 0
    %801 = vmatprep.mubr.bf16.mxu0 0
    %802 = vmatmul.mubr.bf16.gmra.mxu0 %v472
    %v803 = vpop.f32.mrf.mxu0
    %v804 = vadd.f32 %v297, %v803
    %v805 = vpop.f32.mrf.mxu0
    %v806 = vadd.f32 %v301, %v805
    %v807 = vpop.f32.mrf.mxu0
    %v808 = vpop.f32.mrf.mxu0
    %809 = vdwg.mxu0
    %810 = vmatprep.subr.bf16.mxu0 0
    %811 = vmatpush1.bf16.msra.mxu0 0
    %812 = vmatprep.subr.bf16.mxu0 0
    %813 = vmatpush1.bf16.msra.mxu0 0
    %814 = vmatprep.subr.bf16.mxu0 0
    %815 = vmatpush1.bf16.msra.mxu0 0
    %816 = vmatprep.subr.bf16.mxu0 0
    %817 = vmatpush1.bf16.msra.mxu0 0
    %818 = vmatprep.subr.bf16.mxu0 0
    %819 = vmatpush1.bf16.msra.mxu0 0
    %820 = vmatprep.subr.bf16.mxu0 0
    %821 = vmatpush1.bf16.msra.mxu0 0
    %822 = vmatprep.subr.bf16.mxu0 %v521
    %823 = vmatpush1.bf16.msra.mxu0 %v518
    %824 = vmatprep.subr.bf16.mxu0 %v437
    %825 = vmatpush1.bf16.msra.mxu0 %v436
    %826 = vmatprep.subr.bf16.mxu0 0
    %827 = vmatpush2.bf16.msra.mxu0 0
    %828 = vmatprep.subr.bf16.mxu0 0
    %829 = vmatpush2.bf16.msra.mxu0 0
    %830 = vmatprep.subr.bf16.mxu0 0
    %831 = vmatpush2.bf16.msra.mxu0 0
    %832 = vmatprep.subr.bf16.mxu0 0
    %833 = vmatpush2.bf16.msra.mxu0 0
    %834 = vmatprep.subr.bf16.mxu0 0
    %835 = vmatpush2.bf16.msra.mxu0 0
    %836 = vmatprep.subr.bf16.mxu0 0
    %837 = vmatpush2.bf16.msra.mxu0 0
    %838 = vmatprep.subr.bf16.mxu0 0
    %839 = vmatpush2.bf16.msra.mxu0 0
    %840 = vmatprep.subr.bf16.mxu0 0
    %841 = vmatpush2.bf16.msra.mxu0 0
    %842 = vmatprep.mubr.bf16.mxu0 0
    %843 = vmatmul.mubr.bf16.gmra.mxu0 %v472
    %v844 = vpop.f32.mrf.mxu0
    %v845 = vadd.f32 %v305, %v844
    %v846 = vpop.f32.mrf.mxu0
    %v847 = vadd.f32 %v309, %v846
    %v848 = vpop.f32.mrf.mxu0
    %v849 = vpop.f32.mrf.mxu0
    %850 = vdwg.mxu0
    %v867 = vcombine.low %v558, %v560
    %v868 = vcombine.low %v599, %v601
    %v869 = vcombine.low %v640, %v642
    %v870 = vcombine.low %v681, %v683
    %v872 = vunpack.c.l.s4 1966171168
    %v873 = vunpack.c.0.s8 %v872
    %v874 = vlaneseq
    %v875 = vshrl.u32 %v874, 7
    %v876 = vsub.s32 %v873, %v875
    %v877 = vrot.slane %v867, %v876
    %v879 = vunpack.c.l.s4 1966171168
    %v880 = vunpack.c.0.s8 %v879
    %v881 = vlaneseq
    %v882 = vshrl.u32 %v881, 7
    %v883 = vsub.s32 %v880, %v882
    %v884 = vrot.slane %v868, %v883
    %v886 = vunpack.c.l.s4 1966171168
    %v887 = vunpack.c.0.s8 %v886
    %v888 = vlaneseq
    %v889 = vshrl.u32 %v888, 7
    %v890 = vsub.s32 %v887, %v889
    %v891 = vrot.slane %v869, %v890
    %v893 = vunpack.c.l.s4 1966171168
    %v894 = vunpack.c.0.s8 %v893
    %v895 = vlaneseq
    %v896 = vshrl.u32 %v895, 7
    %v897 = vsub.s32 %v894, %v896
    %v898 = vrot.slane %v870, %v897
    %v899 = vcombine.low %v877, %v884
    %v900 = vcombine.high %v877, %v884
    %v901 = vcombine.low %v891, %v898
    %v902 = vcombine.high %v891, %v898
    %v904 = vunpack.c.l.s4 1966171168
    %v905 = vunpack.c.0.s8 %v904
    %v906 = vlaneseq
    %v907 = vshrl.u32 %v906, 7
    %v908 = vsub.s32 %v905, %v907
    %v909 = vrot.slane %v899, %v908
    %v911 = vunpack.c.l.s4 1966171168
    %v912 = vunpack.c.0.s8 %v911
    %v913 = vlaneseq
    %v914 = vshrl.u32 %v913, 7
    %v915 = vsub.s32 %v912, %v914
    %v916 = vrot.slane %v900, %v915
    %v918 = vunpack.c.l.s4 1966171168
    %v919 = vunpack.c.0.s8 %v918
    %v920 = vlaneseq
    %v921 = vshrl.u32 %v920, 7
    %v922 = vsub.s32 %v919, %v921
    %v923 = vrot.slane %v901, %v922
    %v925 = vunpack.c.l.s4 1966171168
    %v926 = vunpack.c.0.s8 %v925
    %v927 = vlaneseq
    %v928 = vshrl.u32 %v927, 7
    %v929 = vsub.s32 %v926, %v928
    %v930 = vrot.slane %v902, %v929
    %v931 = vcombine.low %v909, %v923
    %v932 = vcombine.low %v916, %v930
    %v933 = vcombine.low %v722, %v724
    %v934 = vcombine.low %v763, %v765
    %v935 = vcombine.low %v804, %v806
    %v936 = vcombine.low %v845, %v847
    %v938 = vunpack.c.l.s4 1966171168
    %v939 = vunpack.c.0.s8 %v938
    %v940 = vlaneseq
    %v941 = vshrl.u32 %v940, 7
    %v942 = vsub.s32 %v939, %v941
    %v943 = vrot.slane %v933, %v942
    %v945 = vunpack.c.l.s4 1966171168
    %v946 = vunpack.c.0.s8 %v945
    %v947 = vlaneseq
    %v948 = vshrl.u32 %v947, 7
    %v949 = vsub.s32 %v946, %v948
    %v950 = vrot.slane %v934, %v949
    %v952 = vunpack.c.l.s4 1966171168
    %v953 = vunpack.c.0.s8 %v952
    %v954 = vlaneseq
    %v955 = vshrl.u32 %v954, 7
    %v956 = vsub.s32 %v953, %v955
    %v957 = vrot.slane %v935, %v956
    %v959 = vunpack.c.l.s4 1966171168
    %v960 = vunpack.c.0.s8 %v959
    %v961 = vlaneseq
    %v962 = vshrl.u32 %v961, 7
    %v963 = vsub.s32 %v960, %v962
    %v964 = vrot.slane %v936, %v963
    %v965 = vcombine.low %v943, %v950
    %v966 = vcombine.high %v943, %v950
    %v967 = vcombine.low %v957, %v964
    %v968 = vcombine.high %v957, %v964
    %v970 = vunpack.c.l.s4 1966171168
    %v971 = vunpack.c.0.s8 %v970
    %v972 = vlaneseq
    %v973 = vshrl.u32 %v972, 7
    %v974 = vsub.s32 %v971, %v973
    %v975 = vrot.slane %v965, %v974
    %v977 = vunpack.c.l.s4 1966171168
    %v978 = vunpack.c.0.s8 %v977
    %v979 = vlaneseq
    %v980 = vshrl.u32 %v979, 7
    %v981 = vsub.s32 %v978, %v980
    %v982 = vrot.slane %v966, %v981
    %v984 = vunpack.c.l.s4 1966171168
    %v985 = vunpack.c.0.s8 %v984
    %v986 = vlaneseq
    %v987 = vshrl.u32 %v986, 7
    %v988 = vsub.s32 %v985, %v987
    %v989 = vrot.slane %v967, %v988
    %v991 = vunpack.c.l.s4 1966171168
    %v992 = vunpack.c.0.s8 %v991
    %v993 = vlaneseq
    %v994 = vshrl.u32 %v993, 7
    %v995 = vsub.s32 %v992, %v994
    %v996 = vrot.slane %v968, %v995
    %v997 = vcombine.low %v975, %v989
    %v998 = vcombine.low %v982, %v996
    %v1003 = vld [vmem:[#allocation6] sm:$0x1]
    %v1004 = vld [vmem:[#allocation7] sm:$0x1]
    %v1005 = vadd.f32 %v931, %v997
    %v1006 = vadd.f32 %v1005, %v932
    %v1007 = vadd.f32 %v1006, %v998
    %v1008 = vrot.slane %v1007, 4
    %v1009 = vadd.f32 %v1007, %v1008
    %v1010 = vrot.slane %v1009, 2
    %v1011 = vadd.f32 %v1009, %v1010
    %v1012 = vrot.slane %v1011, 1
    %v1013 = vadd.f32 %v1011, %v1012
    %v1014 = vmul.f32 %v931, %v931
    %v1015 = vmul.f32 %v997, %v997
    %v1016 = vmul.f32 %v932, %v932
    %v1017 = vmul.f32 %v998, %v998
    %v1018 = vadd.f32 %v1014, %v1015
    %v1019 = vadd.f32 %v1018, %v1016
    %v1020 = vadd.f32 %v1019, %v1017
    %v1021 = vrot.slane %v1020, 4
    %v1022 = vadd.f32 %v1020, %v1021
    %v1023 = vrot.slane %v1022, 2
    %v1024 = vadd.f32 %v1022, %v1023
    %v1025 = vrot.slane %v1024, 1
    %v1026 = vadd.f32 %v1024, %v1025
    %v1027 = vmul.f32 %v1013, 0.03125
    %v1028 = vmul.f32 %v1026, 0.03125
    %v1029 = vmul.f32 %v1027, %v1027
    %v1030 = vsub.f32 %v1028, %v1029
    %v1031 = vadd.f32 %v1030, 1e-05
    %v1032 = vrsqrt.pop %v1031
    %v1033 = vmul.f32 %v1003, %v1032
    %v1034 = vmul.f32 %v1027, %v1033
    %v1035 = vsub.f32 %v1004, %v1034
    %v1037 = vlaneseq
    %v1038 = vshrl.u32 %v1037, 7
    %v1039 = vsub.s32 0, %v1038
    %v1040 = vrot.slane %v1033, %v1039
    %v1042 = vmul.f32 %v931, %v1040
    %v1043 = vmul.f32 %v997, %v1040
    %v1044 = vmul.f32 %v932, %v1040
    %v1045 = vmul.f32 %v998, %v1040
    %v1047 = vlaneseq
    %v1048 = vshrl.u32 %v1047, 7
    %v1049 = vsub.s32 0, %v1048
    %v1050 = vrot.slane %v1035, %v1049
    %v1052 = vadd.f32 %v1042, %v1050
    %v1053 = vadd.f32 %v1043, %v1050
    %v1054 = vadd.f32 %v1044, %v1050
    %v1055 = vadd.f32 %v1045, %v1050
    %v1056 = vmax.f32 %v1052, 0.0
    %v1057 = vmax.f32 %v1053, 0.0
    %v1058 = vmax.f32 %v1054, 0.0
    %v1059 = vmax.f32 %v1055, 0.0
    %v1060 = vpack.c.bf16 %v1057, %v1056
    %v1061 = vpack.c.bf16 %v1059, %v1058
    %v1064 = vcombine.high %v1060, %v1060
    %v1066 = vunpack.c.l.s4 1983009808
    %v1067 = vunpack.c.0.s8 %v1066
    %v1068 = vlaneseq
    %v1069 = vshrl.u32 %v1068, 7
    %v1070 = vsub.s32 %v1067, %v1069
    %v1071 = vrot.slane %v1060, %v1070
    %v1073 = vunpack.c.l.s4 1983009808
    %v1074 = vunpack.c.0.s8 %v1073
    %v1075 = vlaneseq
    %v1076 = vshrl.u32 %v1075, 7
    %v1077 = vsub.s32 %v1074, %v1076
    %v1078 = vrot.slane %v1064, %v1077
    %v1079 = vcombine.high %v1071, %v1071
    %v1080 = vcombine.high %v1078, %v1078
    %v1081 = vcombine.high %v1061, %v1061
    %v1083 = vunpack.c.l.s4 1983009808
    %v1084 = vunpack.c.0.s8 %v1083
    %v1085 = vlaneseq
    %v1086 = vshrl.u32 %v1085, 7
    %v1087 = vsub.s32 %v1084, %v1086
    %v1088 = vrot.slane %v1061, %v1087
    %v1090 = vunpack.c.l.s4 1983009808
    %v1091 = vunpack.c.0.s8 %v1090
    %v1092 = vlaneseq
    %v1093 = vshrl.u32 %v1092, 7
    %v1094 = vsub.s32 %v1091, %v1093
    %v1095 = vrot.slane %v1081, %v1094
    %v1096 = vcombine.high %v1088, %v1088
    %v1097 = vcombine.high %v1095, %v1095
    %v1099 = vshrl.u32 0, 16
    %v1101 = vrot.slane %v1099, 7
    %v1102 = vshll.u32 0, 16
    %v1104 = vor.u32 %v1101, %v1102
    %v1106 = vshrl.u32 %v1071, 16
    %v1108 = vrot.slane %v1106, 7
    %v1109 = vshll.u32 %v1071, 16
    %v1111 = vor.u32 %v1108, %v1109
    %v1113 = vshrl.u32 %v1079, 16
    %v1115 = vrot.slane %v1113, 7
    %v1116 = vshll.u32 %v1079, 16
    %v1118 = vor.u32 %v1115, %v1116
    %v1120 = vshrl.u32 %v1078, 16
    %v1122 = vrot.slane %v1120, 7
    %v1123 = vshll.u32 %v1078, 16
    %v1125 = vor.u32 %v1122, %v1123
    %v1127 = vshrl.u32 %v1080, 16
    %v1129 = vrot.slane %v1127, 7
    %v1130 = vshll.u32 %v1080, 16
    %v1132 = vor.u32 %v1129, %v1130
    %v1134 = vshrl.u32 %v1088, 16
    %v1136 = vrot.slane %v1134, 7
    %v1137 = vshll.u32 %v1088, 16
    %v1139 = vor.u32 %v1136, %v1137
    %v1141 = vshrl.u32 %v1096, 16
    %v1143 = vrot.slane %v1141, 7
    %v1144 = vshll.u32 %v1096, 16
    %v1146 = vor.u32 %v1143, %v1144
    %v1148 = vshrl.u32 %v1095, 16
    %v1150 = vrot.slane %v1148, 7
    %v1151 = vshll.u32 %v1095, 16
    %v1153 = vor.u32 %v1150, %v1151
    %v1155 = vshrl.u32 %v1097, 16
    %v1157 = vrot.slane %v1155, 7
    %v1158 = vshll.u32 %v1097, 16
    %v1160 = vor.u32 %v1157, %v1158
    %vm1170 = vcmask 1040384
    %vm1171 = vsmask.f32 256
    %vm1172 = vmand %vm1170, %vm1171
    %v1173 = vsel %vm1172, 0, %v1104
    %v1174 = vsel %vm1172, 0, %v1111
    %v1175 = vsel %vm1172, 0, %v1118
    %v1176 = vsel %vm1172, 0, %v1125
    %v1177 = vsel %vm1172, 0, %v1132
    %v1178 = vsel %vm1172, 0, %v1139
    %v1179 = vsel %vm1172, 0, %v1146
    %v1180 = vsel %vm1172, 0, %v1153
    %v1181 = vsel %vm1172, 0, %v1160
    %vm1182 = vcmask 1042432
    %vm1183 = vsmask.f32 2304
    %vm1184 = vmand %vm1182, %vm1183
    %v1185 = vsel %vm1184, %v1173, 0
    %v1186 = vsel %vm1184, %v1174, 0
    %v1187 = vsel %vm1184, %v1175, 0
    %v1188 = vsel %vm1184, %v1176, 0
    %v1189 = vsel %vm1184, %v1177, 0
    %v1190 = vsel %vm1184, %v1178, 0
    %v1191 = vsel %vm1184, %v1179, 0
    %v1192 = vsel %vm1184, %v1180, 0
    %v1193 = vsel %vm1184, %v1181, 0
    %v1202 = vunpack.c.l.s4 1983009808
    %v1203 = vunpack.c.0.s8 %v1202
    %v1204 = vlaneseq
    %v1205 = vshrl.u32 %v1204, 7
    %v1206 = vsub.s32 %v1203, %v1205
    %v1207 = vrot.slane %v1185, %v1206
    %v1208 = vcombine.high %v1207, %v1207
    %v1210 = vunpack.c.l.s4 1983009808
    %v1211 = vunpack.c.0.s8 %v1210
    %v1212 = vlaneseq
    %v1213 = vshrl.u32 %v1212, 7
    %v1214 = vsub.s32 %v1211, %v1213
    %v1215 = vrot.slane %v1186, %v1214
    %v1216 = vcombine.high %v1215, %v1215
    %v1218 = vunpack.c.l.s4 1983009808
    %v1219 = vunpack.c.0.s8 %v1218
    %v1220 = vlaneseq
    %v1221 = vshrl.u32 %v1220, 7
    %v1222 = vsub.s32 %v1219, %v1221
    %v1223 = vrot.slane %v1187, %v1222
    %v1224 = vcombine.high %v1223, %v1223
    %v1226 = vunpack.c.l.s4 1983009808
    %v1227 = vunpack.c.0.s8 %v1226
    %v1228 = vlaneseq
    %v1229 = vshrl.u32 %v1228, 7
    %v1230 = vsub.s32 %v1227, %v1229
    %v1231 = vrot.slane %v1188, %v1230
    %v1232 = vcombine.high %v1231, %v1231
    %v1234 = vunpack.c.l.s4 1983009808
    %v1235 = vunpack.c.0.s8 %v1234
    %v1236 = vlaneseq
    %v1237 = vshrl.u32 %v1236, 7
    %v1238 = vsub.s32 %v1235, %v1237
    %v1239 = vrot.slane %v1190, %v1238
    %v1240 = vcombine.high %v1239, %v1239
    %v1242 = vunpack.c.l.s4 1983009808
    %v1243 = vunpack.c.0.s8 %v1242
    %v1244 = vlaneseq
    %v1245 = vshrl.u32 %v1244, 7
    %v1246 = vsub.s32 %v1243, %v1245
    %v1247 = vrot.slane %v1191, %v1246
    %v1248 = vcombine.high %v1247, %v1247
    %v1250 = vunpack.c.l.s4 1983009808
    %v1251 = vunpack.c.0.s8 %v1250
    %v1252 = vlaneseq
    %v1253 = vshrl.u32 %v1252, 7
    %v1254 = vsub.s32 %v1251, %v1253
    %v1255 = vrot.slane %v1192, %v1254
    %v1256 = vcombine.high %v1255, %v1255
    %vm1257 = vsmask.f32 1280
    %vm1258 = vsmask.f32 3336
    %vm1259 = vmor %vm1257, %vm1258
    %vm1260 = vsmask.f32 5392
    %vm1261 = vmor %vm1259, %vm1260
    %vm1262 = vsmask.f32 7448
    %vm1263 = vmor %vm1261, %vm1262
    %v1265 = vshrl.u32 %v1207, 16
    %v1267 = vrot.slane %v1265, 6
    %v1268 = vshll.u32 %v1207, 16
    %v1270 = vrot.slane %v1268, 7
    %v1271 = vor.u32 %v1267, %v1270
    %v1272 = vrot.slane %v1271, 2
    %v1274 = vshll.u32 %v1208, 16
    %v1276 = vrot.slane %v1274, 7
    %v1277 = vsel %vm1263, %v1272, %v1276
    %v1279 = vshrl.u32 %v1215, 16
    %v1281 = vrot.slane %v1279, 6
    %v1282 = vshll.u32 %v1215, 16
    %v1284 = vrot.slane %v1282, 7
    %v1285 = vor.u32 %v1281, %v1284
    %v1286 = vrot.slane %v1285, 2
    %v1288 = vshll.u32 %v1216, 16
    %v1290 = vrot.slane %v1288, 7
    %v1291 = vsel %vm1263, %v1286, %v1290
    %v1293 = vshrl.u32 %v1223, 16
    %v1295 = vrot.slane %v1293, 6
    %v1296 = vshll.u32 %v1223, 16
    %v1298 = vrot.slane %v1296, 7
    %v1299 = vor.u32 %v1295, %v1298
    %v1300 = vrot.slane %v1299, 2
    %v1302 = vshll.u32 %v1224, 16
    %v1304 = vrot.slane %v1302, 7
    %v1305 = vsel %vm1263, %v1300, %v1304
    %v1307 = vshrl.u32 %v1231, 16
    %v1309 = vrot.slane %v1307, 6
    %v1310 = vshll.u32 %v1231, 16
    %v1312 = vrot.slane %v1310, 7
    %v1313 = vor.u32 %v1309, %v1312
    %v1314 = vrot.slane %v1313, 2
    %v1316 = vshll.u32 %v1232, 16
    %v1318 = vrot.slane %v1316, 7
    %v1319 = vsel %vm1263, %v1314, %v1318
    %v1321 = vshrl.u32 %v1239, 16
    %v1323 = vrot.slane %v1321, 6
    %v1324 = vshll.u32 %v1239, 16
    %v1326 = vrot.slane %v1324, 7
    %v1327 = vor.u32 %v1323, %v1326
    %v1328 = vrot.slane %v1327, 2
    %v1330 = vshll.u32 %v1240, 16
    %v1332 = vrot.slane %v1330, 7
    %v1333 = vsel %vm1263, %v1328, %v1332
    %v1335 = vshrl.u32 %v1247, 16
    %v1337 = vrot.slane %v1335, 6
    %v1338 = vshll.u32 %v1247, 16
    %v1340 = vrot.slane %v1338, 7
    %v1341 = vor.u32 %v1337, %v1340
    %v1342 = vrot.slane %v1341, 2
    %v1344 = vshll.u32 %v1248, 16
    %v1346 = vrot.slane %v1344, 7
    %v1347 = vsel %vm1263, %v1342, %v1346
    %v1349 = vshrl.u32 %v1255, 16
    %v1351 = vrot.slane %v1349, 6
    %v1352 = vshll.u32 %v1255, 16
    %v1354 = vrot.slane %v1352, 7
    %v1355 = vor.u32 %v1351, %v1354
    %v1356 = vrot.slane %v1355, 2
    %v1358 = vshll.u32 %v1256, 16
    %v1360 = vrot.slane %v1358, 7
    %v1361 = vsel %vm1263, %v1356, %v1360
    %vm1362 = vcmask 1042434
    %vm1363 = vmor %vm1170, %vm1362
    %vm1364 = vcmask 1044484
    %vm1365 = vmor %vm1363, %vm1364
    %vm1366 = vcmask 1046534
    %vm1367 = vmor %vm1365, %vm1366
    %v1368 = vrot.slane %v1207, 7
    %v1369 = vrot.slane %v1368, 2
    %v1370 = vrot.slane %v1208, 7
    %v1371 = vsel %vm1367, %v1369, %v1370
    %v1372 = vrot.slane %v1215, 7
    %v1373 = vrot.slane %v1372, 2
    %v1374 = vrot.slane %v1216, 7
    %v1375 = vsel %vm1367, %v1373, %v1374
    %v1376 = vrot.slane %v1223, 7
    %v1377 = vrot.slane %v1376, 2
    %v1378 = vrot.slane %v1224, 7
    %v1379 = vsel %vm1367, %v1377, %v1378
    %v1380 = vrot.slane %v1231, 7
    %v1381 = vrot.slane %v1380, 2
    %v1382 = vrot.slane %v1232, 7
    %v1383 = vsel %vm1367, %v1381, %v1382
    %v1384 = vrot.slane %v1239, 7
    %v1385 = vrot.slane %v1384, 2
    %v1386 = vrot.slane %v1240, 7
    %v1387 = vsel %vm1367, %v1385, %v1386
    %v1388 = vrot.slane %v1247, 7
    %v1389 = vrot.slane %v1388, 2
    %v1390 = vrot.slane %v1248, 7
    %v1391 = vsel %vm1367, %v1389, %v1390
    %v1392 = vrot.slane %v1255, 7
    %v1393 = vrot.slane %v1392, 2
    %v1394 = vrot.slane %v1256, 7
    %v1395 = vsel %vm1367, %v1393, %v1394
    %v1399 = vunpack.c.l.s4 1983009808
    %v1400 = vunpack.c.0.s8 %v1399
    %v1401 = vlaneseq
    %v1402 = vshrl.u32 %v1401, 7
    %v1403 = vsub.s32 %v1400, %v1402
    %v1404 = vrot.slane %v1189, %v1403
    %v1405 = vcombine.high %v1404, %v1404
    %v1407 = vunpack.c.l.s4 1983009808
    %v1408 = vunpack.c.0.s8 %v1407
    %v1409 = vlaneseq
    %v1410 = vshrl.u32 %v1409, 7
    %v1411 = vsub.s32 %v1408, %v1410
    %v1412 = vrot.slane %v1193, %v1411
    %v1413 = vcombine.high %v1412, %v1412
    %v1415 = vshrl.u32 %v1404, 16
    %v1417 = vrot.slane %v1415, 6
    %v1418 = vshll.u32 %v1404, 16
    %v1420 = vrot.slane %v1418, 7
    %v1421 = vor.u32 %v1417, %v1420
    %v1422 = vrot.slane %v1421, 2
    %v1424 = vshll.u32 %v1405, 16
    %v1426 = vrot.slane %v1424, 7
    %v1427 = vsel %vm1263, %v1422, %v1426
    %v1429 = vshrl.u32 %v1412, 16
    %v1431 = vrot.slane %v1429, 6
    %v1432 = vshll.u32 %v1412, 16
    %v1434 = vrot.slane %v1432, 7
    %v1435 = vor.u32 %v1431, %v1434
    %v1436 = vrot.slane %v1435, 2
    %v1438 = vshll.u32 %v1413, 16
    %v1440 = vrot.slane %v1438, 7
    %v1441 = vsel %vm1263, %v1436, %v1440
    %v1442 = vrot.slane %v1404, 7
    %v1443 = vrot.slane %v1442, 2
    %v1444 = vrot.slane %v1405, 7
    %v1445 = vsel %vm1367, %v1443, %v1444
    %v1446 = vrot.slane %v1412, 7
    %v1447 = vrot.slane %v1446, 2
    %v1448 = vrot.slane %v1413, 7
    %v1449 = vsel %vm1367, %v1447, %v1448
    %v1450 = vcombine.low %v1185, %v1186
    %v1451 = vcombine.low %v1187, %v1188
    %v1453 = vunpack.c.l.s4 1983009808
    %v1454 = vunpack.c.0.s8 %v1453
    %v1455 = vlaneseq
    %v1456 = vshrl.u32 %v1455, 7
    %v1457 = vsub.s32 %v1454, %v1456
    %v1458 = vrot.slane %v1450, %v1457
    %v1460 = vunpack.c.l.s4 1983009808
    %v1461 = vunpack.c.0.s8 %v1460
    %v1462 = vlaneseq
    %v1463 = vshrl.u32 %v1462, 7
    %v1464 = vsub.s32 %v1461, %v1463
    %v1465 = vrot.slane %v1451, %v1464
    %v1466 = vcombine.low %v1458, %v1465
    %v1467 = vcombine.low %v1185, %v1190
    %v1468 = vcombine.low %v1191, %v1192
    %v1470 = vunpack.c.l.s4 1983009808
    %v1471 = vunpack.c.0.s8 %v1470
    %v1472 = vlaneseq
    %v1473 = vshrl.u32 %v1472, 7
    %v1474 = vsub.s32 %v1471, %v1473
    %v1475 = vrot.slane %v1467, %v1474
    %v1477 = vunpack.c.l.s4 1983009808
    %v1478 = vunpack.c.0.s8 %v1477
    %v1479 = vlaneseq
    %v1480 = vshrl.u32 %v1479, 7
    %v1481 = vsub.s32 %v1478, %v1480
    %v1482 = vrot.slane %v1468, %v1481
    %v1483 = vcombine.low %v1475, %v1482
    %v1486 = vcombine.low %v1277, %v1291
    %v1487 = vcombine.low %v1305, %v1319
    %v1489 = vunpack.c.l.s4 1983009808
    %v1490 = vunpack.c.0.s8 %v1489
    %v1491 = vlaneseq
    %v1492 = vshrl.u32 %v1491, 7
    %v1493 = vsub.s32 %v1490, %v1492
    %v1494 = vrot.slane %v1486, %v1493
    %v1496 = vunpack.c.l.s4 1983009808
    %v1497 = vunpack.c.0.s8 %v1496
    %v1498 = vlaneseq
    %v1499 = vshrl.u32 %v1498, 7
    %v1500 = vsub.s32 %v1497, %v1499
    %v1501 = vrot.slane %v1487, %v1500
    %v1502 = vcombine.low %v1494, %v1501
    %v1503 = vcombine.low %v1277, %v1333
    %v1504 = vcombine.low %v1347, %v1361
    %v1506 = vunpack.c.l.s4 1983009808
    %v1507 = vunpack.c.0.s8 %v1506
    %v1508 = vlaneseq
    %v1509 = vshrl.u32 %v1508, 7
    %v1510 = vsub.s32 %v1507, %v1509
    %v1511 = vrot.slane %v1503, %v1510
    %v1513 = vunpack.c.l.s4 1983009808
    %v1514 = vunpack.c.0.s8 %v1513
    %v1515 = vlaneseq
    %v1516 = vshrl.u32 %v1515, 7
    %v1517 = vsub.s32 %v1514, %v1516
    %v1518 = vrot.slane %v1504, %v1517
    %v1519 = vcombine.low %v1511, %v1518
    %v1522 = vcombine.low %v1371, %v1375
    %v1523 = vcombine.low %v1379, %v1383
    %v1525 = vunpack.c.l.s4 1983009808
    %v1526 = vunpack.c.0.s8 %v1525
    %v1527 = vlaneseq
    %v1528 = vshrl.u32 %v1527, 7
    %v1529 = vsub.s32 %v1526, %v1528
    %v1530 = vrot.slane %v1522, %v1529
    %v1532 = vunpack.c.l.s4 1983009808
    %v1533 = vunpack.c.0.s8 %v1532
    %v1534 = vlaneseq
    %v1535 = vshrl.u32 %v1534, 7
    %v1536 = vsub.s32 %v1533, %v1535
    %v1537 = vrot.slane %v1523, %v1536
    %v1538 = vcombine.low %v1530, %v1537
    %v1539 = vcombine.low %v1371, %v1387
    %v1540 = vcombine.low %v1391, %v1395
    %v1542 = vunpack.c.l.s4 1983009808
    %v1543 = vunpack.c.0.s8 %v1542
    %v1544 = vlaneseq
    %v1545 = vshrl.u32 %v1544, 7
    %v1546 = vsub.s32 %v1543, %v1545
    %v1547 = vrot.slane %v1539, %v1546
    %v1549 = vunpack.c.l.s4 1983009808
    %v1550 = vunpack.c.0.s8 %v1549
    %v1551 = vlaneseq
    %v1552 = vshrl.u32 %v1551, 7
    %v1553 = vsub.s32 %v1550, %v1552
    %v1554 = vrot.slane %v1540, %v1553
    %v1555 = vcombine.low %v1547, %v1554
    %v1558 = vcombine.low %v1186, %v1187
    %v1559 = vcombine.low %v1188, %v1189
    %v1561 = vunpack.c.l.s4 1983009808
    %v1562 = vunpack.c.0.s8 %v1561
    %v1563 = vlaneseq
    %v1564 = vshrl.u32 %v1563, 7
    %v1565 = vsub.s32 %v1562, %v1564
    %v1566 = vrot.slane %v1558, %v1565
    %v1568 = vunpack.c.l.s4 1983009808
    %v1569 = vunpack.c.0.s8 %v1568
    %v1570 = vlaneseq
    %v1571 = vshrl.u32 %v1570, 7
    %v1572 = vsub.s32 %v1569, %v1571
    %v1573 = vrot.slane %v1559, %v1572
    %v1574 = vcombine.low %v1566, %v1573
    %v1575 = vcombine.low %v1190, %v1191
    %v1576 = vcombine.low %v1192, %v1193
    %v1578 = vunpack.c.l.s4 1983009808
    %v1579 = vunpack.c.0.s8 %v1578
    %v1580 = vlaneseq
    %v1581 = vshrl.u32 %v1580, 7
    %v1582 = vsub.s32 %v1579, %v1581
    %v1583 = vrot.slane %v1575, %v1582
    %v1585 = vunpack.c.l.s4 1983009808
    %v1586 = vunpack.c.0.s8 %v1585
    %v1587 = vlaneseq
    %v1588 = vshrl.u32 %v1587, 7
    %v1589 = vsub.s32 %v1586, %v1588
    %v1590 = vrot.slane %v1576, %v1589
    %v1591 = vcombine.low %v1583, %v1590
    %v1594 = vcombine.low %v1291, %v1305
    %v1595 = vcombine.low %v1319, %v1427
    %v1597 = vunpack.c.l.s4 1983009808
    %v1598 = vunpack.c.0.s8 %v1597
    %v1599 = vlaneseq
    %v1600 = vshrl.u32 %v1599, 7
    %v1601 = vsub.s32 %v1598, %v1600
    %v1602 = vrot.slane %v1594, %v1601
    %v1604 = vunpack.c.l.s4 1983009808
    %v1605 = vunpack.c.0.s8 %v1604
    %v1606 = vlaneseq
    %v1607 = vshrl.u32 %v1606, 7
    %v1608 = vsub.s32 %v1605, %v1607
    %v1609 = vrot.slane %v1595, %v1608
    %v1610 = vcombine.low %v1602, %v1609
    %v1611 = vcombine.low %v1333, %v1347
    %v1612 = vcombine.low %v1361, %v1441
    %v1614 = vunpack.c.l.s4 1983009808
    %v1615 = vunpack.c.0.s8 %v1614
    %v1616 = vlaneseq
    %v1617 = vshrl.u32 %v1616, 7
    %v1618 = vsub.s32 %v1615, %v1617
    %v1619 = vrot.slane %v1611, %v1618
    %v1621 = vunpack.c.l.s4 1983009808
    %v1622 = vunpack.c.0.s8 %v1621
    %v1623 = vlaneseq
    %v1624 = vshrl.u32 %v1623, 7
    %v1625 = vsub.s32 %v1622, %v1624
    %v1626 = vrot.slane %v1612, %v1625
    %v1627 = vcombine.low %v1619, %v1626
    %v1630 = vcombine.low %v1375, %v1379
    %v1631 = vcombine.low %v1383, %v1445
    %v1633 = vunpack.c.l.s4 1983009808
    %v1634 = vunpack.c.0.s8 %v1633
    %v1635 = vlaneseq
    %v1636 = vshrl.u32 %v1635, 7
    %v1637 = vsub.s32 %v1634, %v1636
    %v1638 = vrot.slane %v1630, %v1637
    %v1640 = vunpack.c.l.s4 1983009808
    %v1641 = vunpack.c.0.s8 %v1640
    %v1642 = vlaneseq
    %v1643 = vshrl.u32 %v1642, 7
    %v1644 = vsub.s32 %v1641, %v1643
    %v1645 = vrot.slane %v1631, %v1644
    %v1646 = vcombine.low %v1638, %v1645
    %v1647 = vcombine.low %v1387, %v1391
    %v1648 = vcombine.low %v1395, %v1449
    %v1650 = vunpack.c.l.s4 1983009808
    %v1651 = vunpack.c.0.s8 %v1650
    %v1652 = vlaneseq
    %v1653 = vshrl.u32 %v1652, 7
    %v1654 = vsub.s32 %v1651, %v1653
    %v1655 = vrot.slane %v1647, %v1654
    %v1657 = vunpack.c.l.s4 1983009808
    %v1658 = vunpack.c.0.s8 %v1657
    %v1659 = vlaneseq
    %v1660 = vshrl.u32 %v1659, 7
    %v1661 = vsub.s32 %v1658, %v1660
    %v1662 = vrot.slane %v1648, %v1661
    %v1663 = vcombine.low %v1655, %v1662
    %v1666 = vcombine.low %v1189, %v1185
    %v1668 = vunpack.c.l.s4 1983009808
    %v1669 = vunpack.c.0.s8 %v1668
    %v1670 = vlaneseq
    %v1671 = vshrl.u32 %v1670, 7
    %v1672 = vsub.s32 %v1669, %v1671
    %v1673 = vrot.slane %v1666, %v1672
    %v1674 = vcombine.low %v1465, %v1673
    %v1675 = vcombine.low %v1193, %v1185
    %v1677 = vunpack.c.l.s4 1983009808
    %v1678 = vunpack.c.0.s8 %v1677
    %v1679 = vlaneseq
    %v1680 = vshrl.u32 %v1679, 7
    %v1681 = vsub.s32 %v1678, %v1680
    %v1682 = vrot.slane %v1675, %v1681
    %v1683 = vcombine.low %v1482, %v1682
    %v1686 = vcombine.low %v1427, %v1277
    %v1688 = vunpack.c.l.s4 1983009808
    %v1689 = vunpack.c.0.s8 %v1688
    %v1690 = vlaneseq
    %v1691 = vshrl.u32 %v1690, 7
    %v1692 = vsub.s32 %v1689, %v1691
    %v1693 = vrot.slane %v1686, %v1692
    %v1694 = vcombine.low %v1501, %v1693
    %v1695 = vcombine.low %v1441, %v1277
    %v1697 = vunpack.c.l.s4 1983009808
    %v1698 = vunpack.c.0.s8 %v1697
    %v1699 = vlaneseq
    %v1700 = vshrl.u32 %v1699, 7
    %v1701 = vsub.s32 %v1698, %v1700
    %v1702 = vrot.slane %v1695, %v1701
    %v1703 = vcombine.low %v1518, %v1702
    %v1706 = vcombine.low %v1445, %v1371
    %v1708 = vunpack.c.l.s4 1983009808
    %v1709 = vunpack.c.0.s8 %v1708
    %v1710 = vlaneseq
    %v1711 = vshrl.u32 %v1710, 7
    %v1712 = vsub.s32 %v1709, %v1711
    %v1713 = vrot.slane %v1706, %v1712
    %v1714 = vcombine.low %v1537, %v1713
    %v1715 = vcombine.low %v1449, %v1371
    %v1717 = vunpack.c.l.s4 1983009808
    %v1718 = vunpack.c.0.s8 %v1717
    %v1719 = vlaneseq
    %v1720 = vshrl.u32 %v1719, 7
    %v1721 = vsub.s32 %v1718, %v1720
    %v1722 = vrot.slane %v1715, %v1721
    %v1723 = vcombine.low %v1554, %v1722
    %v1726 = vld [vmem:[#allocation9] sm:$0xff]
    %v1727 = vld [vmem:[#allocation9 + $0x8] sm:$0xff]
    %v1728 = vld [vmem:[#allocation9 + $0x10] sm:$0xff]
    %v1729 = vld [vmem:[#allocation9 + $0x18] sm:$0xff]
    %v1730 = vld [vmem:[#allocation9 + $0x20] sm:$0xff]
    %v1731 = vld [vmem:[#allocation9 + $0x28] sm:$0xff]
    %v1732 = vld [vmem:[#allocation9 + $0x30] sm:$0xff]
    %v1733 = vld [vmem:[#allocation9 + $0x38] sm:$0xff]
    %v1734 = vld [vmem:[#allocation9 + $0x40] sm:$0xff]
    %v1735 = vld [vmem:[#allocation9 + $0x48] sm:$0xff]
    %v1736 = vld [vmem:[#allocation9 + $0x50] sm:$0xff]
    %v1737 = vld [vmem:[#allocation9 + $0x58] sm:$0xff]
    %v1738 = vld [vmem:[#allocation9 + $0x60] sm:$0xff]
    %v1739 = vld [vmem:[#allocation9 + $0x68] sm:$0xff]
    %v1740 = vld [vmem:[#allocation9 + $0x70] sm:$0xff]
    %v1741 = vld [vmem:[#allocation9 + $0x78] sm:$0xff]
    %v1742 = vld [vmem:[#allocation9 + $0x80] sm:$0xff]
    %v1743 = vld [vmem:[#allocation9 + $0x88] sm:$0xff]
    %v1744 = vld [vmem:[#allocation9 + $0x90] sm:$0xff]
    %v1745 = vld [vmem:[#allocation9 + $0x98] sm:$0xff]
    %v1746 = vld [vmem:[#allocation9 + $0xa0] sm:$0xff]
    %v1747 = vld [vmem:[#allocation9 + $0xa8] sm:$0xff]
    %v1748 = vld [vmem:[#allocation9 + $0xb0] sm:$0xff]
    %v1749 = vld [vmem:[#allocation9 + $0xb8] sm:$0xff]
    %v1750 = vld [vmem:[#allocation9 + $0xc0] sm:$0xff]
    %v1751 = vld [vmem:[#allocation9 + $0xc8] sm:$0xff]
    %v1752 = vld [vmem:[#allocation9 + $0xd0] sm:$0xff]
    %v1753 = vld [vmem:[#allocation9 + $0xd8] sm:$0xff]
    %v1754 = vld [vmem:[#allocation9 + $0xe0] sm:$0xff]
    %v1755 = vld [vmem:[#allocation9 + $0xe8] sm:$0xff]
    %v1756 = vld [vmem:[#allocation9 + $0xf0] sm:$0xff]
    %v1757 = vld [vmem:[#allocation9 + $0xf8] sm:$0xff]
    %v1758 = vld [vmem:[#allocation9 + $0x100] sm:$0xff]
    %v1759 = vld [vmem:[#allocation9 + $0x108] sm:$0xff]
    %v1760 = vld [vmem:[#allocation9 + $0x110] sm:$0xff]
    %v1761 = vld [vmem:[#allocation9 + $0x118] sm:$0xff]
    %v1762 = vld [vmem:[#allocation9 + $0x120] sm:$0xff]
    %v1763 = vld [vmem:[#allocation9 + $0x128] sm:$0xff]
    %v1764 = vld [vmem:[#allocation9 + $0x130] sm:$0xff]
    %v1765 = vld [vmem:[#allocation9 + $0x138] sm:$0xff]
    %v1766 = vld [vmem:[#allocation9 + $0x140] sm:$0xff]
    %v1767 = vld [vmem:[#allocation9 + $0x148] sm:$0xff]
    %v1768 = vld [vmem:[#allocation9 + $0x150] sm:$0xff]
    %v1769 = vld [vmem:[#allocation9 + $0x158] sm:$0xff]
    %v1770 = vld [vmem:[#allocation9 + $0x160] sm:$0xff]
    %v1771 = vld [vmem:[#allocation9 + $0x168] sm:$0xff]
    %v1772 = vld [vmem:[#allocation9 + $0x170] sm:$0xff]
    %v1773 = vld [vmem:[#allocation9 + $0x178] sm:$0xff]
    %v1774 = vld [vmem:[#allocation9 + $0x180] sm:$0xff]
    %v1775 = vld [vmem:[#allocation9 + $0x188] sm:$0xff]
    %v1776 = vld [vmem:[#allocation9 + $0x190] sm:$0xff]
    %v1777 = vld [vmem:[#allocation9 + $0x198] sm:$0xff]
    %v1778 = vld [vmem:[#allocation9 + $0x1a0] sm:$0xff]
    %v1779 = vld [vmem:[#allocation9 + $0x1a8] sm:$0xff]
    %v1780 = vld [vmem:[#allocation9 + $0x1b0] sm:$0xff]
    %v1781 = vld [vmem:[#allocation9 + $0x1b8] sm:$0xff]
    %v1782 = vld [vmem:[#allocation9 + $0x1c0] sm:$0xff]
    %v1783 = vld [vmem:[#allocation9 + $0x1c8] sm:$0xff]
    %v1784 = vld [vmem:[#allocation9 + $0x1d0] sm:$0xff]
    %v1785 = vld [vmem:[#allocation9 + $0x1d8] sm:$0xff]
    %v1786 = vld [vmem:[#allocation9 + $0x1e0] sm:$0xff]
    %v1787 = vld [vmem:[#allocation9 + $0x1e8] sm:$0xff]
    %v1788 = vld [vmem:[#allocation9 + $0x1f0] sm:$0xff]
    %v1789 = vld [vmem:[#allocation9 + $0x1f8] sm:$0xff]
    %v1790 = vld [vmem:[#allocation9 + $0x200] sm:$0xff]
    %v1791 = vld [vmem:[#allocation9 + $0x208] sm:$0xff]
    %v1792 = vld [vmem:[#allocation9 + $0x210] sm:$0xff]
    %v1793 = vld [vmem:[#allocation9 + $0x218] sm:$0xff]
    %v1794 = vld [vmem:[#allocation9 + $0x220] sm:$0xff]
    %v1795 = vld [vmem:[#allocation9 + $0x228] sm:$0xff]
    %v1796 = vld [vmem:[#allocation9 + $0x230] sm:$0xff]
    %v1797 = vld [vmem:[#allocation9 + $0x238] sm:$0xff]
    %v1798 = vld [vmem:[#allocation9 + $0x240] sm:$0xff]
    %v1799 = vld [vmem:[#allocation9 + $0x248] sm:$0xff]
    %v1800 = vld [vmem:[#allocation9 + $0x250] sm:$0xff]
    %v1801 = vld [vmem:[#allocation9 + $0x258] sm:$0xff]
    %v1802 = vld [vmem:[#allocation9 + $0x260] sm:$0xff]
    %v1803 = vld [vmem:[#allocation9 + $0x268] sm:$0xff]
    %v1804 = vld [vmem:[#allocation9 + $0x270] sm:$0xff]
    %v1805 = vld [vmem:[#allocation9 + $0x278] sm:$0xff]
    %v1806 = vld [vmem:[#allocation9 + $0x280] sm:$0xff]
    %v1807 = vld [vmem:[#allocation9 + $0x288] sm:$0xff]
    %v1808 = vld [vmem:[#allocation9 + $0x290] sm:$0xff]
    %v1809 = vld [vmem:[#allocation9 + $0x298] sm:$0xff]
    %v1810 = vld [vmem:[#allocation9 + $0x2a0] sm:$0xff]
    %v1811 = vld [vmem:[#allocation9 + $0x2a8] sm:$0xff]
    %v1812 = vld [vmem:[#allocation9 + $0x2b0] sm:$0xff]
    %v1813 = vld [vmem:[#allocation9 + $0x2b8] sm:$0xff]
    %v1814 = vld [vmem:[#allocation9 + $0x2c0] sm:$0xff]
    %v1815 = vld [vmem:[#allocation9 + $0x2c8] sm:$0xff]
    %v1816 = vld [vmem:[#allocation9 + $0x2d0] sm:$0xff]
    %v1817 = vld [vmem:[#allocation9 + $0x2d8] sm:$0xff]
    %v1818 = vld [vmem:[#allocation9 + $0x2e0] sm:$0xff]
    %v1819 = vld [vmem:[#allocation9 + $0x2e8] sm:$0xff]
    %v1820 = vld [vmem:[#allocation9 + $0x2f0] sm:$0xff]
    %v1821 = vld [vmem:[#allocation9 + $0x2f8] sm:$0xff]
    %v1822 = vld [vmem:[#allocation9 + $0x300] sm:$0xff]
    %v1823 = vld [vmem:[#allocation9 + $0x308] sm:$0xff]
    %v1824 = vld [vmem:[#allocation9 + $0x310] sm:$0xff]
    %v1825 = vld [vmem:[#allocation9 + $0x318] sm:$0xff]
    %v1826 = vld [vmem:[#allocation9 + $0x320] sm:$0xff]
    %v1827 = vld [vmem:[#allocation9 + $0x328] sm:$0xff]
    %v1828 = vld [vmem:[#allocation9 + $0x330] sm:$0xff]
    %v1829 = vld [vmem:[#allocation9 + $0x338] sm:$0xff]
    %v1830 = vld [vmem:[#allocation9 + $0x340] sm:$0xff]
    %v1831 = vld [vmem:[#allocation9 + $0x348] sm:$0xff]
    %v1832 = vld [vmem:[#allocation9 + $0x350] sm:$0xff]
    %v1833 = vld [vmem:[#allocation9 + $0x358] sm:$0xff]
    %v1834 = vld [vmem:[#allocation9 + $0x360] sm:$0xff]
    %v1835 = vld [vmem:[#allocation9 + $0x368] sm:$0xff]
    %v1836 = vld [vmem:[#allocation9 + $0x370] sm:$0xff]
    %v1837 = vld [vmem:[#allocation9 + $0x378] sm:$0xff]
    %v1838 = vld [vmem:[#allocation9 + $0x380] sm:$0xff]
    %v1839 = vld [vmem:[#allocation9 + $0x388] sm:$0xff]
    %v1840 = vld [vmem:[#allocation9 + $0x390] sm:$0xff]
    %v1841 = vld [vmem:[#allocation9 + $0x398] sm:$0xff]
    %v1842 = vld [vmem:[#allocation9 + $0x3a0] sm:$0xff]
    %v1843 = vld [vmem:[#allocation9 + $0x3a8] sm:$0xff]
    %v1844 = vld [vmem:[#allocation9 + $0x3b0] sm:$0xff]
    %v1845 = vld [vmem:[#allocation9 + $0x3b8] sm:$0xff]
    %v1846 = vld [vmem:[#allocation9 + $0x3c0] sm:$0xff]
    %v1847 = vld [vmem:[#allocation9 + $0x3c8] sm:$0xff]
    %v1848 = vld [vmem:[#allocation9 + $0x3d0] sm:$0xff]
    %v1849 = vld [vmem:[#allocation9 + $0x3d8] sm:$0xff]
    %v1850 = vld [vmem:[#allocation9 + $0x3e0] sm:$0xff]
    %v1851 = vld [vmem:[#allocation9 + $0x3e8] sm:$0xff]
    %v1852 = vld [vmem:[#allocation9 + $0x3f0] sm:$0xff]
    %v1853 = vld [vmem:[#allocation9 + $0x3f8] sm:$0xff]
    %v1854 = vld [vmem:[#allocation9 + $0x400] sm:$0xff]
    %v1855 = vld [vmem:[#allocation9 + $0x408] sm:$0xff]
    %v1856 = vld [vmem:[#allocation9 + $0x410] sm:$0xff]
    %v1857 = vld [vmem:[#allocation9 + $0x418] sm:$0xff]
    %v1858 = vld [vmem:[#allocation9 + $0x420] sm:$0xff]
    %v1859 = vld [vmem:[#allocation9 + $0x428] sm:$0xff]
    %v1860 = vld [vmem:[#allocation9 + $0x430] sm:$0xff]
    %v1861 = vld [vmem:[#allocation9 + $0x438] sm:$0xff]
    %v1862 = vld [vmem:[#allocation9 + $0x440] sm:$0xff]
    %v1863 = vld [vmem:[#allocation9 + $0x448] sm:$0xff]
    %v1864 = vld [vmem:[#allocation9 + $0x450] sm:$0xff]
    %v1865 = vld [vmem:[#allocation9 + $0x458] sm:$0xff]
    %v1866 = vld [vmem:[#allocation9 + $0x460] sm:$0xff]
    %v1867 = vld [vmem:[#allocation9 + $0x468] sm:$0xff]
    %v1868 = vld [vmem:[#allocation9 + $0x470] sm:$0xff]
    %v1869 = vld [vmem:[#allocation9 + $0x478] sm:$0xff]
    %v1870 = vld [vmem:[#allocation10] sm:$0x3]
    %v1872 = vlaneseq
    %v1873 = vshrl.u32 %v1872, 7
    %v1874 = vsub.s32 0, %v1873
    %v1875 = vrot.slane %v1870, %v1874
    %v1876 = vlaneseq
    %v1877 = vshrl.u32 %v1876, 7
    %v1878 = vsub.s32 1, %v1877
    %v1879 = vrot.slane %v1870, %v1878
    %v2026 = vunpack.c.l.b16 %v1726
    %v2027 = vunpack.c.h.b16 %v1726
    %v2028 = vunpack.c.l.b16 %v1727
    %v2029 = vunpack.c.h.b16 %v1727
    %v2030 = vunpack.c.l.b16 %v1728
    %v2031 = vunpack.c.h.b16 %v1728
    %v2032 = vunpack.c.l.b16 %v1729
    %v2033 = vunpack.c.h.b16 %v1729
    %v2034 = vunpack.c.l.b16 %v1730
    %v2035 = vunpack.c.h.b16 %v1730
    %v2036 = vunpack.c.l.b16 %v1731
    %v2037 = vunpack.c.h.b16 %v1731
    %v2038 = vunpack.c.l.b16 %v1732
    %v2039 = vunpack.c.h.b16 %v1732
    %v2040 = vunpack.c.l.b16 %v1733
    %v2041 = vunpack.c.h.b16 %v1733
    %v2042 = vunpack.c.l.b16 %v1734
    %v2043 = vunpack.c.h.b16 %v1734
    %v2044 = vunpack.c.l.b16 %v1735
    %v2045 = vunpack.c.h.b16 %v1735
    %v2046 = vunpack.c.l.b16 %v1736
    %v2047 = vunpack.c.h.b16 %v1736
    %v2048 = vunpack.c.l.b16 %v1737
    %v2049 = vunpack.c.h.b16 %v1737
    %v2050 = vunpack.c.l.b16 %v1738
    %v2051 = vunpack.c.h.b16 %v1738
    %v2052 = vunpack.c.l.b16 %v1739
    %v2053 = vunpack.c.h.b16 %v1739
    %v2054 = vunpack.c.l.b16 %v1740
    %v2055 = vunpack.c.h.b16 %v1740
    %v2056 = vunpack.c.l.b16 %v1741
    %v2057 = vunpack.c.h.b16 %v1741
    %v2058 = vunpack.c.l.b16 %v1742
    %v2059 = vunpack.c.h.b16 %v1742
    %v2060 = vunpack.c.l.b16 %v1743
    %v2061 = vunpack.c.h.b16 %v1743
    %v2062 = vunpack.c.l.b16 %v1744
    %v2063 = vunpack.c.h.b16 %v1744
    %v2064 = vunpack.c.l.b16 %v1745
    %v2065 = vunpack.c.h.b16 %v1745
    %v2066 = vunpack.c.l.b16 %v1746
    %v2067 = vunpack.c.h.b16 %v1746
    %v2068 = vunpack.c.l.b16 %v1747
    %v2069 = vunpack.c.h.b16 %v1747
    %v2070 = vunpack.c.l.b16 %v1748
    %v2071 = vunpack.c.h.b16 %v1748
    %v2072 = vunpack.c.l.b16 %v1749
    %v2073 = vunpack.c.h.b16 %v1749
    %v2074 = vunpack.c.l.b16 %v1750
    %v2075 = vunpack.c.h.b16 %v1750
    %v2076 = vunpack.c.l.b16 %v1751
    %v2077 = vunpack.c.h.b16 %v1751
    %v2078 = vunpack.c.l.b16 %v1752
    %v2079 = vunpack.c.h.b16 %v1752
    %v2080 = vunpack.c.l.b16 %v1753
    %v2081 = vunpack.c.h.b16 %v1753
    %v2082 = vunpack.c.l.b16 %v1754
    %v2083 = vunpack.c.h.b16 %v1754
    %v2084 = vunpack.c.l.b16 %v1755
    %v2085 = vunpack.c.h.b16 %v1755
    %v2086 = vunpack.c.l.b16 %v1756
    %v2087 = vunpack.c.h.b16 %v1756
    %v2088 = vunpack.c.l.b16 %v1757
    %v2089 = vunpack.c.h.b16 %v1757
    %v2090 = vunpack.c.l.b16 %v1758
    %v2091 = vunpack.c.h.b16 %v1758
    %v2092 = vunpack.c.l.b16 %v1759
    %v2093 = vunpack.c.h.b16 %v1759
    %v2094 = vunpack.c.l.b16 %v1760
    %v2095 = vunpack.c.h.b16 %v1760
    %v2096 = vunpack.c.l.b16 %v1761
    %v2097 = vunpack.c.h.b16 %v1761
    %v2098 = vunpack.c.l.b16 %v1762
    %v2099 = vunpack.c.h.b16 %v1762
    %v2100 = vunpack.c.l.b16 %v1763
    %v2101 = vunpack.c.h.b16 %v1763
    %v2102 = vunpack.c.l.b16 %v1764
    %v2103 = vunpack.c.h.b16 %v1764
    %v2104 = vunpack.c.l.b16 %v1765
    %v2105 = vunpack.c.h.b16 %v1765
    %v2106 = vunpack.c.l.b16 %v1766
    %v2107 = vunpack.c.h.b16 %v1766
    %v2108 = vunpack.c.l.b16 %v1767
    %v2109 = vunpack.c.h.b16 %v1767
    %v2110 = vunpack.c.l.b16 %v1768
    %v2111 = vunpack.c.h.b16 %v1768
    %v2112 = vunpack.c.l.b16 %v1769
    %v2113 = vunpack.c.h.b16 %v1769
    %v2114 = vunpack.c.l.b16 %v1770
    %v2115 = vunpack.c.h.b16 %v1770
    %v2116 = vunpack.c.l.b16 %v1771
    %v2117 = vunpack.c.h.b16 %v1771
    %v2118 = vunpack.c.l.b16 %v1772
    %v2119 = vunpack.c.h.b16 %v1772
    %v2120 = vunpack.c.l.b16 %v1773
    %v2121 = vunpack.c.h.b16 %v1773
    %v2122 = vunpack.c.l.b16 %v1774
    %v2123 = vunpack.c.h.b16 %v1774
    %v2124 = vunpack.c.l.b16 %v1775
    %v2125 = vunpack.c.h.b16 %v1775
    %v2126 = vunpack.c.l.b16 %v1776
    %v2127 = vunpack.c.h.b16 %v1776
    %v2128 = vunpack.c.l.b16 %v1777
    %v2129 = vunpack.c.h.b16 %v1777
    %v2130 = vunpack.c.l.b16 %v1778
    %v2131 = vunpack.c.h.b16 %v1778
    %v2132 = vunpack.c.l.b16 %v1779
    %v2133 = vunpack.c.h.b16 %v1779
    %v2134 = vunpack.c.l.b16 %v1780
    %v2135 = vunpack.c.h.b16 %v1780
    %v2136 = vunpack.c.l.b16 %v1781
    %v2137 = vunpack.c.h.b16 %v1781
    %v2138 = vunpack.c.l.b16 %v1782
    %v2139 = vunpack.c.h.b16 %v1782
    %v2140 = vunpack.c.l.b16 %v1783
    %v2141 = vunpack.c.h.b16 %v1783
    %v2142 = vunpack.c.l.b16 %v1784
    %v2143 = vunpack.c.h.b16 %v1784
    %v2144 = vunpack.c.l.b16 %v1785
    %v2145 = vunpack.c.h.b16 %v1785
    %v2146 = vunpack.c.l.b16 %v1786
    %v2147 = vunpack.c.h.b16 %v1786
    %v2148 = vunpack.c.l.b16 %v1787
    %v2149 = vunpack.c.h.b16 %v1787
    %v2150 = vunpack.c.l.b16 %v1788
    %v2151 = vunpack.c.h.b16 %v1788
    %v2152 = vunpack.c.l.b16 %v1789
    %v2153 = vunpack.c.h.b16 %v1789
    %v2154 = vunpack.c.l.b16 %v1790
    %v2155 = vunpack.c.h.b16 %v1790
    %v2156 = vunpack.c.l.b16 %v1791
    %v2157 = vunpack.c.h.b16 %v1791
    %v2158 = vunpack.c.l.b16 %v1792
    %v2159 = vunpack.c.h.b16 %v1792
    %v2160 = vunpack.c.l.b16 %v1793
    %v2161 = vunpack.c.h.b16 %v1793
    %v2162 = vunpack.c.l.b16 %v1794
    %v2163 = vunpack.c.h.b16 %v1794
    %v2164 = vunpack.c.l.b16 %v1795
    %v2165 = vunpack.c.h.b16 %v1795
    %v2166 = vunpack.c.l.b16 %v1796
    %v2167 = vunpack.c.h.b16 %v1796
    %v2168 = vunpack.c.l.b16 %v1797
    %v2169 = vunpack.c.h.b16 %v1797
    %v2170 = vunpack.c.l.b16 %v1798
    %v2171 = vunpack.c.h.b16 %v1798
    %v2172 = vunpack.c.l.b16 %v1799
    %v2173 = vunpack.c.h.b16 %v1799
    %v2174 = vunpack.c.l.b16 %v1800
    %v2175 = vunpack.c.h.b16 %v1800
    %v2176 = vunpack.c.l.b16 %v1801
    %v2177 = vunpack.c.h.b16 %v1801
    %v2178 = vunpack.c.l.b16 %v1802
    %v2179 = vunpack.c.h.b16 %v1802
    %v2180 = vunpack.c.l.b16 %v1803
    %v2181 = vunpack.c.h.b16 %v1803
    %v2182 = vunpack.c.l.b16 %v1804
    %v2183 = vunpack.c.h.b16 %v1804
    %v2184 = vunpack.c.l.b16 %v1805
    %v2185 = vunpack.c.h.b16 %v1805
    %v2186 = vunpack.c.l.b16 %v1806
    %v2187 = vunpack.c.h.b16 %v1806
    %v2188 = vunpack.c.l.b16 %v1807
    %v2189 = vunpack.c.h.b16 %v1807
    %v2190 = vunpack.c.l.b16 %v1808
    %v2191 = vunpack.c.h.b16 %v1808
    %v2192 = vunpack.c.l.b16 %v1809
    %v2193 = vunpack.c.h.b16 %v1809
    %v2194 = vunpack.c.l.b16 %v1810
    %v2195 = vunpack.c.h.b16 %v1810
    %v2196 = vunpack.c.l.b16 %v1811
    %v2197 = vunpack.c.h.b16 %v1811
    %v2198 = vunpack.c.l.b16 %v1812
    %v2199 = vunpack.c.h.b16 %v1812
    %v2200 = vunpack.c.l.b16 %v1813
    %v2201 = vunpack.c.h.b16 %v1813
    %v2202 = vunpack.c.l.b16 %v1814
    %v2203 = vunpack.c.h.b16 %v1814
    %v2204 = vunpack.c.l.b16 %v1815
    %v2205 = vunpack.c.h.b16 %v1815
    %v2206 = vunpack.c.l.b16 %v1816
    %v2207 = vunpack.c.h.b16 %v1816
    %v2208 = vunpack.c.l.b16 %v1817
    %v2209 = vunpack.c.h.b16 %v1817
    %v2210 = vunpack.c.l.b16 %v1818
    %v2211 = vunpack.c.h.b16 %v1818
    %v2212 = vunpack.c.l.b16 %v1819
    %v2213 = vunpack.c.h.b16 %v1819
    %v2214 = vunpack.c.l.b16 %v1820
    %v2215 = vunpack.c.h.b16 %v1820
    %v2216 = vunpack.c.l.b16 %v1821
    %v2217 = vunpack.c.h.b16 %v1821
    %v2218 = vunpack.c.l.b16 %v1822
    %v2219 = vunpack.c.h.b16 %v1822
    %v2220 = vunpack.c.l.b16 %v1823
    %v2221 = vunpack.c.h.b16 %v1823
    %v2222 = vunpack.c.l.b16 %v1824
    %v2223 = vunpack.c.h.b16 %v1824
    %v2224 = vunpack.c.l.b16 %v1825
    %v2225 = vunpack.c.h.b16 %v1825
    %v2226 = vunpack.c.l.b16 %v1826
    %v2227 = vunpack.c.h.b16 %v1826
    %v2228 = vunpack.c.l.b16 %v1827
    %v2229 = vunpack.c.h.b16 %v1827
    %v2230 = vunpack.c.l.b16 %v1828
    %v2231 = vunpack.c.h.b16 %v1828
    %v2232 = vunpack.c.l.b16 %v1829
    %v2233 = vunpack.c.h.b16 %v1829
    %v2234 = vunpack.c.l.b16 %v1830
    %v2235 = vunpack.c.h.b16 %v1830
    %v2236 = vunpack.c.l.b16 %v1831
    %v2237 = vunpack.c.h.b16 %v1831
    %v2238 = vunpack.c.l.b16 %v1832
    %v2239 = vunpack.c.h.b16 %v1832
    %v2240 = vunpack.c.l.b16 %v1833
    %v2241 = vunpack.c.h.b16 %v1833
    %v2242 = vunpack.c.l.b16 %v1834
    %v2243 = vunpack.c.h.b16 %v1834
    %v2244 = vunpack.c.l.b16 %v1835
    %v2245 = vunpack.c.h.b16 %v1835
    %v2246 = vunpack.c.l.b16 %v1836
    %v2247 = vunpack.c.h.b16 %v1836
    %v2248 = vunpack.c.l.b16 %v1837
    %v2249 = vunpack.c.h.b16 %v1837
    %v2250 = vunpack.c.l.b16 %v1838
    %v2251 = vunpack.c.h.b16 %v1838
    %v2252 = vunpack.c.l.b16 %v1839
    %v2253 = vunpack.c.h.b16 %v1839
    %v2254 = vunpack.c.l.b16 %v1840
    %v2255 = vunpack.c.h.b16 %v1840
    %v2256 = vunpack.c.l.b16 %v1841
    %v2257 = vunpack.c.h.b16 %v1841
    %v2258 = vunpack.c.l.b16 %v1842
    %v2259 = vunpack.c.h.b16 %v1842
    %v2260 = vunpack.c.l.b16 %v1843
    %v2261 = vunpack.c.h.b16 %v1843
    %v2262 = vunpack.c.l.b16 %v1844
    %v2263 = vunpack.c.h.b16 %v1844
    %v2264 = vunpack.c.l.b16 %v1845
    %v2265 = vunpack.c.h.b16 %v1845
    %v2266 = vunpack.c.l.b16 %v1846
    %v2267 = vunpack.c.h.b16 %v1846
    %v2268 = vunpack.c.l.b16 %v1847
    %v2269 = vunpack.c.h.b16 %v1847
    %v2270 = vunpack.c.l.b16 %v1848
    %v2271 = vunpack.c.h.b16 %v1848
    %v2272 = vunpack.c.l.b16 %v1849
    %v2273 = vunpack.c.h.b16 %v1849
    %v2274 = vunpack.c.l.b16 %v1850
    %v2275 = vunpack.c.h.b16 %v1850
    %v2276 = vunpack.c.l.b16 %v1851
    %v2277 = vunpack.c.h.b16 %v1851
    %v2278 = vunpack.c.l.b16 %v1852
    %v2279 = vunpack.c.h.b16 %v1852
    %v2280 = vunpack.c.l.b16 %v1853
    %v2281 = vunpack.c.h.b16 %v1853
    %v2282 = vunpack.c.l.b16 %v1854
    %v2283 = vunpack.c.h.b16 %v1854
    %v2284 = vunpack.c.l.b16 %v1855
    %v2285 = vunpack.c.h.b16 %v1855
    %v2286 = vunpack.c.l.b16 %v1856
    %v2287 = vunpack.c.h.b16 %v1856
    %v2288 = vunpack.c.l.b16 %v1857
    %v2289 = vunpack.c.h.b16 %v1857
    %v2290 = vunpack.c.l.b16 %v1858
    %v2291 = vunpack.c.h.b16 %v1858
    %v2292 = vunpack.c.l.b16 %v1859
    %v2293 = vunpack.c.h.b16 %v1859
    %v2294 = vunpack.c.l.b16 %v1860
    %v2295 = vunpack.c.h.b16 %v1860
    %v2296 = vunpack.c.l.b16 %v1861
    %v2297 = vunpack.c.h.b16 %v1861
    %v2298 = vunpack.c.l.b16 %v1862
    %v2299 = vunpack.c.h.b16 %v1862
    %v2300 = vunpack.c.l.b16 %v1863
    %v2301 = vunpack.c.h.b16 %v1863
    %v2302 = vunpack.c.l.b16 %v1864
    %v2303 = vunpack.c.h.b16 %v1864
    %v2304 = vunpack.c.l.b16 %v1865
    %v2305 = vunpack.c.h.b16 %v1865
    %v2306 = vunpack.c.l.b16 %v1866
    %v2307 = vunpack.c.h.b16 %v1866
    %v2308 = vunpack.c.l.b16 %v1867
    %v2309 = vunpack.c.h.b16 %v1867
    %v2310 = vunpack.c.l.b16 %v1868
    %v2311 = vunpack.c.h.b16 %v1868
    %v2312 = vunpack.c.l.b16 %v1869
    %v2313 = vunpack.c.h.b16 %v1869
    %v2314 = vpack.c.b16 %v2028, %v2026
    %v2315 = vpack.c.b16 %v2029, %v2027
    %v2316 = vpack.c.b16 %v2032, %v2030
    %v2317 = vpack.c.b16 %v2033, %v2031
    %v2318 = vpack.c.b16 %v2036, %v2034
    %v2319 = vpack.c.b16 %v2037, %v2035
    %v2320 = vpack.c.b16 %v2040, %v2038
    %v2321 = vpack.c.b16 %v2041, %v2039
    %v2322 = vpack.c.b16 %v2044, %v2042
    %v2323 = vpack.c.b16 %v2045, %v2043
    %v2324 = vpack.c.b16 %v2048, %v2046
    %v2325 = vpack.c.b16 %v2049, %v2047
    %v2326 = vpack.c.b16 %v2052, %v2050
    %v2327 = vpack.c.b16 %v2053, %v2051
    %v2328 = vpack.c.b16 %v2056, %v2054
    %v2329 = vpack.c.b16 %v2057, %v2055
    %v2330 = vpack.c.b16 %v2060, %v2058
    %v2331 = vpack.c.b16 %v2061, %v2059
    %v2332 = vpack.c.b16 %v2064, %v2062
    %v2333 = vpack.c.b16 %v2065, %v2063
    %v2334 = vpack.c.b16 %v2068, %v2066
    %v2335 = vpack.c.b16 %v2069, %v2067
    %v2336 = vpack.c.b16 %v2072, %v2070
    %v2337 = vpack.c.b16 %v2073, %v2071
    %v2338 = vpack.c.b16 %v2076, %v2074
    %v2339 = vpack.c.b16 %v2077, %v2075
    %v2340 = vpack.c.b16 %v2080, %v2078
    %v2341 = vpack.c.b16 %v2081, %v2079
    %v2342 = vpack.c.b16 %v2084, %v2082
    %v2343 = vpack.c.b16 %v2085, %v2083
    %v2344 = vpack.c.b16 %v2088, %v2086
    %v2345 = vpack.c.b16 %v2089, %v2087
    %v2346 = vpack.c.b16 %v2092, %v2090
    %v2347 = vpack.c.b16 %v2093, %v2091
    %v2348 = vpack.c.b16 %v2096, %v2094
    %v2349 = vpack.c.b16 %v2097, %v2095
    %v2350 = vpack.c.b16 %v2100, %v2098
    %v2351 = vpack.c.b16 %v2101, %v2099
    %v2352 = vpack.c.b16 %v2104, %v2102
    %v2353 = vpack.c.b16 %v2105, %v2103
    %v2354 = vpack.c.b16 %v2108, %v2106
    %v2355 = vpack.c.b16 %v2109, %v2107
    %v2356 = vpack.c.b16 %v2112, %v2110
    %v2357 = vpack.c.b16 %v2113, %v2111
    %v2358 = vpack.c.b16 %v2116, %v2114
    %v2359 = vpack.c.b16 %v2117, %v2115
    %v2360 = vpack.c.b16 %v2120, %v2118
    %v2361 = vpack.c.b16 %v2121, %v2119
    %v2362 = vpack.c.b16 %v2124, %v2122
    %v2363 = vpack.c.b16 %v2125, %v2123
    %v2364 = vpack.c.b16 %v2128, %v2126
    %v2365 = vpack.c.b16 %v2129, %v2127
    %v2366 = vpack.c.b16 %v2132, %v2130
    %v2367 = vpack.c.b16 %v2133, %v2131
    %v2368 = vpack.c.b16 %v2136, %v2134
    %v2369 = vpack.c.b16 %v2137, %v2135
    %v2370 = vpack.c.b16 %v2140, %v2138
    %v2371 = vpack.c.b16 %v2141, %v2139
    %v2372 = vpack.c.b16 %v2144, %v2142
    %v2373 = vpack.c.b16 %v2145, %v2143
    %v2374 = vpack.c.b16 %v2148, %v2146
    %v2375 = vpack.c.b16 %v2149, %v2147
    %v2376 = vpack.c.b16 %v2152, %v2150
    %v2377 = vpack.c.b16 %v2153, %v2151
    %v2378 = vpack.c.b16 %v2156, %v2154
    %v2379 = vpack.c.b16 %v2157, %v2155
    %v2380 = vpack.c.b16 %v2160, %v2158
    %v2381 = vpack.c.b16 %v2161, %v2159
    %v2382 = vpack.c.b16 %v2164, %v2162
    %v2383 = vpack.c.b16 %v2165, %v2163
    %v2384 = vpack.c.b16 %v2168, %v2166
    %v2385 = vpack.c.b16 %v2169, %v2167
    %v2386 = vpack.c.b16 %v2172, %v2170
    %v2387 = vpack.c.b16 %v2173, %v2171
    %v2388 = vpack.c.b16 %v2176, %v2174
    %v2389 = vpack.c.b16 %v2177, %v2175
    %v2390 = vpack.c.b16 %v2180, %v2178
    %v2391 = vpack.c.b16 %v2181, %v2179
    %v2392 = vpack.c.b16 %v2184, %v2182
    %v2393 = vpack.c.b16 %v2185, %v2183
    %v2394 = vpack.c.b16 %v2188, %v2186
    %v2395 = vpack.c.b16 %v2189, %v2187
    %v2396 = vpack.c.b16 %v2192, %v2190
    %v2397 = vpack.c.b16 %v2193, %v2191
    %v2398 = vpack.c.b16 %v2196, %v2194
    %v2399 = vpack.c.b16 %v2197, %v2195
    %v2400 = vpack.c.b16 %v2200, %v2198
    %v2401 = vpack.c.b16 %v2201, %v2199
    %v2402 = vpack.c.b16 %v2204, %v2202
    %v2403 = vpack.c.b16 %v2205, %v2203
    %v2404 = vpack.c.b16 %v2208, %v2206
    %v2405 = vpack.c.b16 %v2209, %v2207
    %v2406 = vpack.c.b16 %v2212, %v2210
    %v2407 = vpack.c.b16 %v2213, %v2211
    %v2408 = vpack.c.b16 %v2216, %v2214
    %v2409 = vpack.c.b16 %v2217, %v2215
    %v2410 = vpack.c.b16 %v2220, %v2218
    %v2411 = vpack.c.b16 %v2221, %v2219
    %v2412 = vpack.c.b16 %v2224, %v2222
    %v2413 = vpack.c.b16 %v2225, %v2223
    %v2414 = vpack.c.b16 %v2228, %v2226
    %v2415 = vpack.c.b16 %v2229, %v2227
    %v2416 = vpack.c.b16 %v2232, %v2230
    %v2417 = vpack.c.b16 %v2233, %v2231
    %v2418 = vpack.c.b16 %v2236, %v2234
    %v2419 = vpack.c.b16 %v2237, %v2235
    %v2420 = vpack.c.b16 %v2240, %v2238
    %v2421 = vpack.c.b16 %v2241, %v2239
    %v2422 = vpack.c.b16 %v2244, %v2242
    %v2423 = vpack.c.b16 %v2245, %v2243
    %v2424 = vpack.c.b16 %v2248, %v2246
    %v2425 = vpack.c.b16 %v2249, %v2247
    %v2426 = vpack.c.b16 %v2252, %v2250
    %v2427 = vpack.c.b16 %v2253, %v2251
    %v2428 = vpack.c.b16 %v2256, %v2254
    %v2429 = vpack.c.b16 %v2257, %v2255
    %v2430 = vpack.c.b16 %v2260, %v2258
    %v2431 = vpack.c.b16 %v2261, %v2259
    %v2432 = vpack.c.b16 %v2264, %v2262
    %v2433 = vpack.c.b16 %v2265, %v2263
    %v2434 = vpack.c.b16 %v2268, %v2266
    %v2435 = vpack.c.b16 %v2269, %v2267
    %v2436 = vpack.c.b16 %v2272, %v2270
    %v2437 = vpack.c.b16 %v2273, %v2271
    %v2438 = vpack.c.b16 %v2276, %v2274
    %v2439 = vpack.c.b16 %v2277, %v2275
    %v2440 = vpack.c.b16 %v2280, %v2278
    %v2441 = vpack.c.b16 %v2281, %v2279
    %v2442 = vpack.c.b16 %v2284, %v2282
    %v2443 = vpack.c.b16 %v2285, %v2283
    %v2444 = vpack.c.b16 %v2288, %v2286
    %v2445 = vpack.c.b16 %v2289, %v2287
    %v2446 = vpack.c.b16 %v2292, %v2290
    %v2447 = vpack.c.b16 %v2293, %v2291
    %v2448 = vpack.c.b16 %v2296, %v2294
    %v2449 = vpack.c.b16 %v2297, %v2295
    %v2450 = vpack.c.b16 %v2300, %v2298
    %v2451 = vpack.c.b16 %v2301, %v2299
    %v2452 = vpack.c.b16 %v2304, %v2302
    %v2453 = vpack.c.b16 %v2305, %v2303
    %v2454 = vpack.c.b16 %v2308, %v2306
    %v2455 = vpack.c.b16 %v2309, %v2307
    %v2456 = vpack.c.b16 %v2312, %v2310
    %v2457 = vpack.c.b16 %v2313, %v2311
    %2602 = vmatprep.subr.bf16.mxu0 %v2329
    %2603 = vmatpush1.bf16.msra.mxu0 %v2328
    %2604 = vmatprep.subr.bf16.mxu0 %v2327
    %2605 = vmatpush1.bf16.msra.mxu0 %v2326
    %2606 = vmatprep.subr.bf16.mxu0 %v2325
    %2607 = vmatpush1.bf16.msra.mxu0 %v2324
    %2608 = vmatprep.subr.bf16.mxu0 %v2323
    %2609 = vmatpush1.bf16.msra.mxu0 %v2322
    %2610 = vmatprep.subr.bf16.mxu0 %v2321
    %2611 = vmatpush1.bf16.msra.mxu0 %v2320
    %2612 = vmatprep.subr.bf16.mxu0 %v2319
    %2613 = vmatpush1.bf16.msra.mxu0 %v2318
    %2614 = vmatprep.subr.bf16.mxu0 %v2317
    %2615 = vmatpush1.bf16.msra.mxu0 %v2316
    %2616 = vmatprep.subr.bf16.mxu0 %v2315
    %2617 = vmatpush1.bf16.msra.mxu0 %v2314
    %2618 = vmatprep.subr.bf16.mxu0 %v2345
    %2619 = vmatpush2.bf16.msra.mxu0 %v2344
    %2620 = vmatprep.subr.bf16.mxu0 %v2343
    %2621 = vmatpush2.bf16.msra.mxu0 %v2342
    %2622 = vmatprep.subr.bf16.mxu0 %v2341
    %2623 = vmatpush2.bf16.msra.mxu0 %v2340
    %2624 = vmatprep.subr.bf16.mxu0 %v2339
    %2625 = vmatpush2.bf16.msra.mxu0 %v2338
    %2626 = vmatprep.subr.bf16.mxu0 %v2337
    %2627 = vmatpush2.bf16.msra.mxu0 %v2336
    %2628 = vmatprep.subr.bf16.mxu0 %v2335
    %2629 = vmatpush2.bf16.msra.mxu0 %v2334
    %2630 = vmatprep.subr.bf16.mxu0 %v2333
    %2631 = vmatpush2.bf16.msra.mxu0 %v2332
    %2632 = vmatprep.subr.bf16.mxu0 %v2331
    %2633 = vmatpush2.bf16.msra.mxu0 %v2330
    %2634 = vmatprep.mubr.bf16.mxu0 %v1502
    %2635 = vmatmul.mubr.bf16.gmra.mxu0 %v1466
    %v2636 = vpop.f32.mrf.mxu0
    %v2637 = vadd.f32 %v1875, %v2636
    %v2638 = vpop.f32.mrf.mxu0
    %v2639 = vadd.f32 %v1879, %v2638
    %v2640 = vpop.f32.mrf.mxu0
    %v2641 = vadd.f32 %v1875, %v2640
    %v2642 = vpop.f32.mrf.mxu0
    %v2643 = vadd.f32 %v1879, %v2642
    %2644 = vmatprep.mubr.bf16.mxu0 %v1519
    %2645 = vmatmul.mubr.bf16.gmra.mxu0 %v1483
    %v2646 = vpop.f32.mrf.mxu0
    %v2647 = vadd.f32 %v1875, %v2646
    %v2648 = vpop.f32.mrf.mxu0
    %v2649 = vadd.f32 %v1879, %v2648
    %v2650 = vpop.f32.mrf.mxu0
    %v2651 = vadd.f32 %v1875, %v2650
    %v2652 = vpop.f32.mrf.mxu0
    %v2653 = vadd.f32 %v1879, %v2652
    %2654 = vdwg.mxu0
    %2655 = vmatprep.subr.bf16.mxu0 %v2361
    %2656 = vmatpush1.bf16.msra.mxu0 %v2360
    %2657 = vmatprep.subr.bf16.mxu0 %v2359
    %2658 = vmatpush1.bf16.msra.mxu0 %v2358
    %2659 = vmatprep.subr.bf16.mxu0 %v2357
    %2660 = vmatpush1.bf16.msra.mxu0 %v2356
    %2661 = vmatprep.subr.bf16.mxu0 %v2355
    %2662 = vmatpush1.bf16.msra.mxu0 %v2354
    %2663 = vmatprep.subr.bf16.mxu0 %v2353
    %2664 = vmatpush1.bf16.msra.mxu0 %v2352
    %2665 = vmatprep.subr.bf16.mxu0 %v2351
    %2666 = vmatpush1.bf16.msra.mxu0 %v2350
    %2667 = vmatprep.subr.bf16.mxu0 %v2349
    %2668 = vmatpush1.bf16.msra.mxu0 %v2348
    %2669 = vmatprep.subr.bf16.mxu0 %v2347
    %2670 = vmatpush1.bf16.msra.mxu0 %v2346
    %2671 = vmatprep.subr.bf16.mxu0 %v2377
    %2672 = vmatpush2.bf16.msra.mxu0 %v2376
    %2673 = vmatprep.subr.bf16.mxu0 %v2375
    %2674 = vmatpush2.bf16.msra.mxu0 %v2374
    %2675 = vmatprep.subr.bf16.mxu0 %v2373
    %2676 = vmatpush2.bf16.msra.mxu0 %v2372
    %2677 = vmatprep.subr.bf16.mxu0 %v2371
    %2678 = vmatpush2.bf16.msra.mxu0 %v2370
    %2679 = vmatprep.subr.bf16.mxu0 %v2369
    %2680 = vmatpush2.bf16.msra.mxu0 %v2368
    %2681 = vmatprep.subr.bf16.mxu0 %v2367
    %2682 = vmatpush2.bf16.msra.mxu0 %v2366
    %2683 = vmatprep.subr.bf16.mxu0 %v2365
    %2684 = vmatpush2.bf16.msra.mxu0 %v2364
    %2685 = vmatprep.subr.bf16.mxu0 %v2363
    %2686 = vmatpush2.bf16.msra.mxu0 %v2362
    %2687 = vmatprep.mubr.bf16.mxu0 %v1574
    %2688 = vmatmul.mubr.bf16.gmra.mxu0 %v1538
    %v2689 = vpop.f32.mrf.mxu0
    %v2690 = vadd.f32 %v2637, %v2689
    %v2691 = vpop.f32.mrf.mxu0
    %v2692 = vadd.f32 %v2639, %v2691
    %v2693 = vpop.f32.mrf.mxu0
    %v2694 = vadd.f32 %v2641, %v2693
    %v2695 = vpop.f32.mrf.mxu0
    %v2696 = vadd.f32 %v2643, %v2695
    %2697 = vmatprep.mubr.bf16.mxu0 %v1591
    %2698 = vmatmul.mubr.bf16.gmra.mxu0 %v1555
    %v2699 = vpop.f32.mrf.mxu0
    %v2700 = vadd.f32 %v2647, %v2699
    %v2701 = vpop.f32.mrf.mxu0
    %v2702 = vadd.f32 %v2649, %v2701
    %v2703 = vpop.f32.mrf.mxu0
    %v2704 = vadd.f32 %v2651, %v2703
    %v2705 = vpop.f32.mrf.mxu0
    %v2706 = vadd.f32 %v2653, %v2705
    %2707 = vdwg.mxu0
    %2708 = vmatprep.subr.bf16.mxu0 %v2393
    %2709 = vmatpush1.bf16.msra.mxu0 %v2392
    %2710 = vmatprep.subr.bf16.mxu0 %v2391
    %2711 = vmatpush1.bf16.msra.mxu0 %v2390
    %2712 = vmatprep.subr.bf16.mxu0 %v2389
    %2713 = vmatpush1.bf16.msra.mxu0 %v2388
    %2714 = vmatprep.subr.bf16.mxu0 %v2387
    %2715 = vmatpush1.bf16.msra.mxu0 %v2386
    %2716 = vmatprep.subr.bf16.mxu0 %v2385
    %2717 = vmatpush1.bf16.msra.mxu0 %v2384
    %2718 = vmatprep.subr.bf16.mxu0 %v2383
    %2719 = vmatpush1.bf16.msra.mxu0 %v2382
    %2720 = vmatprep.subr.bf16.mxu0 %v2381
    %2721 = vmatpush1.bf16.msra.mxu0 %v2380
    %2722 = vmatprep.subr.bf16.mxu0 %v2379
    %2723 = vmatpush1.bf16.msra.mxu0 %v2378
    %2724 = vmatprep.subr.bf16.mxu0 %v2409
    %2725 = vmatpush2.bf16.msra.mxu0 %v2408
    %2726 = vmatprep.subr.bf16.mxu0 %v2407
    %2727 = vmatpush2.bf16.msra.mxu0 %v2406
    %2728 = vmatprep.subr.bf16.mxu0 %v2405
    %2729 = vmatpush2.bf16.msra.mxu0 %v2404
    %2730 = vmatprep.subr.bf16.mxu0 %v2403
    %2731 = vmatpush2.bf16.msra.mxu0 %v2402
    %2732 = vmatprep.subr.bf16.mxu0 %v2401
    %2733 = vmatpush2.bf16.msra.mxu0 %v2400
    %2734 = vmatprep.subr.bf16.mxu0 %v2399
    %2735 = vmatpush2.bf16.msra.mxu0 %v2398
    %2736 = vmatprep.subr.bf16.mxu0 %v2397
    %2737 = vmatpush2.bf16.msra.mxu0 %v2396
    %2738 = vmatprep.subr.bf16.mxu0 %v2395
    %2739 = vmatpush2.bf16.msra.mxu0 %v2394
    %2740 = vmatprep.mubr.bf16.mxu0 %v1646
    %2741 = vmatmul.mubr.bf16.gmra.mxu0 %v1610
    %v2742 = vpop.f32.mrf.mxu0
    %v2743 = vadd.f32 %v2690, %v2742
    %v2744 = vpop.f32.mrf.mxu0
    %v2745 = vadd.f32 %v2692, %v2744
    %v2746 = vpop.f32.mrf.mxu0
    %v2747 = vadd.f32 %v2694, %v2746
    %v2748 = vpop.f32.mrf.mxu0
    %v2749 = vadd.f32 %v2696, %v2748
    %2750 = vmatprep.mubr.bf16.mxu0 %v1663
    %2751 = vmatmul.mubr.bf16.gmra.mxu0 %v1627
    %v2752 = vpop.f32.mrf.mxu0
    %v2753 = vadd.f32 %v2700, %v2752
    %v2754 = vpop.f32.mrf.mxu0
    %v2755 = vadd.f32 %v2702, %v2754
    %v2756 = vpop.f32.mrf.mxu0
    %v2757 = vadd.f32 %v2704, %v2756
    %v2758 = vpop.f32.mrf.mxu0
    %v2759 = vadd.f32 %v2706, %v2758
    %2760 = vdwg.mxu0
    %2761 = vmatprep.subr.bf16.mxu0 %v2425
    %2762 = vmatpush1.bf16.msra.mxu0 %v2424
    %2763 = vmatprep.subr.bf16.mxu0 %v2423
    %2764 = vmatpush1.bf16.msra.mxu0 %v2422
    %2765 = vmatprep.subr.bf16.mxu0 %v2421
    %2766 = vmatpush1.bf16.msra.mxu0 %v2420
    %2767 = vmatprep.subr.bf16.mxu0 %v2419
    %2768 = vmatpush1.bf16.msra.mxu0 %v2418
    %2769 = vmatprep.subr.bf16.mxu0 %v2417
    %2770 = vmatpush1.bf16.msra.mxu0 %v2416
    %2771 = vmatprep.subr.bf16.mxu0 %v2415
    %2772 = vmatpush1.bf16.msra.mxu0 %v2414
    %2773 = vmatprep.subr.bf16.mxu0 %v2413
    %2774 = vmatpush1.bf16.msra.mxu0 %v2412
    %2775 = vmatprep.subr.bf16.mxu0 %v2411
    %2776 = vmatpush1.bf16.msra.mxu0 %v2410
    %2777 = vmatprep.subr.bf16.mxu0 %v2441
    %2778 = vmatpush2.bf16.msra.mxu0 %v2440
    %2779 = vmatprep.subr.bf16.mxu0 %v2439
    %2780 = vmatpush2.bf16.msra.mxu0 %v2438
    %2781 = vmatprep.subr.bf16.mxu0 %v2437
    %2782 = vmatpush2.bf16.msra.mxu0 %v2436
    %2783 = vmatprep.subr.bf16.mxu0 %v2435
    %2784 = vmatpush2.bf16.msra.mxu0 %v2434
    %2785 = vmatprep.subr.bf16.mxu0 %v2433
    %2786 = vmatpush2.bf16.msra.mxu0 %v2432
    %2787 = vmatprep.subr.bf16.mxu0 %v2431
    %2788 = vmatpush2.bf16.msra.mxu0 %v2430
    %2789 = vmatprep.subr.bf16.mxu0 %v2429
    %2790 = vmatpush2.bf16.msra.mxu0 %v2428
    %2791 = vmatprep.subr.bf16.mxu0 %v2427
    %2792 = vmatpush2.bf16.msra.mxu0 %v2426
    %2793 = vmatprep.mubr.bf16.mxu0 %v1694
    %2794 = vmatmul.mubr.bf16.gmra.mxu0 %v1674
    %v2795 = vpop.f32.mrf.mxu0
    %v2796 = vadd.f32 %v2743, %v2795
    %v2797 = vpop.f32.mrf.mxu0
    %v2798 = vadd.f32 %v2745, %v2797
    %v2799 = vpop.f32.mrf.mxu0
    %v2800 = vadd.f32 %v2747, %v2799
    %v2801 = vpop.f32.mrf.mxu0
    %v2802 = vadd.f32 %v2749, %v2801
    %2803 = vmatprep.mubr.bf16.mxu0 %v1703
    %2804 = vmatmul.mubr.bf16.gmra.mxu0 %v1683
    %v2805 = vpop.f32.mrf.mxu0
    %v2806 = vadd.f32 %v2753, %v2805
    %v2807 = vpop.f32.mrf.mxu0
    %v2808 = vadd.f32 %v2755, %v2807
    %v2809 = vpop.f32.mrf.mxu0
    %v2810 = vadd.f32 %v2757, %v2809
    %v2811 = vpop.f32.mrf.mxu0
    %v2812 = vadd.f32 %v2759, %v2811
    %2813 = vdwg.mxu0
    %2814 = vmatprep.subr.bf16.mxu0 %v2457
    %2815 = vmatpush1.bf16.msra.mxu0 %v2456
    %2816 = vmatprep.subr.bf16.mxu0 %v2455
    %2817 = vmatpush1.bf16.msra.mxu0 %v2454
    %2818 = vmatprep.subr.bf16.mxu0 %v2453
    %2819 = vmatpush1.bf16.msra.mxu0 %v2452
    %2820 = vmatprep.subr.bf16.mxu0 %v2451
    %2821 = vmatpush1.bf16.msra.mxu0 %v2450
    %2822 = vmatprep.subr.bf16.mxu0 %v2449
    %2823 = vmatpush1.bf16.msra.mxu0 %v2448
    %2824 = vmatprep.subr.bf16.mxu0 %v2447
    %2825 = vmatpush1.bf16.msra.mxu0 %v2446
    %2826 = vmatprep.subr.bf16.mxu0 %v2445
    %2827 = vmatpush1.bf16.msra.mxu0 %v2444
    %2828 = vmatprep.subr.bf16.mxu0 %v2443
    %2829 = vmatpush1.bf16.msra.mxu0 %v2442
    %2830 = vmatprep.subr.bf16.mxu0 0
    %2831 = vmatpush2.bf16.msra.mxu0 0
    %2832 = vmatprep.subr.bf16.mxu0 0
    %2833 = vmatpush2.bf16.msra.mxu0 0
    %2834 = vmatprep.subr.bf16.mxu0 0
    %2835 = vmatpush2.bf16.msra.mxu0 0
    %2836 = vmatprep.subr.bf16.mxu0 0
    %2837 = vmatpush2.bf16.msra.mxu0 0
    %2838 = vmatprep.subr.bf16.mxu0 0
    %2839 = vmatpush2.bf16.msra.mxu0 0
    %2840 = vmatprep.subr.bf16.mxu0 0
    %2841 = vmatpush2.bf16.msra.mxu0 0
    %2842 = vmatprep.subr.bf16.mxu0 0
    %2843 = vmatpush2.bf16.msra.mxu0 0
    %2844 = vmatprep.subr.bf16.mxu0 0
    %2845 = vmatpush2.bf16.msra.mxu0 0
    %2846 = vmatprep.mubr.bf16.mxu0 0
    %2847 = vmatmul.mubr.bf16.gmra.mxu0 %v1714
    %v2848 = vpop.f32.mrf.mxu0
    %v2849 = vadd.f32 %v2796, %v2848
    %v2850 = vpop.f32.mrf.mxu0
    %v2851 = vadd.f32 %v2798, %v2850
    %v2852 = vpop.f32.mrf.mxu0
    %v2853 = vadd.f32 %v2800, %v2852
    %v2854 = vpop.f32.mrf.mxu0
    %v2855 = vadd.f32 %v2802, %v2854
    %2856 = vmatprep.mubr.bf16.mxu0 0
    %2857 = vmatmul.mubr.bf16.gmra.mxu0 %v1723
    %v2858 = vpop.f32.mrf.mxu0
    %v2859 = vadd.f32 %v2806, %v2858
    %v2860 = vpop.f32.mrf.mxu0
    %v2861 = vadd.f32 %v2808, %v2860
    %v2862 = vpop.f32.mrf.mxu0
    %v2863 = vadd.f32 %v2810, %v2862
    %v2864 = vpop.f32.mrf.mxu0
    %v2865 = vadd.f32 %v2812, %v2864
    %2866 = vdwg.mxu0
    %v2867 = vld [vmem:[#allocation12] sm:$0x1]
    %v2868 = vld [vmem:[#allocation13] sm:$0x1]
    %v2869 = vadd.f32 %v2849, %v2853
    %v2870 = vadd.f32 %v2869, %v2859
    %v2871 = vadd.f32 %v2870, %v2863
    %v2872 = vrot.slane %v2871, 4
    %v2873 = vadd.f32 %v2871, %v2872
    %v2874 = vrot.slane %v2873, 2
    %v2875 = vadd.f32 %v2873, %v2874
    %v2876 = vrot.slane %v2875, 1
    %v2877 = vadd.f32 %v2875, %v2876
    %v2878 = vadd.f32 %v2851, %v2855
    %v2879 = vadd.f32 %v2878, %v2861
    %v2880 = vadd.f32 %v2879, %v2865
    %v2881 = vrot.slane %v2880, 4
    %v2882 = vadd.f32 %v2880, %v2881
    %v2883 = vrot.slane %v2882, 2
    %v2884 = vadd.f32 %v2882, %v2883
    %v2885 = vrot.slane %v2884, 1
    %v2886 = vadd.f32 %v2884, %v2885
    %v2887 = vmul.f32 %v2849, %v2849
    %v2888 = vmul.f32 %v2851, %v2851
    %v2889 = vmul.f32 %v2853, %v2853
    %v2890 = vmul.f32 %v2855, %v2855
    %v2891 = vmul.f32 %v2859, %v2859
    %v2892 = vmul.f32 %v2861, %v2861
    %v2893 = vmul.f32 %v2863, %v2863
    %v2894 = vmul.f32 %v2865, %v2865
    %v2895 = vadd.f32 %v2887, %v2889
    %v2896 = vadd.f32 %v2895, %v2891
    %v2897 = vadd.f32 %v2896, %v2893
    %v2898 = vrot.slane %v2897, 4
    %v2899 = vadd.f32 %v2897, %v2898
    %v2900 = vrot.slane %v2899, 2
    %v2901 = vadd.f32 %v2899, %v2900
    %v2902 = vrot.slane %v2901, 1
    %v2903 = vadd.f32 %v2901, %v2902
    %v2904 = vadd.f32 %v2888, %v2890
    %v2905 = vadd.f32 %v2904, %v2892
    %v2906 = vadd.f32 %v2905, %v2894
    %v2907 = vrot.slane %v2906, 4
    %v2908 = vadd.f32 %v2906, %v2907
    %v2909 = vrot.slane %v2908, 2
    %v2910 = vadd.f32 %v2908, %v2909
    %v2911 = vrot.slane %v2910, 1
    %v2912 = vadd.f32 %v2910, %v2911
    %v2913 = vadd.f32 %v2877, 0.0
    %2915 = vrot.lane.b32.xlu0 %v2877, 64
    %v2916 = vpop.permute.xlu0 %2915
    %v2918 = vadd.f32 %v2913, %v2916
    %v2919 = vadd.f32 %v2918, %v2886
    %2921 = vrot.lane.b32.xlu0 %v2886, 64
    %v2922 = vpop.permute.xlu0 %2921
    %v2924 = vadd.f32 %v2919, %v2922
    %v2925 = vadd.f32 %v2903, 0.0
    %2927 = vrot.lane.b32.xlu0 %v2903, 64
    %v2928 = vpop.permute.xlu0 %2927
    %v2930 = vadd.f32 %v2925, %v2928
    %v2931 = vadd.f32 %v2930, %v2912
    %2933 = vrot.lane.b32.xlu0 %v2912, 64
    %v2934 = vpop.permute.xlu0 %2933
    %v2936 = vadd.f32 %v2931, %v2934
    %v2937 = vmul.f32 %v2924, 0.0078125
    %v2938 = vmul.f32 %v2936, 0.0078125
    %v2939 = vmul.f32 %v2937, %v2937
    %v2940 = vsub.f32 %v2938, %v2939
    %v2941 = vadd.f32 %v2940, 1e-05
    %v2942 = vrsqrt.pop %v2941
    %v2943 = vmul.f32 %v2867, %v2942
    %v2944 = vmul.f32 %v2937, %v2943
    %v2945 = vsub.f32 %v2868, %v2944
    %v2947 = vlaneseq
    %v2948 = vshrl.u32 %v2947, 7
    %v2949 = vsub.s32 0, %v2948
    %v2950 = vrot.slane %v2943, %v2949
    %2951 = vrot.lane.b32.xlu0 %v2950, 64
    %v2952 = vpop.permute.xlu0 %2951
    %vm2954 = vcmask 523264
    %v2955 = vsel %vm2954, %v2943, %v2952
    %v2957 = vlaneseq
    %v2958 = vshrl.u32 %v2957, 7
    %v2959 = vsub.s32 0, %v2958
    %v2960 = vrot.slane %v2945, %v2959
    %2961 = vrot.lane.b32.xlu0 %v2960, 64
    %v2962 = vpop.permute.xlu0 %2961
    %v2964 = vsel %vm2954, %v2945, %v2962
    %v2965 = vlaneseq
    %v2966 = vshrl.u32 %v2965, 7
    %v2967 = vsub.s32 0, %v2966
    %v2968 = vrot.slane %v2955, %v2967
    %v2969 = vmul.f32 %v2849, %v2968
    %v2970 = vmul.f32 %v2851, %v2968
    %v2971 = vmul.f32 %v2853, %v2968
    %v2972 = vmul.f32 %v2855, %v2968
    %v2973 = vmul.f32 %v2859, %v2968
    %v2974 = vmul.f32 %v2861, %v2968
    %v2975 = vmul.f32 %v2863, %v2968
    %v2976 = vmul.f32 %v2865, %v2968
    %v2977 = vlaneseq
    %v2978 = vshrl.u32 %v2977, 7
    %v2979 = vsub.s32 0, %v2978
    %v2980 = vrot.slane %v2964, %v2979
    %v2981 = vadd.f32 %v2969, %v2980
    %v2982 = vadd.f32 %v2970, %v2980
    %v2983 = vadd.f32 %v2971, %v2980
    %v2984 = vadd.f32 %v2972, %v2980
    %v2985 = vadd.f32 %v2973, %v2980
    %v2986 = vadd.f32 %v2974, %v2980
    %v2987 = vadd.f32 %v2975, %v2980
    %v2988 = vadd.f32 %v2976, %v2980
    %v2989 = vmax.f32 %v2981, 0.0
    %v2990 = vmax.f32 %v2982, 0.0
    %v2991 = vmax.f32 %v2983, 0.0
    %v2992 = vmax.f32 %v2984, 0.0
    %v2993 = vmax.f32 %v2985, 0.0
    %v2994 = vmax.f32 %v2986, 0.0
    %v2995 = vmax.f32 %v2987, 0.0
    %v2996 = vmax.f32 %v2988, 0.0
    %v2997 = vpack.c.bf16 %v2991, %v2989
    %v2998 = vpack.c.bf16 %v2992, %v2990
    %v2999 = vpack.c.bf16 %v2995, %v2993
    %v3000 = vpack.c.bf16 %v2996, %v2994
    %v3003 = vcombine.high %v2997, %v2997
    %v3005 = vunpack.c.l.s4 1983009808
    %v3006 = vunpack.c.0.s8 %v3005
    %v3007 = vlaneseq
    %v3008 = vshrl.u32 %v3007, 7
    %v3009 = vsub.s32 %v3006, %v3008
    %v3010 = vrot.slane %v2997, %v3009
    %v3012 = vunpack.c.l.s4 1983009808
    %v3013 = vunpack.c.0.s8 %v3012
    %v3014 = vlaneseq
    %v3015 = vshrl.u32 %v3014, 7
    %v3016 = vsub.s32 %v3013, %v3015
    %v3017 = vrot.slane %v3003, %v3016
    %v3018 = vcombine.high %v3010, %v3010
    %v3019 = vcombine.high %v3017, %v3017
    %v3020 = vcombine.high %v2999, %v2999
    %v3022 = vunpack.c.l.s4 1983009808
    %v3023 = vunpack.c.0.s8 %v3022
    %v3024 = vlaneseq
    %v3025 = vshrl.u32 %v3024, 7
    %v3026 = vsub.s32 %v3023, %v3025
    %v3027 = vrot.slane %v2999, %v3026
    %v3029 = vunpack.c.l.s4 1983009808
    %v3030 = vunpack.c.0.s8 %v3029
    %v3031 = vlaneseq
    %v3032 = vshrl.u32 %v3031, 7
    %v3033 = vsub.s32 %v3030, %v3032
    %v3034 = vrot.slane %v3020, %v3033
    %v3035 = vcombine.high %v3027, %v3027
    %v3036 = vcombine.high %v3034, %v3034
    %v3038 = vshrl.u32 %v3010, 16
    %v3040 = vrot.slane %v3038, 7
    %v3041 = vshll.u32 %v3010, 16
    %v3043 = vor.u32 %v3040, %v3041
    %v3045 = vshrl.u32 %v3018, 16
    %v3047 = vrot.slane %v3045, 7
    %v3048 = vshll.u32 %v3018, 16
    %v3050 = vor.u32 %v3047, %v3048
    %v3052 = vshrl.u32 %v3017, 16
    %v3054 = vrot.slane %v3052, 7
    %v3055 = vshll.u32 %v3017, 16
    %v3057 = vor.u32 %v3054, %v3055
    %v3059 = vshrl.u32 %v3019, 16
    %v3061 = vrot.slane %v3059, 7
    %v3062 = vshll.u32 %v3019, 16
    %v3064 = vor.u32 %v3061, %v3062
    %v3066 = vshrl.u32 %v3027, 16
    %v3068 = vrot.slane %v3066, 7
    %v3069 = vshll.u32 %v3027, 16
    %v3071 = vor.u32 %v3068, %v3069
    %v3073 = vshrl.u32 %v3035, 16
    %v3075 = vrot.slane %v3073, 7
    %v3076 = vshll.u32 %v3035, 16
    %v3078 = vor.u32 %v3075, %v3076
    %v3080 = vshrl.u32 %v3034, 16
    %v3082 = vrot.slane %v3080, 7
    %v3083 = vshll.u32 %v3034, 16
    %v3085 = vor.u32 %v3082, %v3083
    %v3087 = vshrl.u32 %v3036, 16
    %v3089 = vrot.slane %v3087, 7
    %v3090 = vshll.u32 %v3036, 16
    %v3092 = vor.u32 %v3089, %v3090
    %v3101 = vsel %vm1172, 0, %v3043
    %v3102 = vsel %vm1172, 0, %v3050
    %v3103 = vsel %vm1172, 0, %v3057
    %v3104 = vsel %vm1172, 0, %v3064
    %v3105 = vsel %vm1172, 0, %v3071
    %v3106 = vsel %vm1172, 0, %v3078
    %v3107 = vsel %vm1172, 0, %v3085
    %v3108 = vsel %vm1172, 0, %v3092
    %v3109 = vsel %vm1184, %v3101, 0
    %v3110 = vsel %vm1184, %v3102, 0
    %v3111 = vsel %vm1184, %v3103, 0
    %v3112 = vsel %vm1184, %v3104, 0
    %v3113 = vsel %vm1184, %v3105, 0
    %v3114 = vsel %vm1184, %v3106, 0
    %v3115 = vsel %vm1184, %v3107, 0
    %v3116 = vsel %vm1184, %v3108, 0
    %v3118 = vunpack.c.l.s4 1983009808
    %v3119 = vunpack.c.0.s8 %v3118
    %v3120 = vlaneseq
    %v3121 = vshrl.u32 %v3120, 7
    %v3122 = vsub.s32 %v3119, %v3121
    %v3123 = vrot.slane %v3010, %v3122
    %v3125 = vunpack.c.l.s4 1983009808
    %v3126 = vunpack.c.0.s8 %v3125
    %v3127 = vlaneseq
    %v3128 = vshrl.u32 %v3127, 7
    %v3129 = vsub.s32 %v3126, %v3128
    %v3130 = vrot.slane %v3018, %v3129
    %v3132 = vunpack.c.l.s4 1983009808
    %v3133 = vunpack.c.0.s8 %v3132
    %v3134 = vlaneseq
    %v3135 = vshrl.u32 %v3134, 7
    %v3136 = vsub.s32 %v3133, %v3135
    %v3137 = vrot.slane %v3017, %v3136
    %v3139 = vunpack.c.l.s4 1983009808
    %v3140 = vunpack.c.0.s8 %v3139
    %v3141 = vlaneseq
    %v3142 = vshrl.u32 %v3141, 7
    %v3143 = vsub.s32 %v3140, %v3142
    %v3144 = vrot.slane %v3019, %v3143
    %v3146 = vunpack.c.l.s4 1983009808
    %v3147 = vunpack.c.0.s8 %v3146
    %v3148 = vlaneseq
    %v3149 = vshrl.u32 %v3148, 7
    %v3150 = vsub.s32 %v3147, %v3149
    %v3151 = vrot.slane %v3027, %v3150
    %v3153 = vunpack.c.l.s4 1983009808
    %v3154 = vunpack.c.0.s8 %v3153
    %v3155 = vlaneseq
    %v3156 = vshrl.u32 %v3155, 7
    %v3157 = vsub.s32 %v3154, %v3156
    %v3158 = vrot.slane %v3035, %v3157
    %v3160 = vunpack.c.l.s4 1983009808
    %v3161 = vunpack.c.0.s8 %v3160
    %v3162 = vlaneseq
    %v3163 = vshrl.u32 %v3162, 7
    %v3164 = vsub.s32 %v3161, %v3163
    %v3165 = vrot.slane %v3034, %v3164
    %v3167 = vunpack.c.l.s4 1983009808
    %v3168 = vunpack.c.0.s8 %v3167
    %v3169 = vlaneseq
    %v3170 = vshrl.u32 %v3169, 7
    %v3171 = vsub.s32 %v3168, %v3170
    %v3172 = vrot.slane %v3036, %v3171
    %3173 = vrot.lane.b32.xlu0 %v3123, 64
    %v3174 = vpop.permute.xlu0 %3173
    %3175 = vrot.lane.b32.xlu0 %v3130, 64
    %v3176 = vpop.permute.xlu0 %3175
    %3177 = vrot.lane.b32.xlu0 %v3137, 64
    %v3178 = vpop.permute.xlu0 %3177
    %3179 = vrot.lane.b32.xlu0 %v3144, 64
    %v3180 = vpop.permute.xlu0 %3179
    %3181 = vrot.lane.b32.xlu0 %v3151, 64
    %v3182 = vpop.permute.xlu0 %3181
    %3183 = vrot.lane.b32.xlu0 %v3158, 64
    %v3184 = vpop.permute.xlu0 %3183
    %3185 = vrot.lane.b32.xlu0 %v3165, 64
    %v3186 = vpop.permute.xlu0 %3185
    %3187 = vrot.lane.b32.xlu0 %v3172, 64
    %v3188 = vpop.permute.xlu0 %3187
    %v3190 = vshrl.u32 %v3174, 16
    %v3192 = vrot.slane %v3190, 7
    %v3193 = vshll.u32 %v3174, 16
    %v3195 = vor.u32 %v3192, %v3193
    %v3197 = vshrl.u32 %v3176, 16
    %v3199 = vrot.slane %v3197, 7
    %v3200 = vshll.u32 %v3176, 16
    %v3202 = vor.u32 %v3199, %v3200
    %v3204 = vshrl.u32 %v3178, 16
    %v3206 = vrot.slane %v3204, 7
    %v3207 = vshll.u32 %v3178, 16
    %v3209 = vor.u32 %v3206, %v3207
    %v3211 = vshrl.u32 %v3180, 16
    %v3213 = vrot.slane %v3211, 7
    %v3214 = vshll.u32 %v3180, 16
    %v3216 = vor.u32 %v3213, %v3214
    %v3218 = vshrl.u32 %v3182, 16
    %v3220 = vrot.slane %v3218, 7
    %v3221 = vshll.u32 %v3182, 16
    %v3223 = vor.u32 %v3220, %v3221
    %v3225 = vshrl.u32 %v3184, 16
    %v3227 = vrot.slane %v3225, 7
    %v3228 = vshll.u32 %v3184, 16
    %v3230 = vor.u32 %v3227, %v3228
    %v3232 = vshrl.u32 %v3186, 16
    %v3234 = vrot.slane %v3232, 7
    %v3235 = vshll.u32 %v3186, 16
    %v3237 = vor.u32 %v3234, %v3235
    %v3239 = vshrl.u32 %v3188, 16
    %v3241 = vrot.slane %v3239, 7
    %v3242 = vshll.u32 %v3188, 16
    %v3244 = vor.u32 %v3241, %v3242
    %v3253 = vsel %vm1172, 0, %v3195
    %v3254 = vsel %vm1172, 0, %v3202
    %v3255 = vsel %vm1172, 0, %v3209
    %v3256 = vsel %vm1172, 0, %v3216
    %v3257 = vsel %vm1172, 0, %v3223
    %v3258 = vsel %vm1172, 0, %v3230
    %v3259 = vsel %vm1172, 0, %v3237
    %v3260 = vsel %vm1172, 0, %v3244
    %v3261 = vsel %vm1184, %v3253, 0
    %v3262 = vsel %vm1184, %v3254, 0
    %v3263 = vsel %vm1184, %v3255, 0
    %v3264 = vsel %vm1184, %v3256, 0
    %v3265 = vsel %vm1184, %v3257, 0
    %v3266 = vsel %vm1184, %v3258, 0
    %v3267 = vsel %vm1184, %v3259, 0
    %v3268 = vsel %vm1184, %v3260, 0
    %v3271 = vcombine.high %v2998, %v2998
    %v3273 = vunpack.c.l.s4 1983009808
    %v3274 = vunpack.c.0.s8 %v3273
    %v3275 = vlaneseq
    %v3276 = vshrl.u32 %v3275, 7
    %v3277 = vsub.s32 %v3274, %v3276
    %v3278 = vrot.slane %v2998, %v3277
    %v3280 = vunpack.c.l.s4 1983009808
    %v3281 = vunpack.c.0.s8 %v3280
    %v3282 = vlaneseq
    %v3283 = vshrl.u32 %v3282, 7
    %v3284 = vsub.s32 %v3281, %v3283
    %v3285 = vrot.slane %v3271, %v3284
    %v3286 = vcombine.high %v3278, %v3278
    %v3287 = vcombine.high %v3285, %v3285
    %v3288 = vcombine.high %v3000, %v3000
    %v3290 = vunpack.c.l.s4 1983009808
    %v3291 = vunpack.c.0.s8 %v3290
    %v3292 = vlaneseq
    %v3293 = vshrl.u32 %v3292, 7
    %v3294 = vsub.s32 %v3291, %v3293
    %v3295 = vrot.slane %v3000, %v3294
    %v3297 = vunpack.c.l.s4 1983009808
    %v3298 = vunpack.c.0.s8 %v3297
    %v3299 = vlaneseq
    %v3300 = vshrl.u32 %v3299, 7
    %v3301 = vsub.s32 %v3298, %v3300
    %v3302 = vrot.slane %v3288, %v3301
    %v3303 = vcombine.high %v3295, %v3295
    %v3304 = vcombine.high %v3302, %v3302
    %v3306 = vshrl.u32 %v3278, 16
    %v3308 = vrot.slane %v3306, 7
    %v3309 = vshll.u32 %v3278, 16
    %v3311 = vor.u32 %v3308, %v3309
    %v3313 = vshrl.u32 %v3286, 16
    %v3315 = vrot.slane %v3313, 7
    %v3316 = vshll.u32 %v3286, 16
    %v3318 = vor.u32 %v3315, %v3316
    %v3320 = vshrl.u32 %v3285, 16
    %v3322 = vrot.slane %v3320, 7
    %v3323 = vshll.u32 %v3285, 16
    %v3325 = vor.u32 %v3322, %v3323
    %v3327 = vshrl.u32 %v3287, 16
    %v3329 = vrot.slane %v3327, 7
    %v3330 = vshll.u32 %v3287, 16
    %v3332 = vor.u32 %v3329, %v3330
    %v3334 = vshrl.u32 %v3295, 16
    %v3336 = vrot.slane %v3334, 7
    %v3337 = vshll.u32 %v3295, 16
    %v3339 = vor.u32 %v3336, %v3337
    %v3341 = vshrl.u32 %v3303, 16
    %v3343 = vrot.slane %v3341, 7
    %v3344 = vshll.u32 %v3303, 16
    %v3346 = vor.u32 %v3343, %v3344
    %v3348 = vshrl.u32 %v3302, 16
    %v3350 = vrot.slane %v3348, 7
    %v3351 = vshll.u32 %v3302, 16
    %v3353 = vor.u32 %v3350, %v3351
    %v3355 = vshrl.u32 %v3304, 16
    %v3357 = vrot.slane %v3355, 7
    %v3358 = vshll.u32 %v3304, 16
    %v3360 = vor.u32 %v3357, %v3358
    %v3369 = vsel %vm1172, 0, %v3311
    %v3370 = vsel %vm1172, 0, %v3318
    %v3371 = vsel %vm1172, 0, %v3325
    %v3372 = vsel %vm1172, 0, %v3332
    %v3373 = vsel %vm1172, 0, %v3339
    %v3374 = vsel %vm1172, 0, %v3346
    %v3375 = vsel %vm1172, 0, %v3353
    %v3376 = vsel %vm1172, 0, %v3360
    %v3377 = vsel %vm1184, %v3369, 0
    %v3378 = vsel %vm1184, %v3370, 0
    %v3379 = vsel %vm1184, %v3371, 0
    %v3380 = vsel %vm1184, %v3372, 0
    %v3381 = vsel %vm1184, %v3373, 0
    %v3382 = vsel %vm1184, %v3374, 0
    %v3383 = vsel %vm1184, %v3375, 0
    %v3384 = vsel %vm1184, %v3376, 0
    %v3386 = vunpack.c.l.s4 1983009808
    %v3387 = vunpack.c.0.s8 %v3386
    %v3388 = vlaneseq
    %v3389 = vshrl.u32 %v3388, 7
    %v3390 = vsub.s32 %v3387, %v3389
    %v3391 = vrot.slane %v3278, %v3390
    %v3393 = vunpack.c.l.s4 1983009808
    %v3394 = vunpack.c.0.s8 %v3393
    %v3395 = vlaneseq
    %v3396 = vshrl.u32 %v3395, 7
    %v3397 = vsub.s32 %v3394, %v3396
    %v3398 = vrot.slane %v3286, %v3397
    %v3400 = vunpack.c.l.s4 1983009808
    %v3401 = vunpack.c.0.s8 %v3400
    %v3402 = vlaneseq
    %v3403 = vshrl.u32 %v3402, 7
    %v3404 = vsub.s32 %v3401, %v3403
    %v3405 = vrot.slane %v3285, %v3404
    %v3407 = vunpack.c.l.s4 1983009808
    %v3408 = vunpack.c.0.s8 %v3407
    %v3409 = vlaneseq
    %v3410 = vshrl.u32 %v3409, 7
    %v3411 = vsub.s32 %v3408, %v3410
    %v3412 = vrot.slane %v3287, %v3411
    %v3414 = vunpack.c.l.s4 1983009808
    %v3415 = vunpack.c.0.s8 %v3414
    %v3416 = vlaneseq
    %v3417 = vshrl.u32 %v3416, 7
    %v3418 = vsub.s32 %v3415, %v3417
    %v3419 = vrot.slane %v3295, %v3418
    %v3421 = vunpack.c.l.s4 1983009808
    %v3422 = vunpack.c.0.s8 %v3421
    %v3423 = vlaneseq
    %v3424 = vshrl.u32 %v3423, 7
    %v3425 = vsub.s32 %v3422, %v3424
    %v3426 = vrot.slane %v3303, %v3425
    %v3428 = vunpack.c.l.s4 1983009808
    %v3429 = vunpack.c.0.s8 %v3428
    %v3430 = vlaneseq
    %v3431 = vshrl.u32 %v3430, 7
    %v3432 = vsub.s32 %v3429, %v3431
    %v3433 = vrot.slane %v3302, %v3432
    %v3435 = vunpack.c.l.s4 1983009808
    %v3436 = vunpack.c.0.s8 %v3435
    %v3437 = vlaneseq
    %v3438 = vshrl.u32 %v3437, 7
    %v3439 = vsub.s32 %v3436, %v3438
    %v3440 = vrot.slane %v3304, %v3439
    %3441 = vrot.lane.b32.xlu0 %v3391, 64
    %v3442 = vpop.permute.xlu0 %3441
    %3443 = vrot.lane.b32.xlu0 %v3398, 64
    %v3444 = vpop.permute.xlu0 %3443
    %3445 = vrot.lane.b32.xlu0 %v3405, 64
    %v3446 = vpop.permute.xlu0 %3445
    %3447 = vrot.lane.b32.xlu0 %v3412, 64
    %v3448 = vpop.permute.xlu0 %3447
    %3449 = vrot.lane.b32.xlu0 %v3419, 64
    %v3450 = vpop.permute.xlu0 %3449
    %3451 = vrot.lane.b32.xlu0 %v3426, 64
    %v3452 = vpop.permute.xlu0 %3451
    %3453 = vrot.lane.b32.xlu0 %v3433, 64
    %v3454 = vpop.permute.xlu0 %3453
    %3455 = vrot.lane.b32.xlu0 %v3440, 64
    %v3456 = vpop.permute.xlu0 %3455
    %v3458 = vshrl.u32 %v3442, 16
    %v3460 = vrot.slane %v3458, 7
    %v3461 = vshll.u32 %v3442, 16
    %v3463 = vor.u32 %v3460, %v3461
    %v3465 = vshrl.u32 %v3444, 16
    %v3467 = vrot.slane %v3465, 7
    %v3468 = vshll.u32 %v3444, 16
    %v3470 = vor.u32 %v3467, %v3468
    %v3472 = vshrl.u32 %v3446, 16
    %v3474 = vrot.slane %v3472, 7
    %v3475 = vshll.u32 %v3446, 16
    %v3477 = vor.u32 %v3474, %v3475
    %v3479 = vshrl.u32 %v3448, 16
    %v3481 = vrot.slane %v3479, 7
    %v3482 = vshll.u32 %v3448, 16
    %v3484 = vor.u32 %v3481, %v3482
    %v3486 = vshrl.u32 %v3450, 16
    %v3488 = vrot.slane %v3486, 7
    %v3489 = vshll.u32 %v3450, 16
    %v3491 = vor.u32 %v3488, %v3489
    %v3493 = vshrl.u32 %v3452, 16
    %v3495 = vrot.slane %v3493, 7
    %v3496 = vshll.u32 %v3452, 16
    %v3498 = vor.u32 %v3495, %v3496
    %v3500 = vshrl.u32 %v3454, 16
    %v3502 = vrot.slane %v3500, 7
    %v3503 = vshll.u32 %v3454, 16
    %v3505 = vor.u32 %v3502, %v3503
    %v3507 = vshrl.u32 %v3456, 16
    %v3509 = vrot.slane %v3507, 7
    %v3510 = vshll.u32 %v3456, 16
    %v3512 = vor.u32 %v3509, %v3510
    %v3521 = vsel %vm1172, 0, %v3463
    %v3522 = vsel %vm1172, 0, %v3470
    %v3523 = vsel %vm1172, 0, %v3477
    %v3524 = vsel %vm1172, 0, %v3484
    %v3525 = vsel %vm1172, 0, %v3491
    %v3526 = vsel %vm1172, 0, %v3498
    %v3527 = vsel %vm1172, 0, %v3505
    %v3528 = vsel %vm1172, 0, %v3512
    %v3529 = vsel %vm1184, %v3521, 0
    %v3530 = vsel %vm1184, %v3522, 0
    %v3531 = vsel %vm1184, %v3523, 0
    %v3532 = vsel %vm1184, %v3524, 0
    %v3533 = vsel %vm1184, %v3525, 0
    %v3534 = vsel %vm1184, %v3526, 0
    %v3535 = vsel %vm1184, %v3527, 0
    %v3536 = vsel %vm1184, %v3528, 0
    %v3544 = vunpack.c.l.s4 1983009808
    %v3545 = vunpack.c.0.s8 %v3544
    %v3546 = vlaneseq
    %v3547 = vshrl.u32 %v3546, 7
    %v3548 = vsub.s32 %v3545, %v3547
    %v3549 = vrot.slane %v3377, %v3548
    %v3550 = vcombine.high %v3549, %v3549
    %v3552 = vunpack.c.l.s4 1983009808
    %v3553 = vunpack.c.0.s8 %v3552
    %v3554 = vlaneseq
    %v3555 = vshrl.u32 %v3554, 7
    %v3556 = vsub.s32 %v3553, %v3555
    %v3557 = vrot.slane %v3378, %v3556
    %v3558 = vcombine.high %v3557, %v3557
    %v3560 = vunpack.c.l.s4 1983009808
    %v3561 = vunpack.c.0.s8 %v3560
    %v3562 = vlaneseq
    %v3563 = vshrl.u32 %v3562, 7
    %v3564 = vsub.s32 %v3561, %v3563
    %v3565 = vrot.slane %v3379, %v3564
    %v3566 = vcombine.high %v3565, %v3565
    %v3568 = vunpack.c.l.s4 1983009808
    %v3569 = vunpack.c.0.s8 %v3568
    %v3570 = vlaneseq
    %v3571 = vshrl.u32 %v3570, 7
    %v3572 = vsub.s32 %v3569, %v3571
    %v3573 = vrot.slane %v3381, %v3572
    %v3574 = vcombine.high %v3573, %v3573
    %v3576 = vunpack.c.l.s4 1983009808
    %v3577 = vunpack.c.0.s8 %v3576
    %v3578 = vlaneseq
    %v3579 = vshrl.u32 %v3578, 7
    %v3580 = vsub.s32 %v3577, %v3579
    %v3581 = vrot.slane %v3382, %v3580
    %v3582 = vcombine.high %v3581, %v3581
    %v3584 = vunpack.c.l.s4 1983009808
    %v3585 = vunpack.c.0.s8 %v3584
    %v3586 = vlaneseq
    %v3587 = vshrl.u32 %v3586, 7
    %v3588 = vsub.s32 %v3585, %v3587
    %v3589 = vrot.slane %v3383, %v3588
    %v3590 = vcombine.high %v3589, %v3589
    %v3592 = vshrl.u32 %v3549, 16
    %v3594 = vrot.slane %v3592, 6
    %v3595 = vshll.u32 %v3549, 16
    %v3597 = vrot.slane %v3595, 7
    %v3598 = vor.u32 %v3594, %v3597
    %v3599 = vrot.slane %v3598, 2
    %v3601 = vshll.u32 %v3550, 16
    %v3603 = vrot.slane %v3601, 7
    %v3604 = vsel %vm1263, %v3599, %v3603
    %v3606 = vshrl.u32 %v3557, 16
    %v3608 = vrot.slane %v3606, 6
    %v3609 = vshll.u32 %v3557, 16
    %v3611 = vrot.slane %v3609, 7
    %v3612 = vor.u32 %v3608, %v3611
    %v3613 = vrot.slane %v3612, 2
    %v3615 = vshll.u32 %v3558, 16
    %v3617 = vrot.slane %v3615, 7
    %v3618 = vsel %vm1263, %v3613, %v3617
    %v3620 = vshrl.u32 %v3565, 16
    %v3622 = vrot.slane %v3620, 6
    %v3623 = vshll.u32 %v3565, 16
    %v3625 = vrot.slane %v3623, 7
    %v3626 = vor.u32 %v3622, %v3625
    %v3627 = vrot.slane %v3626, 2
    %v3629 = vshll.u32 %v3566, 16
    %v3631 = vrot.slane %v3629, 7
    %v3632 = vsel %vm1263, %v3627, %v3631
    %v3634 = vshrl.u32 %v3573, 16
    %v3636 = vrot.slane %v3634, 6
    %v3637 = vshll.u32 %v3573, 16
    %v3639 = vrot.slane %v3637, 7
    %v3640 = vor.u32 %v3636, %v3639
    %v3641 = vrot.slane %v3640, 2
    %v3643 = vshll.u32 %v3574, 16
    %v3645 = vrot.slane %v3643, 7
    %v3646 = vsel %vm1263, %v3641, %v3645
    %v3648 = vshrl.u32 %v3581, 16
    %v3650 = vrot.slane %v3648, 6
    %v3651 = vshll.u32 %v3581, 16
    %v3653 = vrot.slane %v3651, 7
    %v3654 = vor.u32 %v3650, %v3653
    %v3655 = vrot.slane %v3654, 2
    %v3657 = vshll.u32 %v3582, 16
    %v3659 = vrot.slane %v3657, 7
    %v3660 = vsel %vm1263, %v3655, %v3659
    %v3662 = vshrl.u32 %v3589, 16
    %v3664 = vrot.slane %v3662, 6
    %v3665 = vshll.u32 %v3589, 16
    %v3667 = vrot.slane %v3665, 7
    %v3668 = vor.u32 %v3664, %v3667
    %v3669 = vrot.slane %v3668, 2
    %v3671 = vshll.u32 %v3590, 16
    %v3673 = vrot.slane %v3671, 7
    %v3674 = vsel %vm1263, %v3669, %v3673
    %v3682 = vunpack.c.l.s4 1983009808
    %v3683 = vunpack.c.0.s8 %v3682
    %v3684 = vlaneseq
    %v3685 = vshrl.u32 %v3684, 7
    %v3686 = vsub.s32 %v3683, %v3685
    %v3687 = vrot.slane %v3529, %v3686
    %v3688 = vcombine.high %v3687, %v3687
    %v3690 = vunpack.c.l.s4 1983009808
    %v3691 = vunpack.c.0.s8 %v3690
    %v3692 = vlaneseq
    %v3693 = vshrl.u32 %v3692, 7
    %v3694 = vsub.s32 %v3691, %v3693
    %v3695 = vrot.slane %v3530, %v3694
    %v3696 = vcombine.high %v3695, %v3695
    %v3698 = vunpack.c.l.s4 1983009808
    %v3699 = vunpack.c.0.s8 %v3698
    %v3700 = vlaneseq
    %v3701 = vshrl.u32 %v3700, 7
    %v3702 = vsub.s32 %v3699, %v3701
    %v3703 = vrot.slane %v3531, %v3702
    %v3704 = vcombine.high %v3703, %v3703
    %v3706 = vunpack.c.l.s4 1983009808
    %v3707 = vunpack.c.0.s8 %v3706
    %v3708 = vlaneseq
    %v3709 = vshrl.u32 %v3708, 7
    %v3710 = vsub.s32 %v3707, %v3709
    %v3711 = vrot.slane %v3533, %v3710
    %v3712 = vcombine.high %v3711, %v3711
    %v3714 = vunpack.c.l.s4 1983009808
    %v3715 = vunpack.c.0.s8 %v3714
    %v3716 = vlaneseq
    %v3717 = vshrl.u32 %v3716, 7
    %v3718 = vsub.s32 %v3715, %v3717
    %v3719 = vrot.slane %v3534, %v3718
    %v3720 = vcombine.high %v3719, %v3719
    %v3722 = vunpack.c.l.s4 1983009808
    %v3723 = vunpack.c.0.s8 %v3722
    %v3724 = vlaneseq
    %v3725 = vshrl.u32 %v3724, 7
    %v3726 = vsub.s32 %v3723, %v3725
    %v3727 = vrot.slane %v3535, %v3726
    %v3728 = vcombine.high %v3727, %v3727
    %v3730 = vshrl.u32 %v3687, 16
    %v3732 = vrot.slane %v3730, 6
    %v3733 = vshll.u32 %v3687, 16
    %v3735 = vrot.slane %v3733, 7
    %v3736 = vor.u32 %v3732, %v3735
    %v3737 = vrot.slane %v3736, 2
    %v3739 = vshll.u32 %v3688, 16
    %v3741 = vrot.slane %v3739, 7
    %v3742 = vsel %vm1263, %v3737, %v3741
    %v3744 = vshrl.u32 %v3695, 16
    %v3746 = vrot.slane %v3744, 6
    %v3747 = vshll.u32 %v3695, 16
    %v3749 = vrot.slane %v3747, 7
    %v3750 = vor.u32 %v3746, %v3749
    %v3751 = vrot.slane %v3750, 2
    %v3753 = vshll.u32 %v3696, 16
    %v3755 = vrot.slane %v3753, 7
    %v3756 = vsel %vm1263, %v3751, %v3755
    %v3758 = vshrl.u32 %v3703, 16
    %v3760 = vrot.slane %v3758, 6
    %v3761 = vshll.u32 %v3703, 16
    %v3763 = vrot.slane %v3761, 7
    %v3764 = vor.u32 %v3760, %v3763
    %v3765 = vrot.slane %v3764, 2
    %v3767 = vshll.u32 %v3704, 16
    %v3769 = vrot.slane %v3767, 7
    %v3770 = vsel %vm1263, %v3765, %v3769
    %v3772 = vshrl.u32 %v3711, 16
    %v3774 = vrot.slane %v3772, 6
    %v3775 = vshll.u32 %v3711, 16
    %v3777 = vrot.slane %v3775, 7
    %v3778 = vor.u32 %v3774, %v3777
    %v3779 = vrot.slane %v3778, 2
    %v3781 = vshll.u32 %v3712, 16
    %v3783 = vrot.slane %v3781, 7
    %v3784 = vsel %vm1263, %v3779, %v3783
    %v3786 = vshrl.u32 %v3719, 16
    %v3788 = vrot.slane %v3786, 6
    %v3789 = vshll.u32 %v3719, 16
    %v3791 = vrot.slane %v3789, 7
    %v3792 = vor.u32 %v3788, %v3791
    %v3793 = vrot.slane %v3792, 2
    %v3795 = vshll.u32 %v3720, 16
    %v3797 = vrot.slane %v3795, 7
    %v3798 = vsel %vm1263, %v3793, %v3797
    %v3800 = vshrl.u32 %v3727, 16
    %v3802 = vrot.slane %v3800, 6
    %v3803 = vshll.u32 %v3727, 16
    %v3805 = vrot.slane %v3803, 7
    %v3806 = vor.u32 %v3802, %v3805
    %v3807 = vrot.slane %v3806, 2
    %v3809 = vshll.u32 %v3728, 16
    %v3811 = vrot.slane %v3809, 7
    %v3812 = vsel %vm1263, %v3807, %v3811
    %v3822 = vunpack.c.l.s4 1983009808
    %v3823 = vunpack.c.0.s8 %v3822
    %v3824 = vlaneseq
    %v3825 = vshrl.u32 %v3824, 7
    %v3826 = vsub.s32 %v3823, %v3825
    %v3827 = vrot.slane %v3109, %v3826
    %v3828 = vcombine.high %v3827, %v3827
    %v3830 = vunpack.c.l.s4 1983009808
    %v3831 = vunpack.c.0.s8 %v3830
    %v3832 = vlaneseq
    %v3833 = vshrl.u32 %v3832, 7
    %v3834 = vsub.s32 %v3831, %v3833
    %v3835 = vrot.slane %v3110, %v3834
    %v3836 = vcombine.high %v3835, %v3835
    %v3838 = vunpack.c.l.s4 1983009808
    %v3839 = vunpack.c.0.s8 %v3838
    %v3840 = vlaneseq
    %v3841 = vshrl.u32 %v3840, 7
    %v3842 = vsub.s32 %v3839, %v3841
    %v3843 = vrot.slane %v3111, %v3842
    %v3844 = vcombine.high %v3843, %v3843
    %v3846 = vunpack.c.l.s4 1983009808
    %v3847 = vunpack.c.0.s8 %v3846
    %v3848 = vlaneseq
    %v3849 = vshrl.u32 %v3848, 7
    %v3850 = vsub.s32 %v3847, %v3849
    %v3851 = vrot.slane %v3112, %v3850
    %v3852 = vcombine.high %v3851, %v3851
    %v3854 = vunpack.c.l.s4 1983009808
    %v3855 = vunpack.c.0.s8 %v3854
    %v3856 = vlaneseq
    %v3857 = vshrl.u32 %v3856, 7
    %v3858 = vsub.s32 %v3855, %v3857
    %v3859 = vrot.slane %v3113, %v3858
    %v3860 = vcombine.high %v3859, %v3859
    %v3862 = vunpack.c.l.s4 1983009808
    %v3863 = vunpack.c.0.s8 %v3862
    %v3864 = vlaneseq
    %v3865 = vshrl.u32 %v3864, 7
    %v3866 = vsub.s32 %v3863, %v3865
    %v3867 = vrot.slane %v3114, %v3866
    %v3868 = vcombine.high %v3867, %v3867
    %v3870 = vunpack.c.l.s4 1983009808
    %v3871 = vunpack.c.0.s8 %v3870
    %v3872 = vlaneseq
    %v3873 = vshrl.u32 %v3872, 7
    %v3874 = vsub.s32 %v3871, %v3873
    %v3875 = vrot.slane %v3115, %v3874
    %v3876 = vcombine.high %v3875, %v3875
    %v3878 = vunpack.c.l.s4 1983009808
    %v3879 = vunpack.c.0.s8 %v3878
    %v3880 = vlaneseq
    %v3881 = vshrl.u32 %v3880, 7
    %v3882 = vsub.s32 %v3879, %v3881
    %v3883 = vrot.slane %v3116, %v3882
    %v3884 = vcombine.high %v3883, %v3883
    %v3886 = vshrl.u32 %v3827, 16
    %v3888 = vrot.slane %v3886, 6
    %v3889 = vshll.u32 %v3827, 16
    %v3891 = vrot.slane %v3889, 7
    %v3892 = vor.u32 %v3888, %v3891
    %v3893 = vrot.slane %v3892, 2
    %v3895 = vshll.u32 %v3828, 16
    %v3897 = vrot.slane %v3895, 7
    %v3898 = vsel %vm1263, %v3893, %v3897
    %v3900 = vshrl.u32 %v3835, 16
    %v3902 = vrot.slane %v3900, 6
    %v3903 = vshll.u32 %v3835, 16
    %v3905 = vrot.slane %v3903, 7
    %v3906 = vor.u32 %v3902, %v3905
    %v3907 = vrot.slane %v3906, 2
    %v3909 = vshll.u32 %v3836, 16
    %v3911 = vrot.slane %v3909, 7
    %v3912 = vsel %vm1263, %v3907, %v3911
    %v3914 = vshrl.u32 %v3843, 16
    %v3916 = vrot.slane %v3914, 6
    %v3917 = vshll.u32 %v3843, 16
    %v3919 = vrot.slane %v3917, 7
    %v3920 = vor.u32 %v3916, %v3919
    %v3921 = vrot.slane %v3920, 2
    %v3923 = vshll.u32 %v3844, 16
    %v3925 = vrot.slane %v3923, 7
    %v3926 = vsel %vm1263, %v3921, %v3925
    %v3928 = vshrl.u32 %v3851, 16
    %v3930 = vrot.slane %v3928, 6
    %v3931 = vshll.u32 %v3851, 16
    %v3933 = vrot.slane %v3931, 7
    %v3934 = vor.u32 %v3930, %v3933
    %v3935 = vrot.slane %v3934, 2
    %v3937 = vshll.u32 %v3852, 16
    %v3939 = vrot.slane %v3937, 7
    %v3940 = vsel %vm1263, %v3935, %v3939
    %v3942 = vshrl.u32 %v3859, 16
    %v3944 = vrot.slane %v3942, 6
    %v3945 = vshll.u32 %v3859, 16
    %v3947 = vrot.slane %v3945, 7
    %v3948 = vor.u32 %v3944, %v3947
    %v3949 = vrot.slane %v3948, 2
    %v3951 = vshll.u32 %v3860, 16
    %v3953 = vrot.slane %v3951, 7
    %v3954 = vsel %vm1263, %v3949, %v3953
    %v3956 = vshrl.u32 %v3867, 16
    %v3958 = vrot.slane %v3956, 6
    %v3959 = vshll.u32 %v3867, 16
    %v3961 = vrot.slane %v3959, 7
    %v3962 = vor.u32 %v3958, %v3961
    %v3963 = vrot.slane %v3962, 2
    %v3965 = vshll.u32 %v3868, 16
    %v3967 = vrot.slane %v3965, 7
    %v3968 = vsel %vm1263, %v3963, %v3967
    %v3970 = vshrl.u32 %v3875, 16
    %v3972 = vrot.slane %v3970, 6
    %v3973 = vshll.u32 %v3875, 16
    %v3975 = vrot.slane %v3973, 7
    %v3976 = vor.u32 %v3972, %v3975
    %v3977 = vrot.slane %v3976, 2
    %v3979 = vshll.u32 %v3876, 16
    %v3981 = vrot.slane %v3979, 7
    %v3982 = vsel %vm1263, %v3977, %v3981
    %v3984 = vshrl.u32 %v3883, 16
    %v3986 = vrot.slane %v3984, 6
    %v3987 = vshll.u32 %v3883, 16
    %v3989 = vrot.slane %v3987, 7
    %v3990 = vor.u32 %v3986, %v3989
    %v3991 = vrot.slane %v3990, 2
    %v3993 = vshll.u32 %v3884, 16
    %v3995 = vrot.slane %v3993, 7
    %v3996 = vsel %vm1263, %v3991, %v3995
    %v4006 = vunpack.c.l.s4 1983009808
    %v4007 = vunpack.c.0.s8 %v4006
    %v4008 = vlaneseq
    %v4009 = vshrl.u32 %v4008, 7
    %v4010 = vsub.s32 %v4007, %v4009
    %v4011 = vrot.slane %v3261, %v4010
    %v4012 = vcombine.high %v4011, %v4011
    %v4014 = vunpack.c.l.s4 1983009808
    %v4015 = vunpack.c.0.s8 %v4014
    %v4016 = vlaneseq
    %v4017 = vshrl.u32 %v4016, 7
    %v4018 = vsub.s32 %v4015, %v4017
    %v4019 = vrot.slane %v3262, %v4018
    %v4020 = vcombine.high %v4019, %v4019
    %v4022 = vunpack.c.l.s4 1983009808
    %v4023 = vunpack.c.0.s8 %v4022
    %v4024 = vlaneseq
    %v4025 = vshrl.u32 %v4024, 7
    %v4026 = vsub.s32 %v4023, %v4025
    %v4027 = vrot.slane %v3263, %v4026
    %v4028 = vcombine.high %v4027, %v4027
    %v4030 = vunpack.c.l.s4 1983009808
    %v4031 = vunpack.c.0.s8 %v4030
    %v4032 = vlaneseq
    %v4033 = vshrl.u32 %v4032, 7
    %v4034 = vsub.s32 %v4031, %v4033
    %v4035 = vrot.slane %v3264, %v4034
    %v4036 = vcombine.high %v4035, %v4035
    %v4038 = vunpack.c.l.s4 1983009808
    %v4039 = vunpack.c.0.s8 %v4038
    %v4040 = vlaneseq
    %v4041 = vshrl.u32 %v4040, 7
    %v4042 = vsub.s32 %v4039, %v4041
    %v4043 = vrot.slane %v3265, %v4042
    %v4044 = vcombine.high %v4043, %v4043
    %v4046 = vunpack.c.l.s4 1983009808
    %v4047 = vunpack.c.0.s8 %v4046
    %v4048 = vlaneseq
    %v4049 = vshrl.u32 %v4048, 7
    %v4050 = vsub.s32 %v4047, %v4049
    %v4051 = vrot.slane %v3266, %v4050
    %v4052 = vcombine.high %v4051, %v4051
    %v4054 = vunpack.c.l.s4 1983009808
    %v4055 = vunpack.c.0.s8 %v4054
    %v4056 = vlaneseq
    %v4057 = vshrl.u32 %v4056, 7
    %v4058 = vsub.s32 %v4055, %v4057
    %v4059 = vrot.slane %v3267, %v4058
    %v4060 = vcombine.high %v4059, %v4059
    %v4062 = vunpack.c.l.s4 1983009808
    %v4063 = vunpack.c.0.s8 %v4062
    %v4064 = vlaneseq
    %v4065 = vshrl.u32 %v4064, 7
    %v4066 = vsub.s32 %v4063, %v4065
    %v4067 = vrot.slane %v3268, %v4066
    %v4068 = vcombine.high %v4067, %v4067
    %v4070 = vshrl.u32 %v4011, 16
    %v4072 = vrot.slane %v4070, 6
    %v4073 = vshll.u32 %v4011, 16
    %v4075 = vrot.slane %v4073, 7
    %v4076 = vor.u32 %v4072, %v4075
    %v4077 = vrot.slane %v4076, 2
    %v4079 = vshll.u32 %v4012, 16
    %v4081 = vrot.slane %v4079, 7
    %v4082 = vsel %vm1263, %v4077, %v4081
    %v4084 = vshrl.u32 %v4019, 16
    %v4086 = vrot.slane %v4084, 6
    %v4087 = vshll.u32 %v4019, 16
    %v4089 = vrot.slane %v4087, 7
    %v4090 = vor.u32 %v4086, %v4089
    %v4091 = vrot.slane %v4090, 2
    %v4093 = vshll.u32 %v4020, 16
    %v4095 = vrot.slane %v4093, 7
    %v4096 = vsel %vm1263, %v4091, %v4095
    %v4098 = vshrl.u32 %v4027, 16
    %v4100 = vrot.slane %v4098, 6
    %v4101 = vshll.u32 %v4027, 16
    %v4103 = vrot.slane %v4101, 7
    %v4104 = vor.u32 %v4100, %v4103
    %v4105 = vrot.slane %v4104, 2
    %v4107 = vshll.u32 %v4028, 16
    %v4109 = vrot.slane %v4107, 7
    %v4110 = vsel %vm1263, %v4105, %v4109
    %v4112 = vshrl.u32 %v4035, 16
    %v4114 = vrot.slane %v4112, 6
    %v4115 = vshll.u32 %v4035, 16
    %v4117 = vrot.slane %v4115, 7
    %v4118 = vor.u32 %v4114, %v4117
    %v4119 = vrot.slane %v4118, 2
    %v4121 = vshll.u32 %v4036, 16
    %v4123 = vrot.slane %v4121, 7
    %v4124 = vsel %vm1263, %v4119, %v4123
    %v4126 = vshrl.u32 %v4043, 16
    %v4128 = vrot.slane %v4126, 6
    %v4129 = vshll.u32 %v4043, 16
    %v4131 = vrot.slane %v4129, 7
    %v4132 = vor.u32 %v4128, %v4131
    %v4133 = vrot.slane %v4132, 2
    %v4135 = vshll.u32 %v4044, 16
    %v4137 = vrot.slane %v4135, 7
    %v4138 = vsel %vm1263, %v4133, %v4137
    %v4140 = vshrl.u32 %v4051, 16
    %v4142 = vrot.slane %v4140, 6
    %v4143 = vshll.u32 %v4051, 16
    %v4145 = vrot.slane %v4143, 7
    %v4146 = vor.u32 %v4142, %v4145
    %v4147 = vrot.slane %v4146, 2
    %v4149 = vshll.u32 %v4052, 16
    %v4151 = vrot.slane %v4149, 7
    %v4152 = vsel %vm1263, %v4147, %v4151
    %v4154 = vshrl.u32 %v4059, 16
    %v4156 = vrot.slane %v4154, 6
    %v4157 = vshll.u32 %v4059, 16
    %v4159 = vrot.slane %v4157, 7
    %v4160 = vor.u32 %v4156, %v4159
    %v4161 = vrot.slane %v4160, 2
    %v4163 = vshll.u32 %v4060, 16
    %v4165 = vrot.slane %v4163, 7
    %v4166 = vsel %vm1263, %v4161, %v4165
    %v4168 = vshrl.u32 %v4067, 16
    %v4170 = vrot.slane %v4168, 6
    %v4171 = vshll.u32 %v4067, 16
    %v4173 = vrot.slane %v4171, 7
    %v4174 = vor.u32 %v4170, %v4173
    %v4175 = vrot.slane %v4174, 2
    %v4177 = vshll.u32 %v4068, 16
    %v4179 = vrot.slane %v4177, 7
    %v4180 = vsel %vm1263, %v4175, %v4179
    %v4184 = vunpack.c.l.s4 1983009808
    %v4185 = vunpack.c.0.s8 %v4184
    %v4186 = vlaneseq
    %v4187 = vshrl.u32 %v4186, 7
    %v4188 = vsub.s32 %v4185, %v4187
    %v4189 = vrot.slane %v3380, %v4188
    %v4190 = vcombine.high %v4189, %v4189
    %v4192 = vunpack.c.l.s4 1983009808
    %v4193 = vunpack.c.0.s8 %v4192
    %v4194 = vlaneseq
    %v4195 = vshrl.u32 %v4194, 7
    %v4196 = vsub.s32 %v4193, %v4195
    %v4197 = vrot.slane %v3384, %v4196
    %v4198 = vcombine.high %v4197, %v4197
    %v4200 = vshrl.u32 %v4189, 16
    %v4202 = vrot.slane %v4200, 6
    %v4203 = vshll.u32 %v4189, 16
    %v4205 = vrot.slane %v4203, 7
    %v4206 = vor.u32 %v4202, %v4205
    %v4207 = vrot.slane %v4206, 2
    %v4209 = vshll.u32 %v4190, 16
    %v4211 = vrot.slane %v4209, 7
    %v4212 = vsel %vm1263, %v4207, %v4211
    %v4214 = vshrl.u32 %v4197, 16
    %v4216 = vrot.slane %v4214, 6
    %v4217 = vshll.u32 %v4197, 16
    %v4219 = vrot.slane %v4217, 7
    %v4220 = vor.u32 %v4216, %v4219
    %v4221 = vrot.slane %v4220, 2
    %v4223 = vshll.u32 %v4198, 16
    %v4225 = vrot.slane %v4223, 7
    %v4226 = vsel %vm1263, %v4221, %v4225
    %v4230 = vunpack.c.l.s4 1983009808
    %v4231 = vunpack.c.0.s8 %v4230
    %v4232 = vlaneseq
    %v4233 = vshrl.u32 %v4232, 7
    %v4234 = vsub.s32 %v4231, %v4233
    %v4235 = vrot.slane %v3532, %v4234
    %v4236 = vcombine.high %v4235, %v4235
    %v4238 = vunpack.c.l.s4 1983009808
    %v4239 = vunpack.c.0.s8 %v4238
    %v4240 = vlaneseq
    %v4241 = vshrl.u32 %v4240, 7
    %v4242 = vsub.s32 %v4239, %v4241
    %v4243 = vrot.slane %v3536, %v4242
    %v4244 = vcombine.high %v4243, %v4243
    %v4246 = vshrl.u32 %v4235, 16
    %v4248 = vrot.slane %v4246, 6
    %v4249 = vshll.u32 %v4235, 16
    %v4251 = vrot.slane %v4249, 7
    %v4252 = vor.u32 %v4248, %v4251
    %v4253 = vrot.slane %v4252, 2
    %v4255 = vshll.u32 %v4236, 16
    %v4257 = vrot.slane %v4255, 7
    %v4258 = vsel %vm1263, %v4253, %v4257
    %v4260 = vshrl.u32 %v4243, 16
    %v4262 = vrot.slane %v4260, 6
    %v4263 = vshll.u32 %v4243, 16
    %v4265 = vrot.slane %v4263, 7
    %v4266 = vor.u32 %v4262, %v4265
    %v4267 = vrot.slane %v4266, 2
    %v4269 = vshll.u32 %v4244, 16
    %v4271 = vrot.slane %v4269, 7
    %v4272 = vsel %vm1263, %v4267, %v4271
    %v4273 = vcombine.low %v1185, %v3529
    %v4274 = vcombine.low %v3530, %v3531
    %v4276 = vunpack.c.l.s4 1983009808
    %v4277 = vunpack.c.0.s8 %v4276
    %v4278 = vlaneseq
    %v4279 = vshrl.u32 %v4278, 7
    %v4280 = vsub.s32 %v4277, %v4279
    %v4281 = vrot.slane %v4273, %v4280
    %v4283 = vunpack.c.l.s4 1983009808
    %v4284 = vunpack.c.0.s8 %v4283
    %v4285 = vlaneseq
    %v4286 = vshrl.u32 %v4285, 7
    %v4287 = vsub.s32 %v4284, %v4286
    %v4288 = vrot.slane %v4274, %v4287
    %v4289 = vcombine.low %v4281, %v4288
    %v4290 = vcombine.low %v1185, %v3533
    %v4291 = vcombine.low %v3534, %v3535
    %v4293 = vunpack.c.l.s4 1983009808
    %v4294 = vunpack.c.0.s8 %v4293
    %v4295 = vlaneseq
    %v4296 = vshrl.u32 %v4295, 7
    %v4297 = vsub.s32 %v4294, %v4296
    %v4298 = vrot.slane %v4290, %v4297
    %v4300 = vunpack.c.l.s4 1983009808
    %v4301 = vunpack.c.0.s8 %v4300
    %v4302 = vlaneseq
    %v4303 = vshrl.u32 %v4302, 7
    %v4304 = vsub.s32 %v4301, %v4303
    %v4305 = vrot.slane %v4291, %v4304
    %v4306 = vcombine.low %v4298, %v4305
    %v4307 = vcombine.low %v1277, %v3604
    %v4308 = vcombine.low %v3618, %v3632
    %v4310 = vunpack.c.l.s4 1983009808
    %v4311 = vunpack.c.0.s8 %v4310
    %v4312 = vlaneseq
    %v4313 = vshrl.u32 %v4312, 7
    %v4314 = vsub.s32 %v4311, %v4313
    %v4315 = vrot.slane %v4307, %v4314
    %v4317 = vunpack.c.l.s4 1983009808
    %v4318 = vunpack.c.0.s8 %v4317
    %v4319 = vlaneseq
    %v4320 = vshrl.u32 %v4319, 7
    %v4321 = vsub.s32 %v4318, %v4320
    %v4322 = vrot.slane %v4308, %v4321
    %v4323 = vcombine.low %v4315, %v4322
    %v4324 = vcombine.low %v1277, %v3646
    %v4325 = vcombine.low %v3660, %v3674
    %v4327 = vunpack.c.l.s4 1983009808
    %v4328 = vunpack.c.0.s8 %v4327
    %v4329 = vlaneseq
    %v4330 = vshrl.u32 %v4329, 7
    %v4331 = vsub.s32 %v4328, %v4330
    %v4332 = vrot.slane %v4324, %v4331
    %v4334 = vunpack.c.l.s4 1983009808
    %v4335 = vunpack.c.0.s8 %v4334
    %v4336 = vlaneseq
    %v4337 = vshrl.u32 %v4336, 7
    %v4338 = vsub.s32 %v4335, %v4337
    %v4339 = vrot.slane %v4325, %v4338
    %v4340 = vcombine.low %v4332, %v4339
    %4341 = vrot.lane.b32.xlu0 %v4323, 64
    %v4342 = vpop.permute.xlu0 %4341
    %4343 = vrot.lane.b32.xlu0 %v4340, 64
    %v4344 = vpop.permute.xlu0 %4343
    %v4345 = vcombine.low %v1277, %v3742
    %v4346 = vcombine.low %v3756, %v3770
    %v4348 = vunpack.c.l.s4 1983009808
    %v4349 = vunpack.c.0.s8 %v4348
    %v4350 = vlaneseq
    %v4351 = vshrl.u32 %v4350, 7
    %v4352 = vsub.s32 %v4349, %v4351
    %v4353 = vrot.slane %v4345, %v4352
    %v4355 = vunpack.c.l.s4 1983009808
    %v4356 = vunpack.c.0.s8 %v4355
    %v4357 = vlaneseq
    %v4358 = vshrl.u32 %v4357, 7
    %v4359 = vsub.s32 %v4356, %v4358
    %v4360 = vrot.slane %v4346, %v4359
    %v4361 = vcombine.low %v4353, %v4360
    %v4362 = vcombine.low %v1277, %v3784
    %v4363 = vcombine.low %v3798, %v3812
    %v4365 = vunpack.c.l.s4 1983009808
    %v4366 = vunpack.c.0.s8 %v4365
    %v4367 = vlaneseq
    %v4368 = vshrl.u32 %v4367, 7
    %v4369 = vsub.s32 %v4366, %v4368
    %v4370 = vrot.slane %v4362, %v4369
    %v4372 = vunpack.c.l.s4 1983009808
    %v4373 = vunpack.c.0.s8 %v4372
    %v4374 = vlaneseq
    %v4375 = vshrl.u32 %v4374, 7
    %v4376 = vsub.s32 %v4373, %v4375
    %v4377 = vrot.slane %v4363, %v4376
    %v4378 = vcombine.low %v4370, %v4377
    %v4379 = vcombine.low %v3261, %v3262
    %v4380 = vcombine.low %v3263, %v3264
    %v4382 = vunpack.c.l.s4 1983009808
    %v4383 = vunpack.c.0.s8 %v4382
    %v4384 = vlaneseq
    %v4385 = vshrl.u32 %v4384, 7
    %v4386 = vsub.s32 %v4383, %v4385
    %v4387 = vrot.slane %v4379, %v4386
    %v4389 = vunpack.c.l.s4 1983009808
    %v4390 = vunpack.c.0.s8 %v4389
    %v4391 = vlaneseq
    %v4392 = vshrl.u32 %v4391, 7
    %v4393 = vsub.s32 %v4390, %v4392
    %v4394 = vrot.slane %v4380, %v4393
    %v4395 = vcombine.low %v4387, %v4394
    %v4396 = vcombine.low %v3265, %v3266
    %v4397 = vcombine.low %v3267, %v3268
    %v4399 = vunpack.c.l.s4 1983009808
    %v4400 = vunpack.c.0.s8 %v4399
    %v4401 = vlaneseq
    %v4402 = vshrl.u32 %v4401, 7
    %v4403 = vsub.s32 %v4400, %v4402
    %v4404 = vrot.slane %v4396, %v4403
    %v4406 = vunpack.c.l.s4 1983009808
    %v4407 = vunpack.c.0.s8 %v4406
    %v4408 = vlaneseq
    %v4409 = vshrl.u32 %v4408, 7
    %v4410 = vsub.s32 %v4407, %v4409
    %v4411 = vrot.slane %v4397, %v4410
    %v4412 = vcombine.low %v4404, %v4411
    %4413 = vrot.lane.b32.xlu0 %v4395, 64
    %v4414 = vpop.permute.xlu0 %4413
    %4415 = vrot.lane.b32.xlu0 %v4412, 64
    %v4416 = vpop.permute.xlu0 %4415
    %v4417 = vcombine.low %v3898, %v3912
    %v4418 = vcombine.low %v3926, %v3940
    %v4420 = vunpack.c.l.s4 1983009808
    %v4421 = vunpack.c.0.s8 %v4420
    %v4422 = vlaneseq
    %v4423 = vshrl.u32 %v4422, 7
    %v4424 = vsub.s32 %v4421, %v4423
    %v4425 = vrot.slane %v4417, %v4424
    %v4427 = vunpack.c.l.s4 1983009808
    %v4428 = vunpack.c.0.s8 %v4427
    %v4429 = vlaneseq
    %v4430 = vshrl.u32 %v4429, 7
    %v4431 = vsub.s32 %v4428, %v4430
    %v4432 = vrot.slane %v4418, %v4431
    %v4433 = vcombine.low %v4425, %v4432
    %v4434 = vcombine.low %v3954, %v3968
    %v4435 = vcombine.low %v3982, %v3996
    %v4437 = vunpack.c.l.s4 1983009808
    %v4438 = vunpack.c.0.s8 %v4437
    %v4439 = vlaneseq
    %v4440 = vshrl.u32 %v4439, 7
    %v4441 = vsub.s32 %v4438, %v4440
    %v4442 = vrot.slane %v4434, %v4441
    %v4444 = vunpack.c.l.s4 1983009808
    %v4445 = vunpack.c.0.s8 %v4444
    %v4446 = vlaneseq
    %v4447 = vshrl.u32 %v4446, 7
    %v4448 = vsub.s32 %v4445, %v4447
    %v4449 = vrot.slane %v4435, %v4448
    %v4450 = vcombine.low %v4442, %v4449
    %v4451 = vcombine.low %v4082, %v4096
    %v4452 = vcombine.low %v4110, %v4124
    %v4454 = vunpack.c.l.s4 1983009808
    %v4455 = vunpack.c.0.s8 %v4454
    %v4456 = vlaneseq
    %v4457 = vshrl.u32 %v4456, 7
    %v4458 = vsub.s32 %v4455, %v4457
    %v4459 = vrot.slane %v4451, %v4458
    %v4461 = vunpack.c.l.s4 1983009808
    %v4462 = vunpack.c.0.s8 %v4461
    %v4463 = vlaneseq
    %v4464 = vshrl.u32 %v4463, 7
    %v4465 = vsub.s32 %v4462, %v4464
    %v4466 = vrot.slane %v4452, %v4465
    %v4467 = vcombine.low %v4459, %v4466
    %v4468 = vcombine.low %v4138, %v4152
    %v4469 = vcombine.low %v4166, %v4180
    %v4471 = vunpack.c.l.s4 1983009808
    %v4472 = vunpack.c.0.s8 %v4471
    %v4473 = vlaneseq
    %v4474 = vshrl.u32 %v4473, 7
    %v4475 = vsub.s32 %v4472, %v4474
    %v4476 = vrot.slane %v4468, %v4475
    %v4478 = vunpack.c.l.s4 1983009808
    %v4479 = vunpack.c.0.s8 %v4478
    %v4480 = vlaneseq
    %v4481 = vshrl.u32 %v4480, 7
    %v4482 = vsub.s32 %v4479, %v4481
    %v4483 = vrot.slane %v4469, %v4482
    %v4484 = vcombine.low %v4476, %v4483
    %4485 = vrot.lane.b32.xlu0 %v4467, 64
    %v4486 = vpop.permute.xlu0 %4485
    %4487 = vrot.lane.b32.xlu0 %v4484, 64
    %v4488 = vpop.permute.xlu0 %4487
    %v4489 = vcombine.low %v3529, %v3530
    %v4490 = vcombine.low %v3531, %v3532
    %v4492 = vunpack.c.l.s4 1983009808
    %v4493 = vunpack.c.0.s8 %v4492
    %v4494 = vlaneseq
    %v4495 = vshrl.u32 %v4494, 7
    %v4496 = vsub.s32 %v4493, %v4495
    %v4497 = vrot.slane %v4489, %v4496
    %v4499 = vunpack.c.l.s4 1983009808
    %v4500 = vunpack.c.0.s8 %v4499
    %v4501 = vlaneseq
    %v4502 = vshrl.u32 %v4501, 7
    %v4503 = vsub.s32 %v4500, %v4502
    %v4504 = vrot.slane %v4490, %v4503
    %v4505 = vcombine.low %v4497, %v4504
    %v4506 = vcombine.low %v3533, %v3534
    %v4507 = vcombine.low %v3535, %v3536
    %v4509 = vunpack.c.l.s4 1983009808
    %v4510 = vunpack.c.0.s8 %v4509
    %v4511 = vlaneseq
    %v4512 = vshrl.u32 %v4511, 7
    %v4513 = vsub.s32 %v4510, %v4512
    %v4514 = vrot.slane %v4506, %v4513
    %v4516 = vunpack.c.l.s4 1983009808
    %v4517 = vunpack.c.0.s8 %v4516
    %v4518 = vlaneseq
    %v4519 = vshrl.u32 %v4518, 7
    %v4520 = vsub.s32 %v4517, %v4519
    %v4521 = vrot.slane %v4507, %v4520
    %v4522 = vcombine.low %v4514, %v4521
    %v4523 = vcombine.low %v3604, %v3618
    %v4524 = vcombine.low %v3632, %v4212
    %v4526 = vunpack.c.l.s4 1983009808
    %v4527 = vunpack.c.0.s8 %v4526
    %v4528 = vlaneseq
    %v4529 = vshrl.u32 %v4528, 7
    %v4530 = vsub.s32 %v4527, %v4529
    %v4531 = vrot.slane %v4523, %v4530
    %v4533 = vunpack.c.l.s4 1983009808
    %v4534 = vunpack.c.0.s8 %v4533
    %v4535 = vlaneseq
    %v4536 = vshrl.u32 %v4535, 7
    %v4537 = vsub.s32 %v4534, %v4536
    %v4538 = vrot.slane %v4524, %v4537
    %v4539 = vcombine.low %v4531, %v4538
    %v4540 = vcombine.low %v3646, %v3660
    %v4541 = vcombine.low %v3674, %v4226
    %v4543 = vunpack.c.l.s4 1983009808
    %v4544 = vunpack.c.0.s8 %v4543
    %v4545 = vlaneseq
    %v4546 = vshrl.u32 %v4545, 7
    %v4547 = vsub.s32 %v4544, %v4546
    %v4548 = vrot.slane %v4540, %v4547
    %v4550 = vunpack.c.l.s4 1983009808
    %v4551 = vunpack.c.0.s8 %v4550
    %v4552 = vlaneseq
    %v4553 = vshrl.u32 %v4552, 7
    %v4554 = vsub.s32 %v4551, %v4553
    %v4555 = vrot.slane %v4541, %v4554
    %v4556 = vcombine.low %v4548, %v4555
    %4557 = vrot.lane.b32.xlu0 %v4539, 64
    %v4558 = vpop.permute.xlu0 %4557
    %4559 = vrot.lane.b32.xlu0 %v4556, 64
    %v4560 = vpop.permute.xlu0 %4559
    %v4561 = vcombine.low %v3742, %v3756
    %v4562 = vcombine.low %v3770, %v4258
    %v4564 = vunpack.c.l.s4 1983009808
    %v4565 = vunpack.c.0.s8 %v4564
    %v4566 = vlaneseq
    %v4567 = vshrl.u32 %v4566, 7
    %v4568 = vsub.s32 %v4565, %v4567
    %v4569 = vrot.slane %v4561, %v4568
    %v4571 = vunpack.c.l.s4 1983009808
    %v4572 = vunpack.c.0.s8 %v4571
    %v4573 = vlaneseq
    %v4574 = vshrl.u32 %v4573, 7
    %v4575 = vsub.s32 %v4572, %v4574
    %v4576 = vrot.slane %v4562, %v4575
    %v4577 = vcombine.low %v4569, %v4576
    %v4578 = vcombine.low %v3784, %v3798
    %v4579 = vcombine.low %v3812, %v4272
    %v4581 = vunpack.c.l.s4 1983009808
    %v4582 = vunpack.c.0.s8 %v4581
    %v4583 = vlaneseq
    %v4584 = vshrl.u32 %v4583, 7
    %v4585 = vsub.s32 %v4582, %v4584
    %v4586 = vrot.slane %v4578, %v4585
    %v4588 = vunpack.c.l.s4 1983009808
    %v4589 = vunpack.c.0.s8 %v4588
    %v4590 = vlaneseq
    %v4591 = vshrl.u32 %v4590, 7
    %v4592 = vsub.s32 %v4589, %v4591
    %v4593 = vrot.slane %v4579, %v4592
    %v4594 = vcombine.low %v4586, %v4593
    %v4597 = vsel %vm2954, %v4289, %v4342
    %v4601 = vsel %vm2954, %v4306, %v4344
    %v4605 = vsel %vm2954, %v4361, %v4414
    %v4609 = vsel %vm2954, %v4378, %v4416
    %v4613 = vsel %vm2954, %v4433, %v4486
    %v4617 = vsel %vm2954, %v4450, %v4488
    %v4621 = vsel %vm2954, %v4505, %v4558
    %v4625 = vsel %vm2954, %v4522, %v4560
    %v4627 = vrot.slane %v3549, 7
    %v4628 = vrot.slane %v4627, 2
    %v4629 = vrot.slane %v3550, 7
    %v4630 = vsel %vm1367, %v4628, %v4629
    %v4631 = vrot.slane %v3557, 7
    %v4632 = vrot.slane %v4631, 2
    %v4633 = vrot.slane %v3558, 7
    %v4634 = vsel %vm1367, %v4632, %v4633
    %v4635 = vrot.slane %v3565, 7
    %v4636 = vrot.slane %v4635, 2
    %v4637 = vrot.slane %v3566, 7
    %v4638 = vsel %vm1367, %v4636, %v4637
    %v4639 = vrot.slane %v3573, 7
    %v4640 = vrot.slane %v4639, 2
    %v4641 = vrot.slane %v3574, 7
    %v4642 = vsel %vm1367, %v4640, %v4641
    %v4643 = vrot.slane %v3581, 7
    %v4644 = vrot.slane %v4643, 2
    %v4645 = vrot.slane %v3582, 7
    %v4646 = vsel %vm1367, %v4644, %v4645
    %v4647 = vrot.slane %v3589, 7
    %v4648 = vrot.slane %v4647, 2
    %v4649 = vrot.slane %v3590, 7
    %v4650 = vsel %vm1367, %v4648, %v4649
    %v4651 = vrot.slane %v3827, 7
    %v4652 = vrot.slane %v4651, 2
    %v4653 = vrot.slane %v3828, 7
    %v4654 = vsel %vm1367, %v4652, %v4653
    %v4655 = vrot.slane %v3835, 7
    %v4656 = vrot.slane %v4655, 2
    %v4657 = vrot.slane %v3836, 7
    %v4658 = vsel %vm1367, %v4656, %v4657
    %v4659 = vrot.slane %v3843, 7
    %v4660 = vrot.slane %v4659, 2
    %v4661 = vrot.slane %v3844, 7
    %v4662 = vsel %vm1367, %v4660, %v4661
    %v4663 = vrot.slane %v3851, 7
    %v4664 = vrot.slane %v4663, 2
    %v4665 = vrot.slane %v3852, 7
    %v4666 = vsel %vm1367, %v4664, %v4665
    %v4667 = vrot.slane %v3859, 7
    %v4668 = vrot.slane %v4667, 2
    %v4669 = vrot.slane %v3860, 7
    %v4670 = vsel %vm1367, %v4668, %v4669
    %v4671 = vrot.slane %v3867, 7
    %v4672 = vrot.slane %v4671, 2
    %v4673 = vrot.slane %v3868, 7
    %v4674 = vsel %vm1367, %v4672, %v4673
    %v4675 = vrot.slane %v3875, 7
    %v4676 = vrot.slane %v4675, 2
    %v4677 = vrot.slane %v3876, 7
    %v4678 = vsel %vm1367, %v4676, %v4677
    %v4679 = vrot.slane %v3883, 7
    %v4680 = vrot.slane %v4679, 2
    %v4681 = vrot.slane %v3884, 7
    %v4682 = vsel %vm1367, %v4680, %v4681
    %v4683 = vrot.slane %v4189, 7
    %v4684 = vrot.slane %v4683, 2
    %v4685 = vrot.slane %v4190, 7
    %v4686 = vsel %vm1367, %v4684, %v4685
    %v4687 = vrot.slane %v4197, 7
    %v4688 = vrot.slane %v4687, 2
    %v4689 = vrot.slane %v4198, 7
    %v4690 = vsel %vm1367, %v4688, %v4689
    %4691 = vrot.lane.b32.xlu0 %v4361, 64
    %v4692 = vpop.permute.xlu0 %4691
    %4693 = vrot.lane.b32.xlu0 %v4378, 64
    %v4694 = vpop.permute.xlu0 %4693
    %v4695 = vcombine.low %v1371, %v4630
    %v4696 = vcombine.low %v4634, %v4638
    %v4698 = vunpack.c.l.s4 1983009808
    %v4699 = vunpack.c.0.s8 %v4698
    %v4700 = vlaneseq
    %v4701 = vshrl.u32 %v4700, 7
    %v4702 = vsub.s32 %v4699, %v4701
    %v4703 = vrot.slane %v4695, %v4702
    %v4705 = vunpack.c.l.s4 1983009808
    %v4706 = vunpack.c.0.s8 %v4705
    %v4707 = vlaneseq
    %v4708 = vshrl.u32 %v4707, 7
    %v4709 = vsub.s32 %v4706, %v4708
    %v4710 = vrot.slane %v4696, %v4709
    %v4711 = vcombine.low %v4703, %v4710
    %v4712 = vcombine.low %v1371, %v4642
    %v4713 = vcombine.low %v4646, %v4650
    %v4715 = vunpack.c.l.s4 1983009808
    %v4716 = vunpack.c.0.s8 %v4715
    %v4717 = vlaneseq
    %v4718 = vshrl.u32 %v4717, 7
    %v4719 = vsub.s32 %v4716, %v4718
    %v4720 = vrot.slane %v4712, %v4719
    %v4722 = vunpack.c.l.s4 1983009808
    %v4723 = vunpack.c.0.s8 %v4722
    %v4724 = vlaneseq
    %v4725 = vshrl.u32 %v4724, 7
    %v4726 = vsub.s32 %v4723, %v4725
    %v4727 = vrot.slane %v4713, %v4726
    %v4728 = vcombine.low %v4720, %v4727
    %4729 = vrot.lane.b32.xlu0 %v4433, 64
    %v4730 = vpop.permute.xlu0 %4729
    %4731 = vrot.lane.b32.xlu0 %v4450, 64
    %v4732 = vpop.permute.xlu0 %4731
    %v4733 = vcombine.low %v4654, %v4658
    %v4734 = vcombine.low %v4662, %v4666
    %v4736 = vunpack.c.l.s4 1983009808
    %v4737 = vunpack.c.0.s8 %v4736
    %v4738 = vlaneseq
    %v4739 = vshrl.u32 %v4738, 7
    %v4740 = vsub.s32 %v4737, %v4739
    %v4741 = vrot.slane %v4733, %v4740
    %v4743 = vunpack.c.l.s4 1983009808
    %v4744 = vunpack.c.0.s8 %v4743
    %v4745 = vlaneseq
    %v4746 = vshrl.u32 %v4745, 7
    %v4747 = vsub.s32 %v4744, %v4746
    %v4748 = vrot.slane %v4734, %v4747
    %v4749 = vcombine.low %v4741, %v4748
    %v4750 = vcombine.low %v4670, %v4674
    %v4751 = vcombine.low %v4678, %v4682
    %v4753 = vunpack.c.l.s4 1983009808
    %v4754 = vunpack.c.0.s8 %v4753
    %v4755 = vlaneseq
    %v4756 = vshrl.u32 %v4755, 7
    %v4757 = vsub.s32 %v4754, %v4756
    %v4758 = vrot.slane %v4750, %v4757
    %v4760 = vunpack.c.l.s4 1983009808
    %v4761 = vunpack.c.0.s8 %v4760
    %v4762 = vlaneseq
    %v4763 = vshrl.u32 %v4762, 7
    %v4764 = vsub.s32 %v4761, %v4763
    %v4765 = vrot.slane %v4751, %v4764
    %v4766 = vcombine.low %v4758, %v4765
    %4767 = vrot.lane.b32.xlu0 %v4749, 64
    %v4768 = vpop.permute.xlu0 %4767
    %4769 = vrot.lane.b32.xlu0 %v4766, 64
    %v4770 = vpop.permute.xlu0 %4769
    %4771 = vrot.lane.b32.xlu0 %v4577, 64
    %v4772 = vpop.permute.xlu0 %4771
    %4773 = vrot.lane.b32.xlu0 %v4594, 64
    %v4774 = vpop.permute.xlu0 %4773
    %v4775 = vcombine.low %v4630, %v4634
    %v4776 = vcombine.low %v4638, %v4686
    %v4778 = vunpack.c.l.s4 1983009808
    %v4779 = vunpack.c.0.s8 %v4778
    %v4780 = vlaneseq
    %v4781 = vshrl.u32 %v4780, 7
    %v4782 = vsub.s32 %v4779, %v4781
    %v4783 = vrot.slane %v4775, %v4782
    %v4785 = vunpack.c.l.s4 1983009808
    %v4786 = vunpack.c.0.s8 %v4785
    %v4787 = vlaneseq
    %v4788 = vshrl.u32 %v4787, 7
    %v4789 = vsub.s32 %v4786, %v4788
    %v4790 = vrot.slane %v4776, %v4789
    %v4791 = vcombine.low %v4783, %v4790
    %v4792 = vcombine.low %v4642, %v4646
    %v4793 = vcombine.low %v4650, %v4690
    %v4795 = vunpack.c.l.s4 1983009808
    %v4796 = vunpack.c.0.s8 %v4795
    %v4797 = vlaneseq
    %v4798 = vshrl.u32 %v4797, 7
    %v4799 = vsub.s32 %v4796, %v4798
    %v4800 = vrot.slane %v4792, %v4799
    %v4802 = vunpack.c.l.s4 1983009808
    %v4803 = vunpack.c.0.s8 %v4802
    %v4804 = vlaneseq
    %v4805 = vshrl.u32 %v4804, 7
    %v4806 = vsub.s32 %v4803, %v4805
    %v4807 = vrot.slane %v4793, %v4806
    %v4808 = vcombine.low %v4800, %v4807
    %v4811 = vsel %vm2954, %v4323, %v4692
    %v4815 = vsel %vm2954, %v4340, %v4694
    %v4819 = vsel %vm2954, %v4711, %v4730
    %v4823 = vsel %vm2954, %v4728, %v4732
    %v4827 = vsel %vm2954, %v4467, %v4768
    %v4831 = vsel %vm2954, %v4484, %v4770
    %v4835 = vsel %vm2954, %v4539, %v4772
    %v4839 = vsel %vm2954, %v4556, %v4774
    %4841 = vrot.lane.b32.xlu0 %v4505, 64
    %v4842 = vpop.permute.xlu0 %4841
    %4843 = vrot.lane.b32.xlu0 %v4522, 64
    %v4844 = vpop.permute.xlu0 %4843
    %v4845 = vcombine.low %v3262, %v3263
    %v4846 = vcombine.low %v3264, %v1185
    %v4848 = vunpack.c.l.s4 1983009808
    %v4849 = vunpack.c.0.s8 %v4848
    %v4850 = vlaneseq
    %v4851 = vshrl.u32 %v4850, 7
    %v4852 = vsub.s32 %v4849, %v4851
    %v4853 = vrot.slane %v4845, %v4852
    %v4855 = vunpack.c.l.s4 1983009808
    %v4856 = vunpack.c.0.s8 %v4855
    %v4857 = vlaneseq
    %v4858 = vshrl.u32 %v4857, 7
    %v4859 = vsub.s32 %v4856, %v4858
    %v4860 = vrot.slane %v4846, %v4859
    %v4861 = vcombine.low %v4853, %v4860
    %v4862 = vcombine.low %v3266, %v3267
    %v4863 = vcombine.low %v3268, %v1185
    %v4865 = vunpack.c.l.s4 1983009808
    %v4866 = vunpack.c.0.s8 %v4865
    %v4867 = vlaneseq
    %v4868 = vshrl.u32 %v4867, 7
    %v4869 = vsub.s32 %v4866, %v4868
    %v4870 = vrot.slane %v4862, %v4869
    %v4872 = vunpack.c.l.s4 1983009808
    %v4873 = vunpack.c.0.s8 %v4872
    %v4874 = vlaneseq
    %v4875 = vshrl.u32 %v4874, 7
    %v4876 = vsub.s32 %v4873, %v4875
    %v4877 = vrot.slane %v4863, %v4876
    %v4878 = vcombine.low %v4870, %v4877
    %v4879 = vcombine.low %v3912, %v3926
    %v4880 = vcombine.low %v3940, %v1277
    %v4882 = vunpack.c.l.s4 1983009808
    %v4883 = vunpack.c.0.s8 %v4882
    %v4884 = vlaneseq
    %v4885 = vshrl.u32 %v4884, 7
    %v4886 = vsub.s32 %v4883, %v4885
    %v4887 = vrot.slane %v4879, %v4886
    %v4889 = vunpack.c.l.s4 1983009808
    %v4890 = vunpack.c.0.s8 %v4889
    %v4891 = vlaneseq
    %v4892 = vshrl.u32 %v4891, 7
    %v4893 = vsub.s32 %v4890, %v4892
    %v4894 = vrot.slane %v4880, %v4893
    %v4895 = vcombine.low %v4887, %v4894
    %v4896 = vcombine.low %v3968, %v3982
    %v4897 = vcombine.low %v3996, %v1277
    %v4899 = vunpack.c.l.s4 1983009808
    %v4900 = vunpack.c.0.s8 %v4899
    %v4901 = vlaneseq
    %v4902 = vshrl.u32 %v4901, 7
    %v4903 = vsub.s32 %v4900, %v4902
    %v4904 = vrot.slane %v4896, %v4903
    %v4906 = vunpack.c.l.s4 1983009808
    %v4907 = vunpack.c.0.s8 %v4906
    %v4908 = vlaneseq
    %v4909 = vshrl.u32 %v4908, 7
    %v4910 = vsub.s32 %v4907, %v4909
    %v4911 = vrot.slane %v4897, %v4910
    %v4912 = vcombine.low %v4904, %v4911
    %4913 = vrot.lane.b32.xlu0 %v4895, 64
    %v4914 = vpop.permute.xlu0 %4913
    %4915 = vrot.lane.b32.xlu0 %v4912, 64
    %v4916 = vpop.permute.xlu0 %4915
    %v4917 = vcombine.low %v4096, %v4110
    %v4918 = vcombine.low %v4124, %v1277
    %v4920 = vunpack.c.l.s4 1983009808
    %v4921 = vunpack.c.0.s8 %v4920
    %v4922 = vlaneseq
    %v4923 = vshrl.u32 %v4922, 7
    %v4924 = vsub.s32 %v4921, %v4923
    %v4925 = vrot.slane %v4917, %v4924
    %v4927 = vunpack.c.l.s4 1983009808
    %v4928 = vunpack.c.0.s8 %v4927
    %v4929 = vlaneseq
    %v4930 = vshrl.u32 %v4929, 7
    %v4931 = vsub.s32 %v4928, %v4930
    %v4932 = vrot.slane %v4918, %v4931
    %v4933 = vcombine.low %v4925, %v4932
    %v4934 = vcombine.low %v4152, %v4166
    %v4935 = vcombine.low %v4180, %v1277
    %v4937 = vunpack.c.l.s4 1983009808
    %v4938 = vunpack.c.0.s8 %v4937
    %v4939 = vlaneseq
    %v4940 = vshrl.u32 %v4939, 7
    %v4941 = vsub.s32 %v4938, %v4940
    %v4942 = vrot.slane %v4934, %v4941
    %v4944 = vunpack.c.l.s4 1983009808
    %v4945 = vunpack.c.0.s8 %v4944
    %v4946 = vlaneseq
    %v4947 = vshrl.u32 %v4946, 7
    %v4948 = vsub.s32 %v4945, %v4947
    %v4949 = vrot.slane %v4935, %v4948
    %v4950 = vcombine.low %v4942, %v4949
    %v4952 = vsel %vm2954, %v4395, %v4730
    %v4955 = vsel %vm2954, %v4412, %v4732
    %v4958 = vsel %vm2954, %v4467, %v4842
    %v4961 = vsel %vm2954, %v4484, %v4844
    %v4965 = vsel %vm2954, %v4861, %v4914
    %v4969 = vsel %vm2954, %v4878, %v4916
    %4971 = vrot.lane.b32.xlu0 %v4791, 64
    %v4972 = vpop.permute.xlu0 %4971
    %4973 = vrot.lane.b32.xlu0 %v4808, 64
    %v4974 = vpop.permute.xlu0 %4973
    %4975 = vrot.lane.b32.xlu0 %v4933, 64
    %v4976 = vpop.permute.xlu0 %4975
    %4977 = vrot.lane.b32.xlu0 %v4950, 64
    %v4978 = vpop.permute.xlu0 %4977
    %v4979 = vcombine.low %v4658, %v4662
    %v4980 = vcombine.low %v4666, %v1371
    %v4982 = vunpack.c.l.s4 1983009808
    %v4983 = vunpack.c.0.s8 %v4982
    %v4984 = vlaneseq
    %v4985 = vshrl.u32 %v4984, 7
    %v4986 = vsub.s32 %v4983, %v4985
    %v4987 = vrot.slane %v4979, %v4986
    %v4989 = vunpack.c.l.s4 1983009808
    %v4990 = vunpack.c.0.s8 %v4989
    %v4991 = vlaneseq
    %v4992 = vshrl.u32 %v4991, 7
    %v4993 = vsub.s32 %v4990, %v4992
    %v4994 = vrot.slane %v4980, %v4993
    %v4995 = vcombine.low %v4987, %v4994
    %v4996 = vcombine.low %v4674, %v4678
    %v4997 = vcombine.low %v4682, %v1371
    %v4999 = vunpack.c.l.s4 1983009808
    %v5000 = vunpack.c.0.s8 %v4999
    %v5001 = vlaneseq
    %v5002 = vshrl.u32 %v5001, 7
    %v5003 = vsub.s32 %v5000, %v5002
    %v5004 = vrot.slane %v4996, %v5003
    %v5006 = vunpack.c.l.s4 1983009808
    %v5007 = vunpack.c.0.s8 %v5006
    %v5008 = vlaneseq
    %v5009 = vshrl.u32 %v5008, 7
    %v5010 = vsub.s32 %v5007, %v5009
    %v5011 = vrot.slane %v4997, %v5010
    %v5012 = vcombine.low %v5004, %v5011
    %v5014 = vsel %vm2954, %v4749, %v4558
    %v5017 = vsel %vm2954, %v4766, %v4560
    %v5021 = vsel %vm2954, %v4577, %v4972
    %v5025 = vsel %vm2954, %v4594, %v4974
    %v5029 = vsel %vm2954, %v4895, %v4976
    %v5033 = vsel %vm2954, %v4912, %v4978
    %v5035 = vld [vmem:[#allocation15] sm:$0xf]
    %v5036 = vld [vmem:[#allocation15 + $0x4] sm:$0xf]
    %v5037 = vld [vmem:[#allocation15 + $0x8] sm:$0xf]
    %v5038 = vld [vmem:[#allocation15 + $0xc] sm:$0xf]
    %v5039 = vld [vmem:[#allocation15 + $0x10] sm:$0xf]
    %v5040 = vld [vmem:[#allocation15 + $0x14] sm:$0xf]
    %v5041 = vld [vmem:[#allocation15 + $0x18] sm:$0xf]
    %v5042 = vld [vmem:[#allocation15 + $0x1c] sm:$0xf]
    %v5043 = vld [vmem:[#allocation15 + $0x20] sm:$0xf]
    %v5044 = vld [vmem:[#allocation15 + $0x24] sm:$0xf]
    %v5045 = vld [vmem:[#allocation15 + $0x28] sm:$0xf]
    %v5046 = vld [vmem:[#allocation15 + $0x2c] sm:$0xf]
    %v5047 = vld [vmem:[#allocation15 + $0x30] sm:$0xf]
    %v5048 = vld [vmem:[#allocation15 + $0x34] sm:$0xf]
    %v5049 = vld [vmem:[#allocation15 + $0x38] sm:$0xf]
    %v5050 = vld [vmem:[#allocation15 + $0x3c] sm:$0xf]
    %v5051 = vld [vmem:[#allocation15 + $0x40] sm:$0xf]
    %v5052 = vld [vmem:[#allocation15 + $0x44] sm:$0xf]
    %v5053 = vld [vmem:[#allocation15 + $0x48] sm:$0xf]
    %v5054 = vld [vmem:[#allocation15 + $0x4c] sm:$0xf]
    %v5055 = vld [vmem:[#allocation15 + $0x50] sm:$0xf]
    %v5056 = vld [vmem:[#allocation15 + $0x54] sm:$0xf]
    %v5057 = vld [vmem:[#allocation15 + $0x58] sm:$0xf]
    %v5058 = vld [vmem:[#allocation15 + $0x5c] sm:$0xf]
    %v5059 = vld [vmem:[#allocation15 + $0x60] sm:$0xf]
    %v5060 = vld [vmem:[#allocation15 + $0x64] sm:$0xf]
    %v5061 = vld [vmem:[#allocation15 + $0x68] sm:$0xf]
    %v5062 = vld [vmem:[#allocation15 + $0x6c] sm:$0xf]
    %v5063 = vld [vmem:[#allocation15 + $0x70] sm:$0xf]
    %v5064 = vld [vmem:[#allocation15 + $0x74] sm:$0xf]
    %v5065 = vld [vmem:[#allocation15 + $0x78] sm:$0xf]
    %v5066 = vld [vmem:[#allocation15 + $0x7c] sm:$0xf]
    %v5067 = vld [vmem:[#allocation15 + $0x80] sm:$0xf]
    %v5068 = vld [vmem:[#allocation15 + $0x84] sm:$0xf]
    %v5069 = vld [vmem:[#allocation15 + $0x88] sm:$0xf]
    %v5070 = vld [vmem:[#allocation15 + $0x8c] sm:$0xf]
    %v5071 = vld [vmem:[#allocation15 + $0x90] sm:$0xf]
    %v5072 = vld [vmem:[#allocation15 + $0x94] sm:$0xf]
    %v5073 = vld [vmem:[#allocation15 + $0x98] sm:$0xf]
    %v5074 = vld [vmem:[#allocation15 + $0x9c] sm:$0xf]
    %v5075 = vld [vmem:[#allocation15 + $0xa0] sm:$0xf]
    %v5076 = vld [vmem:[#allocation15 + $0xa4] sm:$0xf]
    %v5077 = vld [vmem:[#allocation15 + $0xa8] sm:$0xf]
    %v5078 = vld [vmem:[#allocation15 + $0xac] sm:$0xf]
    %v5079 = vld [vmem:[#allocation15 + $0xb0] sm:$0xf]
    %v5080 = vld [vmem:[#allocation15 + $0xb4] sm:$0xf]
    %v5081 = vld [vmem:[#allocation15 + $0xb8] sm:$0xf]
    %v5082 = vld [vmem:[#allocation15 + $0xbc] sm:$0xf]
    %v5083 = vld [vmem:[#allocation15 + $0xc0] sm:$0xf]
    %v5084 = vld [vmem:[#allocation15 + $0xc4] sm:$0xf]
    %v5085 = vld [vmem:[#allocation15 + $0xc8] sm:$0xf]
    %v5086 = vld [vmem:[#allocation15 + $0xcc] sm:$0xf]
    %v5087 = vld [vmem:[#allocation15 + $0xd0] sm:$0xf]
    %v5088 = vld [vmem:[#allocation15 + $0xd4] sm:$0xf]
    %v5089 = vld [vmem:[#allocation15 + $0xd8] sm:$0xf]
    %v5090 = vld [vmem:[#allocation15 + $0xdc] sm:$0xf]
    %v5091 = vld [vmem:[#allocation15 + $0xe0] sm:$0xf]
    %v5092 = vld [vmem:[#allocation15 + $0xe4] sm:$0xf]
    %v5093 = vld [vmem:[#allocation15 + $0xe8] sm:$0xf]
    %v5094 = vld [vmem:[#allocation15 + $0xec] sm:$0xf]
    %v5095 = vld [vmem:[#allocation15 + $0xf0] sm:$0xf]
    %v5096 = vld [vmem:[#allocation15 + $0xf4] sm:$0xf]
    %v5097 = vld [vmem:[#allocation15 + $0xf8] sm:$0xf]
    %v5098 = vld [vmem:[#allocation15 + $0xfc] sm:$0xf]
    %v5099 = vld [vmem:[#allocation15 + $0x100] sm:$0xf]
    %v5100 = vld [vmem:[#allocation15 + $0x104] sm:$0xf]
    %v5101 = vld [vmem:[#allocation15 + $0x108] sm:$0xf]
    %v5102 = vld [vmem:[#allocation15 + $0x10c] sm:$0xf]
    %v5103 = vld [vmem:[#allocation15 + $0x110] sm:$0xf]
    %v5104 = vld [vmem:[#allocation15 + $0x114] sm:$0xf]
    %v5105 = vld [vmem:[#allocation15 + $0x118] sm:$0xf]
    %v5106 = vld [vmem:[#allocation15 + $0x11c] sm:$0xf]
    %v5107 = vld [vmem:[#allocation16] sm:$0x1]
    %v5109 = vlaneseq
    %v5110 = vshrl.u32 %v5109, 7
    %v5111 = vsub.s32 0, %v5110
    %v5112 = vrot.slane %v5107, %v5111
    %v5186 = vunpack.c.l.b16 %v5035
    %v5187 = vunpack.c.l.b16 %v5036
    %v5188 = vunpack.c.l.b16 %v5037
    %v5189 = vunpack.c.l.b16 %v5038
    %v5190 = vunpack.c.l.b16 %v5039
    %v5191 = vunpack.c.l.b16 %v5040
    %v5192 = vunpack.c.l.b16 %v5041
    %v5193 = vunpack.c.l.b16 %v5042
    %v5194 = vunpack.c.l.b16 %v5043
    %v5195 = vunpack.c.l.b16 %v5044
    %v5196 = vunpack.c.l.b16 %v5045
    %v5197 = vunpack.c.l.b16 %v5046
    %v5198 = vunpack.c.l.b16 %v5047
    %v5199 = vunpack.c.l.b16 %v5048
    %v5200 = vunpack.c.l.b16 %v5049
    %v5201 = vunpack.c.l.b16 %v5050
    %v5202 = vunpack.c.l.b16 %v5051
    %v5203 = vunpack.c.l.b16 %v5052
    %v5204 = vunpack.c.l.b16 %v5053
    %v5205 = vunpack.c.l.b16 %v5054
    %v5206 = vunpack.c.l.b16 %v5055
    %v5207 = vunpack.c.l.b16 %v5056
    %v5208 = vunpack.c.l.b16 %v5057
    %v5209 = vunpack.c.l.b16 %v5058
    %v5210 = vunpack.c.l.b16 %v5059
    %v5211 = vunpack.c.l.b16 %v5060
    %v5212 = vunpack.c.l.b16 %v5061
    %v5213 = vunpack.c.l.b16 %v5062
    %v5214 = vunpack.c.l.b16 %v5063
    %v5215 = vunpack.c.l.b16 %v5064
    %v5216 = vunpack.c.l.b16 %v5065
    %v5217 = vunpack.c.l.b16 %v5066
    %v5218 = vunpack.c.l.b16 %v5067
    %v5219 = vunpack.c.l.b16 %v5068
    %v5220 = vunpack.c.l.b16 %v5069
    %v5221 = vunpack.c.l.b16 %v5070
    %v5222 = vunpack.c.l.b16 %v5071
    %v5223 = vunpack.c.l.b16 %v5072
    %v5224 = vunpack.c.l.b16 %v5073
    %v5225 = vunpack.c.l.b16 %v5074
    %v5226 = vunpack.c.l.b16 %v5075
    %v5227 = vunpack.c.l.b16 %v5076
    %v5228 = vunpack.c.l.b16 %v5077
    %v5229 = vunpack.c.l.b16 %v5078
    %v5230 = vunpack.c.l.b16 %v5079
    %v5231 = vunpack.c.l.b16 %v5080
    %v5232 = vunpack.c.l.b16 %v5081
    %v5233 = vunpack.c.l.b16 %v5082
    %v5234 = vunpack.c.l.b16 %v5083
    %v5235 = vunpack.c.l.b16 %v5084
    %v5236 = vunpack.c.l.b16 %v5085
    %v5237 = vunpack.c.l.b16 %v5086
    %v5238 = vunpack.c.l.b16 %v5087
    %v5239 = vunpack.c.l.b16 %v5088
    %v5240 = vunpack.c.l.b16 %v5089
    %v5241 = vunpack.c.l.b16 %v5090
    %v5242 = vunpack.c.l.b16 %v5091
    %v5243 = vunpack.c.l.b16 %v5092
    %v5244 = vunpack.c.l.b16 %v5093
    %v5245 = vunpack.c.l.b16 %v5094
    %v5246 = vunpack.c.l.b16 %v5095
    %v5247 = vunpack.c.l.b16 %v5096
    %v5248 = vunpack.c.l.b16 %v5097
    %v5249 = vunpack.c.l.b16 %v5098
    %v5250 = vunpack.c.l.b16 %v5099
    %v5251 = vunpack.c.l.b16 %v5100
    %v5252 = vunpack.c.l.b16 %v5101
    %v5253 = vunpack.c.l.b16 %v5102
    %v5254 = vunpack.c.l.b16 %v5103
    %v5255 = vunpack.c.l.b16 %v5104
    %v5256 = vunpack.c.l.b16 %v5105
    %v5257 = vunpack.c.l.b16 %v5106
    %v5258 = vpack.c.b16 %v5187, %v5186
    %v5259 = vpack.c.b16 %v5189, %v5188
    %v5260 = vpack.c.b16 %v5191, %v5190
    %v5261 = vpack.c.b16 %v5193, %v5192
    %v5262 = vpack.c.b16 %v5195, %v5194
    %v5263 = vpack.c.b16 %v5197, %v5196
    %v5264 = vpack.c.b16 %v5199, %v5198
    %v5265 = vpack.c.b16 %v5201, %v5200
    %v5266 = vpack.c.b16 %v5203, %v5202
    %v5267 = vpack.c.b16 %v5205, %v5204
    %v5268 = vpack.c.b16 %v5207, %v5206
    %v5269 = vpack.c.b16 %v5209, %v5208
    %v5270 = vpack.c.b16 %v5211, %v5210
    %v5271 = vpack.c.b16 %v5213, %v5212
    %v5272 = vpack.c.b16 %v5215, %v5214
    %v5273 = vpack.c.b16 %v5217, %v5216
    %v5274 = vpack.c.b16 %v5219, %v5218
    %v5275 = vpack.c.b16 %v5221, %v5220
    %v5276 = vpack.c.b16 %v5223, %v5222
    %v5277 = vpack.c.b16 %v5225, %v5224
    %v5278 = vpack.c.b16 %v5227, %v5226
    %v5279 = vpack.c.b16 %v5229, %v5228
    %v5280 = vpack.c.b16 %v5231, %v5230
    %v5281 = vpack.c.b16 %v5233, %v5232
    %v5282 = vpack.c.b16 %v5235, %v5234
    %v5283 = vpack.c.b16 %v5237, %v5236
    %v5284 = vpack.c.b16 %v5239, %v5238
    %v5285 = vpack.c.b16 %v5241, %v5240
    %v5286 = vpack.c.b16 %v5243, %v5242
    %v5287 = vpack.c.b16 %v5245, %v5244
    %v5288 = vpack.c.b16 %v5247, %v5246
    %v5289 = vpack.c.b16 %v5249, %v5248
    %v5290 = vpack.c.b16 %v5251, %v5250
    %v5291 = vpack.c.b16 %v5253, %v5252
    %v5292 = vpack.c.b16 %v5255, %v5254
    %v5293 = vpack.c.b16 %v5257, %v5256
    %v5330 = vsel %vm2954, %v4577, 0
    %v5332 = vsel %vm2954, %v4594, 0
    %v5335 = vsel %vm2954, %v4791, 0
    %v5338 = vsel %vm2954, %v4808, 0
    %v5341 = vsel %vm2954, %v4933, 0
    %v5344 = vsel %vm2954, %v4950, 0
    %v5347 = vsel %vm2954, %v4995, 0
    %v5350 = vsel %vm2954, %v5012, 0
    %5352 = vmatprep.subr.bf16.mxu0 0
    %5353 = vmatpush1.bf16.msra.mxu0 %v5265
    %5354 = vmatprep.subr.bf16.mxu0 0
    %5355 = vmatpush1.bf16.msra.mxu0 %v5264
    %5356 = vmatprep.subr.bf16.mxu0 0
    %5357 = vmatpush1.bf16.msra.mxu0 %v5263
    %5358 = vmatprep.subr.bf16.mxu0 0
    %5359 = vmatpush1.bf16.msra.mxu0 %v5262
    %5360 = vmatprep.subr.bf16.mxu0 0
    %5361 = vmatpush1.bf16.msra.mxu0 %v5261
    %5362 = vmatprep.subr.bf16.mxu0 0
    %5363 = vmatpush1.bf16.msra.mxu0 %v5260
    %5364 = vmatprep.subr.bf16.mxu0 0
    %5365 = vmatpush1.bf16.msra.mxu0 %v5259
    %5366 = vmatprep.subr.bf16.mxu0 0
    %5367 = vmatpush1.bf16.msra.mxu0 %v5258
    %5368 = vmatprep.subr.bf16.mxu0 0
    %5369 = vmatpush2.bf16.msra.mxu0 %v5273
    %5370 = vmatprep.subr.bf16.mxu0 0
    %5371 = vmatpush2.bf16.msra.mxu0 %v5272
    %5372 = vmatprep.subr.bf16.mxu0 0
    %5373 = vmatpush2.bf16.msra.mxu0 %v5271
    %5374 = vmatprep.subr.bf16.mxu0 0
    %5375 = vmatpush2.bf16.msra.mxu0 %v5270
    %5376 = vmatprep.subr.bf16.mxu0 0
    %5377 = vmatpush2.bf16.msra.mxu0 %v5269
    %5378 = vmatprep.subr.bf16.mxu0 0
    %5379 = vmatpush2.bf16.msra.mxu0 %v5268
    %5380 = vmatprep.subr.bf16.mxu0 0
    %5381 = vmatpush2.bf16.msra.mxu0 %v5267
    %5382 = vmatprep.subr.bf16.mxu0 0
    %5383 = vmatpush2.bf16.msra.mxu0 %v5266
    %5384 = vmatprep.mubr.bf16.mxu0 %v4605
    %5385 = vmatmul.mubr.bf16.gmra.mxu0 %v4597
    %v5386 = vpop.f32.mrf.mxu0
    %v5387 = vadd.f32 %v5112, %v5386
    %v5388 = vpop.f32.mrf.mxu0
    %v5389 = vpop.f32.mrf.mxu0
    %v5390 = vadd.f32 %v5112, %v5389
    %v5391 = vpop.f32.mrf.mxu0
    %5392 = vmatprep.mubr.bf16.mxu0 %v4609
    %5393 = vmatmul.mubr.bf16.gmra.mxu0 %v4601
    %v5394 = vpop.f32.mrf.mxu0
    %v5395 = vadd.f32 %v5112, %v5394
    %v5396 = vpop.f32.mrf.mxu0
    %v5397 = vpop.f32.mrf.mxu0
    %v5398 = vadd.f32 %v5112, %v5397
    %v5399 = vpop.f32.mrf.mxu0
    %5400 = vmatprep.mubr.bf16.mxu0 %v4819
    %5401 = vmatmul.mubr.bf16.gmra.mxu0 %v4811
    %v5402 = vpop.f32.mrf.mxu0
    %v5403 = vadd.f32 %v5112, %v5402
    %v5404 = vpop.f32.mrf.mxu0
    %v5405 = vpop.f32.mrf.mxu0
    %v5406 = vadd.f32 %v5112, %v5405
    %v5407 = vpop.f32.mrf.mxu0
    %5408 = vmatprep.mubr.bf16.mxu0 %v4823
    %5409 = vmatmul.mubr.bf16.gmra.mxu0 %v4815
    %v5410 = vpop.f32.mrf.mxu0
    %v5411 = vadd.f32 %v5112, %v5410
    %v5412 = vpop.f32.mrf.mxu0
    %v5413 = vpop.f32.mrf.mxu0
    %v5414 = vadd.f32 %v5112, %v5413
    %v5415 = vpop.f32.mrf.mxu0
    %5416 = vmatprep.mubr.bf16.mxu0 %v4958
    %5417 = vmatmul.mubr.bf16.gmra.mxu0 %v4952
    %v5418 = vpop.f32.mrf.mxu0
    %v5419 = vadd.f32 %v5112, %v5418
    %v5420 = vpop.f32.mrf.mxu0
    %v5421 = vpop.f32.mrf.mxu0
    %v5422 = vadd.f32 %v5112, %v5421
    %v5423 = vpop.f32.mrf.mxu0
    %5424 = vmatprep.mubr.bf16.mxu0 %v4961
    %5425 = vmatmul.mubr.bf16.gmra.mxu0 %v4955
    %v5426 = vpop.f32.mrf.mxu0
    %v5427 = vadd.f32 %v5112, %v5426
    %v5428 = vpop.f32.mrf.mxu0
    %v5429 = vpop.f32.mrf.mxu0
    %v5430 = vadd.f32 %v5112, %v5429
    %v5431 = vpop.f32.mrf.mxu0
    %5432 = vmatprep.mubr.bf16.mxu0 %v5014
    %5433 = vmatmul.mubr.bf16.gmra.mxu0 %v4613
    %v5434 = vpop.f32.mrf.mxu0
    %v5435 = vadd.f32 %v5112, %v5434
    %v5436 = vpop.f32.mrf.mxu0
    %v5437 = vpop.f32.mrf.mxu0
    %v5438 = vadd.f32 %v5112, %v5437
    %v5439 = vpop.f32.mrf.mxu0
    %5440 = vmatprep.mubr.bf16.mxu0 %v5017
    %5441 = vmatmul.mubr.bf16.gmra.mxu0 %v4617
    %v5442 = vpop.f32.mrf.mxu0
    %v5443 = vadd.f32 %v5112, %v5442
    %v5444 = vpop.f32.mrf.mxu0
    %v5445 = vpop.f32.mrf.mxu0
    %v5446 = vadd.f32 %v5112, %v5445
    %v5447 = vpop.f32.mrf.mxu0
    %5448 = vdwg.mxu0
    %5449 = vmatprep.subr.bf16.mxu0 0
    %5450 = vmatpush1.bf16.msra.mxu0 %v5281
    %5451 = vmatprep.subr.bf16.mxu0 0
    %5452 = vmatpush1.bf16.msra.mxu0 %v5280
    %5453 = vmatprep.subr.bf16.mxu0 0
    %5454 = vmatpush1.bf16.msra.mxu0 %v5279
    %5455 = vmatprep.subr.bf16.mxu0 0
    %5456 = vmatpush1.bf16.msra.mxu0 %v5278
    %5457 = vmatprep.subr.bf16.mxu0 0
    %5458 = vmatpush1.bf16.msra.mxu0 %v5277
    %5459 = vmatprep.subr.bf16.mxu0 0
    %5460 = vmatpush1.bf16.msra.mxu0 %v5276
    %5461 = vmatprep.subr.bf16.mxu0 0
    %5462 = vmatpush1.bf16.msra.mxu0 %v5275
    %5463 = vmatprep.subr.bf16.mxu0 0
    %5464 = vmatpush1.bf16.msra.mxu0 %v5274
    %5465 = vmatprep.subr.bf16.mxu0 0
    %5466 = vmatpush2.bf16.msra.mxu0 %v5289
    %5467 = vmatprep.subr.bf16.mxu0 0
    %5468 = vmatpush2.bf16.msra.mxu0 %v5288
    %5469 = vmatprep.subr.bf16.mxu0 0
    %5470 = vmatpush2.bf16.msra.mxu0 %v5287
    %5471 = vmatprep.subr.bf16.mxu0 0
    %5472 = vmatpush2.bf16.msra.mxu0 %v5286
    %5473 = vmatprep.subr.bf16.mxu0 0
    %5474 = vmatpush2.bf16.msra.mxu0 %v5285
    %5475 = vmatprep.subr.bf16.mxu0 0
    %5476 = vmatpush2.bf16.msra.mxu0 %v5284
    %5477 = vmatprep.subr.bf16.mxu0 0
    %5478 = vmatpush2.bf16.msra.mxu0 %v5283
    %5479 = vmatprep.subr.bf16.mxu0 0
    %5480 = vmatpush2.bf16.msra.mxu0 %v5282
    %5481 = vmatprep.mubr.bf16.mxu0 %v4621
    %5482 = vmatmul.mubr.bf16.gmra.mxu0 %v4613
    %v5483 = vpop.f32.mrf.mxu0
    %v5484 = vadd.f32 %v5387, %v5483
    %v5485 = vpop.f32.mrf.mxu0
    %v5486 = vpop.f32.mrf.mxu0
    %v5487 = vadd.f32 %v5390, %v5486
    %v5488 = vpop.f32.mrf.mxu0
    %5489 = vmatprep.mubr.bf16.mxu0 %v4625
    %5490 = vmatmul.mubr.bf16.gmra.mxu0 %v4617
    %v5491 = vpop.f32.mrf.mxu0
    %v5492 = vadd.f32 %v5395, %v5491
    %v5493 = vpop.f32.mrf.mxu0
    %v5494 = vpop.f32.mrf.mxu0
    %v5495 = vadd.f32 %v5398, %v5494
    %v5496 = vpop.f32.mrf.mxu0
    %5497 = vmatprep.mubr.bf16.mxu0 %v4835
    %5498 = vmatmul.mubr.bf16.gmra.mxu0 %v4827
    %v5499 = vpop.f32.mrf.mxu0
    %v5500 = vadd.f32 %v5403, %v5499
    %v5501 = vpop.f32.mrf.mxu0
    %v5502 = vpop.f32.mrf.mxu0
    %v5503 = vadd.f32 %v5406, %v5502
    %v5504 = vpop.f32.mrf.mxu0
    %5505 = vmatprep.mubr.bf16.mxu0 %v4839
    %5506 = vmatmul.mubr.bf16.gmra.mxu0 %v4831
    %v5507 = vpop.f32.mrf.mxu0
    %v5508 = vadd.f32 %v5411, %v5507
    %v5509 = vpop.f32.mrf.mxu0
    %v5510 = vpop.f32.mrf.mxu0
    %v5511 = vadd.f32 %v5414, %v5510
    %v5512 = vpop.f32.mrf.mxu0
    %5513 = vmatprep.mubr.bf16.mxu0 %v4965
    %5514 = vmatmul.mubr.bf16.gmra.mxu0 %v4835
    %v5515 = vpop.f32.mrf.mxu0
    %v5516 = vadd.f32 %v5419, %v5515
    %v5517 = vpop.f32.mrf.mxu0
    %v5518 = vpop.f32.mrf.mxu0
    %v5519 = vadd.f32 %v5422, %v5518
    %v5520 = vpop.f32.mrf.mxu0
    %5521 = vmatprep.mubr.bf16.mxu0 %v4969
    %5522 = vmatmul.mubr.bf16.gmra.mxu0 %v4839
    %v5523 = vpop.f32.mrf.mxu0
    %v5524 = vadd.f32 %v5427, %v5523
    %v5525 = vpop.f32.mrf.mxu0
    %v5526 = vpop.f32.mrf.mxu0
    %v5527 = vadd.f32 %v5430, %v5526
    %v5528 = vpop.f32.mrf.mxu0
    %5529 = vmatprep.mubr.bf16.mxu0 %v5029
    %5530 = vmatmul.mubr.bf16.gmra.mxu0 %v5021
    %v5531 = vpop.f32.mrf.mxu0
    %v5532 = vadd.f32 %v5435, %v5531
    %v5533 = vpop.f32.mrf.mxu0
    %v5534 = vpop.f32.mrf.mxu0
    %v5535 = vadd.f32 %v5438, %v5534
    %v5536 = vpop.f32.mrf.mxu0
    %5537 = vmatprep.mubr.bf16.mxu0 %v5033
    %5538 = vmatmul.mubr.bf16.gmra.mxu0 %v5025
    %v5539 = vpop.f32.mrf.mxu0
    %v5540 = vadd.f32 %v5443, %v5539
    %v5541 = vpop.f32.mrf.mxu0
    %v5542 = vpop.f32.mrf.mxu0
    %v5543 = vadd.f32 %v5446, %v5542
    %v5544 = vpop.f32.mrf.mxu0
    %5545 = vdwg.mxu0
    %5546 = vmatprep.subr.bf16.mxu0 0
    %5547 = vmatpush1.bf16.msra.mxu0 0
    %5548 = vmatprep.subr.bf16.mxu0 0
    %5549 = vmatpush1.bf16.msra.mxu0 0
    %5550 = vmatprep.subr.bf16.mxu0 0
    %5551 = vmatpush1.bf16.msra.mxu0 0
    %5552 = vmatprep.subr.bf16.mxu0 0
    %5553 = vmatpush1.bf16.msra.mxu0 0
    %5554 = vmatprep.subr.bf16.mxu0 0
    %5555 = vmatpush1.bf16.msra.mxu0 %v5293
    %5556 = vmatprep.subr.bf16.mxu0 0
    %5557 = vmatpush1.bf16.msra.mxu0 %v5292
    %5558 = vmatprep.subr.bf16.mxu0 0
    %5559 = vmatpush1.bf16.msra.mxu0 %v5291
    %5560 = vmatprep.subr.bf16.mxu0 0
    %5561 = vmatpush1.bf16.msra.mxu0 %v5290
    %5562 = vmatprep.subr.bf16.mxu0 0
    %5563 = vmatpush2.bf16.msra.mxu0 0
    %5564 = vmatprep.subr.bf16.mxu0 0
    %5565 = vmatpush2.bf16.msra.mxu0 0
    %5566 = vmatprep.subr.bf16.mxu0 0
    %5567 = vmatpush2.bf16.msra.mxu0 0
    %5568 = vmatprep.subr.bf16.mxu0 0
    %5569 = vmatpush2.bf16.msra.mxu0 0
    %5570 = vmatprep.subr.bf16.mxu0 0
    %5571 = vmatpush2.bf16.msra.mxu0 0
    %5572 = vmatprep.subr.bf16.mxu0 0
    %5573 = vmatpush2.bf16.msra.mxu0 0
    %5574 = vmatprep.subr.bf16.mxu0 0
    %5575 = vmatpush2.bf16.msra.mxu0 0
    %5576 = vmatprep.subr.bf16.mxu0 0
    %5577 = vmatpush2.bf16.msra.mxu0 0
    %5578 = vmatprep.mubr.bf16.mxu0 0
    %5579 = vmatmul.mubr.bf16.gmra.mxu0 %v5330
    %v5580 = vpop.f32.mrf.mxu0
    %v5581 = vadd.f32 %v5484, %v5580
    %v5582 = vpop.f32.mrf.mxu0
    %v5583 = vpop.f32.mrf.mxu0
    %v5584 = vadd.f32 %v5487, %v5583
    %v5585 = vpop.f32.mrf.mxu0
    %5586 = vmatprep.mubr.bf16.mxu0 0
    %5587 = vmatmul.mubr.bf16.gmra.mxu0 %v5332
    %v5588 = vpop.f32.mrf.mxu0
    %v5589 = vadd.f32 %v5492, %v5588
    %v5590 = vpop.f32.mrf.mxu0
    %v5591 = vpop.f32.mrf.mxu0
    %v5592 = vadd.f32 %v5495, %v5591
    %v5593 = vpop.f32.mrf.mxu0
    %5594 = vmatprep.mubr.bf16.mxu0 0
    %5595 = vmatmul.mubr.bf16.gmra.mxu0 %v5335
    %v5596 = vpop.f32.mrf.mxu0
    %v5597 = vadd.f32 %v5500, %v5596
    %v5598 = vpop.f32.mrf.mxu0
    %v5599 = vpop.f32.mrf.mxu0
    %v5600 = vadd.f32 %v5503, %v5599
    %v5601 = vpop.f32.mrf.mxu0
    %5602 = vmatprep.mubr.bf16.mxu0 0
    %5603 = vmatmul.mubr.bf16.gmra.mxu0 %v5338
    %v5604 = vpop.f32.mrf.mxu0
    %v5605 = vadd.f32 %v5508, %v5604
    %v5606 = vpop.f32.mrf.mxu0
    %v5607 = vpop.f32.mrf.mxu0
    %v5608 = vadd.f32 %v5511, %v5607
    %v5609 = vpop.f32.mrf.mxu0
    %5610 = vmatprep.mubr.bf16.mxu0 0
    %5611 = vmatmul.mubr.bf16.gmra.mxu0 %v5341
    %v5612 = vpop.f32.mrf.mxu0
    %v5613 = vadd.f32 %v5516, %v5612
    %v5614 = vpop.f32.mrf.mxu0
    %v5615 = vpop.f32.mrf.mxu0
    %v5616 = vadd.f32 %v5519, %v5615
    %v5617 = vpop.f32.mrf.mxu0
    %5618 = vmatprep.mubr.bf16.mxu0 0
    %5619 = vmatmul.mubr.bf16.gmra.mxu0 %v5344
    %v5620 = vpop.f32.mrf.mxu0
    %v5621 = vadd.f32 %v5524, %v5620
    %v5622 = vpop.f32.mrf.mxu0
    %v5623 = vpop.f32.mrf.mxu0
    %v5624 = vadd.f32 %v5527, %v5623
    %v5625 = vpop.f32.mrf.mxu0
    %5626 = vmatprep.mubr.bf16.mxu0 0
    %5627 = vmatmul.mubr.bf16.gmra.mxu0 %v5347
    %v5628 = vpop.f32.mrf.mxu0
    %v5629 = vadd.f32 %v5532, %v5628
    %v5630 = vpop.f32.mrf.mxu0
    %v5631 = vpop.f32.mrf.mxu0
    %v5632 = vadd.f32 %v5535, %v5631
    %v5633 = vpop.f32.mrf.mxu0
    %5634 = vmatprep.mubr.bf16.mxu0 0
    %5635 = vmatmul.mubr.bf16.gmra.mxu0 %v5350
    %v5636 = vpop.f32.mrf.mxu0
    %v5637 = vadd.f32 %v5540, %v5636
    %v5638 = vpop.f32.mrf.mxu0
    %v5639 = vpop.f32.mrf.mxu0
    %v5640 = vadd.f32 %v5543, %v5639
    %v5641 = vpop.f32.mrf.mxu0
    %5642 = vdwg.mxu0
    %v5643 = vld [vmem:[#allocation18] sm:$0x1]
    %v5644 = vld [vmem:[#allocation19] sm:$0x1]
    %v5645 = vadd.f32 %v5581, %v5584
    %v5646 = vadd.f32 %v5645, %v5589
    %v5647 = vadd.f32 %v5646, %v5592
    %v5648 = vadd.f32 %v5647, %v5597
    %v5649 = vadd.f32 %v5648, %v5600
    %v5650 = vadd.f32 %v5649, %v5605
    %v5651 = vadd.f32 %v5650, %v5608
    %v5652 = vadd.f32 %v5651, %v5613
    %v5653 = vadd.f32 %v5652, %v5616
    %v5654 = vadd.f32 %v5653, %v5621
    %v5655 = vadd.f32 %v5654, %v5624
    %v5656 = vadd.f32 %v5655, %v5629
    %v5657 = vadd.f32 %v5656, %v5632
    %v5658 = vadd.f32 %v5657, %v5637
    %v5659 = vadd.f32 %v5658, %v5640
    %v5660 = vrot.slane %v5659, 4
    %v5661 = vadd.f32 %v5659, %v5660
    %v5662 = vrot.slane %v5661, 2
    %v5663 = vadd.f32 %v5661, %v5662
    %v5664 = vrot.slane %v5663, 1
    %v5665 = vadd.f32 %v5663, %v5664
    %v5666 = vmul.f32 %v5581, %v5581
    %v5667 = vmul.f32 %v5584, %v5584
    %v5668 = vmul.f32 %v5589, %v5589
    %v5669 = vmul.f32 %v5592, %v5592
    %v5670 = vmul.f32 %v5597, %v5597
    %v5671 = vmul.f32 %v5600, %v5600
    %v5672 = vmul.f32 %v5605, %v5605
    %v5673 = vmul.f32 %v5608, %v5608
    %v5674 = vmul.f32 %v5613, %v5613
    %v5675 = vmul.f32 %v5616, %v5616
    %v5676 = vmul.f32 %v5621, %v5621
    %v5677 = vmul.f32 %v5624, %v5624
    %v5678 = vmul.f32 %v5629, %v5629
    %v5679 = vmul.f32 %v5632, %v5632
    %v5680 = vmul.f32 %v5637, %v5637
    %v5681 = vmul.f32 %v5640, %v5640
    %v5682 = vadd.f32 %v5666, %v5667
    %v5683 = vadd.f32 %v5682, %v5668
    %v5684 = vadd.f32 %v5683, %v5669
    %v5685 = vadd.f32 %v5684, %v5670
    %v5686 = vadd.f32 %v5685, %v5671
    %v5687 = vadd.f32 %v5686, %v5672
    %v5688 = vadd.f32 %v5687, %v5673
    %v5689 = vadd.f32 %v5688, %v5674
    %v5690 = vadd.f32 %v5689, %v5675
    %v5691 = vadd.f32 %v5690, %v5676
    %v5692 = vadd.f32 %v5691, %v5677
    %v5693 = vadd.f32 %v5692, %v5678
    %v5694 = vadd.f32 %v5693, %v5679
    %v5695 = vadd.f32 %v5694, %v5680
    %v5696 = vadd.f32 %v5695, %v5681
    %v5697 = vrot.slane %v5696, 4
    %v5698 = vadd.f32 %v5696, %v5697
    %v5699 = vrot.slane %v5698, 2
    %v5700 = vadd.f32 %v5698, %v5699
    %v5701 = vrot.slane %v5700, 1
    %v5702 = vadd.f32 %v5700, %v5701
    %v5703 = vadd.f32 %v5665, 0.0
    %5705 = vrot.lane.b32.xlu0 %v5665, 96
    %v5706 = vpop.permute.xlu0 %5705
    %v5708 = vadd.f32 %v5703, %v5706
    %5709 = vrot.lane.b32.xlu0 %v5665, 64
    %v5710 = vpop.permute.xlu0 %5709
    %v5712 = vadd.f32 %v5708, %v5710
    %5713 = vrot.lane.b32.xlu0 %v5665, 32
    %v5714 = vpop.permute.xlu0 %5713
    %v5716 = vadd.f32 %v5712, %v5714
    %v5717 = vadd.f32 %v5702, 0.0
    %5719 = vrot.lane.b32.xlu0 %v5702, 96
    %v5720 = vpop.permute.xlu0 %5719
    %v5722 = vadd.f32 %v5717, %v5720
    %5723 = vrot.lane.b32.xlu0 %v5702, 64
    %v5724 = vpop.permute.xlu0 %5723
    %v5726 = vadd.f32 %v5722, %v5724
    %5727 = vrot.lane.b32.xlu0 %v5702, 32
    %v5728 = vpop.permute.xlu0 %5727
    %v5730 = vadd.f32 %v5726, %v5728
    %v5731 = vmul.f32 %v5716, 0.001953125
    %v5732 = vmul.f32 %v5730, 0.001953125
    %v5733 = vmul.f32 %v5731, %v5731
    %v5734 = vsub.f32 %v5732, %v5733
    %v5735 = vadd.f32 %v5734, 1e-05
    %v5736 = vrsqrt.pop %v5735
    %v5737 = vmul.f32 %v5643, %v5736
    %v5738 = vmul.f32 %v5731, %v5737
    %v5739 = vsub.f32 %v5644, %v5738
    %v5741 = vlaneseq
    %v5742 = vshrl.u32 %v5741, 7
    %v5743 = vsub.s32 0, %v5742
    %v5744 = vrot.slane %v5737, %v5743
    %5745 = vrot.lane.b32.xlu0 %v5744, 32
    %v5746 = vpop.permute.xlu0 %5745
    %5748 = vrot.lane.b32.xlu0 %v5744, 64
    %v5749 = vpop.permute.xlu0 %5748
    %5751 = vrot.lane.b32.xlu0 %v5744, 96
    %v5752 = vpop.permute.xlu0 %5751
    %vm5754 = vcmask 261120
    %v5755 = vsel %vm5754, %v5737, %v5746
    %v5756 = vsel %vm2954, %v5755, %v5749
    %vm5757 = vcmask 785408
    %v5758 = vsel %vm5757, %v5756, %v5752
    %v5760 = vlaneseq
    %v5761 = vshrl.u32 %v5760, 7
    %v5762 = vsub.s32 0, %v5761
    %v5763 = vrot.slane %v5739, %v5762
    %5764 = vrot.lane.b32.xlu0 %v5763, 32
    %v5765 = vpop.permute.xlu0 %5764
    %5767 = vrot.lane.b32.xlu0 %v5763, 64
    %v5768 = vpop.permute.xlu0 %5767
    %5770 = vrot.lane.b32.xlu0 %v5763, 96
    %v5771 = vpop.permute.xlu0 %5770
    %v5773 = vsel %vm5754, %v5739, %v5765
    %v5774 = vsel %vm2954, %v5773, %v5768
    %v5775 = vsel %vm5757, %v5774, %v5771
    %v5776 = vlaneseq
    %v5777 = vshrl.u32 %v5776, 7
    %v5778 = vsub.s32 0, %v5777
    %v5779 = vrot.slane %v5758, %v5778
    %v5780 = vmul.f32 %v5581, %v5779
    %v5781 = vmul.f32 %v5584, %v5779
    %v5782 = vmul.f32 %v5589, %v5779
    %v5783 = vmul.f32 %v5592, %v5779
    %v5784 = vmul.f32 %v5597, %v5779
    %v5785 = vmul.f32 %v5600, %v5779
    %v5786 = vmul.f32 %v5605, %v5779
    %v5787 = vmul.f32 %v5608, %v5779
    %v5788 = vmul.f32 %v5613, %v5779
    %v5789 = vmul.f32 %v5616, %v5779
    %v5790 = vmul.f32 %v5621, %v5779
    %v5791 = vmul.f32 %v5624, %v5779
    %v5792 = vmul.f32 %v5629, %v5779
    %v5793 = vmul.f32 %v5632, %v5779
    %v5794 = vmul.f32 %v5637, %v5779
    %v5795 = vmul.f32 %v5640, %v5779
    %v5796 = vlaneseq
    %v5797 = vshrl.u32 %v5796, 7
    %v5798 = vsub.s32 0, %v5797
    %v5799 = vrot.slane %v5775, %v5798
    %v5800 = vadd.f32 %v5780, %v5799
    %v5801 = vadd.f32 %v5781, %v5799
    %v5802 = vadd.f32 %v5782, %v5799
    %v5803 = vadd.f32 %v5783, %v5799
    %v5804 = vadd.f32 %v5784, %v5799
    %v5805 = vadd.f32 %v5785, %v5799
    %v5806 = vadd.f32 %v5786, %v5799
    %v5807 = vadd.f32 %v5787, %v5799
    %v5808 = vadd.f32 %v5788, %v5799
    %v5809 = vadd.f32 %v5789, %v5799
    %v5810 = vadd.f32 %v5790, %v5799
    %v5811 = vadd.f32 %v5791, %v5799
    %v5812 = vadd.f32 %v5792, %v5799
    %v5813 = vadd.f32 %v5793, %v5799
    %v5814 = vadd.f32 %v5794, %v5799
    %v5815 = vadd.f32 %v5795, %v5799
    %v5816 = vmax.f32 %v5800, 0.0
    %v5817 = vmax.f32 %v5801, 0.0
    %v5818 = vmax.f32 %v5802, 0.0
    %v5819 = vmax.f32 %v5803, 0.0
    %v5820 = vmax.f32 %v5804, 0.0
    %v5821 = vmax.f32 %v5805, 0.0
    %v5822 = vmax.f32 %v5806, 0.0
    %v5823 = vmax.f32 %v5807, 0.0
    %v5824 = vmax.f32 %v5808, 0.0
    %v5825 = vmax.f32 %v5809, 0.0
    %v5826 = vmax.f32 %v5810, 0.0
    %v5827 = vmax.f32 %v5811, 0.0
    %v5828 = vmax.f32 %v5812, 0.0
    %v5829 = vmax.f32 %v5813, 0.0
    %v5830 = vmax.f32 %v5814, 0.0
    %v5831 = vmax.f32 %v5815, 0.0
    %v5832 = vpack.c.bf16 %v5817, %v5816
    %v5833 = vpack.c.bf16 %v5819, %v5818
    %v5834 = vpack.c.bf16 %v5821, %v5820
    %v5835 = vpack.c.bf16 %v5823, %v5822
    %v5836 = vpack.c.bf16 %v5825, %v5824
    %v5837 = vpack.c.bf16 %v5827, %v5826
    %v5838 = vpack.c.bf16 %v5829, %v5828
    %v5839 = vpack.c.bf16 %v5831, %v5830
    %v5842 = vcombine.high %v5832, %v5832
    %v5844 = vunpack.c.l.s4 1966171168
    %v5845 = vunpack.c.0.s8 %v5844
    %v5846 = vlaneseq
    %v5847 = vshrl.u32 %v5846, 7
    %v5848 = vsub.s32 %v5845, %v5847
    %v5849 = vrot.slane %v5832, %v5848
    %v5851 = vunpack.c.l.s4 1966171168
    %v5852 = vunpack.c.0.s8 %v5851
    %v5853 = vlaneseq
    %v5854 = vshrl.u32 %v5853, 7
    %v5855 = vsub.s32 %v5852, %v5854
    %v5856 = vrot.slane %v5842, %v5855
    %v5857 = vcombine.high %v5849, %v5849
    %v5858 = vcombine.high %v5856, %v5856
    %v5860 = vunpack.c.l.s4 1966171168
    %v5861 = vunpack.c.0.s8 %v5860
    %v5862 = vlaneseq
    %v5863 = vshrl.u32 %v5862, 7
    %v5864 = vsub.s32 %v5861, %v5863
    %v5865 = vrot.slane %v5849, %v5864
    %v5867 = vunpack.c.l.s4 1966171168
    %v5868 = vunpack.c.0.s8 %v5867
    %v5869 = vlaneseq
    %v5870 = vshrl.u32 %v5869, 7
    %v5871 = vsub.s32 %v5868, %v5870
    %v5872 = vrot.slane %v5856, %v5871
    %v5874 = vunpack.c.l.s4 1966171168
    %v5875 = vunpack.c.0.s8 %v5874
    %v5876 = vlaneseq
    %v5877 = vshrl.u32 %v5876, 7
    %v5878 = vsub.s32 %v5875, %v5877
    %v5879 = vrot.slane %v5857, %v5878
    %v5881 = vunpack.c.l.s4 1966171168
    %v5882 = vunpack.c.0.s8 %v5881
    %v5883 = vlaneseq
    %v5884 = vshrl.u32 %v5883, 7
    %v5885 = vsub.s32 %v5882, %v5884
    %v5886 = vrot.slane %v5858, %v5885
    %v5887 = vcombine.high %v5865, %v5865
    %v5888 = vcombine.high %v5872, %v5872
    %v5889 = vcombine.high %v5879, %v5879
    %v5890 = vcombine.high %v5886, %v5886
    %v5891 = vcombine.high %v5833, %v5833
    %v5893 = vunpack.c.l.s4 1966171168
    %v5894 = vunpack.c.0.s8 %v5893
    %v5895 = vlaneseq
    %v5896 = vshrl.u32 %v5895, 7
    %v5897 = vsub.s32 %v5894, %v5896
    %v5898 = vrot.slane %v5833, %v5897
    %v5900 = vunpack.c.l.s4 1966171168
    %v5901 = vunpack.c.0.s8 %v5900
    %v5902 = vlaneseq
    %v5903 = vshrl.u32 %v5902, 7
    %v5904 = vsub.s32 %v5901, %v5903
    %v5905 = vrot.slane %v5891, %v5904
    %v5906 = vcombine.high %v5898, %v5898
    %v5907 = vcombine.high %v5905, %v5905
    %v5909 = vunpack.c.l.s4 1966171168
    %v5910 = vunpack.c.0.s8 %v5909
    %v5911 = vlaneseq
    %v5912 = vshrl.u32 %v5911, 7
    %v5913 = vsub.s32 %v5910, %v5912
    %v5914 = vrot.slane %v5898, %v5913
    %v5916 = vunpack.c.l.s4 1966171168
    %v5917 = vunpack.c.0.s8 %v5916
    %v5918 = vlaneseq
    %v5919 = vshrl.u32 %v5918, 7
    %v5920 = vsub.s32 %v5917, %v5919
    %v5921 = vrot.slane %v5905, %v5920
    %v5923 = vunpack.c.l.s4 1966171168
    %v5924 = vunpack.c.0.s8 %v5923
    %v5925 = vlaneseq
    %v5926 = vshrl.u32 %v5925, 7
    %v5927 = vsub.s32 %v5924, %v5926
    %v5928 = vrot.slane %v5906, %v5927
    %v5930 = vunpack.c.l.s4 1966171168
    %v5931 = vunpack.c.0.s8 %v5930
    %v5932 = vlaneseq
    %v5933 = vshrl.u32 %v5932, 7
    %v5934 = vsub.s32 %v5931, %v5933
    %v5935 = vrot.slane %v5907, %v5934
    %v5936 = vcombine.high %v5914, %v5914
    %v5937 = vcombine.high %v5921, %v5921
    %v5938 = vcombine.high %v5928, %v5928
    %v5939 = vcombine.high %v5935, %v5935
    %v5940 = vunpack.i.l.s16 %v5865
    %v5941 = vunpack.i.h.s16 %v5865
    %v5942 = vunpack.i.l.s16 %v5879
    %v5943 = vunpack.i.h.s16 %v5879
    %v5944 = vunpack.i.l.s16 %v5887
    %v5945 = vunpack.i.h.s16 %v5887
    %v5946 = vunpack.i.l.s16 %v5889
    %v5947 = vunpack.i.h.s16 %v5889
    %v5948 = vunpack.i.l.s16 %v5872
    %v5949 = vunpack.i.h.s16 %v5872
    %v5950 = vunpack.i.l.s16 %v5886
    %v5951 = vunpack.i.h.s16 %v5886
    %v5952 = vunpack.i.l.s16 %v5888
    %v5953 = vunpack.i.h.s16 %v5888
    %v5954 = vunpack.i.l.s16 %v5890
    %v5955 = vunpack.i.h.s16 %v5890
    %v5956 = vunpack.i.l.s16 %v5914
    %v5957 = vunpack.i.h.s16 %v5914
    %v5958 = vunpack.i.l.s16 %v5928
    %v5959 = vunpack.i.h.s16 %v5928
    %v5960 = vunpack.i.l.s16 %v5936
    %v5961 = vunpack.i.h.s16 %v5936
    %v5962 = vunpack.i.l.s16 %v5938
    %v5963 = vunpack.i.h.s16 %v5938
    %v5964 = vunpack.i.l.s16 %v5921
    %v5965 = vunpack.i.h.s16 %v5921
    %v5966 = vunpack.i.l.s16 %v5935
    %v5967 = vunpack.i.h.s16 %v5935
    %v5968 = vunpack.i.l.s16 %v5937
    %v5969 = vunpack.i.h.s16 %v5937
    %v5970 = vunpack.i.l.s16 %v5939
    %v5971 = vunpack.i.h.s16 %v5939
    %v5974 = vcombine.high %v5834, %v5834
    %v5976 = vunpack.c.l.s4 1966171168
    %v5977 = vunpack.c.0.s8 %v5976
    %v5978 = vlaneseq
    %v5979 = vshrl.u32 %v5978, 7
    %v5980 = vsub.s32 %v5977, %v5979
    %v5981 = vrot.slane %v5834, %v5980
    %v5983 = vunpack.c.l.s4 1966171168
    %v5984 = vunpack.c.0.s8 %v5983
    %v5985 = vlaneseq
    %v5986 = vshrl.u32 %v5985, 7
    %v5987 = vsub.s32 %v5984, %v5986
    %v5988 = vrot.slane %v5974, %v5987
    %v5989 = vcombine.high %v5981, %v5981
    %v5990 = vcombine.high %v5988, %v5988
    %v5992 = vunpack.c.l.s4 1966171168
    %v5993 = vunpack.c.0.s8 %v5992
    %v5994 = vlaneseq
    %v5995 = vshrl.u32 %v5994, 7
    %v5996 = vsub.s32 %v5993, %v5995
    %v5997 = vrot.slane %v5981, %v5996
    %v5999 = vunpack.c.l.s4 1966171168
    %v6000 = vunpack.c.0.s8 %v5999
    %v6001 = vlaneseq
    %v6002 = vshrl.u32 %v6001, 7
    %v6003 = vsub.s32 %v6000, %v6002
    %v6004 = vrot.slane %v5988, %v6003
    %v6006 = vunpack.c.l.s4 1966171168
    %v6007 = vunpack.c.0.s8 %v6006
    %v6008 = vlaneseq
    %v6009 = vshrl.u32 %v6008, 7
    %v6010 = vsub.s32 %v6007, %v6009
    %v6011 = vrot.slane %v5989, %v6010
    %v6013 = vunpack.c.l.s4 1966171168
    %v6014 = vunpack.c.0.s8 %v6013
    %v6015 = vlaneseq
    %v6016 = vshrl.u32 %v6015, 7
    %v6017 = vsub.s32 %v6014, %v6016
    %v6018 = vrot.slane %v5990, %v6017
    %v6019 = vcombine.high %v5997, %v5997
    %v6020 = vcombine.high %v6004, %v6004
    %v6021 = vcombine.high %v6011, %v6011
    %v6022 = vcombine.high %v6018, %v6018
    %v6023 = vcombine.high %v5835, %v5835
    %v6025 = vunpack.c.l.s4 1966171168
    %v6026 = vunpack.c.0.s8 %v6025
    %v6027 = vlaneseq
    %v6028 = vshrl.u32 %v6027, 7
    %v6029 = vsub.s32 %v6026, %v6028
    %v6030 = vrot.slane %v5835, %v6029
    %v6032 = vunpack.c.l.s4 1966171168
    %v6033 = vunpack.c.0.s8 %v6032
    %v6034 = vlaneseq
    %v6035 = vshrl.u32 %v6034, 7
    %v6036 = vsub.s32 %v6033, %v6035
    %v6037 = vrot.slane %v6023, %v6036
    %v6038 = vcombine.high %v6030, %v6030
    %v6039 = vcombine.high %v6037, %v6037
    %v6041 = vunpack.c.l.s4 1966171168
    %v6042 = vunpack.c.0.s8 %v6041
    %v6043 = vlaneseq
    %v6044 = vshrl.u32 %v6043, 7
    %v6045 = vsub.s32 %v6042, %v6044
    %v6046 = vrot.slane %v6030, %v6045
    %v6048 = vunpack.c.l.s4 1966171168
    %v6049 = vunpack.c.0.s8 %v6048
    %v6050 = vlaneseq
    %v6051 = vshrl.u32 %v6050, 7
    %v6052 = vsub.s32 %v6049, %v6051
    %v6053 = vrot.slane %v6037, %v6052
    %v6055 = vunpack.c.l.s4 1966171168
    %v6056 = vunpack.c.0.s8 %v6055
    %v6057 = vlaneseq
    %v6058 = vshrl.u32 %v6057, 7
    %v6059 = vsub.s32 %v6056, %v6058
    %v6060 = vrot.slane %v6038, %v6059
    %v6062 = vunpack.c.l.s4 1966171168
    %v6063 = vunpack.c.0.s8 %v6062
    %v6064 = vlaneseq
    %v6065 = vshrl.u32 %v6064, 7
    %v6066 = vsub.s32 %v6063, %v6065
    %v6067 = vrot.slane %v6039, %v6066
    %v6068 = vcombine.high %v6046, %v6046
    %v6069 = vcombine.high %v6053, %v6053
    %v6070 = vcombine.high %v6060, %v6060
    %v6071 = vcombine.high %v6067, %v6067
    %v6072 = vunpack.i.l.s16 %v5997
    %v6073 = vunpack.i.h.s16 %v5997
    %v6074 = vunpack.i.l.s16 %v6011
    %v6075 = vunpack.i.h.s16 %v6011
    %v6076 = vunpack.i.l.s16 %v6019
    %v6077 = vunpack.i.h.s16 %v6019
    %v6078 = vunpack.i.l.s16 %v6021
    %v6079 = vunpack.i.h.s16 %v6021
    %v6080 = vunpack.i.l.s16 %v6004
    %v6081 = vunpack.i.h.s16 %v6004
    %v6082 = vunpack.i.l.s16 %v6018
    %v6083 = vunpack.i.h.s16 %v6018
    %v6084 = vunpack.i.l.s16 %v6020
    %v6085 = vunpack.i.h.s16 %v6020
    %v6086 = vunpack.i.l.s16 %v6022
    %v6087 = vunpack.i.h.s16 %v6022
    %v6088 = vunpack.i.l.s16 %v6046
    %v6089 = vunpack.i.h.s16 %v6046
    %v6090 = vunpack.i.l.s16 %v6060
    %v6091 = vunpack.i.h.s16 %v6060
    %v6092 = vunpack.i.l.s16 %v6068
    %v6093 = vunpack.i.h.s16 %v6068
    %v6094 = vunpack.i.l.s16 %v6070
    %v6095 = vunpack.i.h.s16 %v6070
    %v6096 = vunpack.i.l.s16 %v6053
    %v6097 = vunpack.i.h.s16 %v6053
    %v6098 = vunpack.i.l.s16 %v6067
    %v6099 = vunpack.i.h.s16 %v6067
    %v6100 = vunpack.i.l.s16 %v6069
    %v6101 = vunpack.i.h.s16 %v6069
    %v6102 = vunpack.i.l.s16 %v6071
    %v6103 = vunpack.i.h.s16 %v6071
    %v6104 = vpack.i.b16 %v5940, %v5940
    %v6105 = vpack.i.b16 %v5941, %v5941
    %v6106 = vpack.i.b16 %v5942, %v5942
    %v6107 = vpack.i.b16 %v5943, %v5943
    %v6108 = vpack.i.b16 %v5944, %v5944
    %v6109 = vpack.i.b16 %v5945, %v5945
    %v6110 = vpack.i.b16 %v5946, %v5946
    %v6111 = vpack.i.b16 %v5947, %v5947
    %v6112 = vpack.i.b16 %v5948, %v5948
    %v6113 = vpack.i.b16 %v5949, %v5949
    %v6114 = vpack.i.b16 %v5950, %v5950
    %v6115 = vpack.i.b16 %v5951, %v5951
    %v6116 = vpack.i.b16 %v5952, %v5952
    %v6117 = vpack.i.b16 %v5953, %v5953
    %v6118 = vpack.i.b16 %v5954, %v5954
    %v6119 = vpack.i.b16 %v5955, %v5955
    %v6120 = vpack.i.b16 %v5956, %v5956
    %v6121 = vpack.i.b16 %v5957, %v5957
    %v6122 = vpack.i.b16 %v5958, %v5958
    %v6123 = vpack.i.b16 %v5959, %v5959
    %v6124 = vpack.i.b16 %v5960, %v5960
    %v6125 = vpack.i.b16 %v5961, %v5961
    %v6126 = vpack.i.b16 %v5962, %v5962
    %v6127 = vpack.i.b16 %v5963, %v5963
    %v6128 = vpack.i.b16 %v5964, %v5964
    %v6129 = vpack.i.b16 %v5965, %v5965
    %v6130 = vpack.i.b16 %v5966, %v5966
    %v6131 = vpack.i.b16 %v5967, %v5967
    %v6132 = vpack.i.b16 %v5968, %v5968
    %v6133 = vpack.i.b16 %v5969, %v5969
    %v6134 = vpack.i.b16 %v5970, %v5970
    %v6135 = vpack.i.b16 %v5971, %v5971
    %v6136 = vlaneseq
    %v6137 = vshrl.u32 %v6136, 7
    %v6138 = vsub.s32 0, %v6137
    %v6139 = vrot.slane %v6104, %v6138
    %v6140 = vlaneseq
    %v6141 = vshrl.u32 %v6140, 7
    %v6142 = vsub.s32 0, %v6141
    %v6143 = vrot.slane %v6105, %v6142
    %v6144 = vlaneseq
    %v6145 = vshrl.u32 %v6144, 7
    %v6146 = vsub.s32 0, %v6145
    %v6147 = vrot.slane %v6106, %v6146
    %v6148 = vlaneseq
    %v6149 = vshrl.u32 %v6148, 7
    %v6150 = vsub.s32 0, %v6149
    %v6151 = vrot.slane %v6107, %v6150
    %v6152 = vlaneseq
    %v6153 = vshrl.u32 %v6152, 7
    %v6154 = vsub.s32 0, %v6153
    %v6155 = vrot.slane %v6108, %v6154
    %v6156 = vlaneseq
    %v6157 = vshrl.u32 %v6156, 7
    %v6158 = vsub.s32 0, %v6157
    %v6159 = vrot.slane %v6109, %v6158
    %v6160 = vlaneseq
    %v6161 = vshrl.u32 %v6160, 7
    %v6162 = vsub.s32 0, %v6161
    %v6163 = vrot.slane %v6110, %v6162
    %v6164 = vlaneseq
    %v6165 = vshrl.u32 %v6164, 7
    %v6166 = vsub.s32 0, %v6165
    %v6167 = vrot.slane %v6111, %v6166
    %v6168 = vlaneseq
    %v6169 = vshrl.u32 %v6168, 7
    %v6170 = vsub.s32 0, %v6169
    %v6171 = vrot.slane %v6112, %v6170
    %v6172 = vlaneseq
    %v6173 = vshrl.u32 %v6172, 7
    %v6174 = vsub.s32 0, %v6173
    %v6175 = vrot.slane %v6113, %v6174
    %v6176 = vlaneseq
    %v6177 = vshrl.u32 %v6176, 7
    %v6178 = vsub.s32 0, %v6177
    %v6179 = vrot.slane %v6114, %v6178
    %v6180 = vlaneseq
    %v6181 = vshrl.u32 %v6180, 7
    %v6182 = vsub.s32 0, %v6181
    %v6183 = vrot.slane %v6115, %v6182
    %v6184 = vlaneseq
    %v6185 = vshrl.u32 %v6184, 7
    %v6186 = vsub.s32 0, %v6185
    %v6187 = vrot.slane %v6116, %v6186
    %v6188 = vlaneseq
    %v6189 = vshrl.u32 %v6188, 7
    %v6190 = vsub.s32 0, %v6189
    %v6191 = vrot.slane %v6117, %v6190
    %v6192 = vlaneseq
    %v6193 = vshrl.u32 %v6192, 7
    %v6194 = vsub.s32 0, %v6193
    %v6195 = vrot.slane %v6118, %v6194
    %v6196 = vlaneseq
    %v6197 = vshrl.u32 %v6196, 7
    %v6198 = vsub.s32 0, %v6197
    %v6199 = vrot.slane %v6119, %v6198
    %v6200 = vlaneseq
    %v6201 = vshrl.u32 %v6200, 7
    %v6202 = vsub.s32 0, %v6201
    %v6203 = vrot.slane %v6120, %v6202
    %v6204 = vlaneseq
    %v6205 = vshrl.u32 %v6204, 7
    %v6206 = vsub.s32 0, %v6205
    %v6207 = vrot.slane %v6121, %v6206
    %v6208 = vlaneseq
    %v6209 = vshrl.u32 %v6208, 7
    %v6210 = vsub.s32 0, %v6209
    %v6211 = vrot.slane %v6122, %v6210
    %v6212 = vlaneseq
    %v6213 = vshrl.u32 %v6212, 7
    %v6214 = vsub.s32 0, %v6213
    %v6215 = vrot.slane %v6123, %v6214
    %v6216 = vlaneseq
    %v6217 = vshrl.u32 %v6216, 7
    %v6218 = vsub.s32 0, %v6217
    %v6219 = vrot.slane %v6124, %v6218
    %v6220 = vlaneseq
    %v6221 = vshrl.u32 %v6220, 7
    %v6222 = vsub.s32 0, %v6221
    %v6223 = vrot.slane %v6125, %v6222
    %v6224 = vlaneseq
    %v6225 = vshrl.u32 %v6224, 7
    %v6226 = vsub.s32 0, %v6225
    %v6227 = vrot.slane %v6126, %v6226
    %v6228 = vlaneseq
    %v6229 = vshrl.u32 %v6228, 7
    %v6230 = vsub.s32 0, %v6229
    %v6231 = vrot.slane %v6127, %v6230
    %v6232 = vlaneseq
    %v6233 = vshrl.u32 %v6232, 7
    %v6234 = vsub.s32 0, %v6233
    %v6235 = vrot.slane %v6128, %v6234
    %v6236 = vlaneseq
    %v6237 = vshrl.u32 %v6236, 7
    %v6238 = vsub.s32 0, %v6237
    %v6239 = vrot.slane %v6129, %v6238
    %v6240 = vlaneseq
    %v6241 = vshrl.u32 %v6240, 7
    %v6242 = vsub.s32 0, %v6241
    %v6243 = vrot.slane %v6130, %v6242
    %v6244 = vlaneseq
    %v6245 = vshrl.u32 %v6244, 7
    %v6246 = vsub.s32 0, %v6245
    %v6247 = vrot.slane %v6131, %v6246
    %v6248 = vlaneseq
    %v6249 = vshrl.u32 %v6248, 7
    %v6250 = vsub.s32 0, %v6249
    %v6251 = vrot.slane %v6132, %v6250
    %v6252 = vlaneseq
    %v6253 = vshrl.u32 %v6252, 7
    %v6254 = vsub.s32 0, %v6253
    %v6255 = vrot.slane %v6133, %v6254
    %v6256 = vlaneseq
    %v6257 = vshrl.u32 %v6256, 7
    %v6258 = vsub.s32 0, %v6257
    %v6259 = vrot.slane %v6134, %v6258
    %v6260 = vlaneseq
    %v6261 = vshrl.u32 %v6260, 7
    %v6262 = vsub.s32 0, %v6261
    %v6263 = vrot.slane %v6135, %v6262
    %v6296 = vpack.i.b16 %v6072, %v6072
    %v6297 = vpack.i.b16 %v6073, %v6073
    %v6298 = vpack.i.b16 %v6074, %v6074
    %v6299 = vpack.i.b16 %v6075, %v6075
    %v6300 = vpack.i.b16 %v6076, %v6076
    %v6301 = vpack.i.b16 %v6077, %v6077
    %v6302 = vpack.i.b16 %v6078, %v6078
    %v6303 = vpack.i.b16 %v6079, %v6079
    %v6304 = vpack.i.b16 %v6080, %v6080
    %v6305 = vpack.i.b16 %v6081, %v6081
    %v6306 = vpack.i.b16 %v6082, %v6082
    %v6307 = vpack.i.b16 %v6083, %v6083
    %v6308 = vpack.i.b16 %v6084, %v6084
    %v6309 = vpack.i.b16 %v6085, %v6085
    %v6310 = vpack.i.b16 %v6086, %v6086
    %v6311 = vpack.i.b16 %v6087, %v6087
    %v6312 = vpack.i.b16 %v6088, %v6088
    %v6313 = vpack.i.b16 %v6089, %v6089
    %v6314 = vpack.i.b16 %v6090, %v6090
    %v6315 = vpack.i.b16 %v6091, %v6091
    %v6316 = vpack.i.b16 %v6092, %v6092
    %v6317 = vpack.i.b16 %v6093, %v6093
    %v6318 = vpack.i.b16 %v6094, %v6094
    %v6319 = vpack.i.b16 %v6095, %v6095
    %v6320 = vpack.i.b16 %v6096, %v6096
    %v6321 = vpack.i.b16 %v6097, %v6097
    %v6322 = vpack.i.b16 %v6098, %v6098
    %v6323 = vpack.i.b16 %v6099, %v6099
    %v6324 = vpack.i.b16 %v6100, %v6100
    %v6325 = vpack.i.b16 %v6101, %v6101
    %v6326 = vpack.i.b16 %v6102, %v6102
    %v6327 = vpack.i.b16 %v6103, %v6103
    %v6328 = vlaneseq
    %v6329 = vshrl.u32 %v6328, 7
    %v6330 = vsub.s32 0, %v6329
    %v6331 = vrot.slane %v6296, %v6330
    %v6332 = vlaneseq
    %v6333 = vshrl.u32 %v6332, 7
    %v6334 = vsub.s32 0, %v6333
    %v6335 = vrot.slane %v6297, %v6334
    %v6336 = vlaneseq
    %v6337 = vshrl.u32 %v6336, 7
    %v6338 = vsub.s32 0, %v6337
    %v6339 = vrot.slane %v6298, %v6338
    %v6340 = vlaneseq
    %v6341 = vshrl.u32 %v6340, 7
    %v6342 = vsub.s32 0, %v6341
    %v6343 = vrot.slane %v6299, %v6342
    %v6344 = vlaneseq
    %v6345 = vshrl.u32 %v6344, 7
    %v6346 = vsub.s32 0, %v6345
    %v6347 = vrot.slane %v6300, %v6346
    %v6348 = vlaneseq
    %v6349 = vshrl.u32 %v6348, 7
    %v6350 = vsub.s32 0, %v6349
    %v6351 = vrot.slane %v6301, %v6350
    %v6352 = vlaneseq
    %v6353 = vshrl.u32 %v6352, 7
    %v6354 = vsub.s32 0, %v6353
    %v6355 = vrot.slane %v6302, %v6354
    %v6356 = vlaneseq
    %v6357 = vshrl.u32 %v6356, 7
    %v6358 = vsub.s32 0, %v6357
    %v6359 = vrot.slane %v6303, %v6358
    %v6360 = vlaneseq
    %v6361 = vshrl.u32 %v6360, 7
    %v6362 = vsub.s32 0, %v6361
    %v6363 = vrot.slane %v6304, %v6362
    %v6364 = vlaneseq
    %v6365 = vshrl.u32 %v6364, 7
    %v6366 = vsub.s32 0, %v6365
    %v6367 = vrot.slane %v6305, %v6366
    %v6368 = vlaneseq
    %v6369 = vshrl.u32 %v6368, 7
    %v6370 = vsub.s32 0, %v6369
    %v6371 = vrot.slane %v6306, %v6370
    %v6372 = vlaneseq
    %v6373 = vshrl.u32 %v6372, 7
    %v6374 = vsub.s32 0, %v6373
    %v6375 = vrot.slane %v6307, %v6374
    %v6376 = vlaneseq
    %v6377 = vshrl.u32 %v6376, 7
    %v6378 = vsub.s32 0, %v6377
    %v6379 = vrot.slane %v6308, %v6378
    %v6380 = vlaneseq
    %v6381 = vshrl.u32 %v6380, 7
    %v6382 = vsub.s32 0, %v6381
    %v6383 = vrot.slane %v6309, %v6382
    %v6384 = vlaneseq
    %v6385 = vshrl.u32 %v6384, 7
    %v6386 = vsub.s32 0, %v6385
    %v6387 = vrot.slane %v6310, %v6386
    %v6388 = vlaneseq
    %v6389 = vshrl.u32 %v6388, 7
    %v6390 = vsub.s32 0, %v6389
    %v6391 = vrot.slane %v6311, %v6390
    %v6392 = vlaneseq
    %v6393 = vshrl.u32 %v6392, 7
    %v6394 = vsub.s32 0, %v6393
    %v6395 = vrot.slane %v6312, %v6394
    %v6396 = vlaneseq
    %v6397 = vshrl.u32 %v6396, 7
    %v6398 = vsub.s32 0, %v6397
    %v6399 = vrot.slane %v6313, %v6398
    %v6400 = vlaneseq
    %v6401 = vshrl.u32 %v6400, 7
    %v6402 = vsub.s32 0, %v6401
    %v6403 = vrot.slane %v6314, %v6402
    %v6404 = vlaneseq
    %v6405 = vshrl.u32 %v6404, 7
    %v6406 = vsub.s32 0, %v6405
    %v6407 = vrot.slane %v6315, %v6406
    %v6408 = vlaneseq
    %v6409 = vshrl.u32 %v6408, 7
    %v6410 = vsub.s32 0, %v6409
    %v6411 = vrot.slane %v6316, %v6410
    %v6412 = vlaneseq
    %v6413 = vshrl.u32 %v6412, 7
    %v6414 = vsub.s32 0, %v6413
    %v6415 = vrot.slane %v6317, %v6414
    %v6416 = vlaneseq
    %v6417 = vshrl.u32 %v6416, 7
    %v6418 = vsub.s32 0, %v6417
    %v6419 = vrot.slane %v6318, %v6418
    %v6420 = vlaneseq
    %v6421 = vshrl.u32 %v6420, 7
    %v6422 = vsub.s32 0, %v6421
    %v6423 = vrot.slane %v6319, %v6422
    %v6424 = vlaneseq
    %v6425 = vshrl.u32 %v6424, 7
    %v6426 = vsub.s32 0, %v6425
    %v6427 = vrot.slane %v6320, %v6426
    %v6428 = vlaneseq
    %v6429 = vshrl.u32 %v6428, 7
    %v6430 = vsub.s32 0, %v6429
    %v6431 = vrot.slane %v6321, %v6430
    %v6432 = vlaneseq
    %v6433 = vshrl.u32 %v6432, 7
    %v6434 = vsub.s32 0, %v6433
    %v6435 = vrot.slane %v6322, %v6434
    %v6436 = vlaneseq
    %v6437 = vshrl.u32 %v6436, 7
    %v6438 = vsub.s32 0, %v6437
    %v6439 = vrot.slane %v6323, %v6438
    %v6440 = vlaneseq
    %v6441 = vshrl.u32 %v6440, 7
    %v6442 = vsub.s32 0, %v6441
    %v6443 = vrot.slane %v6324, %v6442
    %v6444 = vlaneseq
    %v6445 = vshrl.u32 %v6444, 7
    %v6446 = vsub.s32 0, %v6445
    %v6447 = vrot.slane %v6325, %v6446
    %v6448 = vlaneseq
    %v6449 = vshrl.u32 %v6448, 7
    %v6450 = vsub.s32 0, %v6449
    %v6451 = vrot.slane %v6326, %v6450
    %v6452 = vlaneseq
    %v6453 = vshrl.u32 %v6452, 7
    %v6454 = vsub.s32 0, %v6453
    %v6455 = vrot.slane %v6327, %v6454
    %v6488 = vsel %vm1172, %v6139, %v6331
    %v6489 = vsel %vm1172, %v6143, %v6335
    %v6490 = vsel %vm1172, %v6147, %v6339
    %v6491 = vsel %vm1172, %v6151, %v6343
    %v6492 = vsel %vm1172, %v6155, %v6347
    %v6493 = vsel %vm1172, %v6159, %v6351
    %v6494 = vsel %vm1172, %v6163, %v6355
    %v6495 = vsel %vm1172, %v6167, %v6359
    %v6496 = vsel %vm1172, %v6171, %v6363
    %v6497 = vsel %vm1172, %v6175, %v6367
    %v6498 = vsel %vm1172, %v6179, %v6371
    %v6499 = vsel %vm1172, %v6183, %v6375
    %v6500 = vsel %vm1172, %v6187, %v6379
    %v6501 = vsel %vm1172, %v6191, %v6383
    %v6502 = vsel %vm1172, %v6195, %v6387
    %v6503 = vsel %vm1172, %v6199, %v6391
    %v6504 = vsel %vm1172, %v6203, %v6395
    %v6505 = vsel %vm1172, %v6207, %v6399
    %v6506 = vsel %vm1172, %v6211, %v6403
    %v6507 = vsel %vm1172, %v6215, %v6407
    %v6508 = vsel %vm1172, %v6219, %v6411
    %v6509 = vsel %vm1172, %v6223, %v6415
    %v6510 = vsel %vm1172, %v6227, %v6419
    %v6511 = vsel %vm1172, %v6231, %v6423
    %v6512 = vsel %vm1172, %v6235, %v6427
    %v6513 = vsel %vm1172, %v6239, %v6431
    %v6514 = vsel %vm1172, %v6243, %v6435
    %v6515 = vsel %vm1172, %v6247, %v6439
    %v6516 = vsel %vm1172, %v6251, %v6443
    %v6517 = vsel %vm1172, %v6255, %v6447
    %v6518 = vsel %vm1172, %v6259, %v6451
    %v6519 = vsel %vm1172, %v6263, %v6455
    %v6522 = vcombine.high %v5836, %v5836
    %v6524 = vunpack.c.l.s4 1966171168
    %v6525 = vunpack.c.0.s8 %v6524
    %v6526 = vlaneseq
    %v6527 = vshrl.u32 %v6526, 7
    %v6528 = vsub.s32 %v6525, %v6527
    %v6529 = vrot.slane %v5836, %v6528
    %v6531 = vunpack.c.l.s4 1966171168
    %v6532 = vunpack.c.0.s8 %v6531
    %v6533 = vlaneseq
    %v6534 = vshrl.u32 %v6533, 7
    %v6535 = vsub.s32 %v6532, %v6534
    %v6536 = vrot.slane %v6522, %v6535
    %v6537 = vcombine.high %v6529, %v6529
    %v6538 = vcombine.high %v6536, %v6536
    %v6540 = vunpack.c.l.s4 1966171168
    %v6541 = vunpack.c.0.s8 %v6540
    %v6542 = vlaneseq
    %v6543 = vshrl.u32 %v6542, 7
    %v6544 = vsub.s32 %v6541, %v6543
    %v6545 = vrot.slane %v6529, %v6544
    %v6547 = vunpack.c.l.s4 1966171168
    %v6548 = vunpack.c.0.s8 %v6547
    %v6549 = vlaneseq
    %v6550 = vshrl.u32 %v6549, 7
    %v6551 = vsub.s32 %v6548, %v6550
    %v6552 = vrot.slane %v6536, %v6551
    %v6554 = vunpack.c.l.s4 1966171168
    %v6555 = vunpack.c.0.s8 %v6554
    %v6556 = vlaneseq
    %v6557 = vshrl.u32 %v6556, 7
    %v6558 = vsub.s32 %v6555, %v6557
    %v6559 = vrot.slane %v6537, %v6558
    %v6561 = vunpack.c.l.s4 1966171168
    %v6562 = vunpack.c.0.s8 %v6561
    %v6563 = vlaneseq
    %v6564 = vshrl.u32 %v6563, 7
    %v6565 = vsub.s32 %v6562, %v6564
    %v6566 = vrot.slane %v6538, %v6565
    %v6567 = vcombine.high %v6545, %v6545
    %v6568 = vcombine.high %v6552, %v6552
    %v6569 = vcombine.high %v6559, %v6559
    %v6570 = vcombine.high %v6566, %v6566
    %v6571 = vcombine.high %v5837, %v5837
    %v6573 = vunpack.c.l.s4 1966171168
    %v6574 = vunpack.c.0.s8 %v6573
    %v6575 = vlaneseq
    %v6576 = vshrl.u32 %v6575, 7
    %v6577 = vsub.s32 %v6574, %v6576
    %v6578 = vrot.slane %v5837, %v6577
    %v6580 = vunpack.c.l.s4 1966171168
    %v6581 = vunpack.c.0.s8 %v6580
    %v6582 = vlaneseq
    %v6583 = vshrl.u32 %v6582, 7
    %v6584 = vsub.s32 %v6581, %v6583
    %v6585 = vrot.slane %v6571, %v6584
    %v6586 = vcombine.high %v6578, %v6578
    %v6587 = vcombine.high %v6585, %v6585
    %v6589 = vunpack.c.l.s4 1966171168
    %v6590 = vunpack.c.0.s8 %v6589
    %v6591 = vlaneseq
    %v6592 = vshrl.u32 %v6591, 7
    %v6593 = vsub.s32 %v6590, %v6592
    %v6594 = vrot.slane %v6578, %v6593
    %v6596 = vunpack.c.l.s4 1966171168
    %v6597 = vunpack.c.0.s8 %v6596
    %v6598 = vlaneseq
    %v6599 = vshrl.u32 %v6598, 7
    %v6600 = vsub.s32 %v6597, %v6599
    %v6601 = vrot.slane %v6585, %v6600
    %v6603 = vunpack.c.l.s4 1966171168
    %v6604 = vunpack.c.0.s8 %v6603
    %v6605 = vlaneseq
    %v6606 = vshrl.u32 %v6605, 7
    %v6607 = vsub.s32 %v6604, %v6606
    %v6608 = vrot.slane %v6586, %v6607
    %v6610 = vunpack.c.l.s4 1966171168
    %v6611 = vunpack.c.0.s8 %v6610
    %v6612 = vlaneseq
    %v6613 = vshrl.u32 %v6612, 7
    %v6614 = vsub.s32 %v6611, %v6613
    %v6615 = vrot.slane %v6587, %v6614
    %v6616 = vcombine.high %v6594, %v6594
    %v6617 = vcombine.high %v6601, %v6601
    %v6618 = vcombine.high %v6608, %v6608
    %v6619 = vcombine.high %v6615, %v6615
    %v6620 = vunpack.i.l.s16 %v6545
    %v6621 = vunpack.i.h.s16 %v6545
    %v6622 = vunpack.i.l.s16 %v6559
    %v6623 = vunpack.i.h.s16 %v6559
    %v6624 = vunpack.i.l.s16 %v6567
    %v6625 = vunpack.i.h.s16 %v6567
    %v6626 = vunpack.i.l.s16 %v6569
    %v6627 = vunpack.i.h.s16 %v6569
    %v6628 = vunpack.i.l.s16 %v6552
    %v6629 = vunpack.i.h.s16 %v6552
    %v6630 = vunpack.i.l.s16 %v6566
    %v6631 = vunpack.i.h.s16 %v6566
    %v6632 = vunpack.i.l.s16 %v6568
    %v6633 = vunpack.i.h.s16 %v6568
    %v6634 = vunpack.i.l.s16 %v6570
    %v6635 = vunpack.i.h.s16 %v6570
    %v6636 = vunpack.i.l.s16 %v6594
    %v6637 = vunpack.i.h.s16 %v6594
    %v6638 = vunpack.i.l.s16 %v6608
    %v6639 = vunpack.i.h.s16 %v6608
    %v6640 = vunpack.i.l.s16 %v6616
    %v6641 = vunpack.i.h.s16 %v6616
    %v6642 = vunpack.i.l.s16 %v6618
    %v6643 = vunpack.i.h.s16 %v6618
    %v6644 = vunpack.i.l.s16 %v6601
    %v6645 = vunpack.i.h.s16 %v6601
    %v6646 = vunpack.i.l.s16 %v6615
    %v6647 = vunpack.i.h.s16 %v6615
    %v6648 = vunpack.i.l.s16 %v6617
    %v6649 = vunpack.i.h.s16 %v6617
    %v6650 = vunpack.i.l.s16 %v6619
    %v6651 = vunpack.i.h.s16 %v6619
    %v6654 = vcombine.high %v5838, %v5838
    %v6656 = vunpack.c.l.s4 1966171168
    %v6657 = vunpack.c.0.s8 %v6656
    %v6658 = vlaneseq
    %v6659 = vshrl.u32 %v6658, 7
    %v6660 = vsub.s32 %v6657, %v6659
    %v6661 = vrot.slane %v5838, %v6660
    %v6663 = vunpack.c.l.s4 1966171168
    %v6664 = vunpack.c.0.s8 %v6663
    %v6665 = vlaneseq
    %v6666 = vshrl.u32 %v6665, 7
    %v6667 = vsub.s32 %v6664, %v6666
    %v6668 = vrot.slane %v6654, %v6667
    %v6669 = vcombine.high %v6661, %v6661
    %v6670 = vcombine.high %v6668, %v6668
    %v6672 = vunpack.c.l.s4 1966171168
    %v6673 = vunpack.c.0.s8 %v6672
    %v6674 = vlaneseq
    %v6675 = vshrl.u32 %v6674, 7
    %v6676 = vsub.s32 %v6673, %v6675
    %v6677 = vrot.slane %v6661, %v6676
    %v6679 = vunpack.c.l.s4 1966171168
    %v6680 = vunpack.c.0.s8 %v6679
    %v6681 = vlaneseq
    %v6682 = vshrl.u32 %v6681, 7
    %v6683 = vsub.s32 %v6680, %v6682
    %v6684 = vrot.slane %v6668, %v6683
    %v6686 = vunpack.c.l.s4 1966171168
    %v6687 = vunpack.c.0.s8 %v6686
    %v6688 = vlaneseq
    %v6689 = vshrl.u32 %v6688, 7
    %v6690 = vsub.s32 %v6687, %v6689
    %v6691 = vrot.slane %v6669, %v6690
    %v6693 = vunpack.c.l.s4 1966171168
    %v6694 = vunpack.c.0.s8 %v6693
    %v6695 = vlaneseq
    %v6696 = vshrl.u32 %v6695, 7
    %v6697 = vsub.s32 %v6694, %v6696
    %v6698 = vrot.slane %v6670, %v6697
    %v6699 = vcombine.high %v6677, %v6677
    %v6700 = vcombine.high %v6684, %v6684
    %v6701 = vcombine.high %v6691, %v6691
    %v6702 = vcombine.high %v6698, %v6698
    %v6703 = vcombine.high %v5839, %v5839
    %v6705 = vunpack.c.l.s4 1966171168
    %v6706 = vunpack.c.0.s8 %v6705
    %v6707 = vlaneseq
    %v6708 = vshrl.u32 %v6707, 7
    %v6709 = vsub.s32 %v6706, %v6708
    %v6710 = vrot.slane %v5839, %v6709
    %v6712 = vunpack.c.l.s4 1966171168
    %v6713 = vunpack.c.0.s8 %v6712
    %v6714 = vlaneseq
    %v6715 = vshrl.u32 %v6714, 7
    %v6716 = vsub.s32 %v6713, %v6715
    %v6717 = vrot.slane %v6703, %v6716
    %v6718 = vcombine.high %v6710, %v6710
    %v6719 = vcombine.high %v6717, %v6717
    %v6721 = vunpack.c.l.s4 1966171168
    %v6722 = vunpack.c.0.s8 %v6721
    %v6723 = vlaneseq
    %v6724 = vshrl.u32 %v6723, 7
    %v6725 = vsub.s32 %v6722, %v6724
    %v6726 = vrot.slane %v6710, %v6725
    %v6728 = vunpack.c.l.s4 1966171168
    %v6729 = vunpack.c.0.s8 %v6728
    %v6730 = vlaneseq
    %v6731 = vshrl.u32 %v6730, 7
    %v6732 = vsub.s32 %v6729, %v6731
    %v6733 = vrot.slane %v6717, %v6732
    %v6735 = vunpack.c.l.s4 1966171168
    %v6736 = vunpack.c.0.s8 %v6735
    %v6737 = vlaneseq
    %v6738 = vshrl.u32 %v6737, 7
    %v6739 = vsub.s32 %v6736, %v6738
    %v6740 = vrot.slane %v6718, %v6739
    %v6742 = vunpack.c.l.s4 1966171168
    %v6743 = vunpack.c.0.s8 %v6742
    %v6744 = vlaneseq
    %v6745 = vshrl.u32 %v6744, 7
    %v6746 = vsub.s32 %v6743, %v6745
    %v6747 = vrot.slane %v6719, %v6746
    %v6748 = vcombine.high %v6726, %v6726
    %v6749 = vcombine.high %v6733, %v6733
    %v6750 = vcombine.high %v6740, %v6740
    %v6751 = vcombine.high %v6747, %v6747
    %v6752 = vunpack.i.l.s16 %v6677
    %v6753 = vunpack.i.h.s16 %v6677
    %v6754 = vunpack.i.l.s16 %v6691
    %v6755 = vunpack.i.h.s16 %v6691
    %v6756 = vunpack.i.l.s16 %v6699
    %v6757 = vunpack.i.h.s16 %v6699
    %v6758 = vunpack.i.l.s16 %v6701
    %v6759 = vunpack.i.h.s16 %v6701
    %v6760 = vunpack.i.l.s16 %v6684
    %v6761 = vunpack.i.h.s16 %v6684
    %v6762 = vunpack.i.l.s16 %v6698
    %v6763 = vunpack.i.h.s16 %v6698
    %v6764 = vunpack.i.l.s16 %v6700
    %v6765 = vunpack.i.h.s16 %v6700
    %v6766 = vunpack.i.l.s16 %v6702
    %v6767 = vunpack.i.h.s16 %v6702
    %v6768 = vunpack.i.l.s16 %v6726
    %v6769 = vunpack.i.h.s16 %v6726
    %v6770 = vunpack.i.l.s16 %v6740
    %v6771 = vunpack.i.h.s16 %v6740
    %v6772 = vunpack.i.l.s16 %v6748
    %v6773 = vunpack.i.h.s16 %v6748
    %v6774 = vunpack.i.l.s16 %v6750
    %v6775 = vunpack.i.h.s16 %v6750
    %v6776 = vunpack.i.l.s16 %v6733
    %v6777 = vunpack.i.h.s16 %v6733
    %v6778 = vunpack.i.l.s16 %v6747
    %v6779 = vunpack.i.h.s16 %v6747
    %v6780 = vunpack.i.l.s16 %v6749
    %v6781 = vunpack.i.h.s16 %v6749
    %v6782 = vunpack.i.l.s16 %v6751
    %v6783 = vunpack.i.h.s16 %v6751
    %v6784 = vpack.i.b16 %v6620, %v6620
    %v6785 = vpack.i.b16 %v6621, %v6621
    %v6786 = vpack.i.b16 %v6622, %v6622
    %v6787 = vpack.i.b16 %v6623, %v6623
    %v6788 = vpack.i.b16 %v6624, %v6624
    %v6789 = vpack.i.b16 %v6625, %v6625
    %v6790 = vpack.i.b16 %v6626, %v6626
    %v6791 = vpack.i.b16 %v6627, %v6627
    %v6792 = vpack.i.b16 %v6628, %v6628
    %v6793 = vpack.i.b16 %v6629, %v6629
    %v6794 = vpack.i.b16 %v6630, %v6630
    %v6795 = vpack.i.b16 %v6631, %v6631
    %v6796 = vpack.i.b16 %v6632, %v6632
    %v6797 = vpack.i.b16 %v6633, %v6633
    %v6798 = vpack.i.b16 %v6634, %v6634
    %v6799 = vpack.i.b16 %v6635, %v6635
    %v6800 = vpack.i.b16 %v6636, %v6636
    %v6801 = vpack.i.b16 %v6637, %v6637
    %v6802 = vpack.i.b16 %v6638, %v6638
    %v6803 = vpack.i.b16 %v6639, %v6639
    %v6804 = vpack.i.b16 %v6640, %v6640
    %v6805 = vpack.i.b16 %v6641, %v6641
    %v6806 = vpack.i.b16 %v6642, %v6642
    %v6807 = vpack.i.b16 %v6643, %v6643
    %v6808 = vpack.i.b16 %v6644, %v6644
    %v6809 = vpack.i.b16 %v6645, %v6645
    %v6810 = vpack.i.b16 %v6646, %v6646
    %v6811 = vpack.i.b16 %v6647, %v6647
    %v6812 = vpack.i.b16 %v6648, %v6648
    %v6813 = vpack.i.b16 %v6649, %v6649
    %v6814 = vpack.i.b16 %v6650, %v6650
    %v6815 = vpack.i.b16 %v6651, %v6651
    %v6816 = vlaneseq
    %v6817 = vshrl.u32 %v6816, 7
    %v6818 = vsub.s32 0, %v6817
    %v6819 = vrot.slane %v6784, %v6818
    %v6820 = vlaneseq
    %v6821 = vshrl.u32 %v6820, 7
    %v6822 = vsub.s32 0, %v6821
    %v6823 = vrot.slane %v6785, %v6822
    %v6824 = vlaneseq
    %v6825 = vshrl.u32 %v6824, 7
    %v6826 = vsub.s32 0, %v6825
    %v6827 = vrot.slane %v6786, %v6826
    %v6828 = vlaneseq
    %v6829 = vshrl.u32 %v6828, 7
    %v6830 = vsub.s32 0, %v6829
    %v6831 = vrot.slane %v6787, %v6830
    %v6832 = vlaneseq
    %v6833 = vshrl.u32 %v6832, 7
    %v6834 = vsub.s32 0, %v6833
    %v6835 = vrot.slane %v6788, %v6834
    %v6836 = vlaneseq
    %v6837 = vshrl.u32 %v6836, 7
    %v6838 = vsub.s32 0, %v6837
    %v6839 = vrot.slane %v6789, %v6838
    %v6840 = vlaneseq
    %v6841 = vshrl.u32 %v6840, 7
    %v6842 = vsub.s32 0, %v6841
    %v6843 = vrot.slane %v6790, %v6842
    %v6844 = vlaneseq
    %v6845 = vshrl.u32 %v6844, 7
    %v6846 = vsub.s32 0, %v6845
    %v6847 = vrot.slane %v6791, %v6846
    %v6848 = vlaneseq
    %v6849 = vshrl.u32 %v6848, 7
    %v6850 = vsub.s32 0, %v6849
    %v6851 = vrot.slane %v6792, %v6850
    %v6852 = vlaneseq
    %v6853 = vshrl.u32 %v6852, 7
    %v6854 = vsub.s32 0, %v6853
    %v6855 = vrot.slane %v6793, %v6854
    %v6856 = vlaneseq
    %v6857 = vshrl.u32 %v6856, 7
    %v6858 = vsub.s32 0, %v6857
    %v6859 = vrot.slane %v6794, %v6858
    %v6860 = vlaneseq
    %v6861 = vshrl.u32 %v6860, 7
    %v6862 = vsub.s32 0, %v6861
    %v6863 = vrot.slane %v6795, %v6862
    %v6864 = vlaneseq
    %v6865 = vshrl.u32 %v6864, 7
    %v6866 = vsub.s32 0, %v6865
    %v6867 = vrot.slane %v6796, %v6866
    %v6868 = vlaneseq
    %v6869 = vshrl.u32 %v6868, 7
    %v6870 = vsub.s32 0, %v6869
    %v6871 = vrot.slane %v6797, %v6870
    %v6872 = vlaneseq
    %v6873 = vshrl.u32 %v6872, 7
    %v6874 = vsub.s32 0, %v6873
    %v6875 = vrot.slane %v6798, %v6874
    %v6876 = vlaneseq
    %v6877 = vshrl.u32 %v6876, 7
    %v6878 = vsub.s32 0, %v6877
    %v6879 = vrot.slane %v6799, %v6878
    %v6880 = vlaneseq
    %v6881 = vshrl.u32 %v6880, 7
    %v6882 = vsub.s32 0, %v6881
    %v6883 = vrot.slane %v6800, %v6882
    %v6884 = vlaneseq
    %v6885 = vshrl.u32 %v6884, 7
    %v6886 = vsub.s32 0, %v6885
    %v6887 = vrot.slane %v6801, %v6886
    %v6888 = vlaneseq
    %v6889 = vshrl.u32 %v6888, 7
    %v6890 = vsub.s32 0, %v6889
    %v6891 = vrot.slane %v6802, %v6890
    %v6892 = vlaneseq
    %v6893 = vshrl.u32 %v6892, 7
    %v6894 = vsub.s32 0, %v6893
    %v6895 = vrot.slane %v6803, %v6894
    %v6896 = vlaneseq
    %v6897 = vshrl.u32 %v6896, 7
    %v6898 = vsub.s32 0, %v6897
    %v6899 = vrot.slane %v6804, %v6898
    %v6900 = vlaneseq
    %v6901 = vshrl.u32 %v6900, 7
    %v6902 = vsub.s32 0, %v6901
    %v6903 = vrot.slane %v6805, %v6902
    %v6904 = vlaneseq
    %v6905 = vshrl.u32 %v6904, 7
    %v6906 = vsub.s32 0, %v6905
    %v6907 = vrot.slane %v6806, %v6906
    %v6908 = vlaneseq
    %v6909 = vshrl.u32 %v6908, 7
    %v6910 = vsub.s32 0, %v6909
    %v6911 = vrot.slane %v6807, %v6910
    %v6912 = vlaneseq
    %v6913 = vshrl.u32 %v6912, 7
    %v6914 = vsub.s32 0, %v6913
    %v6915 = vrot.slane %v6808, %v6914
    %v6916 = vlaneseq
    %v6917 = vshrl.u32 %v6916, 7
    %v6918 = vsub.s32 0, %v6917
    %v6919 = vrot.slane %v6809, %v6918
    %v6920 = vlaneseq
    %v6921 = vshrl.u32 %v6920, 7
    %v6922 = vsub.s32 0, %v6921
    %v6923 = vrot.slane %v6810, %v6922
    %v6924 = vlaneseq
    %v6925 = vshrl.u32 %v6924, 7
    %v6926 = vsub.s32 0, %v6925
    %v6927 = vrot.slane %v6811, %v6926
    %v6928 = vlaneseq
    %v6929 = vshrl.u32 %v6928, 7
    %v6930 = vsub.s32 0, %v6929
    %v6931 = vrot.slane %v6812, %v6930
    %v6932 = vlaneseq
    %v6933 = vshrl.u32 %v6932, 7
    %v6934 = vsub.s32 0, %v6933
    %v6935 = vrot.slane %v6813, %v6934
    %v6936 = vlaneseq
    %v6937 = vshrl.u32 %v6936, 7
    %v6938 = vsub.s32 0, %v6937
    %v6939 = vrot.slane %v6814, %v6938
    %v6940 = vlaneseq
    %v6941 = vshrl.u32 %v6940, 7
    %v6942 = vsub.s32 0, %v6941
    %v6943 = vrot.slane %v6815, %v6942
    %v6976 = vpack.i.b16 %v6752, %v6752
    %v6977 = vpack.i.b16 %v6753, %v6753
    %v6978 = vpack.i.b16 %v6754, %v6754
    %v6979 = vpack.i.b16 %v6755, %v6755
    %v6980 = vpack.i.b16 %v6756, %v6756
    %v6981 = vpack.i.b16 %v6757, %v6757
    %v6982 = vpack.i.b16 %v6758, %v6758
    %v6983 = vpack.i.b16 %v6759, %v6759
    %v6984 = vpack.i.b16 %v6760, %v6760
    %v6985 = vpack.i.b16 %v6761, %v6761
    %v6986 = vpack.i.b16 %v6762, %v6762
    %v6987 = vpack.i.b16 %v6763, %v6763
    %v6988 = vpack.i.b16 %v6764, %v6764
    %v6989 = vpack.i.b16 %v6765, %v6765
    %v6990 = vpack.i.b16 %v6766, %v6766
    %v6991 = vpack.i.b16 %v6767, %v6767
    %v6992 = vpack.i.b16 %v6768, %v6768
    %v6993 = vpack.i.b16 %v6769, %v6769
    %v6994 = vpack.i.b16 %v6770, %v6770
    %v6995 = vpack.i.b16 %v6771, %v6771
    %v6996 = vpack.i.b16 %v6772, %v6772
    %v6997 = vpack.i.b16 %v6773, %v6773
    %v6998 = vpack.i.b16 %v6774, %v6774
    %v6999 = vpack.i.b16 %v6775, %v6775
    %v7000 = vpack.i.b16 %v6776, %v6776
    %v7001 = vpack.i.b16 %v6777, %v6777
    %v7002 = vpack.i.b16 %v6778, %v6778
    %v7003 = vpack.i.b16 %v6779, %v6779
    %v7004 = vpack.i.b16 %v6780, %v6780
    %v7005 = vpack.i.b16 %v6781, %v6781
    %v7006 = vpack.i.b16 %v6782, %v6782
    %v7007 = vpack.i.b16 %v6783, %v6783
    %v7008 = vlaneseq
    %v7009 = vshrl.u32 %v7008, 7
    %v7010 = vsub.s32 0, %v7009
    %v7011 = vrot.slane %v6976, %v7010
    %v7012 = vlaneseq
    %v7013 = vshrl.u32 %v7012, 7
    %v7014 = vsub.s32 0, %v7013
    %v7015 = vrot.slane %v6977, %v7014
    %v7016 = vlaneseq
    %v7017 = vshrl.u32 %v7016, 7
    %v7018 = vsub.s32 0, %v7017
    %v7019 = vrot.slane %v6978, %v7018
    %v7020 = vlaneseq
    %v7021 = vshrl.u32 %v7020, 7
    %v7022 = vsub.s32 0, %v7021
    %v7023 = vrot.slane %v6979, %v7022
    %v7024 = vlaneseq
    %v7025 = vshrl.u32 %v7024, 7
    %v7026 = vsub.s32 0, %v7025
    %v7027 = vrot.slane %v6980, %v7026
    %v7028 = vlaneseq
    %v7029 = vshrl.u32 %v7028, 7
    %v7030 = vsub.s32 0, %v7029
    %v7031 = vrot.slane %v6981, %v7030
    %v7032 = vlaneseq
    %v7033 = vshrl.u32 %v7032, 7
    %v7034 = vsub.s32 0, %v7033
    %v7035 = vrot.slane %v6982, %v7034
    %v7036 = vlaneseq
    %v7037 = vshrl.u32 %v7036, 7
    %v7038 = vsub.s32 0, %v7037
    %v7039 = vrot.slane %v6983, %v7038
    %v7040 = vlaneseq
    %v7041 = vshrl.u32 %v7040, 7
    %v7042 = vsub.s32 0, %v7041
    %v7043 = vrot.slane %v6984, %v7042
    %v7044 = vlaneseq
    %v7045 = vshrl.u32 %v7044, 7
    %v7046 = vsub.s32 0, %v7045
    %v7047 = vrot.slane %v6985, %v7046
    %v7048 = vlaneseq
    %v7049 = vshrl.u32 %v7048, 7
    %v7050 = vsub.s32 0, %v7049
    %v7051 = vrot.slane %v6986, %v7050
    %v7052 = vlaneseq
    %v7053 = vshrl.u32 %v7052, 7
    %v7054 = vsub.s32 0, %v7053
    %v7055 = vrot.slane %v6987, %v7054
    %v7056 = vlaneseq
    %v7057 = vshrl.u32 %v7056, 7
    %v7058 = vsub.s32 0, %v7057
    %v7059 = vrot.slane %v6988, %v7058
    %v7060 = vlaneseq
    %v7061 = vshrl.u32 %v7060, 7
    %v7062 = vsub.s32 0, %v7061
    %v7063 = vrot.slane %v6989, %v7062
    %v7064 = vlaneseq
    %v7065 = vshrl.u32 %v7064, 7
    %v7066 = vsub.s32 0, %v7065
    %v7067 = vrot.slane %v6990, %v7066
    %v7068 = vlaneseq
    %v7069 = vshrl.u32 %v7068, 7
    %v7070 = vsub.s32 0, %v7069
    %v7071 = vrot.slane %v6991, %v7070
    %v7072 = vlaneseq
    %v7073 = vshrl.u32 %v7072, 7
    %v7074 = vsub.s32 0, %v7073
    %v7075 = vrot.slane %v6992, %v7074
    %v7076 = vlaneseq
    %v7077 = vshrl.u32 %v7076, 7
    %v7078 = vsub.s32 0, %v7077
    %v7079 = vrot.slane %v6993, %v7078
    %v7080 = vlaneseq
    %v7081 = vshrl.u32 %v7080, 7
    %v7082 = vsub.s32 0, %v7081
    %v7083 = vrot.slane %v6994, %v7082
    %v7084 = vlaneseq
    %v7085 = vshrl.u32 %v7084, 7
    %v7086 = vsub.s32 0, %v7085
    %v7087 = vrot.slane %v6995, %v7086
    %v7088 = vlaneseq
    %v7089 = vshrl.u32 %v7088, 7
    %v7090 = vsub.s32 0, %v7089
    %v7091 = vrot.slane %v6996, %v7090
    %v7092 = vlaneseq
    %v7093 = vshrl.u32 %v7092, 7
    %v7094 = vsub.s32 0, %v7093
    %v7095 = vrot.slane %v6997, %v7094
    %v7096 = vlaneseq
    %v7097 = vshrl.u32 %v7096, 7
    %v7098 = vsub.s32 0, %v7097
    %v7099 = vrot.slane %v6998, %v7098
    %v7100 = vlaneseq
    %v7101 = vshrl.u32 %v7100, 7
    %v7102 = vsub.s32 0, %v7101
    %v7103 = vrot.slane %v6999, %v7102
    %v7104 = vlaneseq
    %v7105 = vshrl.u32 %v7104, 7
    %v7106 = vsub.s32 0, %v7105
    %v7107 = vrot.slane %v7000, %v7106
    %v7108 = vlaneseq
    %v7109 = vshrl.u32 %v7108, 7
    %v7110 = vsub.s32 0, %v7109
    %v7111 = vrot.slane %v7001, %v7110
    %v7112 = vlaneseq
    %v7113 = vshrl.u32 %v7112, 7
    %v7114 = vsub.s32 0, %v7113
    %v7115 = vrot.slane %v7002, %v7114
    %v7116 = vlaneseq
    %v7117 = vshrl.u32 %v7116, 7
    %v7118 = vsub.s32 0, %v7117
    %v7119 = vrot.slane %v7003, %v7118
    %v7120 = vlaneseq
    %v7121 = vshrl.u32 %v7120, 7
    %v7122 = vsub.s32 0, %v7121
    %v7123 = vrot.slane %v7004, %v7122
    %v7124 = vlaneseq
    %v7125 = vshrl.u32 %v7124, 7
    %v7126 = vsub.s32 0, %v7125
    %v7127 = vrot.slane %v7005, %v7126
    %v7128 = vlaneseq
    %v7129 = vshrl.u32 %v7128, 7
    %v7130 = vsub.s32 0, %v7129
    %v7131 = vrot.slane %v7006, %v7130
    %v7132 = vlaneseq
    %v7133 = vshrl.u32 %v7132, 7
    %v7134 = vsub.s32 0, %v7133
    %v7135 = vrot.slane %v7007, %v7134
    %v7168 = vsel %vm1172, %v6819, %v7011
    %v7169 = vsel %vm1172, %v6823, %v7015
    %v7170 = vsel %vm1172, %v6827, %v7019
    %v7171 = vsel %vm1172, %v6831, %v7023
    %v7172 = vsel %vm1172, %v6835, %v7027
    %v7173 = vsel %vm1172, %v6839, %v7031
    %v7174 = vsel %vm1172, %v6843, %v7035
    %v7175 = vsel %vm1172, %v6847, %v7039
    %v7176 = vsel %vm1172, %v6851, %v7043
    %v7177 = vsel %vm1172, %v6855, %v7047
    %v7178 = vsel %vm1172, %v6859, %v7051
    %v7179 = vsel %vm1172, %v6863, %v7055
    %v7180 = vsel %vm1172, %v6867, %v7059
    %v7181 = vsel %vm1172, %v6871, %v7063
    %v7182 = vsel %vm1172, %v6875, %v7067
    %v7183 = vsel %vm1172, %v6879, %v7071
    %v7184 = vsel %vm1172, %v6883, %v7075
    %v7185 = vsel %vm1172, %v6887, %v7079
    %v7186 = vsel %vm1172, %v6891, %v7083
    %v7187 = vsel %vm1172, %v6895, %v7087
    %v7188 = vsel %vm1172, %v6899, %v7091
    %v7189 = vsel %vm1172, %v6903, %v7095
    %v7190 = vsel %vm1172, %v6907, %v7099
    %v7191 = vsel %vm1172, %v6911, %v7103
    %v7192 = vsel %vm1172, %v6915, %v7107
    %v7193 = vsel %vm1172, %v6919, %v7111
    %v7194 = vsel %vm1172, %v6923, %v7115
    %v7195 = vsel %vm1172, %v6927, %v7119
    %v7196 = vsel %vm1172, %v6931, %v7123
    %v7197 = vsel %vm1172, %v6935, %v7127
    %v7198 = vsel %vm1172, %v6939, %v7131
    %v7199 = vsel %vm1172, %v6943, %v7135
    %v7264 = vcombine.low %v6488, %v6489
    %v7265 = vcombine.low %v6490, %v6491
    %v7267 = vunpack.c.l.s4 1966171168
    %v7268 = vunpack.c.0.s8 %v7267
    %v7269 = vlaneseq
    %v7270 = vshrl.u32 %v7269, 7
    %v7271 = vsub.s32 %v7268, %v7270
    %v7272 = vrot.slane %v7264, %v7271
    %v7274 = vunpack.c.l.s4 1966171168
    %v7275 = vunpack.c.0.s8 %v7274
    %v7276 = vlaneseq
    %v7277 = vshrl.u32 %v7276, 7
    %v7278 = vsub.s32 %v7275, %v7277
    %v7279 = vrot.slane %v7265, %v7278
    %v7280 = vcombine.low %v7272, %v7279
    %v7282 = vunpack.c.l.s4 1966171168
    %v7283 = vunpack.c.0.s8 %v7282
    %v7284 = vlaneseq
    %v7285 = vshrl.u32 %v7284, 7
    %v7286 = vsub.s32 %v7283, %v7285
    %v7287 = vrot.slane %v7280, %v7286
    %v7288 = vcombine.low %v7168, %v7169
    %v7289 = vcombine.low %v7170, %v7171
    %v7291 = vunpack.c.l.s4 1966171168
    %v7292 = vunpack.c.0.s8 %v7291
    %v7293 = vlaneseq
    %v7294 = vshrl.u32 %v7293, 7
    %v7295 = vsub.s32 %v7292, %v7294
    %v7296 = vrot.slane %v7288, %v7295
    %v7298 = vunpack.c.l.s4 1966171168
    %v7299 = vunpack.c.0.s8 %v7298
    %v7300 = vlaneseq
    %v7301 = vshrl.u32 %v7300, 7
    %v7302 = vsub.s32 %v7299, %v7301
    %v7303 = vrot.slane %v7289, %v7302
    %v7304 = vcombine.low %v7296, %v7303
    %v7306 = vunpack.c.l.s4 1966171168
    %v7307 = vunpack.c.0.s8 %v7306
    %v7308 = vlaneseq
    %v7309 = vshrl.u32 %v7308, 7
    %v7310 = vsub.s32 %v7307, %v7309
    %v7311 = vrot.slane %v7304, %v7310
    %v7312 = vcombine.low %v6492, %v6493
    %v7313 = vcombine.low %v6494, %v6495
    %v7315 = vunpack.c.l.s4 1966171168
    %v7316 = vunpack.c.0.s8 %v7315
    %v7317 = vlaneseq
    %v7318 = vshrl.u32 %v7317, 7
    %v7319 = vsub.s32 %v7316, %v7318
    %v7320 = vrot.slane %v7312, %v7319
    %v7322 = vunpack.c.l.s4 1966171168
    %v7323 = vunpack.c.0.s8 %v7322
    %v7324 = vlaneseq
    %v7325 = vshrl.u32 %v7324, 7
    %v7326 = vsub.s32 %v7323, %v7325
    %v7327 = vrot.slane %v7313, %v7326
    %v7328 = vcombine.low %v7320, %v7327
    %v7330 = vunpack.c.l.s4 1966171168
    %v7331 = vunpack.c.0.s8 %v7330
    %v7332 = vlaneseq
    %v7333 = vshrl.u32 %v7332, 7
    %v7334 = vsub.s32 %v7331, %v7333
    %v7335 = vrot.slane %v7328, %v7334
    %v7336 = vcombine.low %v7172, %v7173
    %v7337 = vcombine.low %v7174, %v7175
    %v7339 = vunpack.c.l.s4 1966171168
    %v7340 = vunpack.c.0.s8 %v7339
    %v7341 = vlaneseq
    %v7342 = vshrl.u32 %v7341, 7
    %v7343 = vsub.s32 %v7340, %v7342
    %v7344 = vrot.slane %v7336, %v7343
    %v7346 = vunpack.c.l.s4 1966171168
    %v7347 = vunpack.c.0.s8 %v7346
    %v7348 = vlaneseq
    %v7349 = vshrl.u32 %v7348, 7
    %v7350 = vsub.s32 %v7347, %v7349
    %v7351 = vrot.slane %v7337, %v7350
    %v7352 = vcombine.low %v7344, %v7351
    %v7354 = vunpack.c.l.s4 1966171168
    %v7355 = vunpack.c.0.s8 %v7354
    %v7356 = vlaneseq
    %v7357 = vshrl.u32 %v7356, 7
    %v7358 = vsub.s32 %v7355, %v7357
    %v7359 = vrot.slane %v7352, %v7358
    %v7360 = vcombine.low %v6496, %v6497
    %v7361 = vcombine.low %v6498, %v6499
    %v7363 = vunpack.c.l.s4 1966171168
    %v7364 = vunpack.c.0.s8 %v7363
    %v7365 = vlaneseq
    %v7366 = vshrl.u32 %v7365, 7
    %v7367 = vsub.s32 %v7364, %v7366
    %v7368 = vrot.slane %v7360, %v7367
    %v7370 = vunpack.c.l.s4 1966171168
    %v7371 = vunpack.c.0.s8 %v7370
    %v7372 = vlaneseq
    %v7373 = vshrl.u32 %v7372, 7
    %v7374 = vsub.s32 %v7371, %v7373
    %v7375 = vrot.slane %v7361, %v7374
    %v7376 = vcombine.low %v7368, %v7375
    %v7378 = vunpack.c.l.s4 1966171168
    %v7379 = vunpack.c.0.s8 %v7378
    %v7380 = vlaneseq
    %v7381 = vshrl.u32 %v7380, 7
    %v7382 = vsub.s32 %v7379, %v7381
    %v7383 = vrot.slane %v7376, %v7382
    %v7384 = vcombine.low %v7176, %v7177
    %v7385 = vcombine.low %v7178, %v7179
    %v7387 = vunpack.c.l.s4 1966171168
    %v7388 = vunpack.c.0.s8 %v7387
    %v7389 = vlaneseq
    %v7390 = vshrl.u32 %v7389, 7
    %v7391 = vsub.s32 %v7388, %v7390
    %v7392 = vrot.slane %v7384, %v7391
    %v7394 = vunpack.c.l.s4 1966171168
    %v7395 = vunpack.c.0.s8 %v7394
    %v7396 = vlaneseq
    %v7397 = vshrl.u32 %v7396, 7
    %v7398 = vsub.s32 %v7395, %v7397
    %v7399 = vrot.slane %v7385, %v7398
    %v7400 = vcombine.low %v7392, %v7399
    %v7402 = vunpack.c.l.s4 1966171168
    %v7403 = vunpack.c.0.s8 %v7402
    %v7404 = vlaneseq
    %v7405 = vshrl.u32 %v7404, 7
    %v7406 = vsub.s32 %v7403, %v7405
    %v7407 = vrot.slane %v7400, %v7406
    %v7408 = vcombine.low %v6500, %v6501
    %v7409 = vcombine.low %v6502, %v6503
    %v7411 = vunpack.c.l.s4 1966171168
    %v7412 = vunpack.c.0.s8 %v7411
    %v7413 = vlaneseq
    %v7414 = vshrl.u32 %v7413, 7
    %v7415 = vsub.s32 %v7412, %v7414
    %v7416 = vrot.slane %v7408, %v7415
    %v7418 = vunpack.c.l.s4 1966171168
    %v7419 = vunpack.c.0.s8 %v7418
    %v7420 = vlaneseq
    %v7421 = vshrl.u32 %v7420, 7
    %v7422 = vsub.s32 %v7419, %v7421
    %v7423 = vrot.slane %v7409, %v7422
    %v7424 = vcombine.low %v7416, %v7423
    %v7426 = vunpack.c.l.s4 1966171168
    %v7427 = vunpack.c.0.s8 %v7426
    %v7428 = vlaneseq
    %v7429 = vshrl.u32 %v7428, 7
    %v7430 = vsub.s32 %v7427, %v7429
    %v7431 = vrot.slane %v7424, %v7430
    %v7432 = vcombine.low %v7180, %v7181
    %v7433 = vcombine.low %v7182, %v7183
    %v7435 = vunpack.c.l.s4 1966171168
    %v7436 = vunpack.c.0.s8 %v7435
    %v7437 = vlaneseq
    %v7438 = vshrl.u32 %v7437, 7
    %v7439 = vsub.s32 %v7436, %v7438
    %v7440 = vrot.slane %v7432, %v7439
    %v7442 = vunpack.c.l.s4 1966171168
    %v7443 = vunpack.c.0.s8 %v7442
    %v7444 = vlaneseq
    %v7445 = vshrl.u32 %v7444, 7
    %v7446 = vsub.s32 %v7443, %v7445
    %v7447 = vrot.slane %v7433, %v7446
    %v7448 = vcombine.low %v7440, %v7447
    %v7450 = vunpack.c.l.s4 1966171168
    %v7451 = vunpack.c.0.s8 %v7450
    %v7452 = vlaneseq
    %v7453 = vshrl.u32 %v7452, 7
    %v7454 = vsub.s32 %v7451, %v7453
    %v7455 = vrot.slane %v7448, %v7454
    %v7456 = vcombine.low %v6504, %v6505
    %v7457 = vcombine.low %v6506, %v6507
    %v7459 = vunpack.c.l.s4 1966171168
    %v7460 = vunpack.c.0.s8 %v7459
    %v7461 = vlaneseq
    %v7462 = vshrl.u32 %v7461, 7
    %v7463 = vsub.s32 %v7460, %v7462
    %v7464 = vrot.slane %v7456, %v7463
    %v7466 = vunpack.c.l.s4 1966171168
    %v7467 = vunpack.c.0.s8 %v7466
    %v7468 = vlaneseq
    %v7469 = vshrl.u32 %v7468, 7
    %v7470 = vsub.s32 %v7467, %v7469
    %v7471 = vrot.slane %v7457, %v7470
    %v7472 = vcombine.low %v7464, %v7471
    %v7474 = vunpack.c.l.s4 1966171168
    %v7475 = vunpack.c.0.s8 %v7474
    %v7476 = vlaneseq
    %v7477 = vshrl.u32 %v7476, 7
    %v7478 = vsub.s32 %v7475, %v7477
    %v7479 = vrot.slane %v7472, %v7478
    %v7480 = vcombine.low %v7184, %v7185
    %v7481 = vcombine.low %v7186, %v7187
    %v7483 = vunpack.c.l.s4 1966171168
    %v7484 = vunpack.c.0.s8 %v7483
    %v7485 = vlaneseq
    %v7486 = vshrl.u32 %v7485, 7
    %v7487 = vsub.s32 %v7484, %v7486
    %v7488 = vrot.slane %v7480, %v7487
    %v7490 = vunpack.c.l.s4 1966171168
    %v7491 = vunpack.c.0.s8 %v7490
    %v7492 = vlaneseq
    %v7493 = vshrl.u32 %v7492, 7
    %v7494 = vsub.s32 %v7491, %v7493
    %v7495 = vrot.slane %v7481, %v7494
    %v7496 = vcombine.low %v7488, %v7495
    %v7498 = vunpack.c.l.s4 1966171168
    %v7499 = vunpack.c.0.s8 %v7498
    %v7500 = vlaneseq
    %v7501 = vshrl.u32 %v7500, 7
    %v7502 = vsub.s32 %v7499, %v7501
    %v7503 = vrot.slane %v7496, %v7502
    %v7504 = vcombine.low %v6508, %v6509
    %v7505 = vcombine.low %v6510, %v6511
    %v7507 = vunpack.c.l.s4 1966171168
    %v7508 = vunpack.c.0.s8 %v7507
    %v7509 = vlaneseq
    %v7510 = vshrl.u32 %v7509, 7
    %v7511 = vsub.s32 %v7508, %v7510
    %v7512 = vrot.slane %v7504, %v7511
    %v7514 = vunpack.c.l.s4 1966171168
    %v7515 = vunpack.c.0.s8 %v7514
    %v7516 = vlaneseq
    %v7517 = vshrl.u32 %v7516, 7
    %v7518 = vsub.s32 %v7515, %v7517
    %v7519 = vrot.slane %v7505, %v7518
    %v7520 = vcombine.low %v7512, %v7519
    %v7522 = vunpack.c.l.s4 1966171168
    %v7523 = vunpack.c.0.s8 %v7522
    %v7524 = vlaneseq
    %v7525 = vshrl.u32 %v7524, 7
    %v7526 = vsub.s32 %v7523, %v7525
    %v7527 = vrot.slane %v7520, %v7526
    %v7528 = vcombine.low %v7188, %v7189
    %v7529 = vcombine.low %v7190, %v7191
    %v7531 = vunpack.c.l.s4 1966171168
    %v7532 = vunpack.c.0.s8 %v7531
    %v7533 = vlaneseq
    %v7534 = vshrl.u32 %v7533, 7
    %v7535 = vsub.s32 %v7532, %v7534
    %v7536 = vrot.slane %v7528, %v7535
    %v7538 = vunpack.c.l.s4 1966171168
    %v7539 = vunpack.c.0.s8 %v7538
    %v7540 = vlaneseq
    %v7541 = vshrl.u32 %v7540, 7
    %v7542 = vsub.s32 %v7539, %v7541
    %v7543 = vrot.slane %v7529, %v7542
    %v7544 = vcombine.low %v7536, %v7543
    %v7546 = vunpack.c.l.s4 1966171168
    %v7547 = vunpack.c.0.s8 %v7546
    %v7548 = vlaneseq
    %v7549 = vshrl.u32 %v7548, 7
    %v7550 = vsub.s32 %v7547, %v7549
    %v7551 = vrot.slane %v7544, %v7550
    %v7552 = vcombine.low %v6512, %v6513
    %v7553 = vcombine.low %v6514, %v6515
    %v7555 = vunpack.c.l.s4 1966171168
    %v7556 = vunpack.c.0.s8 %v7555
    %v7557 = vlaneseq
    %v7558 = vshrl.u32 %v7557, 7
    %v7559 = vsub.s32 %v7556, %v7558
    %v7560 = vrot.slane %v7552, %v7559
    %v7562 = vunpack.c.l.s4 1966171168
    %v7563 = vunpack.c.0.s8 %v7562
    %v7564 = vlaneseq
    %v7565 = vshrl.u32 %v7564, 7
    %v7566 = vsub.s32 %v7563, %v7565
    %v7567 = vrot.slane %v7553, %v7566
    %v7568 = vcombine.low %v7560, %v7567
    %v7570 = vunpack.c.l.s4 1966171168
    %v7571 = vunpack.c.0.s8 %v7570
    %v7572 = vlaneseq
    %v7573 = vshrl.u32 %v7572, 7
    %v7574 = vsub.s32 %v7571, %v7573
    %v7575 = vrot.slane %v7568, %v7574
    %v7576 = vcombine.low %v7192, %v7193
    %v7577 = vcombine.low %v7194, %v7195
    %v7579 = vunpack.c.l.s4 1966171168
    %v7580 = vunpack.c.0.s8 %v7579
    %v7581 = vlaneseq
    %v7582 = vshrl.u32 %v7581, 7
    %v7583 = vsub.s32 %v7580, %v7582
    %v7584 = vrot.slane %v7576, %v7583
    %v7586 = vunpack.c.l.s4 1966171168
    %v7587 = vunpack.c.0.s8 %v7586
    %v7588 = vlaneseq
    %v7589 = vshrl.u32 %v7588, 7
    %v7590 = vsub.s32 %v7587, %v7589
    %v7591 = vrot.slane %v7577, %v7590
    %v7592 = vcombine.low %v7584, %v7591
    %v7594 = vunpack.c.l.s4 1966171168
    %v7595 = vunpack.c.0.s8 %v7594
    %v7596 = vlaneseq
    %v7597 = vshrl.u32 %v7596, 7
    %v7598 = vsub.s32 %v7595, %v7597
    %v7599 = vrot.slane %v7592, %v7598
    %v7600 = vcombine.low %v6516, %v6517
    %v7601 = vcombine.low %v6518, %v6519
    %v7603 = vunpack.c.l.s4 1966171168
    %v7604 = vunpack.c.0.s8 %v7603
    %v7605 = vlaneseq
    %v7606 = vshrl.u32 %v7605, 7
    %v7607 = vsub.s32 %v7604, %v7606
    %v7608 = vrot.slane %v7600, %v7607
    %v7610 = vunpack.c.l.s4 1966171168
    %v7611 = vunpack.c.0.s8 %v7610
    %v7612 = vlaneseq
    %v7613 = vshrl.u32 %v7612, 7
    %v7614 = vsub.s32 %v7611, %v7613
    %v7615 = vrot.slane %v7601, %v7614
    %v7616 = vcombine.low %v7608, %v7615
    %v7618 = vunpack.c.l.s4 1966171168
    %v7619 = vunpack.c.0.s8 %v7618
    %v7620 = vlaneseq
    %v7621 = vshrl.u32 %v7620, 7
    %v7622 = vsub.s32 %v7619, %v7621
    %v7623 = vrot.slane %v7616, %v7622
    %v7624 = vcombine.low %v7196, %v7197
    %v7625 = vcombine.low %v7198, %v7199
    %v7627 = vunpack.c.l.s4 1966171168
    %v7628 = vunpack.c.0.s8 %v7627
    %v7629 = vlaneseq
    %v7630 = vshrl.u32 %v7629, 7
    %v7631 = vsub.s32 %v7628, %v7630
    %v7632 = vrot.slane %v7624, %v7631
    %v7634 = vunpack.c.l.s4 1966171168
    %v7635 = vunpack.c.0.s8 %v7634
    %v7636 = vlaneseq
    %v7637 = vshrl.u32 %v7636, 7
    %v7638 = vsub.s32 %v7635, %v7637
    %v7639 = vrot.slane %v7625, %v7638
    %v7640 = vcombine.low %v7632, %v7639
    %v7642 = vunpack.c.l.s4 1966171168
    %v7643 = vunpack.c.0.s8 %v7642
    %v7644 = vlaneseq
    %v7645 = vshrl.u32 %v7644, 7
    %v7646 = vsub.s32 %v7643, %v7645
    %v7647 = vrot.slane %v7640, %v7646
    %v7649 = vshrl.u32 %v7287, 16
    %v7651 = vrot.slane %v7649, 7
    %v7652 = vshll.u32 %v7287, 16
    %v7654 = vor.u32 %v7651, %v7652
    %v7656 = vshrl.u32 %v7311, 16
    %v7658 = vrot.slane %v7656, 7
    %v7659 = vshll.u32 %v7311, 16
    %v7661 = vor.u32 %v7658, %v7659
    %v7663 = vshrl.u32 %v7335, 16
    %v7665 = vrot.slane %v7663, 7
    %v7666 = vshll.u32 %v7335, 16
    %v7668 = vor.u32 %v7665, %v7666
    %v7670 = vshrl.u32 %v7359, 16
    %v7672 = vrot.slane %v7670, 7
    %v7673 = vshll.u32 %v7359, 16
    %v7675 = vor.u32 %v7672, %v7673
    %v7677 = vshrl.u32 %v7383, 16
    %v7679 = vrot.slane %v7677, 7
    %v7680 = vshll.u32 %v7383, 16
    %v7682 = vor.u32 %v7679, %v7680
    %v7684 = vshrl.u32 %v7407, 16
    %v7686 = vrot.slane %v7684, 7
    %v7687 = vshll.u32 %v7407, 16
    %v7689 = vor.u32 %v7686, %v7687
    %v7691 = vshrl.u32 %v7431, 16
    %v7693 = vrot.slane %v7691, 7
    %v7694 = vshll.u32 %v7431, 16
    %v7696 = vor.u32 %v7693, %v7694
    %v7698 = vshrl.u32 %v7455, 16
    %v7700 = vrot.slane %v7698, 7
    %v7701 = vshll.u32 %v7455, 16
    %v7703 = vor.u32 %v7700, %v7701
    %v7705 = vshrl.u32 %v7479, 16
    %v7707 = vrot.slane %v7705, 7
    %v7708 = vshll.u32 %v7479, 16
    %v7710 = vor.u32 %v7707, %v7708
    %v7712 = vshrl.u32 %v7503, 16
    %v7714 = vrot.slane %v7712, 7
    %v7715 = vshll.u32 %v7503, 16
    %v7717 = vor.u32 %v7714, %v7715
    %v7719 = vshrl.u32 %v7527, 16
    %v7721 = vrot.slane %v7719, 7
    %v7722 = vshll.u32 %v7527, 16
    %v7724 = vor.u32 %v7721, %v7722
    %v7726 = vshrl.u32 %v7551, 16
    %v7728 = vrot.slane %v7726, 7
    %v7729 = vshll.u32 %v7551, 16
    %v7731 = vor.u32 %v7728, %v7729
    %v7733 = vshrl.u32 %v7575, 16
    %v7735 = vrot.slane %v7733, 7
    %v7736 = vshll.u32 %v7575, 16
    %v7738 = vor.u32 %v7735, %v7736
    %v7740 = vshrl.u32 %v7599, 16
    %v7742 = vrot.slane %v7740, 7
    %v7743 = vshll.u32 %v7599, 16
    %v7745 = vor.u32 %v7742, %v7743
    %v7747 = vshrl.u32 %v7623, 16
    %v7749 = vrot.slane %v7747, 7
    %v7750 = vshll.u32 %v7623, 16
    %v7752 = vor.u32 %v7749, %v7750
    %v7754 = vshrl.u32 %v7647, 16
    %v7756 = vrot.slane %v7754, 7
    %v7757 = vshll.u32 %v7647, 16
    %v7759 = vor.u32 %v7756, %v7757
    %v7776 = vsel %vm1172, 0, %v7654
    %v7777 = vsel %vm1172, 0, %v7661
    %v7778 = vsel %vm1172, 0, %v7668
    %v7779 = vsel %vm1172, 0, %v7675
    %v7780 = vsel %vm1172, 0, %v7682
    %v7781 = vsel %vm1172, 0, %v7689
    %v7782 = vsel %vm1172, 0, %v7696
    %v7783 = vsel %vm1172, 0, %v7703
    %v7784 = vsel %vm1172, 0, %v7710
    %v7785 = vsel %vm1172, 0, %v7717
    %v7786 = vsel %vm1172, 0, %v7724
    %v7787 = vsel %vm1172, 0, %v7731
    %v7788 = vsel %vm1172, 0, %v7738
    %v7789 = vsel %vm1172, 0, %v7745
    %v7790 = vsel %vm1172, 0, %v7752
    %v7791 = vsel %vm1172, 0, %v7759
    %vm7792 = vcmask 1044480
    %vm7793 = vsmask.f32 4352
    %vm7794 = vmand %vm7792, %vm7793
    %v7795 = vsel %vm7794, %v7776, 0
    %v7796 = vsel %vm7794, %v7777, 0
    %v7797 = vsel %vm7794, %v7778, 0
    %v7798 = vsel %vm7794, %v7779, 0
    %v7799 = vsel %vm7794, %v7780, 0
    %v7800 = vsel %vm7794, %v7781, 0
    %v7801 = vsel %vm7794, %v7782, 0
    %v7802 = vsel %vm7794, %v7783, 0
    %v7803 = vsel %vm7794, %v1173, 0
    %v7804 = vsel %vm7794, %v7784, 0
    %v7805 = vsel %vm7794, %v7785, 0
    %v7806 = vsel %vm7794, %v7786, 0
    %v7807 = vsel %vm7794, %v7787, 0
    %v7808 = vsel %vm7794, %v7788, 0
    %v7809 = vsel %vm7794, %v7789, 0
    %v7810 = vsel %vm7794, %v7790, 0
    %v7811 = vsel %vm7794, %v7791, 0
    %7812 = vrot.lane.b32.xlu0 %v7287, 96
    %v7813 = vpop.permute.xlu0 %7812
    %7814 = vrot.lane.b32.xlu0 %v7311, 96
    %v7815 = vpop.permute.xlu0 %7814
    %7816 = vrot.lane.b32.xlu0 %v7335, 96
    %v7817 = vpop.permute.xlu0 %7816
    %7818 = vrot.lane.b32.xlu0 %v7359, 96
    %v7819 = vpop.permute.xlu0 %7818
    %7820 = vrot.lane.b32.xlu0 %v7383, 96
    %v7821 = vpop.permute.xlu0 %7820
    %7822 = vrot.lane.b32.xlu0 %v7407, 96
    %v7823 = vpop.permute.xlu0 %7822
    %7824 = vrot.lane.b32.xlu0 %v7431, 96
    %v7825 = vpop.permute.xlu0 %7824
    %7826 = vrot.lane.b32.xlu0 %v7455, 96
    %v7827 = vpop.permute.xlu0 %7826
    %7828 = vrot.lane.b32.xlu0 %v7479, 96
    %v7829 = vpop.permute.xlu0 %7828
    %7830 = vrot.lane.b32.xlu0 %v7503, 96
    %v7831 = vpop.permute.xlu0 %7830
    %7832 = vrot.lane.b32.xlu0 %v7527, 96
    %v7833 = vpop.permute.xlu0 %7832
    %7834 = vrot.lane.b32.xlu0 %v7551, 96
    %v7835 = vpop.permute.xlu0 %7834
    %7836 = vrot.lane.b32.xlu0 %v7575, 96
    %v7837 = vpop.permute.xlu0 %7836
    %7838 = vrot.lane.b32.xlu0 %v7599, 96
    %v7839 = vpop.permute.xlu0 %7838
    %7840 = vrot.lane.b32.xlu0 %v7623, 96
    %v7841 = vpop.permute.xlu0 %7840
    %7842 = vrot.lane.b32.xlu0 %v7647, 96
    %v7843 = vpop.permute.xlu0 %7842
    %v7845 = vshrl.u32 %v7813, 16
    %v7847 = vrot.slane %v7845, 7
    %v7848 = vshll.u32 %v7813, 16
    %v7850 = vor.u32 %v7847, %v7848
    %v7852 = vshrl.u32 %v7815, 16
    %v7854 = vrot.slane %v7852, 7
    %v7855 = vshll.u32 %v7815, 16
    %v7857 = vor.u32 %v7854, %v7855
    %v7859 = vshrl.u32 %v7817, 16
    %v7861 = vrot.slane %v7859, 7
    %v7862 = vshll.u32 %v7817, 16
    %v7864 = vor.u32 %v7861, %v7862
    %v7866 = vshrl.u32 %v7819, 16
    %v7868 = vrot.slane %v7866, 7
    %v7869 = vshll.u32 %v7819, 16
    %v7871 = vor.u32 %v7868, %v7869
    %v7873 = vshrl.u32 %v7821, 16
    %v7875 = vrot.slane %v7873, 7
    %v7876 = vshll.u32 %v7821, 16
    %v7878 = vor.u32 %v7875, %v7876
    %v7880 = vshrl.u32 %v7823, 16
    %v7882 = vrot.slane %v7880, 7
    %v7883 = vshll.u32 %v7823, 16
    %v7885 = vor.u32 %v7882, %v7883
    %v7887 = vshrl.u32 %v7825, 16
    %v7889 = vrot.slane %v7887, 7
    %v7890 = vshll.u32 %v7825, 16
    %v7892 = vor.u32 %v7889, %v7890
    %v7894 = vshrl.u32 %v7827, 16
    %v7896 = vrot.slane %v7894, 7
    %v7897 = vshll.u32 %v7827, 16
    %v7899 = vor.u32 %v7896, %v7897
    %v7901 = vshrl.u32 %v7829, 16
    %v7903 = vrot.slane %v7901, 7
    %v7904 = vshll.u32 %v7829, 16
    %v7906 = vor.u32 %v7903, %v7904
    %v7908 = vshrl.u32 %v7831, 16
    %v7910 = vrot.slane %v7908, 7
    %v7911 = vshll.u32 %v7831, 16
    %v7913 = vor.u32 %v7910, %v7911
    %v7915 = vshrl.u32 %v7833, 16
    %v7917 = vrot.slane %v7915, 7
    %v7918 = vshll.u32 %v7833, 16
    %v7920 = vor.u32 %v7917, %v7918
    %v7922 = vshrl.u32 %v7835, 16
    %v7924 = vrot.slane %v7922, 7
    %v7925 = vshll.u32 %v7835, 16
    %v7927 = vor.u32 %v7924, %v7925
    %v7929 = vshrl.u32 %v7837, 16
    %v7931 = vrot.slane %v7929, 7
    %v7932 = vshll.u32 %v7837, 16
    %v7934 = vor.u32 %v7931, %v7932
    %v7936 = vshrl.u32 %v7839, 16
    %v7938 = vrot.slane %v7936, 7
    %v7939 = vshll.u32 %v7839, 16
    %v7941 = vor.u32 %v7938, %v7939
    %v7943 = vshrl.u32 %v7841, 16
    %v7945 = vrot.slane %v7943, 7
    %v7946 = vshll.u32 %v7841, 16
    %v7948 = vor.u32 %v7945, %v7946
    %v7950 = vshrl.u32 %v7843, 16
    %v7952 = vrot.slane %v7950, 7
    %v7953 = vshll.u32 %v7843, 16
    %v7955 = vor.u32 %v7952, %v7953
    %v7972 = vsel %vm1172, 0, %v7850
    %v7973 = vsel %vm1172, 0, %v7857
    %v7974 = vsel %vm1172, 0, %v7864
    %v7975 = vsel %vm1172, 0, %v7871
    %v7976 = vsel %vm1172, 0, %v7878
    %v7977 = vsel %vm1172, 0, %v7885
    %v7978 = vsel %vm1172, 0, %v7892
    %v7979 = vsel %vm1172, 0, %v7899
    %v7980 = vsel %vm1172, 0, %v7906
    %v7981 = vsel %vm1172, 0, %v7913
    %v7982 = vsel %vm1172, 0, %v7920
    %v7983 = vsel %vm1172, 0, %v7927
    %v7984 = vsel %vm1172, 0, %v7934
    %v7985 = vsel %vm1172, 0, %v7941
    %v7986 = vsel %vm1172, 0, %v7948
    %v7987 = vsel %vm1172, 0, %v7955
    %v7988 = vsel %vm7794, %v7972, 0
    %v7989 = vsel %vm7794, %v7973, 0
    %v7990 = vsel %vm7794, %v7974, 0
    %v7991 = vsel %vm7794, %v7975, 0
    %v7992 = vsel %vm7794, %v7976, 0
    %v7993 = vsel %vm7794, %v7977, 0
    %v7994 = vsel %vm7794, %v7978, 0
    %v7995 = vsel %vm7794, %v7979, 0
    %v7996 = vsel %vm7794, %v7980, 0
    %v7997 = vsel %vm7794, %v7981, 0
    %v7998 = vsel %vm7794, %v7982, 0
    %v7999 = vsel %vm7794, %v7983, 0
    %v8000 = vsel %vm7794, %v7984, 0
    %v8001 = vsel %vm7794, %v7985, 0
    %v8002 = vsel %vm7794, %v7986, 0
    %v8003 = vsel %vm7794, %v7987, 0
    %8004 = vrot.lane.b32.xlu0 %v7287, 64
    %v8005 = vpop.permute.xlu0 %8004
    %8006 = vrot.lane.b32.xlu0 %v7311, 64
    %v8007 = vpop.permute.xlu0 %8006
    %8008 = vrot.lane.b32.xlu0 %v7335, 64
    %v8009 = vpop.permute.xlu0 %8008
    %8010 = vrot.lane.b32.xlu0 %v7359, 64
    %v8011 = vpop.permute.xlu0 %8010
    %8012 = vrot.lane.b32.xlu0 %v7383, 64
    %v8013 = vpop.permute.xlu0 %8012
    %8014 = vrot.lane.b32.xlu0 %v7407, 64
    %v8015 = vpop.permute.xlu0 %8014
    %8016 = vrot.lane.b32.xlu0 %v7431, 64
    %v8017 = vpop.permute.xlu0 %8016
    %8018 = vrot.lane.b32.xlu0 %v7455, 64
    %v8019 = vpop.permute.xlu0 %8018
    %8020 = vrot.lane.b32.xlu0 %v7479, 64
    %v8021 = vpop.permute.xlu0 %8020
    %8022 = vrot.lane.b32.xlu0 %v7503, 64
    %v8023 = vpop.permute.xlu0 %8022
    %8024 = vrot.lane.b32.xlu0 %v7527, 64
    %v8025 = vpop.permute.xlu0 %8024
    %8026 = vrot.lane.b32.xlu0 %v7551, 64
    %v8027 = vpop.permute.xlu0 %8026
    %8028 = vrot.lane.b32.xlu0 %v7575, 64
    %v8029 = vpop.permute.xlu0 %8028
    %8030 = vrot.lane.b32.xlu0 %v7599, 64
    %v8031 = vpop.permute.xlu0 %8030
    %8032 = vrot.lane.b32.xlu0 %v7623, 64
    %v8033 = vpop.permute.xlu0 %8032
    %8034 = vrot.lane.b32.xlu0 %v7647, 64
    %v8035 = vpop.permute.xlu0 %8034
    %v8037 = vshrl.u32 %v8005, 16
    %v8039 = vrot.slane %v8037, 7
    %v8040 = vshll.u32 %v8005, 16
    %v8042 = vor.u32 %v8039, %v8040
    %v8044 = vshrl.u32 %v8007, 16
    %v8046 = vrot.slane %v8044, 7
    %v8047 = vshll.u32 %v8007, 16
    %v8049 = vor.u32 %v8046, %v8047
    %v8051 = vshrl.u32 %v8009, 16
    %v8053 = vrot.slane %v8051, 7
    %v8054 = vshll.u32 %v8009, 16
    %v8056 = vor.u32 %v8053, %v8054
    %v8058 = vshrl.u32 %v8011, 16
    %v8060 = vrot.slane %v8058, 7
    %v8061 = vshll.u32 %v8011, 16
    %v8063 = vor.u32 %v8060, %v8061
    %v8065 = vshrl.u32 %v8013, 16
    %v8067 = vrot.slane %v8065, 7
    %v8068 = vshll.u32 %v8013, 16
    %v8070 = vor.u32 %v8067, %v8068
    %v8072 = vshrl.u32 %v8015, 16
    %v8074 = vrot.slane %v8072, 7
    %v8075 = vshll.u32 %v8015, 16
    %v8077 = vor.u32 %v8074, %v8075
    %v8079 = vshrl.u32 %v8017, 16
    %v8081 = vrot.slane %v8079, 7
    %v8082 = vshll.u32 %v8017, 16
    %v8084 = vor.u32 %v8081, %v8082
    %v8086 = vshrl.u32 %v8019, 16
    %v8088 = vrot.slane %v8086, 7
    %v8089 = vshll.u32 %v8019, 16
    %v8091 = vor.u32 %v8088, %v8089
    %v8093 = vshrl.u32 %v8021, 16
    %v8095 = vrot.slane %v8093, 7
    %v8096 = vshll.u32 %v8021, 16
    %v8098 = vor.u32 %v8095, %v8096
    %v8100 = vshrl.u32 %v8023, 16
    %v8102 = vrot.slane %v8100, 7
    %v8103 = vshll.u32 %v8023, 16
    %v8105 = vor.u32 %v8102, %v8103
    %v8107 = vshrl.u32 %v8025, 16
    %v8109 = vrot.slane %v8107, 7
    %v8110 = vshll.u32 %v8025, 16
    %v8112 = vor.u32 %v8109, %v8110
    %v8114 = vshrl.u32 %v8027, 16
    %v8116 = vrot.slane %v8114, 7
    %v8117 = vshll.u32 %v8027, 16
    %v8119 = vor.u32 %v8116, %v8117
    %v8121 = vshrl.u32 %v8029, 16
    %v8123 = vrot.slane %v8121, 7
    %v8124 = vshll.u32 %v8029, 16
    %v8126 = vor.u32 %v8123, %v8124
    %v8128 = vshrl.u32 %v8031, 16
    %v8130 = vrot.slane %v8128, 7
    %v8131 = vshll.u32 %v8031, 16
    %v8133 = vor.u32 %v8130, %v8131
    %v8135 = vshrl.u32 %v8033, 16
    %v8137 = vrot.slane %v8135, 7
    %v8138 = vshll.u32 %v8033, 16
    %v8140 = vor.u32 %v8137, %v8138
    %v8142 = vshrl.u32 %v8035, 16
    %v8144 = vrot.slane %v8142, 7
    %v8145 = vshll.u32 %v8035, 16
    %v8147 = vor.u32 %v8144, %v8145
    %v8164 = vsel %vm1172, 0, %v8042
    %v8165 = vsel %vm1172, 0, %v8049
    %v8166 = vsel %vm1172, 0, %v8056
    %v8167 = vsel %vm1172, 0, %v8063
    %v8168 = vsel %vm1172, 0, %v8070
    %v8169 = vsel %vm1172, 0, %v8077
    %v8170 = vsel %vm1172, 0, %v8084
    %v8171 = vsel %vm1172, 0, %v8091
    %v8172 = vsel %vm1172, 0, %v8098
    %v8173 = vsel %vm1172, 0, %v8105
    %v8174 = vsel %vm1172, 0, %v8112
    %v8175 = vsel %vm1172, 0, %v8119
    %v8176 = vsel %vm1172, 0, %v8126
    %v8177 = vsel %vm1172, 0, %v8133
    %v8178 = vsel %vm1172, 0, %v8140
    %v8179 = vsel %vm1172, 0, %v8147
    %v8180 = vsel %vm7794, %v8164, 0
    %v8181 = vsel %vm7794, %v8165, 0
    %v8182 = vsel %vm7794, %v8166, 0
    %v8183 = vsel %vm7794, %v8167, 0
    %v8184 = vsel %vm7794, %v8168, 0
    %v8185 = vsel %vm7794, %v8169, 0
    %v8186 = vsel %vm7794, %v8170, 0
    %v8187 = vsel %vm7794, %v8171, 0
    %v8188 = vsel %vm7794, %v8172, 0
    %v8189 = vsel %vm7794, %v8173, 0
    %v8190 = vsel %vm7794, %v8174, 0
    %v8191 = vsel %vm7794, %v8175, 0
    %v8192 = vsel %vm7794, %v8176, 0
    %v8193 = vsel %vm7794, %v8177, 0
    %v8194 = vsel %vm7794, %v8178, 0
    %v8195 = vsel %vm7794, %v8179, 0
    %8196 = vrot.lane.b32.xlu0 %v7287, 32
    %v8197 = vpop.permute.xlu0 %8196
    %8198 = vrot.lane.b32.xlu0 %v7311, 32
    %v8199 = vpop.permute.xlu0 %8198
    %8200 = vrot.lane.b32.xlu0 %v7335, 32
    %v8201 = vpop.permute.xlu0 %8200
    %8202 = vrot.lane.b32.xlu0 %v7359, 32
    %v8203 = vpop.permute.xlu0 %8202
    %8204 = vrot.lane.b32.xlu0 %v7383, 32
    %v8205 = vpop.permute.xlu0 %8204
    %8206 = vrot.lane.b32.xlu0 %v7407, 32
    %v8207 = vpop.permute.xlu0 %8206
    %8208 = vrot.lane.b32.xlu0 %v7431, 32
    %v8209 = vpop.permute.xlu0 %8208
    %8210 = vrot.lane.b32.xlu0 %v7455, 32
    %v8211 = vpop.permute.xlu0 %8210
    %8212 = vrot.lane.b32.xlu0 %v7479, 32
    %v8213 = vpop.permute.xlu0 %8212
    %8214 = vrot.lane.b32.xlu0 %v7503, 32
    %v8215 = vpop.permute.xlu0 %8214
    %8216 = vrot.lane.b32.xlu0 %v7527, 32
    %v8217 = vpop.permute.xlu0 %8216
    %8218 = vrot.lane.b32.xlu0 %v7551, 32
    %v8219 = vpop.permute.xlu0 %8218
    %8220 = vrot.lane.b32.xlu0 %v7575, 32
    %v8221 = vpop.permute.xlu0 %8220
    %8222 = vrot.lane.b32.xlu0 %v7599, 32
    %v8223 = vpop.permute.xlu0 %8222
    %8224 = vrot.lane.b32.xlu0 %v7623, 32
    %v8225 = vpop.permute.xlu0 %8224
    %8226 = vrot.lane.b32.xlu0 %v7647, 32
    %v8227 = vpop.permute.xlu0 %8226
    %v8229 = vshrl.u32 %v8197, 16
    %v8231 = vrot.slane %v8229, 7
    %v8232 = vshll.u32 %v8197, 16
    %v8234 = vor.u32 %v8231, %v8232
    %v8236 = vshrl.u32 %v8199, 16
    %v8238 = vrot.slane %v8236, 7
    %v8239 = vshll.u32 %v8199, 16
    %v8241 = vor.u32 %v8238, %v8239
    %v8243 = vshrl.u32 %v8201, 16
    %v8245 = vrot.slane %v8243, 7
    %v8246 = vshll.u32 %v8201, 16
    %v8248 = vor.u32 %v8245, %v8246
    %v8250 = vshrl.u32 %v8203, 16
    %v8252 = vrot.slane %v8250, 7
    %v8253 = vshll.u32 %v8203, 16
    %v8255 = vor.u32 %v8252, %v8253
    %v8257 = vshrl.u32 %v8205, 16
    %v8259 = vrot.slane %v8257, 7
    %v8260 = vshll.u32 %v8205, 16
    %v8262 = vor.u32 %v8259, %v8260
    %v8264 = vshrl.u32 %v8207, 16
    %v8266 = vrot.slane %v8264, 7
    %v8267 = vshll.u32 %v8207, 16
    %v8269 = vor.u32 %v8266, %v8267
    %v8271 = vshrl.u32 %v8209, 16
    %v8273 = vrot.slane %v8271, 7
    %v8274 = vshll.u32 %v8209, 16
    %v8276 = vor.u32 %v8273, %v8274
    %v8278 = vshrl.u32 %v8211, 16
    %v8280 = vrot.slane %v8278, 7
    %v8281 = vshll.u32 %v8211, 16
    %v8283 = vor.u32 %v8280, %v8281
    %v8285 = vshrl.u32 %v8213, 16
    %v8287 = vrot.slane %v8285, 7
    %v8288 = vshll.u32 %v8213, 16
    %v8290 = vor.u32 %v8287, %v8288
    %v8292 = vshrl.u32 %v8215, 16
    %v8294 = vrot.slane %v8292, 7
    %v8295 = vshll.u32 %v8215, 16
    %v8297 = vor.u32 %v8294, %v8295
    %v8299 = vshrl.u32 %v8217, 16
    %v8301 = vrot.slane %v8299, 7
    %v8302 = vshll.u32 %v8217, 16
    %v8304 = vor.u32 %v8301, %v8302
    %v8306 = vshrl.u32 %v8219, 16
    %v8308 = vrot.slane %v8306, 7
    %v8309 = vshll.u32 %v8219, 16
    %v8311 = vor.u32 %v8308, %v8309
    %v8313 = vshrl.u32 %v8221, 16
    %v8315 = vrot.slane %v8313, 7
    %v8316 = vshll.u32 %v8221, 16
    %v8318 = vor.u32 %v8315, %v8316
    %v8320 = vshrl.u32 %v8223, 16
    %v8322 = vrot.slane %v8320, 7
    %v8323 = vshll.u32 %v8223, 16
    %v8325 = vor.u32 %v8322, %v8323
    %v8327 = vshrl.u32 %v8225, 16
    %v8329 = vrot.slane %v8327, 7
    %v8330 = vshll.u32 %v8225, 16
    %v8332 = vor.u32 %v8329, %v8330
    %v8334 = vshrl.u32 %v8227, 16
    %v8336 = vrot.slane %v8334, 7
    %v8337 = vshll.u32 %v8227, 16
    %v8339 = vor.u32 %v8336, %v8337
    %v8356 = vsel %vm1172, 0, %v8234
    %v8357 = vsel %vm1172, 0, %v8241
    %v8358 = vsel %vm1172, 0, %v8248
    %v8359 = vsel %vm1172, 0, %v8255
    %v8360 = vsel %vm1172, 0, %v8262
    %v8361 = vsel %vm1172, 0, %v8269
    %v8362 = vsel %vm1172, 0, %v8276
    %v8363 = vsel %vm1172, 0, %v8283
    %v8364 = vsel %vm1172, 0, %v8290
    %v8365 = vsel %vm1172, 0, %v8297
    %v8366 = vsel %vm1172, 0, %v8304
    %v8367 = vsel %vm1172, 0, %v8311
    %v8368 = vsel %vm1172, 0, %v8318
    %v8369 = vsel %vm1172, 0, %v8325
    %v8370 = vsel %vm1172, 0, %v8332
    %v8371 = vsel %vm1172, 0, %v8339
    %v8372 = vsel %vm7794, %v8356, 0
    %v8373 = vsel %vm7794, %v8357, 0
    %v8374 = vsel %vm7794, %v8358, 0
    %v8375 = vsel %vm7794, %v8359, 0
    %v8376 = vsel %vm7794, %v8360, 0
    %v8377 = vsel %vm7794, %v8361, 0
    %v8378 = vsel %vm7794, %v8362, 0
    %v8379 = vsel %vm7794, %v8363, 0
    %v8380 = vsel %vm7794, %v8364, 0
    %v8381 = vsel %vm7794, %v8365, 0
    %v8382 = vsel %vm7794, %v8366, 0
    %v8383 = vsel %vm7794, %v8367, 0
    %v8384 = vsel %vm7794, %v8368, 0
    %v8385 = vsel %vm7794, %v8369, 0
    %v8386 = vsel %vm7794, %v8370, 0
    %v8387 = vsel %vm7794, %v8371, 0
    %v8403 = vunpack.c.l.b16 %v7803
    %v8404 = vunpack.c.h.b16 %v7803
    %v8405 = vunpack.c.l.b16 %v8180
    %v8406 = vunpack.c.h.b16 %v8180
    %v8407 = vunpack.c.l.b16 %v8181
    %v8408 = vunpack.c.h.b16 %v8181
    %v8409 = vunpack.c.l.b16 %v8182
    %v8410 = vunpack.c.h.b16 %v8182
    %v8411 = vunpack.c.l.b16 %v8183
    %v8412 = vunpack.c.h.b16 %v8183
    %v8413 = vunpack.c.l.b16 %v8184
    %v8414 = vunpack.c.h.b16 %v8184
    %v8415 = vunpack.c.l.b16 %v8185
    %v8416 = vunpack.c.h.b16 %v8185
    %v8417 = vunpack.c.l.b16 %v8186
    %v8418 = vunpack.c.h.b16 %v8186
    %v8419 = vunpack.c.l.b16 %v8188
    %v8420 = vunpack.c.h.b16 %v8188
    %v8421 = vunpack.c.l.b16 %v8189
    %v8422 = vunpack.c.h.b16 %v8189
    %v8423 = vunpack.c.l.b16 %v8190
    %v8424 = vunpack.c.h.b16 %v8190
    %v8425 = vunpack.c.l.b16 %v8191
    %v8426 = vunpack.c.h.b16 %v8191
    %v8427 = vunpack.c.l.b16 %v8192
    %v8428 = vunpack.c.h.b16 %v8192
    %v8429 = vunpack.c.l.b16 %v8193
    %v8430 = vunpack.c.h.b16 %v8193
    %v8431 = vunpack.c.l.b16 %v8194
    %v8432 = vunpack.c.h.b16 %v8194
    %v8433 = vpack.c.b16 %v8403, %v8403
    %v8434 = vpack.c.b16 %v8404, %v8404
    %v8435 = vpack.c.b16 %v8405, %v8405
    %v8436 = vpack.c.b16 %v8406, %v8406
    %v8437 = vpack.c.b16 %v8407, %v8407
    %v8438 = vpack.c.b16 %v8408, %v8408
    %v8439 = vpack.c.b16 %v8409, %v8409
    %v8440 = vpack.c.b16 %v8410, %v8410
    %v8441 = vpack.c.b16 %v8411, %v8411
    %v8442 = vpack.c.b16 %v8412, %v8412
    %v8443 = vpack.c.b16 %v8413, %v8413
    %v8444 = vpack.c.b16 %v8414, %v8414
    %v8445 = vpack.c.b16 %v8415, %v8415
    %v8446 = vpack.c.b16 %v8416, %v8416
    %v8447 = vpack.c.b16 %v8417, %v8417
    %v8448 = vpack.c.b16 %v8418, %v8418
    %v8449 = vpack.c.b16 %v8419, %v8419
    %v8450 = vpack.c.b16 %v8420, %v8420
    %v8451 = vpack.c.b16 %v8421, %v8421
    %v8452 = vpack.c.b16 %v8422, %v8422
    %v8453 = vpack.c.b16 %v8423, %v8423
    %v8454 = vpack.c.b16 %v8424, %v8424
    %v8455 = vpack.c.b16 %v8425, %v8425
    %v8456 = vpack.c.b16 %v8426, %v8426
    %v8457 = vpack.c.b16 %v8427, %v8427
    %v8458 = vpack.c.b16 %v8428, %v8428
    %v8459 = vpack.c.b16 %v8429, %v8429
    %v8460 = vpack.c.b16 %v8430, %v8430
    %v8461 = vpack.c.b16 %v8431, %v8431
    %v8462 = vpack.c.b16 %v8432, %v8432
    %vm8463 = vsmask.f32 3328
    %vm8464 = vsmask.f32 7440
    %vm8465 = vmor %vm8463, %vm8464
    %v8467 = vshrl.u32 %v8433, 16
    %v8469 = vrot.slane %v8467, 4
    %v8470 = vshll.u32 %v8433, 16
    %v8472 = vrot.slane %v8470, 5
    %v8473 = vor.u32 %v8469, %v8472
    %v8474 = vrot.slane %v8473, 4
    %v8476 = vshll.u32 %v8434, 16
    %v8478 = vrot.slane %v8476, 5
    %v8479 = vsel %vm8465, %v8474, %v8478
    %v8481 = vshrl.u32 %v8435, 16
    %v8483 = vrot.slane %v8481, 4
    %v8484 = vshll.u32 %v8435, 16
    %v8486 = vrot.slane %v8484, 5
    %v8487 = vor.u32 %v8483, %v8486
    %v8488 = vrot.slane %v8487, 4
    %v8490 = vshll.u32 %v8436, 16
    %v8492 = vrot.slane %v8490, 5
    %v8493 = vsel %vm8465, %v8488, %v8492
    %v8495 = vshrl.u32 %v8437, 16
    %v8497 = vrot.slane %v8495, 4
    %v8498 = vshll.u32 %v8437, 16
    %v8500 = vrot.slane %v8498, 5
    %v8501 = vor.u32 %v8497, %v8500
    %v8502 = vrot.slane %v8501, 4
    %v8504 = vshll.u32 %v8438, 16
    %v8506 = vrot.slane %v8504, 5
    %v8507 = vsel %vm8465, %v8502, %v8506
    %v8509 = vshrl.u32 %v8439, 16
    %v8511 = vrot.slane %v8509, 4
    %v8512 = vshll.u32 %v8439, 16
    %v8514 = vrot.slane %v8512, 5
    %v8515 = vor.u32 %v8511, %v8514
    %v8516 = vrot.slane %v8515, 4
    %v8518 = vshll.u32 %v8440, 16
    %v8520 = vrot.slane %v8518, 5
    %v8521 = vsel %vm8465, %v8516, %v8520
    %v8523 = vshrl.u32 %v8441, 16
    %v8525 = vrot.slane %v8523, 4
    %v8526 = vshll.u32 %v8441, 16
    %v8528 = vrot.slane %v8526, 5
    %v8529 = vor.u32 %v8525, %v8528
    %v8530 = vrot.slane %v8529, 4
    %v8532 = vshll.u32 %v8442, 16
    %v8534 = vrot.slane %v8532, 5
    %v8535 = vsel %vm8465, %v8530, %v8534
    %v8537 = vshrl.u32 %v8443, 16
    %v8539 = vrot.slane %v8537, 4
    %v8540 = vshll.u32 %v8443, 16
    %v8542 = vrot.slane %v8540, 5
    %v8543 = vor.u32 %v8539, %v8542
    %v8544 = vrot.slane %v8543, 4
    %v8546 = vshll.u32 %v8444, 16
    %v8548 = vrot.slane %v8546, 5
    %v8549 = vsel %vm8465, %v8544, %v8548
    %v8551 = vshrl.u32 %v8445, 16
    %v8553 = vrot.slane %v8551, 4
    %v8554 = vshll.u32 %v8445, 16
    %v8556 = vrot.slane %v8554, 5
    %v8557 = vor.u32 %v8553, %v8556
    %v8558 = vrot.slane %v8557, 4
    %v8560 = vshll.u32 %v8446, 16
    %v8562 = vrot.slane %v8560, 5
    %v8563 = vsel %vm8465, %v8558, %v8562
    %v8565 = vshrl.u32 %v8447, 16
    %v8567 = vrot.slane %v8565, 4
    %v8568 = vshll.u32 %v8447, 16
    %v8570 = vrot.slane %v8568, 5
    %v8571 = vor.u32 %v8567, %v8570
    %v8572 = vrot.slane %v8571, 4
    %v8574 = vshll.u32 %v8448, 16
    %v8576 = vrot.slane %v8574, 5
    %v8577 = vsel %vm8465, %v8572, %v8576
    %v8579 = vshrl.u32 %v8449, 16
    %v8581 = vrot.slane %v8579, 4
    %v8582 = vshll.u32 %v8449, 16
    %v8584 = vrot.slane %v8582, 5
    %v8585 = vor.u32 %v8581, %v8584
    %v8586 = vrot.slane %v8585, 4
    %v8588 = vshll.u32 %v8450, 16
    %v8590 = vrot.slane %v8588, 5
    %v8591 = vsel %vm8465, %v8586, %v8590
    %v8593 = vshrl.u32 %v8451, 16
    %v8595 = vrot.slane %v8593, 4
    %v8596 = vshll.u32 %v8451, 16
    %v8598 = vrot.slane %v8596, 5
    %v8599 = vor.u32 %v8595, %v8598
    %v8600 = vrot.slane %v8599, 4
    %v8602 = vshll.u32 %v8452, 16
    %v8604 = vrot.slane %v8602, 5
    %v8605 = vsel %vm8465, %v8600, %v8604
    %v8607 = vshrl.u32 %v8453, 16
    %v8609 = vrot.slane %v8607, 4
    %v8610 = vshll.u32 %v8453, 16
    %v8612 = vrot.slane %v8610, 5
    %v8613 = vor.u32 %v8609, %v8612
    %v8614 = vrot.slane %v8613, 4
    %v8616 = vshll.u32 %v8454, 16
    %v8618 = vrot.slane %v8616, 5
    %v8619 = vsel %vm8465, %v8614, %v8618
    %v8621 = vshrl.u32 %v8455, 16
    %v8623 = vrot.slane %v8621, 4
    %v8624 = vshll.u32 %v8455, 16
    %v8626 = vrot.slane %v8624, 5
    %v8627 = vor.u32 %v8623, %v8626
    %v8628 = vrot.slane %v8627, 4
    %v8630 = vshll.u32 %v8456, 16
    %v8632 = vrot.slane %v8630, 5
    %v8633 = vsel %vm8465, %v8628, %v8632
    %v8635 = vshrl.u32 %v8457, 16
    %v8637 = vrot.slane %v8635, 4
    %v8638 = vshll.u32 %v8457, 16
    %v8640 = vrot.slane %v8638, 5
    %v8641 = vor.u32 %v8637, %v8640
    %v8642 = vrot.slane %v8641, 4
    %v8644 = vshll.u32 %v8458, 16
    %v8646 = vrot.slane %v8644, 5
    %v8647 = vsel %vm8465, %v8642, %v8646
    %v8649 = vshrl.u32 %v8459, 16
    %v8651 = vrot.slane %v8649, 4
    %v8652 = vshll.u32 %v8459, 16
    %v8654 = vrot.slane %v8652, 5
    %v8655 = vor.u32 %v8651, %v8654
    %v8656 = vrot.slane %v8655, 4
    %v8658 = vshll.u32 %v8460, 16
    %v8660 = vrot.slane %v8658, 5
    %v8661 = vsel %vm8465, %v8656, %v8660
    %v8663 = vshrl.u32 %v8461, 16
    %v8665 = vrot.slane %v8663, 4
    %v8666 = vshll.u32 %v8461, 16
    %v8668 = vrot.slane %v8666, 5
    %v8669 = vor.u32 %v8665, %v8668
    %v8670 = vrot.slane %v8669, 4
    %v8672 = vshll.u32 %v8462, 16
    %v8674 = vrot.slane %v8672, 5
    %v8675 = vsel %vm8465, %v8670, %v8674
    %v8690 = vunpack.c.l.b16 %v8372
    %v8691 = vunpack.c.h.b16 %v8372
    %v8692 = vunpack.c.l.b16 %v8373
    %v8693 = vunpack.c.h.b16 %v8373
    %v8694 = vunpack.c.l.b16 %v8374
    %v8695 = vunpack.c.h.b16 %v8374
    %v8696 = vunpack.c.l.b16 %v8375
    %v8697 = vunpack.c.h.b16 %v8375
    %v8698 = vunpack.c.l.b16 %v8376
    %v8699 = vunpack.c.h.b16 %v8376
    %v8700 = vunpack.c.l.b16 %v8377
    %v8701 = vunpack.c.h.b16 %v8377
    %v8702 = vunpack.c.l.b16 %v8378
    %v8703 = vunpack.c.h.b16 %v8378
    %v8704 = vunpack.c.l.b16 %v8380
    %v8705 = vunpack.c.h.b16 %v8380
    %v8706 = vunpack.c.l.b16 %v8381
    %v8707 = vunpack.c.h.b16 %v8381
    %v8708 = vunpack.c.l.b16 %v8382
    %v8709 = vunpack.c.h.b16 %v8382
    %v8710 = vunpack.c.l.b16 %v8383
    %v8711 = vunpack.c.h.b16 %v8383
    %v8712 = vunpack.c.l.b16 %v8384
    %v8713 = vunpack.c.h.b16 %v8384
    %v8714 = vunpack.c.l.b16 %v8385
    %v8715 = vunpack.c.h.b16 %v8385
    %v8716 = vunpack.c.l.b16 %v8386
    %v8717 = vunpack.c.h.b16 %v8386
    %v8718 = vpack.c.b16 %v8690, %v8690
    %v8719 = vpack.c.b16 %v8691, %v8691
    %v8720 = vpack.c.b16 %v8692, %v8692
    %v8721 = vpack.c.b16 %v8693, %v8693
    %v8722 = vpack.c.b16 %v8694, %v8694
    %v8723 = vpack.c.b16 %v8695, %v8695
    %v8724 = vpack.c.b16 %v8696, %v8696
    %v8725 = vpack.c.b16 %v8697, %v8697
    %v8726 = vpack.c.b16 %v8698, %v8698
    %v8727 = vpack.c.b16 %v8699, %v8699
    %v8728 = vpack.c.b16 %v8700, %v8700
    %v8729 = vpack.c.b16 %v8701, %v8701
    %v8730 = vpack.c.b16 %v8702, %v8702
    %v8731 = vpack.c.b16 %v8703, %v8703
    %v8732 = vpack.c.b16 %v8704, %v8704
    %v8733 = vpack.c.b16 %v8705, %v8705
    %v8734 = vpack.c.b16 %v8706, %v8706
    %v8735 = vpack.c.b16 %v8707, %v8707
    %v8736 = vpack.c.b16 %v8708, %v8708
    %v8737 = vpack.c.b16 %v8709, %v8709
    %v8738 = vpack.c.b16 %v8710, %v8710
    %v8739 = vpack.c.b16 %v8711, %v8711
    %v8740 = vpack.c.b16 %v8712, %v8712
    %v8741 = vpack.c.b16 %v8713, %v8713
    %v8742 = vpack.c.b16 %v8714, %v8714
    %v8743 = vpack.c.b16 %v8715, %v8715
    %v8744 = vpack.c.b16 %v8716, %v8716
    %v8745 = vpack.c.b16 %v8717, %v8717
    %v8747 = vshrl.u32 %v8718, 16
    %v8749 = vrot.slane %v8747, 4
    %v8750 = vshll.u32 %v8718, 16
    %v8752 = vrot.slane %v8750, 5
    %v8753 = vor.u32 %v8749, %v8752
    %v8754 = vrot.slane %v8753, 4
    %v8756 = vshll.u32 %v8719, 16
    %v8758 = vrot.slane %v8756, 5
    %v8759 = vsel %vm8465, %v8754, %v8758
    %v8761 = vshrl.u32 %v8720, 16
    %v8763 = vrot.slane %v8761, 4
    %v8764 = vshll.u32 %v8720, 16
    %v8766 = vrot.slane %v8764, 5
    %v8767 = vor.u32 %v8763, %v8766
    %v8768 = vrot.slane %v8767, 4
    %v8770 = vshll.u32 %v8721, 16
    %v8772 = vrot.slane %v8770, 5
    %v8773 = vsel %vm8465, %v8768, %v8772
    %v8775 = vshrl.u32 %v8722, 16
    %v8777 = vrot.slane %v8775, 4
    %v8778 = vshll.u32 %v8722, 16
    %v8780 = vrot.slane %v8778, 5
    %v8781 = vor.u32 %v8777, %v8780
    %v8782 = vrot.slane %v8781, 4
    %v8784 = vshll.u32 %v8723, 16
    %v8786 = vrot.slane %v8784, 5
    %v8787 = vsel %vm8465, %v8782, %v8786
    %v8789 = vshrl.u32 %v8724, 16
    %v8791 = vrot.slane %v8789, 4
    %v8792 = vshll.u32 %v8724, 16
    %v8794 = vrot.slane %v8792, 5
    %v8795 = vor.u32 %v8791, %v8794
    %v8796 = vrot.slane %v8795, 4
    %v8798 = vshll.u32 %v8725, 16
    %v8800 = vrot.slane %v8798, 5
    %v8801 = vsel %vm8465, %v8796, %v8800
    %v8803 = vshrl.u32 %v8726, 16
    %v8805 = vrot.slane %v8803, 4
    %v8806 = vshll.u32 %v8726, 16
    %v8808 = vrot.slane %v8806, 5
    %v8809 = vor.u32 %v8805, %v8808
    %v8810 = vrot.slane %v8809, 4
    %v8812 = vshll.u32 %v8727, 16
    %v8814 = vrot.slane %v8812, 5
    %v8815 = vsel %vm8465, %v8810, %v8814
    %v8817 = vshrl.u32 %v8728, 16
    %v8819 = vrot.slane %v8817, 4
    %v8820 = vshll.u32 %v8728, 16
    %v8822 = vrot.slane %v8820, 5
    %v8823 = vor.u32 %v8819, %v8822
    %v8824 = vrot.slane %v8823, 4
    %v8826 = vshll.u32 %v8729, 16
    %v8828 = vrot.slane %v8826, 5
    %v8829 = vsel %vm8465, %v8824, %v8828
    %v8831 = vshrl.u32 %v8730, 16
    %v8833 = vrot.slane %v8831, 4
    %v8834 = vshll.u32 %v8730, 16
    %v8836 = vrot.slane %v8834, 5
    %v8837 = vor.u32 %v8833, %v8836
    %v8838 = vrot.slane %v8837, 4
    %v8840 = vshll.u32 %v8731, 16
    %v8842 = vrot.slane %v8840, 5
    %v8843 = vsel %vm8465, %v8838, %v8842
    %v8845 = vshrl.u32 %v8732, 16
    %v8847 = vrot.slane %v8845, 4
    %v8848 = vshll.u32 %v8732, 16
    %v8850 = vrot.slane %v8848, 5
    %v8851 = vor.u32 %v8847, %v8850
    %v8852 = vrot.slane %v8851, 4
    %v8854 = vshll.u32 %v8733, 16
    %v8856 = vrot.slane %v8854, 5
    %v8857 = vsel %vm8465, %v8852, %v8856
    %v8859 = vshrl.u32 %v8734, 16
    %v8861 = vrot.slane %v8859, 4
    %v8862 = vshll.u32 %v8734, 16
    %v8864 = vrot.slane %v8862, 5
    %v8865 = vor.u32 %v8861, %v8864
    %v8866 = vrot.slane %v8865, 4
    %v8868 = vshll.u32 %v8735, 16
    %v8870 = vrot.slane %v8868, 5
    %v8871 = vsel %vm8465, %v8866, %v8870
    %v8873 = vshrl.u32 %v8736, 16
    %v8875 = vrot.slane %v8873, 4
    %v8876 = vshll.u32 %v8736, 16
    %v8878 = vrot.slane %v8876, 5
    %v8879 = vor.u32 %v8875, %v8878
    %v8880 = vrot.slane %v8879, 4
    %v8882 = vshll.u32 %v8737, 16
    %v8884 = vrot.slane %v8882, 5
    %v8885 = vsel %vm8465, %v8880, %v8884
    %v8887 = vshrl.u32 %v8738, 16
    %v8889 = vrot.slane %v8887, 4
    %v8890 = vshll.u32 %v8738, 16
    %v8892 = vrot.slane %v8890, 5
    %v8893 = vor.u32 %v8889, %v8892
    %v8894 = vrot.slane %v8893, 4
    %v8896 = vshll.u32 %v8739, 16
    %v8898 = vrot.slane %v8896, 5
    %v8899 = vsel %vm8465, %v8894, %v8898
    %v8901 = vshrl.u32 %v8740, 16
    %v8903 = vrot.slane %v8901, 4
    %v8904 = vshll.u32 %v8740, 16
    %v8906 = vrot.slane %v8904, 5
    %v8907 = vor.u32 %v8903, %v8906
    %v8908 = vrot.slane %v8907, 4
    %v8910 = vshll.u32 %v8741, 16
    %v8912 = vrot.slane %v8910, 5
    %v8913 = vsel %vm8465, %v8908, %v8912
    %v8915 = vshrl.u32 %v8742, 16
    %v8917 = vrot.slane %v8915, 4
    %v8918 = vshll.u32 %v8742, 16
    %v8920 = vrot.slane %v8918, 5
    %v8921 = vor.u32 %v8917, %v8920
    %v8922 = vrot.slane %v8921, 4
    %v8924 = vshll.u32 %v8743, 16
    %v8926 = vrot.slane %v8924, 5
    %v8927 = vsel %vm8465, %v8922, %v8926
    %v8929 = vshrl.u32 %v8744, 16
    %v8931 = vrot.slane %v8929, 4
    %v8932 = vshll.u32 %v8744, 16
    %v8934 = vrot.slane %v8932, 5
    %v8935 = vor.u32 %v8931, %v8934
    %v8936 = vrot.slane %v8935, 4
    %v8938 = vshll.u32 %v8745, 16
    %v8940 = vrot.slane %v8938, 5
    %v8941 = vsel %vm8465, %v8936, %v8940
    %v8958 = vunpack.c.l.b16 %v7795
    %v8959 = vunpack.c.h.b16 %v7795
    %v8960 = vunpack.c.l.b16 %v7796
    %v8961 = vunpack.c.h.b16 %v7796
    %v8962 = vunpack.c.l.b16 %v7797
    %v8963 = vunpack.c.h.b16 %v7797
    %v8964 = vunpack.c.l.b16 %v7798
    %v8965 = vunpack.c.h.b16 %v7798
    %v8966 = vunpack.c.l.b16 %v7799
    %v8967 = vunpack.c.h.b16 %v7799
    %v8968 = vunpack.c.l.b16 %v7800
    %v8969 = vunpack.c.h.b16 %v7800
    %v8970 = vunpack.c.l.b16 %v7801
    %v8971 = vunpack.c.h.b16 %v7801
    %v8972 = vunpack.c.l.b16 %v7802
    %v8973 = vunpack.c.h.b16 %v7802
    %v8974 = vunpack.c.l.b16 %v7804
    %v8975 = vunpack.c.h.b16 %v7804
    %v8976 = vunpack.c.l.b16 %v7805
    %v8977 = vunpack.c.h.b16 %v7805
    %v8978 = vunpack.c.l.b16 %v7806
    %v8979 = vunpack.c.h.b16 %v7806
    %v8980 = vunpack.c.l.b16 %v7807
    %v8981 = vunpack.c.h.b16 %v7807
    %v8982 = vunpack.c.l.b16 %v7808
    %v8983 = vunpack.c.h.b16 %v7808
    %v8984 = vunpack.c.l.b16 %v7809
    %v8985 = vunpack.c.h.b16 %v7809
    %v8986 = vunpack.c.l.b16 %v7810
    %v8987 = vunpack.c.h.b16 %v7810
    %v8988 = vunpack.c.l.b16 %v7811
    %v8989 = vunpack.c.h.b16 %v7811
    %v8990 = vpack.c.b16 %v8958, %v8958
    %v8991 = vpack.c.b16 %v8959, %v8959
    %v8992 = vpack.c.b16 %v8960, %v8960
    %v8993 = vpack.c.b16 %v8961, %v8961
    %v8994 = vpack.c.b16 %v8962, %v8962
    %v8995 = vpack.c.b16 %v8963, %v8963
    %v8996 = vpack.c.b16 %v8964, %v8964
    %v8997 = vpack.c.b16 %v8965, %v8965
    %v8998 = vpack.c.b16 %v8966, %v8966
    %v8999 = vpack.c.b16 %v8967, %v8967
    %v9000 = vpack.c.b16 %v8968, %v8968
    %v9001 = vpack.c.b16 %v8969, %v8969
    %v9002 = vpack.c.b16 %v8970, %v8970
    %v9003 = vpack.c.b16 %v8971, %v8971
    %v9004 = vpack.c.b16 %v8972, %v8972
    %v9005 = vpack.c.b16 %v8973, %v8973
    %v9006 = vpack.c.b16 %v8974, %v8974
    %v9007 = vpack.c.b16 %v8975, %v8975
    %v9008 = vpack.c.b16 %v8976, %v8976
    %v9009 = vpack.c.b16 %v8977, %v8977
    %v9010 = vpack.c.b16 %v8978, %v8978
    %v9011 = vpack.c.b16 %v8979, %v8979
    %v9012 = vpack.c.b16 %v8980, %v8980
    %v9013 = vpack.c.b16 %v8981, %v8981
    %v9014 = vpack.c.b16 %v8982, %v8982
    %v9015 = vpack.c.b16 %v8983, %v8983
    %v9016 = vpack.c.b16 %v8984, %v8984
    %v9017 = vpack.c.b16 %v8985, %v8985
    %v9018 = vpack.c.b16 %v8986, %v8986
    %v9019 = vpack.c.b16 %v8987, %v8987
    %v9020 = vpack.c.b16 %v8988, %v8988
    %v9021 = vpack.c.b16 %v8989, %v8989
    %v9023 = vshrl.u32 %v8990, 16
    %v9025 = vrot.slane %v9023, 4
    %v9026 = vshll.u32 %v8990, 16
    %v9028 = vrot.slane %v9026, 5
    %v9029 = vor.u32 %v9025, %v9028
    %v9030 = vrot.slane %v9029, 4
    %v9032 = vshll.u32 %v8991, 16
    %v9034 = vrot.slane %v9032, 5
    %v9035 = vsel %vm8465, %v9030, %v9034
    %v9037 = vshrl.u32 %v8992, 16
    %v9039 = vrot.slane %v9037, 4
    %v9040 = vshll.u32 %v8992, 16
    %v9042 = vrot.slane %v9040, 5
    %v9043 = vor.u32 %v9039, %v9042
    %v9044 = vrot.slane %v9043, 4
    %v9046 = vshll.u32 %v8993, 16
    %v9048 = vrot.slane %v9046, 5
    %v9049 = vsel %vm8465, %v9044, %v9048
    %v9051 = vshrl.u32 %v8994, 16
    %v9053 = vrot.slane %v9051, 4
    %v9054 = vshll.u32 %v8994, 16
    %v9056 = vrot.slane %v9054, 5
    %v9057 = vor.u32 %v9053, %v9056
    %v9058 = vrot.slane %v9057, 4
    %v9060 = vshll.u32 %v8995, 16
    %v9062 = vrot.slane %v9060, 5
    %v9063 = vsel %vm8465, %v9058, %v9062
    %v9065 = vshrl.u32 %v8996, 16
    %v9067 = vrot.slane %v9065, 4
    %v9068 = vshll.u32 %v8996, 16
    %v9070 = vrot.slane %v9068, 5
    %v9071 = vor.u32 %v9067, %v9070
    %v9072 = vrot.slane %v9071, 4
    %v9074 = vshll.u32 %v8997, 16
    %v9076 = vrot.slane %v9074, 5
    %v9077 = vsel %vm8465, %v9072, %v9076
    %v9079 = vshrl.u32 %v8998, 16
    %v9081 = vrot.slane %v9079, 4
    %v9082 = vshll.u32 %v8998, 16
    %v9084 = vrot.slane %v9082, 5
    %v9085 = vor.u32 %v9081, %v9084
    %v9086 = vrot.slane %v9085, 4
    %v9088 = vshll.u32 %v8999, 16
    %v9090 = vrot.slane %v9088, 5
    %v9091 = vsel %vm8465, %v9086, %v9090
    %v9093 = vshrl.u32 %v9000, 16
    %v9095 = vrot.slane %v9093, 4
    %v9096 = vshll.u32 %v9000, 16
    %v9098 = vrot.slane %v9096, 5
    %v9099 = vor.u32 %v9095, %v9098
    %v9100 = vrot.slane %v9099, 4
    %v9102 = vshll.u32 %v9001, 16
    %v9104 = vrot.slane %v9102, 5
    %v9105 = vsel %vm8465, %v9100, %v9104
    %v9107 = vshrl.u32 %v9002, 16
    %v9109 = vrot.slane %v9107, 4
    %v9110 = vshll.u32 %v9002, 16
    %v9112 = vrot.slane %v9110, 5
    %v9113 = vor.u32 %v9109, %v9112
    %v9114 = vrot.slane %v9113, 4
    %v9116 = vshll.u32 %v9003, 16
    %v9118 = vrot.slane %v9116, 5
    %v9119 = vsel %vm8465, %v9114, %v9118
    %v9121 = vshrl.u32 %v9004, 16
    %v9123 = vrot.slane %v9121, 4
    %v9124 = vshll.u32 %v9004, 16
    %v9126 = vrot.slane %v9124, 5
    %v9127 = vor.u32 %v9123, %v9126
    %v9128 = vrot.slane %v9127, 4
    %v9130 = vshll.u32 %v9005, 16
    %v9132 = vrot.slane %v9130, 5
    %v9133 = vsel %vm8465, %v9128, %v9132
    %v9135 = vshrl.u32 %v9006, 16
    %v9137 = vrot.slane %v9135, 4
    %v9138 = vshll.u32 %v9006, 16
    %v9140 = vrot.slane %v9138, 5
    %v9141 = vor.u32 %v9137, %v9140
    %v9142 = vrot.slane %v9141, 4
    %v9144 = vshll.u32 %v9007, 16
    %v9146 = vrot.slane %v9144, 5
    %v9147 = vsel %vm8465, %v9142, %v9146
    %v9149 = vshrl.u32 %v9008, 16
    %v9151 = vrot.slane %v9149, 4
    %v9152 = vshll.u32 %v9008, 16
    %v9154 = vrot.slane %v9152, 5
    %v9155 = vor.u32 %v9151, %v9154
    %v9156 = vrot.slane %v9155, 4
    %v9158 = vshll.u32 %v9009, 16
    %v9160 = vrot.slane %v9158, 5
    %v9161 = vsel %vm8465, %v9156, %v9160
    %v9163 = vshrl.u32 %v9010, 16
    %v9165 = vrot.slane %v9163, 4
    %v9166 = vshll.u32 %v9010, 16
    %v9168 = vrot.slane %v9166, 5
    %v9169 = vor.u32 %v9165, %v9168
    %v9170 = vrot.slane %v9169, 4
    %v9172 = vshll.u32 %v9011, 16
    %v9174 = vrot.slane %v9172, 5
    %v9175 = vsel %vm8465, %v9170, %v9174
    %v9177 = vshrl.u32 %v9012, 16
    %v9179 = vrot.slane %v9177, 4
    %v9180 = vshll.u32 %v9012, 16
    %v9182 = vrot.slane %v9180, 5
    %v9183 = vor.u32 %v9179, %v9182
    %v9184 = vrot.slane %v9183, 4
    %v9186 = vshll.u32 %v9013, 16
    %v9188 = vrot.slane %v9186, 5
    %v9189 = vsel %vm8465, %v9184, %v9188
    %v9191 = vshrl.u32 %v9014, 16
    %v9193 = vrot.slane %v9191, 4
    %v9194 = vshll.u32 %v9014, 16
    %v9196 = vrot.slane %v9194, 5
    %v9197 = vor.u32 %v9193, %v9196
    %v9198 = vrot.slane %v9197, 4
    %v9200 = vshll.u32 %v9015, 16
    %v9202 = vrot.slane %v9200, 5
    %v9203 = vsel %vm8465, %v9198, %v9202
    %v9205 = vshrl.u32 %v9016, 16
    %v9207 = vrot.slane %v9205, 4
    %v9208 = vshll.u32 %v9016, 16
    %v9210 = vrot.slane %v9208, 5
    %v9211 = vor.u32 %v9207, %v9210
    %v9212 = vrot.slane %v9211, 4
    %v9214 = vshll.u32 %v9017, 16
    %v9216 = vrot.slane %v9214, 5
    %v9217 = vsel %vm8465, %v9212, %v9216
    %v9219 = vshrl.u32 %v9018, 16
    %v9221 = vrot.slane %v9219, 4
    %v9222 = vshll.u32 %v9018, 16
    %v9224 = vrot.slane %v9222, 5
    %v9225 = vor.u32 %v9221, %v9224
    %v9226 = vrot.slane %v9225, 4
    %v9228 = vshll.u32 %v9019, 16
    %v9230 = vrot.slane %v9228, 5
    %v9231 = vsel %vm8465, %v9226, %v9230
    %v9233 = vshrl.u32 %v9020, 16
    %v9235 = vrot.slane %v9233, 4
    %v9236 = vshll.u32 %v9020, 16
    %v9238 = vrot.slane %v9236, 5
    %v9239 = vor.u32 %v9235, %v9238
    %v9240 = vrot.slane %v9239, 4
    %v9242 = vshll.u32 %v9021, 16
    %v9244 = vrot.slane %v9242, 5
    %v9245 = vsel %vm8465, %v9240, %v9244
    %v9262 = vunpack.c.l.b16 %v7988
    %v9263 = vunpack.c.h.b16 %v7988
    %v9264 = vunpack.c.l.b16 %v7989
    %v9265 = vunpack.c.h.b16 %v7989
    %v9266 = vunpack.c.l.b16 %v7990
    %v9267 = vunpack.c.h.b16 %v7990
    %v9268 = vunpack.c.l.b16 %v7991
    %v9269 = vunpack.c.h.b16 %v7991
    %v9270 = vunpack.c.l.b16 %v7992
    %v9271 = vunpack.c.h.b16 %v7992
    %v9272 = vunpack.c.l.b16 %v7993
    %v9273 = vunpack.c.h.b16 %v7993
    %v9274 = vunpack.c.l.b16 %v7994
    %v9275 = vunpack.c.h.b16 %v7994
    %v9276 = vunpack.c.l.b16 %v7995
    %v9277 = vunpack.c.h.b16 %v7995
    %v9278 = vunpack.c.l.b16 %v7996
    %v9279 = vunpack.c.h.b16 %v7996
    %v9280 = vunpack.c.l.b16 %v7997
    %v9281 = vunpack.c.h.b16 %v7997
    %v9282 = vunpack.c.l.b16 %v7998
    %v9283 = vunpack.c.h.b16 %v7998
    %v9284 = vunpack.c.l.b16 %v7999
    %v9285 = vunpack.c.h.b16 %v7999
    %v9286 = vunpack.c.l.b16 %v8000
    %v9287 = vunpack.c.h.b16 %v8000
    %v9288 = vunpack.c.l.b16 %v8001
    %v9289 = vunpack.c.h.b16 %v8001
    %v9290 = vunpack.c.l.b16 %v8002
    %v9291 = vunpack.c.h.b16 %v8002
    %v9292 = vunpack.c.l.b16 %v8003
    %v9293 = vunpack.c.h.b16 %v8003
    %v9294 = vpack.c.b16 %v9262, %v9262
    %v9295 = vpack.c.b16 %v9263, %v9263
    %v9296 = vpack.c.b16 %v9264, %v9264
    %v9297 = vpack.c.b16 %v9265, %v9265
    %v9298 = vpack.c.b16 %v9266, %v9266
    %v9299 = vpack.c.b16 %v9267, %v9267
    %v9300 = vpack.c.b16 %v9268, %v9268
    %v9301 = vpack.c.b16 %v9269, %v9269
    %v9302 = vpack.c.b16 %v9270, %v9270
    %v9303 = vpack.c.b16 %v9271, %v9271
    %v9304 = vpack.c.b16 %v9272, %v9272
    %v9305 = vpack.c.b16 %v9273, %v9273
    %v9306 = vpack.c.b16 %v9274, %v9274
    %v9307 = vpack.c.b16 %v9275, %v9275
    %v9308 = vpack.c.b16 %v9276, %v9276
    %v9309 = vpack.c.b16 %v9277, %v9277
    %v9310 = vpack.c.b16 %v9278, %v9278
    %v9311 = vpack.c.b16 %v9279, %v9279
    %v9312 = vpack.c.b16 %v9280, %v9280
    %v9313 = vpack.c.b16 %v9281, %v9281
    %v9314 = vpack.c.b16 %v9282, %v9282
    %v9315 = vpack.c.b16 %v9283, %v9283
    %v9316 = vpack.c.b16 %v9284, %v9284
    %v9317 = vpack.c.b16 %v9285, %v9285
    %v9318 = vpack.c.b16 %v9286, %v9286
    %v9319 = vpack.c.b16 %v9287, %v9287
    %v9320 = vpack.c.b16 %v9288, %v9288
    %v9321 = vpack.c.b16 %v9289, %v9289
    %v9322 = vpack.c.b16 %v9290, %v9290
    %v9323 = vpack.c.b16 %v9291, %v9291
    %v9324 = vpack.c.b16 %v9292, %v9292
    %v9325 = vpack.c.b16 %v9293, %v9293
    %v9327 = vshrl.u32 %v9294, 16
    %v9329 = vrot.slane %v9327, 4
    %v9330 = vshll.u32 %v9294, 16
    %v9332 = vrot.slane %v9330, 5
    %v9333 = vor.u32 %v9329, %v9332
    %v9334 = vrot.slane %v9333, 4
    %v9336 = vshll.u32 %v9295, 16
    %v9338 = vrot.slane %v9336, 5
    %v9339 = vsel %vm8465, %v9334, %v9338
    %v9341 = vshrl.u32 %v9296, 16
    %v9343 = vrot.slane %v9341, 4
    %v9344 = vshll.u32 %v9296, 16
    %v9346 = vrot.slane %v9344, 5
    %v9347 = vor.u32 %v9343, %v9346
    %v9348 = vrot.slane %v9347, 4
    %v9350 = vshll.u32 %v9297, 16
    %v9352 = vrot.slane %v9350, 5
    %v9353 = vsel %vm8465, %v9348, %v9352
    %v9355 = vshrl.u32 %v9298, 16
    %v9357 = vrot.slane %v9355, 4
    %v9358 = vshll.u32 %v9298, 16
    %v9360 = vrot.slane %v9358, 5
    %v9361 = vor.u32 %v9357, %v9360
    %v9362 = vrot.slane %v9361, 4
    %v9364 = vshll.u32 %v9299, 16
    %v9366 = vrot.slane %v9364, 5
    %v9367 = vsel %vm8465, %v9362, %v9366
    %v9369 = vshrl.u32 %v9300, 16
    %v9371 = vrot.slane %v9369, 4
    %v9372 = vshll.u32 %v9300, 16
    %v9374 = vrot.slane %v9372, 5
    %v9375 = vor.u32 %v9371, %v9374
    %v9376 = vrot.slane %v9375, 4
    %v9378 = vshll.u32 %v9301, 16
    %v9380 = vrot.slane %v9378, 5
    %v9381 = vsel %vm8465, %v9376, %v9380
    %v9383 = vshrl.u32 %v9302, 16
    %v9385 = vrot.slane %v9383, 4
    %v9386 = vshll.u32 %v9302, 16
    %v9388 = vrot.slane %v9386, 5
    %v9389 = vor.u32 %v9385, %v9388
    %v9390 = vrot.slane %v9389, 4
    %v9392 = vshll.u32 %v9303, 16
    %v9394 = vrot.slane %v9392, 5
    %v9395 = vsel %vm8465, %v9390, %v9394
    %v9397 = vshrl.u32 %v9304, 16
    %v9399 = vrot.slane %v9397, 4
    %v9400 = vshll.u32 %v9304, 16
    %v9402 = vrot.slane %v9400, 5
    %v9403 = vor.u32 %v9399, %v9402
    %v9404 = vrot.slane %v9403, 4
    %v9406 = vshll.u32 %v9305, 16
    %v9408 = vrot.slane %v9406, 5
    %v9409 = vsel %vm8465, %v9404, %v9408
    %v9411 = vshrl.u32 %v9306, 16
    %v9413 = vrot.slane %v9411, 4
    %v9414 = vshll.u32 %v9306, 16
    %v9416 = vrot.slane %v9414, 5
    %v9417 = vor.u32 %v9413, %v9416
    %v9418 = vrot.slane %v9417, 4
    %v9420 = vshll.u32 %v9307, 16
    %v9422 = vrot.slane %v9420, 5
    %v9423 = vsel %vm8465, %v9418, %v9422
    %v9425 = vshrl.u32 %v9308, 16
    %v9427 = vrot.slane %v9425, 4
    %v9428 = vshll.u32 %v9308, 16
    %v9430 = vrot.slane %v9428, 5
    %v9431 = vor.u32 %v9427, %v9430
    %v9432 = vrot.slane %v9431, 4
    %v9434 = vshll.u32 %v9309, 16
    %v9436 = vrot.slane %v9434, 5
    %v9437 = vsel %vm8465, %v9432, %v9436
    %v9439 = vshrl.u32 %v9310, 16
    %v9441 = vrot.slane %v9439, 4
    %v9442 = vshll.u32 %v9310, 16
    %v9444 = vrot.slane %v9442, 5
    %v9445 = vor.u32 %v9441, %v9444
    %v9446 = vrot.slane %v9445, 4
    %v9448 = vshll.u32 %v9311, 16
    %v9450 = vrot.slane %v9448, 5
    %v9451 = vsel %vm8465, %v9446, %v9450
    %v9453 = vshrl.u32 %v9312, 16
    %v9455 = vrot.slane %v9453, 4
    %v9456 = vshll.u32 %v9312, 16
    %v9458 = vrot.slane %v9456, 5
    %v9459 = vor.u32 %v9455, %v9458
    %v9460 = vrot.slane %v9459, 4
    %v9462 = vshll.u32 %v9313, 16
    %v9464 = vrot.slane %v9462, 5
    %v9465 = vsel %vm8465, %v9460, %v9464
    %v9467 = vshrl.u32 %v9314, 16
    %v9469 = vrot.slane %v9467, 4
    %v9470 = vshll.u32 %v9314, 16
    %v9472 = vrot.slane %v9470, 5
    %v9473 = vor.u32 %v9469, %v9472
    %v9474 = vrot.slane %v9473, 4
    %v9476 = vshll.u32 %v9315, 16
    %v9478 = vrot.slane %v9476, 5
    %v9479 = vsel %vm8465, %v9474, %v9478
    %v9481 = vshrl.u32 %v9316, 16
    %v9483 = vrot.slane %v9481, 4
    %v9484 = vshll.u32 %v9316, 16
    %v9486 = vrot.slane %v9484, 5
    %v9487 = vor.u32 %v9483, %v9486
    %v9488 = vrot.slane %v9487, 4
    %v9490 = vshll.u32 %v9317, 16
    %v9492 = vrot.slane %v9490, 5
    %v9493 = vsel %vm8465, %v9488, %v9492
    %v9495 = vshrl.u32 %v9318, 16
    %v9497 = vrot.slane %v9495, 4
    %v9498 = vshll.u32 %v9318, 16
    %v9500 = vrot.slane %v9498, 5
    %v9501 = vor.u32 %v9497, %v9500
    %v9502 = vrot.slane %v9501, 4
    %v9504 = vshll.u32 %v9319, 16
    %v9506 = vrot.slane %v9504, 5
    %v9507 = vsel %vm8465, %v9502, %v9506
    %v9509 = vshrl.u32 %v9320, 16
    %v9511 = vrot.slane %v9509, 4
    %v9512 = vshll.u32 %v9320, 16
    %v9514 = vrot.slane %v9512, 5
    %v9515 = vor.u32 %v9511, %v9514
    %v9516 = vrot.slane %v9515, 4
    %v9518 = vshll.u32 %v9321, 16
    %v9520 = vrot.slane %v9518, 5
    %v9521 = vsel %vm8465, %v9516, %v9520
    %v9523 = vshrl.u32 %v9322, 16
    %v9525 = vrot.slane %v9523, 4
    %v9526 = vshll.u32 %v9322, 16
    %v9528 = vrot.slane %v9526, 5
    %v9529 = vor.u32 %v9525, %v9528
    %v9530 = vrot.slane %v9529, 4
    %v9532 = vshll.u32 %v9323, 16
    %v9534 = vrot.slane %v9532, 5
    %v9535 = vsel %vm8465, %v9530, %v9534
    %v9537 = vshrl.u32 %v9324, 16
    %v9539 = vrot.slane %v9537, 4
    %v9540 = vshll.u32 %v9324, 16
    %v9542 = vrot.slane %v9540, 5
    %v9543 = vor.u32 %v9539, %v9542
    %v9544 = vrot.slane %v9543, 4
    %v9546 = vshll.u32 %v9325, 16
    %v9548 = vrot.slane %v9546, 5
    %v9549 = vsel %vm8465, %v9544, %v9548
    %v9552 = vunpack.c.l.b16 %v8187
    %v9553 = vunpack.c.h.b16 %v8187
    %v9554 = vunpack.c.l.b16 %v8195
    %v9555 = vunpack.c.h.b16 %v8195
    %v9556 = vpack.c.b16 %v9552, %v9552
    %v9557 = vpack.c.b16 %v9553, %v9553
    %v9558 = vpack.c.b16 %v9554, %v9554
    %v9559 = vpack.c.b16 %v9555, %v9555
    %v9561 = vshrl.u32 %v9556, 16
    %v9563 = vrot.slane %v9561, 4
    %v9564 = vshll.u32 %v9556, 16
    %v9566 = vrot.slane %v9564, 5
    %v9567 = vor.u32 %v9563, %v9566
    %v9568 = vrot.slane %v9567, 4
    %v9570 = vshll.u32 %v9557, 16
    %v9572 = vrot.slane %v9570, 5
    %v9573 = vsel %vm8465, %v9568, %v9572
    %v9575 = vshrl.u32 %v9558, 16
    %v9577 = vrot.slane %v9575, 4
    %v9578 = vshll.u32 %v9558, 16
    %v9580 = vrot.slane %v9578, 5
    %v9581 = vor.u32 %v9577, %v9580
    %v9582 = vrot.slane %v9581, 4
    %v9584 = vshll.u32 %v9559, 16
    %v9586 = vrot.slane %v9584, 5
    %v9587 = vsel %vm8465, %v9582, %v9586
    %v9590 = vunpack.c.l.b16 %v8379
    %v9591 = vunpack.c.h.b16 %v8379
    %v9592 = vunpack.c.l.b16 %v8387
    %v9593 = vunpack.c.h.b16 %v8387
    %v9594 = vpack.c.b16 %v9590, %v9590
    %v9595 = vpack.c.b16 %v9591, %v9591
    %v9596 = vpack.c.b16 %v9592, %v9592
    %v9597 = vpack.c.b16 %v9593, %v9593
    %v9599 = vshrl.u32 %v9594, 16
    %v9601 = vrot.slane %v9599, 4
    %v9602 = vshll.u32 %v9594, 16
    %v9604 = vrot.slane %v9602, 5
    %v9605 = vor.u32 %v9601, %v9604
    %v9606 = vrot.slane %v9605, 4
    %v9608 = vshll.u32 %v9595, 16
    %v9610 = vrot.slane %v9608, 5
    %v9611 = vsel %vm8465, %v9606, %v9610
    %v9613 = vshrl.u32 %v9596, 16
    %v9615 = vrot.slane %v9613, 4
    %v9616 = vshll.u32 %v9596, 16
    %v9618 = vrot.slane %v9616, 5
    %v9619 = vor.u32 %v9615, %v9618
    %v9620 = vrot.slane %v9619, 4
    %v9622 = vshll.u32 %v9597, 16
    %v9624 = vrot.slane %v9622, 5
    %v9625 = vsel %vm8465, %v9620, %v9624
    %v9626 = vpack.c.b16 %v8690, %v8403
    %v9627 = vpack.c.b16 %v8694, %v8692
    %v9628 = vpack.c.b16 %v8698, %v8696
    %v9629 = vpack.c.b16 %v8702, %v8700
    %v9630 = vpack.c.b16 %v8704, %v8403
    %v9631 = vpack.c.b16 %v8708, %v8706
    %v9632 = vpack.c.b16 %v8712, %v8710
    %v9633 = vpack.c.b16 %v8716, %v8714
    %v9634 = vunpack.c.l.b16 %v8479
    %v9635 = vunpack.c.l.b16 %v8493
    %v9636 = vunpack.c.l.b16 %v8507
    %v9637 = vunpack.c.l.b16 %v8521
    %v9638 = vunpack.c.l.b16 %v8535
    %v9639 = vunpack.c.l.b16 %v8549
    %v9640 = vunpack.c.l.b16 %v8563
    %v9641 = vunpack.c.l.b16 %v8577
    %v9642 = vunpack.c.l.b16 %v8591
    %v9643 = vunpack.c.l.b16 %v8605
    %v9644 = vunpack.c.l.b16 %v8619
    %v9645 = vunpack.c.l.b16 %v8633
    %v9646 = vunpack.c.l.b16 %v8647
    %v9647 = vunpack.c.l.b16 %v8661
    %v9648 = vunpack.c.l.b16 %v8675
    %v9649 = vpack.c.b16 %v9635, %v9634
    %v9650 = vpack.c.b16 %v9637, %v9636
    %v9651 = vpack.c.b16 %v9639, %v9638
    %v9652 = vpack.c.b16 %v9641, %v9640
    %v9653 = vpack.c.b16 %v9642, %v9634
    %v9654 = vpack.c.b16 %v9644, %v9643
    %v9655 = vpack.c.b16 %v9646, %v9645
    %v9656 = vpack.c.b16 %v9648, %v9647
    %9657 = vrot.lane.b32.xlu0 %v9649, 32
    %v9658 = vpop.permute.xlu0 %9657
    %9659 = vrot.lane.b32.xlu0 %v9650, 32
    %v9660 = vpop.permute.xlu0 %9659
    %9661 = vrot.lane.b32.xlu0 %v9651, 32
    %v9662 = vpop.permute.xlu0 %9661
    %9663 = vrot.lane.b32.xlu0 %v9652, 32
    %v9664 = vpop.permute.xlu0 %9663
    %9665 = vrot.lane.b32.xlu0 %v9653, 32
    %v9666 = vpop.permute.xlu0 %9665
    %9667 = vrot.lane.b32.xlu0 %v9654, 32
    %v9668 = vpop.permute.xlu0 %9667
    %9669 = vrot.lane.b32.xlu0 %v9655, 32
    %v9670 = vpop.permute.xlu0 %9669
    %9671 = vrot.lane.b32.xlu0 %v9656, 32
    %v9672 = vpop.permute.xlu0 %9671
    %v9673 = vunpack.c.l.b16 %v8759
    %v9674 = vunpack.c.l.b16 %v8773
    %v9675 = vunpack.c.l.b16 %v8787
    %v9676 = vunpack.c.l.b16 %v8801
    %v9677 = vunpack.c.l.b16 %v8815
    %v9678 = vunpack.c.l.b16 %v8829
    %v9679 = vunpack.c.l.b16 %v8843
    %v9680 = vunpack.c.l.b16 %v8857
    %v9681 = vunpack.c.l.b16 %v8871
    %v9682 = vunpack.c.l.b16 %v8885
    %v9683 = vunpack.c.l.b16 %v8899
    %v9684 = vunpack.c.l.b16 %v8913
    %v9685 = vunpack.c.l.b16 %v8927
    %v9686 = vunpack.c.l.b16 %v8941
    %v9687 = vpack.c.b16 %v9673, %v9634
    %v9688 = vpack.c.b16 %v9675, %v9674
    %v9689 = vpack.c.b16 %v9677, %v9676
    %v9690 = vpack.c.b16 %v9679, %v9678
    %v9691 = vpack.c.b16 %v9680, %v9634
    %v9692 = vpack.c.b16 %v9682, %v9681
    %v9693 = vpack.c.b16 %v9684, %v9683
    %v9694 = vpack.c.b16 %v9686, %v9685
    %9695 = vrot.lane.b32.xlu0 %v9687, 64
    %v9696 = vpop.permute.xlu0 %9695
    %9697 = vrot.lane.b32.xlu0 %v9688, 64
    %v9698 = vpop.permute.xlu0 %9697
    %9699 = vrot.lane.b32.xlu0 %v9689, 64
    %v9700 = vpop.permute.xlu0 %9699
    %9701 = vrot.lane.b32.xlu0 %v9690, 64
    %v9702 = vpop.permute.xlu0 %9701
    %9703 = vrot.lane.b32.xlu0 %v9691, 64
    %v9704 = vpop.permute.xlu0 %9703
    %9705 = vrot.lane.b32.xlu0 %v9692, 64
    %v9706 = vpop.permute.xlu0 %9705
    %9707 = vrot.lane.b32.xlu0 %v9693, 64
    %v9708 = vpop.permute.xlu0 %9707
    %9709 = vrot.lane.b32.xlu0 %v9694, 64
    %v9710 = vpop.permute.xlu0 %9709
    %v9711 = vpack.c.b16 %v9264, %v9262
    %v9712 = vpack.c.b16 %v9268, %v9266
    %v9713 = vpack.c.b16 %v9272, %v9270
    %v9714 = vpack.c.b16 %v9276, %v9274
    %v9715 = vpack.c.b16 %v9280, %v9278
    %v9716 = vpack.c.b16 %v9284, %v9282
    %v9717 = vpack.c.b16 %v9288, %v9286
    %v9718 = vpack.c.b16 %v9292, %v9290
    %9719 = vrot.lane.b32.xlu0 %v9711, 96
    %v9720 = vpop.permute.xlu0 %9719
    %9721 = vrot.lane.b32.xlu0 %v9712, 96
    %v9722 = vpop.permute.xlu0 %9721
    %9723 = vrot.lane.b32.xlu0 %v9713, 96
    %v9724 = vpop.permute.xlu0 %9723
    %9725 = vrot.lane.b32.xlu0 %v9714, 96
    %v9726 = vpop.permute.xlu0 %9725
    %9727 = vrot.lane.b32.xlu0 %v9715, 96
    %v9728 = vpop.permute.xlu0 %9727
    %9729 = vrot.lane.b32.xlu0 %v9716, 96
    %v9730 = vpop.permute.xlu0 %9729
    %9731 = vrot.lane.b32.xlu0 %v9717, 96
    %v9732 = vpop.permute.xlu0 %9731
    %9733 = vrot.lane.b32.xlu0 %v9718, 96
    %v9734 = vpop.permute.xlu0 %9733
    %v9735 = vunpack.c.l.b16 %v9035
    %v9736 = vunpack.c.l.b16 %v9049
    %v9737 = vunpack.c.l.b16 %v9063
    %v9738 = vunpack.c.l.b16 %v9077
    %v9739 = vunpack.c.l.b16 %v9091
    %v9740 = vunpack.c.l.b16 %v9105
    %v9741 = vunpack.c.l.b16 %v9119
    %v9742 = vunpack.c.l.b16 %v9133
    %v9743 = vunpack.c.l.b16 %v9147
    %v9744 = vunpack.c.l.b16 %v9161
    %v9745 = vunpack.c.l.b16 %v9175
    %v9746 = vunpack.c.l.b16 %v9189
    %v9747 = vunpack.c.l.b16 %v9203
    %v9748 = vunpack.c.l.b16 %v9217
    %v9749 = vunpack.c.l.b16 %v9231
    %v9750 = vunpack.c.l.b16 %v9245
    %v9751 = vpack.c.b16 %v9736, %v9735
    %v9752 = vpack.c.b16 %v9738, %v9737
    %v9753 = vpack.c.b16 %v9740, %v9739
    %v9754 = vpack.c.b16 %v9742, %v9741
    %v9755 = vpack.c.b16 %v9744, %v9743
    %v9756 = vpack.c.b16 %v9746, %v9745
    %v9757 = vpack.c.b16 %v9748, %v9747
    %v9758 = vpack.c.b16 %v9750, %v9749
    %v9759 = vunpack.c.l.b16 %v9339
    %v9760 = vunpack.c.l.b16 %v9353
    %v9761 = vunpack.c.l.b16 %v9367
    %v9762 = vunpack.c.l.b16 %v9381
    %v9763 = vunpack.c.l.b16 %v9395
    %v9764 = vunpack.c.l.b16 %v9409
    %v9765 = vunpack.c.l.b16 %v9423
    %v9766 = vunpack.c.l.b16 %v9437
    %v9767 = vunpack.c.l.b16 %v9451
    %v9768 = vunpack.c.l.b16 %v9465
    %v9769 = vunpack.c.l.b16 %v9479
    %v9770 = vunpack.c.l.b16 %v9493
    %v9771 = vunpack.c.l.b16 %v9507
    %v9772 = vunpack.c.l.b16 %v9521
    %v9773 = vunpack.c.l.b16 %v9535
    %v9774 = vunpack.c.l.b16 %v9549
    %v9775 = vpack.c.b16 %v9760, %v9759
    %v9776 = vpack.c.b16 %v9762, %v9761
    %v9777 = vpack.c.b16 %v9764, %v9763
    %v9778 = vpack.c.b16 %v9766, %v9765
    %v9779 = vpack.c.b16 %v9768, %v9767
    %v9780 = vpack.c.b16 %v9770, %v9769
    %v9781 = vpack.c.b16 %v9772, %v9771
    %v9782 = vpack.c.b16 %v9774, %v9773
    %9783 = vrot.lane.b32.xlu0 %v9775, 32
    %v9784 = vpop.permute.xlu0 %9783
    %9785 = vrot.lane.b32.xlu0 %v9776, 32
    %v9786 = vpop.permute.xlu0 %9785
    %9787 = vrot.lane.b32.xlu0 %v9777, 32
    %v9788 = vpop.permute.xlu0 %9787
    %9789 = vrot.lane.b32.xlu0 %v9778, 32
    %v9790 = vpop.permute.xlu0 %9789
    %9791 = vrot.lane.b32.xlu0 %v9779, 32
    %v9792 = vpop.permute.xlu0 %9791
    %9793 = vrot.lane.b32.xlu0 %v9780, 32
    %v9794 = vpop.permute.xlu0 %9793
    %9795 = vrot.lane.b32.xlu0 %v9781, 32
    %v9796 = vpop.permute.xlu0 %9795
    %9797 = vrot.lane.b32.xlu0 %v9782, 32
    %v9798 = vpop.permute.xlu0 %9797
    %v9799 = vpack.c.b16 %v8692, %v8690
    %v9800 = vpack.c.b16 %v8696, %v8694
    %v9801 = vpack.c.b16 %v8700, %v8698
    %v9802 = vpack.c.b16 %v9590, %v8702
    %v9803 = vpack.c.b16 %v8706, %v8704
    %v9804 = vpack.c.b16 %v8710, %v8708
    %v9805 = vpack.c.b16 %v8714, %v8712
    %v9806 = vpack.c.b16 %v9592, %v8716
    %9807 = vrot.lane.b32.xlu0 %v9799, 64
    %v9808 = vpop.permute.xlu0 %9807
    %9809 = vrot.lane.b32.xlu0 %v9800, 64
    %v9810 = vpop.permute.xlu0 %9809
    %9811 = vrot.lane.b32.xlu0 %v9801, 64
    %v9812 = vpop.permute.xlu0 %9811
    %9813 = vrot.lane.b32.xlu0 %v9802, 64
    %v9814 = vpop.permute.xlu0 %9813
    %9815 = vrot.lane.b32.xlu0 %v9803, 64
    %v9816 = vpop.permute.xlu0 %9815
    %9817 = vrot.lane.b32.xlu0 %v9804, 64
    %v9818 = vpop.permute.xlu0 %9817
    %9819 = vrot.lane.b32.xlu0 %v9805, 64
    %v9820 = vpop.permute.xlu0 %9819
    %9821 = vrot.lane.b32.xlu0 %v9806, 64
    %v9822 = vpop.permute.xlu0 %9821
    %v9823 = vunpack.c.l.b16 %v9573
    %v9824 = vunpack.c.l.b16 %v9587
    %v9825 = vpack.c.b16 %v9636, %v9635
    %v9826 = vpack.c.b16 %v9638, %v9637
    %v9827 = vpack.c.b16 %v9640, %v9639
    %v9828 = vpack.c.b16 %v9823, %v9641
    %v9829 = vpack.c.b16 %v9643, %v9642
    %v9830 = vpack.c.b16 %v9645, %v9644
    %v9831 = vpack.c.b16 %v9647, %v9646
    %v9832 = vpack.c.b16 %v9824, %v9648
    %9833 = vrot.lane.b32.xlu0 %v9825, 96
    %v9834 = vpop.permute.xlu0 %9833
    %9835 = vrot.lane.b32.xlu0 %v9826, 96
    %v9836 = vpop.permute.xlu0 %9835
    %9837 = vrot.lane.b32.xlu0 %v9827, 96
    %v9838 = vpop.permute.xlu0 %9837
    %9839 = vrot.lane.b32.xlu0 %v9828, 96
    %v9840 = vpop.permute.xlu0 %9839
    %9841 = vrot.lane.b32.xlu0 %v9829, 96
    %v9842 = vpop.permute.xlu0 %9841
    %9843 = vrot.lane.b32.xlu0 %v9830, 96
    %v9844 = vpop.permute.xlu0 %9843
    %9845 = vrot.lane.b32.xlu0 %v9831, 96
    %v9846 = vpop.permute.xlu0 %9845
    %9847 = vrot.lane.b32.xlu0 %v9832, 96
    %v9848 = vpop.permute.xlu0 %9847
    %v9849 = vunpack.c.l.b16 %v9611
    %v9850 = vunpack.c.l.b16 %v9625
    %v9851 = vpack.c.b16 %v9674, %v9673
    %v9852 = vpack.c.b16 %v9676, %v9675
    %v9853 = vpack.c.b16 %v9678, %v9677
    %v9854 = vpack.c.b16 %v9849, %v9679
    %v9855 = vpack.c.b16 %v9681, %v9680
    %v9856 = vpack.c.b16 %v9683, %v9682
    %v9857 = vpack.c.b16 %v9685, %v9684
    %v9858 = vpack.c.b16 %v9850, %v9686
    %v9861 = vsel %vm5754, %v9626, %v9658
    %v9864 = vsel %vm5754, %v9627, %v9660
    %v9867 = vsel %vm5754, %v9628, %v9662
    %v9870 = vsel %vm5754, %v9629, %v9664
    %v9873 = vsel %vm5754, %v9630, %v9666
    %v9876 = vsel %vm5754, %v9631, %v9668
    %v9879 = vsel %vm5754, %v9632, %v9670
    %v9882 = vsel %vm5754, %v9633, %v9672
    %v9884 = vsel %vm2954, %v9861, %v9696
    %v9886 = vsel %vm2954, %v9864, %v9698
    %v9888 = vsel %vm2954, %v9867, %v9700
    %v9890 = vsel %vm2954, %v9870, %v9702
    %v9892 = vsel %vm2954, %v9873, %v9704
    %v9894 = vsel %vm2954, %v9876, %v9706
    %v9896 = vsel %vm2954, %v9879, %v9708
    %v9898 = vsel %vm2954, %v9882, %v9710
    %v9900 = vsel %vm5757, %v9884, %v9720
    %v9903 = vsel %vm5757, %v9886, %v9722
    %v9906 = vsel %vm5757, %v9888, %v9724
    %v9909 = vsel %vm5757, %v9890, %v9726
    %v9912 = vsel %vm5757, %v9892, %v9728
    %v9915 = vsel %vm5757, %v9894, %v9730
    %v9918 = vsel %vm5757, %v9896, %v9732
    %v9921 = vsel %vm5757, %v9898, %v9734
    %v9925 = vsel %vm5754, %v9751, %v9784
    %v9928 = vsel %vm5754, %v9752, %v9786
    %v9931 = vsel %vm5754, %v9753, %v9788
    %v9934 = vsel %vm5754, %v9754, %v9790
    %v9937 = vsel %vm5754, %v9755, %v9792
    %v9940 = vsel %vm5754, %v9756, %v9794
    %v9943 = vsel %vm5754, %v9757, %v9796
    %v9946 = vsel %vm5754, %v9758, %v9798
    %v9948 = vsel %vm2954, %v9925, %v9808
    %v9950 = vsel %vm2954, %v9928, %v9810
    %v9952 = vsel %vm2954, %v9931, %v9812
    %v9954 = vsel %vm2954, %v9934, %v9814
    %v9956 = vsel %vm2954, %v9937, %v9816
    %v9958 = vsel %vm2954, %v9940, %v9818
    %v9960 = vsel %vm2954, %v9943, %v9820
    %v9962 = vsel %vm2954, %v9946, %v9822
    %v9964 = vsel %vm5757, %v9948, %v9834
    %v9967 = vsel %vm5757, %v9950, %v9836
    %v9970 = vsel %vm5757, %v9952, %v9838
    %v9973 = vsel %vm5757, %v9954, %v9840
    %v9976 = vsel %vm5757, %v9956, %v9842
    %v9979 = vsel %vm5757, %v9958, %v9844
    %v9982 = vsel %vm5757, %v9960, %v9846
    %v9985 = vsel %vm5757, %v9962, %v9848
    %vm9987 = vcmask 1046532
    %vm9988 = vmor %vm1182, %vm9987
    %v9989 = vrot.slane %v8433, 5
    %v9990 = vrot.slane %v9989, 4
    %v9991 = vrot.slane %v8434, 5
    %v9992 = vsel %vm9988, %v9990, %v9991
    %v9993 = vrot.slane %v8435, 5
    %v9994 = vrot.slane %v9993, 4
    %v9995 = vrot.slane %v8436, 5
    %v9996 = vsel %vm9988, %v9994, %v9995
    %v9997 = vrot.slane %v8437, 5
    %v9998 = vrot.slane %v9997, 4
    %v9999 = vrot.slane %v8438, 5
    %v10000 = vsel %vm9988, %v9998, %v9999
    %v10001 = vrot.slane %v8439, 5
    %v10002 = vrot.slane %v10001, 4
    %v10003 = vrot.slane %v8440, 5
    %v10004 = vsel %vm9988, %v10002, %v10003
    %v10005 = vrot.slane %v8441, 5
    %v10006 = vrot.slane %v10005, 4
    %v10007 = vrot.slane %v8442, 5
    %v10008 = vsel %vm9988, %v10006, %v10007
    %v10009 = vrot.slane %v8443, 5
    %v10010 = vrot.slane %v10009, 4
    %v10011 = vrot.slane %v8444, 5
    %v10012 = vsel %vm9988, %v10010, %v10011
    %v10013 = vrot.slane %v8445, 5
    %v10014 = vrot.slane %v10013, 4
    %v10015 = vrot.slane %v8446, 5
    %v10016 = vsel %vm9988, %v10014, %v10015
    %v10017 = vrot.slane %v8447, 5
    %v10018 = vrot.slane %v10017, 4
    %v10019 = vrot.slane %v8448, 5
    %v10020 = vsel %vm9988, %v10018, %v10019
    %v10021 = vrot.slane %v8449, 5
    %v10022 = vrot.slane %v10021, 4
    %v10023 = vrot.slane %v8450, 5
    %v10024 = vsel %vm9988, %v10022, %v10023
    %v10025 = vrot.slane %v8451, 5
    %v10026 = vrot.slane %v10025, 4
    %v10027 = vrot.slane %v8452, 5
    %v10028 = vsel %vm9988, %v10026, %v10027
    %v10029 = vrot.slane %v8453, 5
    %v10030 = vrot.slane %v10029, 4
    %v10031 = vrot.slane %v8454, 5
    %v10032 = vsel %vm9988, %v10030, %v10031
    %v10033 = vrot.slane %v8455, 5
    %v10034 = vrot.slane %v10033, 4
    %v10035 = vrot.slane %v8456, 5
    %v10036 = vsel %vm9988, %v10034, %v10035
    %v10037 = vrot.slane %v8457, 5
    %v10038 = vrot.slane %v10037, 4
    %v10039 = vrot.slane %v8458, 5
    %v10040 = vsel %vm9988, %v10038, %v10039
    %v10041 = vrot.slane %v8459, 5
    %v10042 = vrot.slane %v10041, 4
    %v10043 = vrot.slane %v8460, 5
    %v10044 = vsel %vm9988, %v10042, %v10043
    %v10045 = vrot.slane %v8461, 5
    %v10046 = vrot.slane %v10045, 4
    %v10047 = vrot.slane %v8462, 5
    %v10048 = vsel %vm9988, %v10046, %v10047
    %v10049 = vrot.slane %v8990, 5
    %v10050 = vrot.slane %v10049, 4
    %v10051 = vrot.slane %v8991, 5
    %v10052 = vsel %vm9988, %v10050, %v10051
    %v10053 = vrot.slane %v8992, 5
    %v10054 = vrot.slane %v10053, 4
    %v10055 = vrot.slane %v8993, 5
    %v10056 = vsel %vm9988, %v10054, %v10055
    %v10057 = vrot.slane %v8994, 5
    %v10058 = vrot.slane %v10057, 4
    %v10059 = vrot.slane %v8995, 5
    %v10060 = vsel %vm9988, %v10058, %v10059
    %v10061 = vrot.slane %v8996, 5
    %v10062 = vrot.slane %v10061, 4
    %v10063 = vrot.slane %v8997, 5
    %v10064 = vsel %vm9988, %v10062, %v10063
    %v10065 = vrot.slane %v8998, 5
    %v10066 = vrot.slane %v10065, 4
    %v10067 = vrot.slane %v8999, 5
    %v10068 = vsel %vm9988, %v10066, %v10067
    %v10069 = vrot.slane %v9000, 5
    %v10070 = vrot.slane %v10069, 4
    %v10071 = vrot.slane %v9001, 5
    %v10072 = vsel %vm9988, %v10070, %v10071
    %v10073 = vrot.slane %v9002, 5
    %v10074 = vrot.slane %v10073, 4
    %v10075 = vrot.slane %v9003, 5
    %v10076 = vsel %vm9988, %v10074, %v10075
    %v10077 = vrot.slane %v9004, 5
    %v10078 = vrot.slane %v10077, 4
    %v10079 = vrot.slane %v9005, 5
    %v10080 = vsel %vm9988, %v10078, %v10079
    %v10081 = vrot.slane %v9006, 5
    %v10082 = vrot.slane %v10081, 4
    %v10083 = vrot.slane %v9007, 5
    %v10084 = vsel %vm9988, %v10082, %v10083
    %v10085 = vrot.slane %v9008, 5
    %v10086 = vrot.slane %v10085, 4
    %v10087 = vrot.slane %v9009, 5
    %v10088 = vsel %vm9988, %v10086, %v10087
    %v10089 = vrot.slane %v9010, 5
    %v10090 = vrot.slane %v10089, 4
    %v10091 = vrot.slane %v9011, 5
    %v10092 = vsel %vm9988, %v10090, %v10091
    %v10093 = vrot.slane %v9012, 5
    %v10094 = vrot.slane %v10093, 4
    %v10095 = vrot.slane %v9013, 5
    %v10096 = vsel %vm9988, %v10094, %v10095
    %v10097 = vrot.slane %v9014, 5
    %v10098 = vrot.slane %v10097, 4
    %v10099 = vrot.slane %v9015, 5
    %v10100 = vsel %vm9988, %v10098, %v10099
    %v10101 = vrot.slane %v9016, 5
    %v10102 = vrot.slane %v10101, 4
    %v10103 = vrot.slane %v9017, 5
    %v10104 = vsel %vm9988, %v10102, %v10103
    %v10105 = vrot.slane %v9018, 5
    %v10106 = vrot.slane %v10105, 4
    %v10107 = vrot.slane %v9019, 5
    %v10108 = vsel %vm9988, %v10106, %v10107
    %v10109 = vrot.slane %v9020, 5
    %v10110 = vrot.slane %v10109, 4
    %v10111 = vrot.slane %v9021, 5
    %v10112 = vsel %vm9988, %v10110, %v10111
    %v10113 = vrot.slane %v9556, 5
    %v10114 = vrot.slane %v10113, 4
    %v10115 = vrot.slane %v9557, 5
    %v10116 = vsel %vm9988, %v10114, %v10115
    %v10117 = vrot.slane %v9558, 5
    %v10118 = vrot.slane %v10117, 4
    %v10119 = vrot.slane %v9559, 5
    %v10120 = vsel %vm9988, %v10118, %v10119
    %10121 = vrot.lane.b32.xlu0 %v9687, 32
    %v10122 = vpop.permute.xlu0 %10121
    %10123 = vrot.lane.b32.xlu0 %v9688, 32
    %v10124 = vpop.permute.xlu0 %10123
    %10125 = vrot.lane.b32.xlu0 %v9689, 32
    %v10126 = vpop.permute.xlu0 %10125
    %10127 = vrot.lane.b32.xlu0 %v9690, 32
    %v10128 = vpop.permute.xlu0 %10127
    %10129 = vrot.lane.b32.xlu0 %v9691, 32
    %v10130 = vpop.permute.xlu0 %10129
    %10131 = vrot.lane.b32.xlu0 %v9692, 32
    %v10132 = vpop.permute.xlu0 %10131
    %10133 = vrot.lane.b32.xlu0 %v9693, 32
    %v10134 = vpop.permute.xlu0 %10133
    %10135 = vrot.lane.b32.xlu0 %v9694, 32
    %v10136 = vpop.permute.xlu0 %10135
    %v10137 = vunpack.c.l.b16 %v9992
    %v10138 = vunpack.c.l.b16 %v9996
    %v10139 = vunpack.c.l.b16 %v10000
    %v10140 = vunpack.c.l.b16 %v10004
    %v10141 = vunpack.c.l.b16 %v10008
    %v10142 = vunpack.c.l.b16 %v10012
    %v10143 = vunpack.c.l.b16 %v10016
    %v10144 = vunpack.c.l.b16 %v10020
    %v10145 = vunpack.c.l.b16 %v10024
    %v10146 = vunpack.c.l.b16 %v10028
    %v10147 = vunpack.c.l.b16 %v10032
    %v10148 = vunpack.c.l.b16 %v10036
    %v10149 = vunpack.c.l.b16 %v10040
    %v10150 = vunpack.c.l.b16 %v10044
    %v10151 = vunpack.c.l.b16 %v10048
    %v10152 = vpack.c.b16 %v10138, %v10137
    %v10153 = vpack.c.b16 %v10140, %v10139
    %v10154 = vpack.c.b16 %v10142, %v10141
    %v10155 = vpack.c.b16 %v10144, %v10143
    %v10156 = vpack.c.b16 %v10145, %v10137
    %v10157 = vpack.c.b16 %v10147, %v10146
    %v10158 = vpack.c.b16 %v10149, %v10148
    %v10159 = vpack.c.b16 %v10151, %v10150
    %10160 = vrot.lane.b32.xlu0 %v10152, 64
    %v10161 = vpop.permute.xlu0 %10160
    %10162 = vrot.lane.b32.xlu0 %v10153, 64
    %v10163 = vpop.permute.xlu0 %10162
    %10164 = vrot.lane.b32.xlu0 %v10154, 64
    %v10165 = vpop.permute.xlu0 %10164
    %10166 = vrot.lane.b32.xlu0 %v10155, 64
    %v10167 = vpop.permute.xlu0 %10166
    %10168 = vrot.lane.b32.xlu0 %v10156, 64
    %v10169 = vpop.permute.xlu0 %10168
    %10170 = vrot.lane.b32.xlu0 %v10157, 64
    %v10171 = vpop.permute.xlu0 %10170
    %10172 = vrot.lane.b32.xlu0 %v10158, 64
    %v10173 = vpop.permute.xlu0 %10172
    %10174 = vrot.lane.b32.xlu0 %v10159, 64
    %v10175 = vpop.permute.xlu0 %10174
    %10176 = vrot.lane.b32.xlu0 %v9751, 96
    %v10177 = vpop.permute.xlu0 %10176
    %10178 = vrot.lane.b32.xlu0 %v9752, 96
    %v10179 = vpop.permute.xlu0 %10178
    %10180 = vrot.lane.b32.xlu0 %v9753, 96
    %v10181 = vpop.permute.xlu0 %10180
    %10182 = vrot.lane.b32.xlu0 %v9754, 96
    %v10183 = vpop.permute.xlu0 %10182
    %10184 = vrot.lane.b32.xlu0 %v9755, 96
    %v10185 = vpop.permute.xlu0 %10184
    %10186 = vrot.lane.b32.xlu0 %v9756, 96
    %v10187 = vpop.permute.xlu0 %10186
    %10188 = vrot.lane.b32.xlu0 %v9757, 96
    %v10189 = vpop.permute.xlu0 %10188
    %10190 = vrot.lane.b32.xlu0 %v9758, 96
    %v10191 = vpop.permute.xlu0 %10190
    %v10192 = vunpack.c.l.b16 %v10052
    %v10193 = vunpack.c.l.b16 %v10056
    %v10194 = vunpack.c.l.b16 %v10060
    %v10195 = vunpack.c.l.b16 %v10064
    %v10196 = vunpack.c.l.b16 %v10068
    %v10197 = vunpack.c.l.b16 %v10072
    %v10198 = vunpack.c.l.b16 %v10076
    %v10199 = vunpack.c.l.b16 %v10080
    %v10200 = vunpack.c.l.b16 %v10084
    %v10201 = vunpack.c.l.b16 %v10088
    %v10202 = vunpack.c.l.b16 %v10092
    %v10203 = vunpack.c.l.b16 %v10096
    %v10204 = vunpack.c.l.b16 %v10100
    %v10205 = vunpack.c.l.b16 %v10104
    %v10206 = vunpack.c.l.b16 %v10108
    %v10207 = vunpack.c.l.b16 %v10112
    %v10208 = vpack.c.b16 %v10193, %v10192
    %v10209 = vpack.c.b16 %v10195, %v10194
    %v10210 = vpack.c.b16 %v10197, %v10196
    %v10211 = vpack.c.b16 %v10199, %v10198
    %v10212 = vpack.c.b16 %v10201, %v10200
    %v10213 = vpack.c.b16 %v10203, %v10202
    %v10214 = vpack.c.b16 %v10205, %v10204
    %v10215 = vpack.c.b16 %v10207, %v10206
    %10216 = vrot.lane.b32.xlu0 %v10208, 32
    %v10217 = vpop.permute.xlu0 %10216
    %10218 = vrot.lane.b32.xlu0 %v10209, 32
    %v10219 = vpop.permute.xlu0 %10218
    %10220 = vrot.lane.b32.xlu0 %v10210, 32
    %v10221 = vpop.permute.xlu0 %10220
    %10222 = vrot.lane.b32.xlu0 %v10211, 32
    %v10223 = vpop.permute.xlu0 %10222
    %10224 = vrot.lane.b32.xlu0 %v10212, 32
    %v10225 = vpop.permute.xlu0 %10224
    %10226 = vrot.lane.b32.xlu0 %v10213, 32
    %v10227 = vpop.permute.xlu0 %10226
    %10228 = vrot.lane.b32.xlu0 %v10214, 32
    %v10229 = vpop.permute.xlu0 %10228
    %10230 = vrot.lane.b32.xlu0 %v10215, 32
    %v10231 = vpop.permute.xlu0 %10230
    %10232 = vrot.lane.b32.xlu0 %v9825, 64
    %v10233 = vpop.permute.xlu0 %10232
    %10234 = vrot.lane.b32.xlu0 %v9826, 64
    %v10235 = vpop.permute.xlu0 %10234
    %10236 = vrot.lane.b32.xlu0 %v9827, 64
    %v10237 = vpop.permute.xlu0 %10236
    %10238 = vrot.lane.b32.xlu0 %v9828, 64
    %v10239 = vpop.permute.xlu0 %10238
    %10240 = vrot.lane.b32.xlu0 %v9829, 64
    %v10241 = vpop.permute.xlu0 %10240
    %10242 = vrot.lane.b32.xlu0 %v9830, 64
    %v10243 = vpop.permute.xlu0 %10242
    %10244 = vrot.lane.b32.xlu0 %v9831, 64
    %v10245 = vpop.permute.xlu0 %10244
    %10246 = vrot.lane.b32.xlu0 %v9832, 64
    %v10247 = vpop.permute.xlu0 %10246
    %10248 = vrot.lane.b32.xlu0 %v9851, 96
    %v10249 = vpop.permute.xlu0 %10248
    %10250 = vrot.lane.b32.xlu0 %v9852, 96
    %v10251 = vpop.permute.xlu0 %10250
    %10252 = vrot.lane.b32.xlu0 %v9853, 96
    %v10253 = vpop.permute.xlu0 %10252
    %10254 = vrot.lane.b32.xlu0 %v9854, 96
    %v10255 = vpop.permute.xlu0 %10254
    %10256 = vrot.lane.b32.xlu0 %v9855, 96
    %v10257 = vpop.permute.xlu0 %10256
    %10258 = vrot.lane.b32.xlu0 %v9856, 96
    %v10259 = vpop.permute.xlu0 %10258
    %10260 = vrot.lane.b32.xlu0 %v9857, 96
    %v10261 = vpop.permute.xlu0 %10260
    %10262 = vrot.lane.b32.xlu0 %v9858, 96
    %v10263 = vpop.permute.xlu0 %10262
    %v10264 = vunpack.c.l.b16 %v10116
    %v10265 = vunpack.c.l.b16 %v10120
    %v10266 = vpack.c.b16 %v10139, %v10138
    %v10267 = vpack.c.b16 %v10141, %v10140
    %v10268 = vpack.c.b16 %v10143, %v10142
    %v10269 = vpack.c.b16 %v10264, %v10144
    %v10270 = vpack.c.b16 %v10146, %v10145
    %v10271 = vpack.c.b16 %v10148, %v10147
    %v10272 = vpack.c.b16 %v10150, %v10149
    %v10273 = vpack.c.b16 %v10265, %v10151
    %v10276 = vsel %vm5754, %v9649, %v10122
    %v10279 = vsel %vm5754, %v9650, %v10124
    %v10282 = vsel %vm5754, %v9651, %v10126
    %v10285 = vsel %vm5754, %v9652, %v10128
    %v10288 = vsel %vm5754, %v9653, %v10130
    %v10291 = vsel %vm5754, %v9654, %v10132
    %v10294 = vsel %vm5754, %v9655, %v10134
    %v10297 = vsel %vm5754, %v9656, %v10136
    %v10299 = vsel %vm2954, %v10276, %v10161
    %v10301 = vsel %vm2954, %v10279, %v10163
    %v10303 = vsel %vm2954, %v10282, %v10165
    %v10305 = vsel %vm2954, %v10285, %v10167
    %v10307 = vsel %vm2954, %v10288, %v10169
    %v10309 = vsel %vm2954, %v10291, %v10171
    %v10311 = vsel %vm2954, %v10294, %v10173
    %v10313 = vsel %vm2954, %v10297, %v10175
    %v10315 = vsel %vm5757, %v10299, %v10177
    %v10318 = vsel %vm5757, %v10301, %v10179
    %v10321 = vsel %vm5757, %v10303, %v10181
    %v10324 = vsel %vm5757, %v10305, %v10183
    %v10327 = vsel %vm5757, %v10307, %v10185
    %v10330 = vsel %vm5757, %v10309, %v10187
    %v10333 = vsel %vm5757, %v10311, %v10189
    %v10336 = vsel %vm5757, %v10313, %v10191
    %v10340 = vsel %vm5754, %v9775, %v10217
    %v10343 = vsel %vm5754, %v9776, %v10219
    %v10346 = vsel %vm5754, %v9777, %v10221
    %v10349 = vsel %vm5754, %v9778, %v10223
    %v10352 = vsel %vm5754, %v9779, %v10225
    %v10355 = vsel %vm5754, %v9780, %v10227
    %v10358 = vsel %vm5754, %v9781, %v10229
    %v10361 = vsel %vm5754, %v9782, %v10231
    %v10363 = vsel %vm2954, %v10340, %v10233
    %v10365 = vsel %vm2954, %v10343, %v10235
    %v10367 = vsel %vm2954, %v10346, %v10237
    %v10369 = vsel %vm2954, %v10349, %v10239
    %v10371 = vsel %vm2954, %v10352, %v10241
    %v10373 = vsel %vm2954, %v10355, %v10243
    %v10375 = vsel %vm2954, %v10358, %v10245
    %v10377 = vsel %vm2954, %v10361, %v10247
    %v10379 = vsel %vm5757, %v10363, %v10249
    %v10382 = vsel %vm5757, %v10365, %v10251
    %v10385 = vsel %vm5757, %v10367, %v10253
    %v10388 = vsel %vm5757, %v10369, %v10255
    %v10391 = vsel %vm5757, %v10371, %v10257
    %v10394 = vsel %vm5757, %v10373, %v10259
    %v10397 = vsel %vm5757, %v10375, %v10261
    %v10400 = vsel %vm5757, %v10377, %v10263
    %10402 = vrot.lane.b32.xlu0 %v9751, 32
    %v10403 = vpop.permute.xlu0 %10402
    %10404 = vrot.lane.b32.xlu0 %v9752, 32
    %v10405 = vpop.permute.xlu0 %10404
    %10406 = vrot.lane.b32.xlu0 %v9753, 32
    %v10407 = vpop.permute.xlu0 %10406
    %10408 = vrot.lane.b32.xlu0 %v9754, 32
    %v10409 = vpop.permute.xlu0 %10408
    %10410 = vrot.lane.b32.xlu0 %v9755, 32
    %v10411 = vpop.permute.xlu0 %10410
    %10412 = vrot.lane.b32.xlu0 %v9756, 32
    %v10413 = vpop.permute.xlu0 %10412
    %10414 = vrot.lane.b32.xlu0 %v9757, 32
    %v10415 = vpop.permute.xlu0 %10414
    %10416 = vrot.lane.b32.xlu0 %v9758, 32
    %v10417 = vpop.permute.xlu0 %10416
    %10418 = vrot.lane.b32.xlu0 %v9775, 64
    %v10419 = vpop.permute.xlu0 %10418
    %10420 = vrot.lane.b32.xlu0 %v9776, 64
    %v10421 = vpop.permute.xlu0 %10420
    %10422 = vrot.lane.b32.xlu0 %v9777, 64
    %v10423 = vpop.permute.xlu0 %10422
    %10424 = vrot.lane.b32.xlu0 %v9778, 64
    %v10425 = vpop.permute.xlu0 %10424
    %10426 = vrot.lane.b32.xlu0 %v9779, 64
    %v10427 = vpop.permute.xlu0 %10426
    %10428 = vrot.lane.b32.xlu0 %v9780, 64
    %v10429 = vpop.permute.xlu0 %10428
    %10430 = vrot.lane.b32.xlu0 %v9781, 64
    %v10431 = vpop.permute.xlu0 %10430
    %10432 = vrot.lane.b32.xlu0 %v9782, 64
    %v10433 = vpop.permute.xlu0 %10432
    %10434 = vrot.lane.b32.xlu0 %v9799, 96
    %v10435 = vpop.permute.xlu0 %10434
    %10436 = vrot.lane.b32.xlu0 %v9800, 96
    %v10437 = vpop.permute.xlu0 %10436
    %10438 = vrot.lane.b32.xlu0 %v9801, 96
    %v10439 = vpop.permute.xlu0 %10438
    %10440 = vrot.lane.b32.xlu0 %v9802, 96
    %v10441 = vpop.permute.xlu0 %10440
    %10442 = vrot.lane.b32.xlu0 %v9803, 96
    %v10443 = vpop.permute.xlu0 %10442
    %10444 = vrot.lane.b32.xlu0 %v9804, 96
    %v10445 = vpop.permute.xlu0 %10444
    %10446 = vrot.lane.b32.xlu0 %v9805, 96
    %v10447 = vpop.permute.xlu0 %10446
    %10448 = vrot.lane.b32.xlu0 %v9806, 96
    %v10449 = vpop.permute.xlu0 %10448
    %10450 = vrot.lane.b32.xlu0 %v9851, 32
    %v10451 = vpop.permute.xlu0 %10450
    %10452 = vrot.lane.b32.xlu0 %v9852, 32
    %v10453 = vpop.permute.xlu0 %10452
    %10454 = vrot.lane.b32.xlu0 %v9853, 32
    %v10455 = vpop.permute.xlu0 %10454
    %10456 = vrot.lane.b32.xlu0 %v9854, 32
    %v10457 = vpop.permute.xlu0 %10456
    %10458 = vrot.lane.b32.xlu0 %v9855, 32
    %v10459 = vpop.permute.xlu0 %10458
    %10460 = vrot.lane.b32.xlu0 %v9856, 32
    %v10461 = vpop.permute.xlu0 %10460
    %10462 = vrot.lane.b32.xlu0 %v9857, 32
    %v10463 = vpop.permute.xlu0 %10462
    %10464 = vrot.lane.b32.xlu0 %v9858, 32
    %v10465 = vpop.permute.xlu0 %10464
    %v10466 = vpack.c.b16 %v9266, %v9264
    %v10467 = vpack.c.b16 %v9270, %v9268
    %v10468 = vpack.c.b16 %v9274, %v9272
    %v10469 = vpack.c.b16 %v8403, %v9276
    %v10470 = vpack.c.b16 %v9282, %v9280
    %v10471 = vpack.c.b16 %v9286, %v9284
    %v10472 = vpack.c.b16 %v9290, %v9288
    %v10473 = vpack.c.b16 %v8403, %v9292
    %10474 = vrot.lane.b32.xlu0 %v10466, 64
    %v10475 = vpop.permute.xlu0 %10474
    %10476 = vrot.lane.b32.xlu0 %v10467, 64
    %v10477 = vpop.permute.xlu0 %10476
    %10478 = vrot.lane.b32.xlu0 %v10468, 64
    %v10479 = vpop.permute.xlu0 %10478
    %10480 = vrot.lane.b32.xlu0 %v10469, 64
    %v10481 = vpop.permute.xlu0 %10480
    %10482 = vrot.lane.b32.xlu0 %v10470, 64
    %v10483 = vpop.permute.xlu0 %10482
    %10484 = vrot.lane.b32.xlu0 %v10471, 64
    %v10485 = vpop.permute.xlu0 %10484
    %10486 = vrot.lane.b32.xlu0 %v10472, 64
    %v10487 = vpop.permute.xlu0 %10486
    %10488 = vrot.lane.b32.xlu0 %v10473, 64
    %v10489 = vpop.permute.xlu0 %10488
    %v10490 = vpack.c.b16 %v9737, %v9736
    %v10491 = vpack.c.b16 %v9739, %v9738
    %v10492 = vpack.c.b16 %v9741, %v9740
    %v10493 = vpack.c.b16 %v9634, %v9742
    %v10494 = vpack.c.b16 %v9745, %v9744
    %v10495 = vpack.c.b16 %v9747, %v9746
    %v10496 = vpack.c.b16 %v9749, %v9748
    %v10497 = vpack.c.b16 %v9634, %v9750
    %10498 = vrot.lane.b32.xlu0 %v10490, 96
    %v10499 = vpop.permute.xlu0 %10498
    %10500 = vrot.lane.b32.xlu0 %v10491, 96
    %v10501 = vpop.permute.xlu0 %10500
    %10502 = vrot.lane.b32.xlu0 %v10492, 96
    %v10503 = vpop.permute.xlu0 %10502
    %10504 = vrot.lane.b32.xlu0 %v10493, 96
    %v10505 = vpop.permute.xlu0 %10504
    %10506 = vrot.lane.b32.xlu0 %v10494, 96
    %v10507 = vpop.permute.xlu0 %10506
    %10508 = vrot.lane.b32.xlu0 %v10495, 96
    %v10509 = vpop.permute.xlu0 %10508
    %10510 = vrot.lane.b32.xlu0 %v10496, 96
    %v10511 = vpop.permute.xlu0 %10510
    %10512 = vrot.lane.b32.xlu0 %v10497, 96
    %v10513 = vpop.permute.xlu0 %10512
    %v10514 = vpack.c.b16 %v9761, %v9760
    %v10515 = vpack.c.b16 %v9763, %v9762
    %v10516 = vpack.c.b16 %v9765, %v9764
    %v10517 = vpack.c.b16 %v9634, %v9766
    %v10518 = vpack.c.b16 %v9769, %v9768
    %v10519 = vpack.c.b16 %v9771, %v9770
    %v10520 = vpack.c.b16 %v9773, %v9772
    %v10521 = vpack.c.b16 %v9634, %v9774
    %v10524 = vsel %vm5754, %v9711, %v10403
    %v10527 = vsel %vm5754, %v9712, %v10405
    %v10530 = vsel %vm5754, %v9713, %v10407
    %v10533 = vsel %vm5754, %v9714, %v10409
    %v10536 = vsel %vm5754, %v9715, %v10411
    %v10539 = vsel %vm5754, %v9716, %v10413
    %v10542 = vsel %vm5754, %v9717, %v10415
    %v10545 = vsel %vm5754, %v9718, %v10417
    %v10547 = vsel %vm2954, %v10524, %v10419
    %v10549 = vsel %vm2954, %v10527, %v10421
    %v10551 = vsel %vm2954, %v10530, %v10423
    %v10553 = vsel %vm2954, %v10533, %v10425
    %v10555 = vsel %vm2954, %v10536, %v10427
    %v10557 = vsel %vm2954, %v10539, %v10429
    %v10559 = vsel %vm2954, %v10542, %v10431
    %v10561 = vsel %vm2954, %v10545, %v10433
    %v10563 = vsel %vm5757, %v10547, %v10435
    %v10566 = vsel %vm5757, %v10549, %v10437
    %v10569 = vsel %vm5757, %v10551, %v10439
    %v10572 = vsel %vm5757, %v10553, %v10441
    %v10575 = vsel %vm5757, %v10555, %v10443
    %v10578 = vsel %vm5757, %v10557, %v10445
    %v10581 = vsel %vm5757, %v10559, %v10447
    %v10584 = vsel %vm5757, %v10561, %v10449
    %v10588 = vsel %vm5754, %v9825, %v10451
    %v10591 = vsel %vm5754, %v9826, %v10453
    %v10594 = vsel %vm5754, %v9827, %v10455
    %v10597 = vsel %vm5754, %v9828, %v10457
    %v10600 = vsel %vm5754, %v9829, %v10459
    %v10603 = vsel %vm5754, %v9830, %v10461
    %v10606 = vsel %vm5754, %v9831, %v10463
    %v10609 = vsel %vm5754, %v9832, %v10465
    %v10611 = vsel %vm2954, %v10588, %v10475
    %v10613 = vsel %vm2954, %v10591, %v10477
    %v10615 = vsel %vm2954, %v10594, %v10479
    %v10617 = vsel %vm2954, %v10597, %v10481
    %v10619 = vsel %vm2954, %v10600, %v10483
    %v10621 = vsel %vm2954, %v10603, %v10485
    %v10623 = vsel %vm2954, %v10606, %v10487
    %v10625 = vsel %vm2954, %v10609, %v10489
    %v10627 = vsel %vm5757, %v10611, %v10499
    %v10630 = vsel %vm5757, %v10613, %v10501
    %v10633 = vsel %vm5757, %v10615, %v10503
    %v10636 = vsel %vm5757, %v10617, %v10505
    %v10639 = vsel %vm5757, %v10619, %v10507
    %v10642 = vsel %vm5757, %v10621, %v10509
    %v10645 = vsel %vm5757, %v10623, %v10511
    %v10648 = vsel %vm5757, %v10625, %v10513
    %10650 = vrot.lane.b32.xlu0 %v10208, 64
    %v10651 = vpop.permute.xlu0 %10650
    %10652 = vrot.lane.b32.xlu0 %v10209, 64
    %v10653 = vpop.permute.xlu0 %10652
    %10654 = vrot.lane.b32.xlu0 %v10210, 64
    %v10655 = vpop.permute.xlu0 %10654
    %10656 = vrot.lane.b32.xlu0 %v10211, 64
    %v10657 = vpop.permute.xlu0 %10656
    %10658 = vrot.lane.b32.xlu0 %v10212, 64
    %v10659 = vpop.permute.xlu0 %10658
    %10660 = vrot.lane.b32.xlu0 %v10213, 64
    %v10661 = vpop.permute.xlu0 %10660
    %10662 = vrot.lane.b32.xlu0 %v10214, 64
    %v10663 = vpop.permute.xlu0 %10662
    %10664 = vrot.lane.b32.xlu0 %v10215, 64
    %v10665 = vpop.permute.xlu0 %10664
    %10666 = vrot.lane.b32.xlu0 %v10266, 32
    %v10667 = vpop.permute.xlu0 %10666
    %10668 = vrot.lane.b32.xlu0 %v10267, 32
    %v10669 = vpop.permute.xlu0 %10668
    %10670 = vrot.lane.b32.xlu0 %v10268, 32
    %v10671 = vpop.permute.xlu0 %10670
    %10672 = vrot.lane.b32.xlu0 %v10269, 32
    %v10673 = vpop.permute.xlu0 %10672
    %10674 = vrot.lane.b32.xlu0 %v10270, 32
    %v10675 = vpop.permute.xlu0 %10674
    %10676 = vrot.lane.b32.xlu0 %v10271, 32
    %v10677 = vpop.permute.xlu0 %10676
    %10678 = vrot.lane.b32.xlu0 %v10272, 32
    %v10679 = vpop.permute.xlu0 %10678
    %10680 = vrot.lane.b32.xlu0 %v10273, 32
    %v10681 = vpop.permute.xlu0 %10680
    %10682 = vrot.lane.b32.xlu0 %v10490, 64
    %v10683 = vpop.permute.xlu0 %10682
    %10684 = vrot.lane.b32.xlu0 %v10491, 64
    %v10685 = vpop.permute.xlu0 %10684
    %10686 = vrot.lane.b32.xlu0 %v10492, 64
    %v10687 = vpop.permute.xlu0 %10686
    %10688 = vrot.lane.b32.xlu0 %v10493, 64
    %v10689 = vpop.permute.xlu0 %10688
    %10690 = vrot.lane.b32.xlu0 %v10494, 64
    %v10691 = vpop.permute.xlu0 %10690
    %10692 = vrot.lane.b32.xlu0 %v10495, 64
    %v10693 = vpop.permute.xlu0 %10692
    %10694 = vrot.lane.b32.xlu0 %v10496, 64
    %v10695 = vpop.permute.xlu0 %10694
    %10696 = vrot.lane.b32.xlu0 %v10497, 64
    %v10697 = vpop.permute.xlu0 %10696
    %10698 = vrot.lane.b32.xlu0 %v10514, 96
    %v10699 = vpop.permute.xlu0 %10698
    %10700 = vrot.lane.b32.xlu0 %v10515, 96
    %v10701 = vpop.permute.xlu0 %10700
    %10702 = vrot.lane.b32.xlu0 %v10516, 96
    %v10703 = vpop.permute.xlu0 %10702
    %10704 = vrot.lane.b32.xlu0 %v10517, 96
    %v10705 = vpop.permute.xlu0 %10704
    %10706 = vrot.lane.b32.xlu0 %v10518, 96
    %v10707 = vpop.permute.xlu0 %10706
    %10708 = vrot.lane.b32.xlu0 %v10519, 96
    %v10709 = vpop.permute.xlu0 %10708
    %10710 = vrot.lane.b32.xlu0 %v10520, 96
    %v10711 = vpop.permute.xlu0 %10710
    %10712 = vrot.lane.b32.xlu0 %v10521, 96
    %v10713 = vpop.permute.xlu0 %10712
    %v10714 = vpack.c.b16 %v10194, %v10193
    %v10715 = vpack.c.b16 %v10196, %v10195
    %v10716 = vpack.c.b16 %v10198, %v10197
    %v10717 = vpack.c.b16 %v10137, %v10199
    %v10718 = vpack.c.b16 %v10202, %v10201
    %v10719 = vpack.c.b16 %v10204, %v10203
    %v10720 = vpack.c.b16 %v10206, %v10205
    %v10721 = vpack.c.b16 %v10137, %v10207
    %v10723 = vsel %vm2954, %v9925, %v10651
    %v10725 = vsel %vm2954, %v9928, %v10653
    %v10727 = vsel %vm2954, %v9931, %v10655
    %v10729 = vsel %vm2954, %v9934, %v10657
    %v10731 = vsel %vm2954, %v9937, %v10659
    %v10733 = vsel %vm2954, %v9940, %v10661
    %v10735 = vsel %vm2954, %v9943, %v10663
    %v10737 = vsel %vm2954, %v9946, %v10665
    %v10738 = vsel %vm5757, %v10723, %v9834
    %v10740 = vsel %vm5757, %v10725, %v9836
    %v10742 = vsel %vm5757, %v10727, %v9838
    %v10744 = vsel %vm5757, %v10729, %v9840
    %v10746 = vsel %vm5757, %v10731, %v9842
    %v10748 = vsel %vm5757, %v10733, %v9844
    %v10750 = vsel %vm5757, %v10735, %v9846
    %v10752 = vsel %vm5757, %v10737, %v9848
    %v10756 = vsel %vm5754, %v9851, %v10667
    %v10759 = vsel %vm5754, %v9852, %v10669
    %v10762 = vsel %vm5754, %v9853, %v10671
    %v10765 = vsel %vm5754, %v9854, %v10673
    %v10768 = vsel %vm5754, %v9855, %v10675
    %v10771 = vsel %vm5754, %v9856, %v10677
    %v10774 = vsel %vm5754, %v9857, %v10679
    %v10777 = vsel %vm5754, %v9858, %v10681
    %v10779 = vsel %vm2954, %v10756, %v10683
    %v10781 = vsel %vm2954, %v10759, %v10685
    %v10783 = vsel %vm2954, %v10762, %v10687
    %v10785 = vsel %vm2954, %v10765, %v10689
    %v10787 = vsel %vm2954, %v10768, %v10691
    %v10789 = vsel %vm2954, %v10771, %v10693
    %v10791 = vsel %vm2954, %v10774, %v10695
    %v10793 = vsel %vm2954, %v10777, %v10697
    %v10795 = vsel %vm5757, %v10779, %v10699
    %v10798 = vsel %vm5757, %v10781, %v10701
    %v10801 = vsel %vm5757, %v10783, %v10703
    %v10804 = vsel %vm5757, %v10785, %v10705
    %v10807 = vsel %vm5757, %v10787, %v10707
    %v10810 = vsel %vm5757, %v10789, %v10709
    %v10813 = vsel %vm5757, %v10791, %v10711
    %v10816 = vsel %vm5757, %v10793, %v10713
    %v10818 = vld [vmem:[#allocation21] sm:$0xff]
    %v10819 = vld [vmem:[#allocation21 + $0x8] sm:$0xf]
    %v10820 = vld [vmem:[#allocation21 + $0xc] sm:$0x33]
    %v10821 = vld [vmem:[#allocation21 + $0x14] sm:$0x3]
    %v10822 = vld [vmem:[%s14] sm:$0xff]
    %v10823 = vld [vmem:[%s14 + $0x8] sm:$0xf]
    %10825 = vset.pattern.permute.xlu0 0
    %10826 = vperm.xlu0 %10825, %v10822
    %v10827 = vpop.permute.xlu0 %10826
    %10830 = vset.pattern.permute.xlu0 0
    %10831 = vperm.xlu0 %10830, %v10823
    %v10832 = vpop.permute.xlu0 %10831
    %v10838 = vunpack.c.l.b16 %v10818
    %v10839 = vunpack.c.h.b16 %v10818
    %v10840 = vunpack.c.l.b16 %v10819
    %v10841 = vunpack.c.l.b16 %v10820
    %v10842 = vunpack.c.h.b16 %v10820
    %v10843 = vunpack.c.l.b16 %v10821
    %v10844 = vpack.c.b16 %v10841, %v10838
    %v10845 = vpack.c.b16 %v10842, %v10839
    %v10846 = vpack.c.b16 %v10843, %v10840
    %v10850 = vsel %vm5754, %v10846, 0
    %v10852 = vsel %vm5754, %v9851, 0
    %v10854 = vsel %vm5754, %v9852, 0
    %v10856 = vsel %vm5754, %v9853, 0
    %v10858 = vsel %vm5754, %v9854, 0
    %v10860 = vsel %vm5754, %v9855, 0
    %v10862 = vsel %vm5754, %v9856, 0
    %v10864 = vsel %vm5754, %v9857, 0
    %v10866 = vsel %vm5754, %v9858, 0
    %v10869 = vsel %vm5754, %v10266, 0
    %v10872 = vsel %vm5754, %v10267, 0
    %v10875 = vsel %vm5754, %v10268, 0
    %v10878 = vsel %vm5754, %v10269, 0
    %v10881 = vsel %vm5754, %v10270, 0
    %v10884 = vsel %vm5754, %v10271, 0
    %v10887 = vsel %vm5754, %v10272, 0
    %v10890 = vsel %vm5754, %v10273, 0
    %v10893 = vsel %vm5754, %v10514, 0
    %v10896 = vsel %vm5754, %v10515, 0
    %v10899 = vsel %vm5754, %v10516, 0
    %v10902 = vsel %vm5754, %v10517, 0
    %v10905 = vsel %vm5754, %v10518, 0
    %v10908 = vsel %vm5754, %v10519, 0
    %v10911 = vsel %vm5754, %v10520, 0
    %v10914 = vsel %vm5754, %v10521, 0
    %v10917 = vsel %vm5754, %v10714, 0
    %v10920 = vsel %vm5754, %v10715, 0
    %v10923 = vsel %vm5754, %v10716, 0
    %v10926 = vsel %vm5754, %v10717, 0
    %v10929 = vsel %vm5754, %v10718, 0
    %v10932 = vsel %vm5754, %v10719, 0
    %v10935 = vsel %vm5754, %v10720, 0
    %v10938 = vsel %vm5754, %v10721, 0
    %10940 = vmatprep.subr.bf16.mxu0 %v9985
    %10941 = vmatpush1.bf16.xpose.msra.mxu0 %v9921
    %10942 = vmatprep.subr.bf16.mxu0 %v9982
    %10943 = vmatpush1.bf16.xpose.msra.mxu0 %v9918
    %10944 = vmatprep.subr.bf16.mxu0 %v9979
    %10945 = vmatpush1.bf16.xpose.msra.mxu0 %v9915
    %10946 = vmatprep.subr.bf16.mxu0 %v9976
    %10947 = vmatpush1.bf16.xpose.msra.mxu0 %v9912
    %10948 = vmatprep.subr.bf16.mxu0 %v9973
    %10949 = vmatpush1.bf16.xpose.msra.mxu0 %v9909
    %10950 = vmatprep.subr.bf16.mxu0 %v9970
    %10951 = vmatpush1.bf16.xpose.msra.mxu0 %v9906
    %10952 = vmatprep.subr.bf16.mxu0 %v9967
    %10953 = vmatpush1.bf16.xpose.msra.mxu0 %v9903
    %10954 = vmatprep.subr.bf16.mxu0 %v9964
    %10955 = vmatpush1.bf16.xpose.msra.mxu0 %v9900
    %10956 = vmatprep.subr.bf16.mxu0 %v10400
    %10957 = vmatpush2.bf16.xpose.msra.mxu0 %v10336
    %10958 = vmatprep.subr.bf16.mxu0 %v10397
    %10959 = vmatpush2.bf16.xpose.msra.mxu0 %v10333
    %10960 = vmatprep.subr.bf16.mxu0 %v10394
    %10961 = vmatpush2.bf16.xpose.msra.mxu0 %v10330
    %10962 = vmatprep.subr.bf16.mxu0 %v10391
    %10963 = vmatpush2.bf16.xpose.msra.mxu0 %v10327
    %10964 = vmatprep.subr.bf16.mxu0 %v10388
    %10965 = vmatpush2.bf16.xpose.msra.mxu0 %v10324
    %10966 = vmatprep.subr.bf16.mxu0 %v10385
    %10967 = vmatpush2.bf16.xpose.msra.mxu0 %v10321
    %10968 = vmatprep.subr.bf16.mxu0 %v10382
    %10969 = vmatpush2.bf16.xpose.msra.mxu0 %v10318
    %10970 = vmatprep.subr.bf16.mxu0 %v10379
    %10971 = vmatpush2.bf16.xpose.msra.mxu0 %v10315
    %10972 = vmatprep.mubr.bf16.mxu0 %v10845
    %10973 = vmatmul.mubr.bf16.gmra.mxu0 %v10844
    %v10974 = vpop.f32.mrf.mxu0
    %v10975 = vadd.f32 %v10827, %v10974
    %v10976 = vpop.f32.mrf.mxu0
    %v10977 = vadd.f32 %v10827, %v10976
    %v10978 = vpop.f32.mrf.mxu0
    %v10979 = vadd.f32 %v10832, %v10978
    %v10980 = vpop.f32.mrf.mxu0
    %v10981 = vadd.f32 %v10832, %v10980
    %10982 = vdwg.mxu0
    %10983 = vmatprep.subr.bf16.mxu0 0
    %10984 = vmatpush1.bf16.xpose.msra.mxu0 %v10866
    %10985 = vmatprep.subr.bf16.mxu0 0
    %10986 = vmatpush1.bf16.xpose.msra.mxu0 %v10864
    %10987 = vmatprep.subr.bf16.mxu0 0
    %10988 = vmatpush1.bf16.xpose.msra.mxu0 %v10862
    %10989 = vmatprep.subr.bf16.mxu0 0
    %10990 = vmatpush1.bf16.xpose.msra.mxu0 %v10860
    %10991 = vmatprep.subr.bf16.mxu0 0
    %10992 = vmatpush1.bf16.xpose.msra.mxu0 %v10858
    %10993 = vmatprep.subr.bf16.mxu0 0
    %10994 = vmatpush1.bf16.xpose.msra.mxu0 %v10856
    %10995 = vmatprep.subr.bf16.mxu0 0
    %10996 = vmatpush1.bf16.xpose.msra.mxu0 %v10854
    %10997 = vmatprep.subr.bf16.mxu0 0
    %10998 = vmatpush1.bf16.xpose.msra.mxu0 %v10852
    %10999 = vmatprep.subr.bf16.mxu0 0
    %11000 = vmatpush2.bf16.xpose.msra.mxu0 %v10890
    %11001 = vmatprep.subr.bf16.mxu0 0
    %11002 = vmatpush2.bf16.xpose.msra.mxu0 %v10887
    %11003 = vmatprep.subr.bf16.mxu0 0
    %11004 = vmatpush2.bf16.xpose.msra.mxu0 %v10884
    %11005 = vmatprep.subr.bf16.mxu0 0
    %11006 = vmatpush2.bf16.xpose.msra.mxu0 %v10881
    %11007 = vmatprep.subr.bf16.mxu0 0
    %11008 = vmatpush2.bf16.xpose.msra.mxu0 %v10878
    %11009 = vmatprep.subr.bf16.mxu0 0
    %11010 = vmatpush2.bf16.xpose.msra.mxu0 %v10875
    %11011 = vmatprep.subr.bf16.mxu0 0
    %11012 = vmatpush2.bf16.xpose.msra.mxu0 %v10872
    %11013 = vmatprep.subr.bf16.mxu0 0
    %11014 = vmatpush2.bf16.xpose.msra.mxu0 %v10869
    %11015 = vmatprep.mubr.bf16.mxu0 0
    %11016 = vmatmul.mubr.bf16.gmra.mxu0 %v10850
    %v11017 = vpop.f32.mrf.mxu0
    %v11018 = vadd.f32 %v10975, %v11017
    %v11019 = vpop.f32.mrf.mxu0
    %v11020 = vadd.f32 %v10977, %v11019
    %v11021 = vpop.f32.mrf.mxu0
    %v11022 = vadd.f32 %v10979, %v11021
    %v11023 = vpop.f32.mrf.mxu0
    %v11024 = vadd.f32 %v10981, %v11023
    %11025 = vdwg.mxu0
    %11026 = vmatprep.subr.bf16.mxu0 %v10648
    %11027 = vmatpush1.bf16.xpose.msra.mxu0 %v10584
    %11028 = vmatprep.subr.bf16.mxu0 %v10645
    %11029 = vmatpush1.bf16.xpose.msra.mxu0 %v10581
    %11030 = vmatprep.subr.bf16.mxu0 %v10642
    %11031 = vmatpush1.bf16.xpose.msra.mxu0 %v10578
    %11032 = vmatprep.subr.bf16.mxu0 %v10639
    %11033 = vmatpush1.bf16.xpose.msra.mxu0 %v10575
    %11034 = vmatprep.subr.bf16.mxu0 %v10636
    %11035 = vmatpush1.bf16.xpose.msra.mxu0 %v10572
    %11036 = vmatprep.subr.bf16.mxu0 %v10633
    %11037 = vmatpush1.bf16.xpose.msra.mxu0 %v10569
    %11038 = vmatprep.subr.bf16.mxu0 %v10630
    %11039 = vmatpush1.bf16.xpose.msra.mxu0 %v10566
    %11040 = vmatprep.subr.bf16.mxu0 %v10627
    %11041 = vmatpush1.bf16.xpose.msra.mxu0 %v10563
    %11042 = vmatprep.subr.bf16.mxu0 %v10816
    %11043 = vmatpush2.bf16.xpose.msra.mxu0 %v10752
    %11044 = vmatprep.subr.bf16.mxu0 %v10813
    %11045 = vmatpush2.bf16.xpose.msra.mxu0 %v10750
    %11046 = vmatprep.subr.bf16.mxu0 %v10810
    %11047 = vmatpush2.bf16.xpose.msra.mxu0 %v10748
    %11048 = vmatprep.subr.bf16.mxu0 %v10807
    %11049 = vmatpush2.bf16.xpose.msra.mxu0 %v10746
    %11050 = vmatprep.subr.bf16.mxu0 %v10804
    %11051 = vmatpush2.bf16.xpose.msra.mxu0 %v10744
    %11052 = vmatprep.subr.bf16.mxu0 %v10801
    %11053 = vmatpush2.bf16.xpose.msra.mxu0 %v10742
    %11054 = vmatprep.subr.bf16.mxu0 %v10798
    %11055 = vmatpush2.bf16.xpose.msra.mxu0 %v10740
    %11056 = vmatprep.subr.bf16.mxu0 %v10795
    %11057 = vmatpush2.bf16.xpose.msra.mxu0 %v10738
    %11058 = vmatprep.mubr.bf16.mxu0 %v10845
    %11059 = vmatmul.mubr.bf16.gmra.mxu0 %v10844
    %v11060 = vpop.f32.mrf.mxu0
    %v11061 = vadd.f32 %v10827, %v11060
    %v11062 = vpop.f32.mrf.mxu0
    %v11063 = vadd.f32 %v10827, %v11062
    %v11064 = vpop.f32.mrf.mxu0
    %v11065 = vadd.f32 %v10832, %v11064
    %v11066 = vpop.f32.mrf.mxu0
    %v11067 = vadd.f32 %v10832, %v11066
    %11068 = vdwg.mxu0
    %11069 = vmatprep.subr.bf16.mxu0 0
    %11070 = vmatpush1.bf16.xpose.msra.mxu0 %v10914
    %11071 = vmatprep.subr.bf16.mxu0 0
    %11072 = vmatpush1.bf16.xpose.msra.mxu0 %v10911
    %11073 = vmatprep.subr.bf16.mxu0 0
    %11074 = vmatpush1.bf16.xpose.msra.mxu0 %v10908
    %11075 = vmatprep.subr.bf16.mxu0 0
    %11076 = vmatpush1.bf16.xpose.msra.mxu0 %v10905
    %11077 = vmatprep.subr.bf16.mxu0 0
    %11078 = vmatpush1.bf16.xpose.msra.mxu0 %v10902
    %11079 = vmatprep.subr.bf16.mxu0 0
    %11080 = vmatpush1.bf16.xpose.msra.mxu0 %v10899
    %11081 = vmatprep.subr.bf16.mxu0 0
    %11082 = vmatpush1.bf16.xpose.msra.mxu0 %v10896
    %11083 = vmatprep.subr.bf16.mxu0 0
    %11084 = vmatpush1.bf16.xpose.msra.mxu0 %v10893
    %11085 = vmatprep.subr.bf16.mxu0 0
    %11086 = vmatpush2.bf16.xpose.msra.mxu0 %v10938
    %11087 = vmatprep.subr.bf16.mxu0 0
    %11088 = vmatpush2.bf16.xpose.msra.mxu0 %v10935
    %11089 = vmatprep.subr.bf16.mxu0 0
    %11090 = vmatpush2.bf16.xpose.msra.mxu0 %v10932
    %11091 = vmatprep.subr.bf16.mxu0 0
    %11092 = vmatpush2.bf16.xpose.msra.mxu0 %v10929
    %11093 = vmatprep.subr.bf16.mxu0 0
    %11094 = vmatpush2.bf16.xpose.msra.mxu0 %v10926
    %11095 = vmatprep.subr.bf16.mxu0 0
    %11096 = vmatpush2.bf16.xpose.msra.mxu0 %v10923
    %11097 = vmatprep.subr.bf16.mxu0 0
    %11098 = vmatpush2.bf16.xpose.msra.mxu0 %v10920
    %11099 = vmatprep.subr.bf16.mxu0 0
    %11100 = vmatpush2.bf16.xpose.msra.mxu0 %v10917
    %11101 = vmatprep.mubr.bf16.mxu0 0
    %11102 = vmatmul.mubr.bf16.gmra.mxu0 %v10850
    %v11103 = vpop.f32.mrf.mxu0
    %v11104 = vadd.f32 %v11061, %v11103
    %v11105 = vpop.f32.mrf.mxu0
    %v11106 = vadd.f32 %v11063, %v11105
    %v11107 = vpop.f32.mrf.mxu0
    %v11108 = vadd.f32 %v11065, %v11107
    %v11109 = vpop.f32.mrf.mxu0
    %v11110 = vadd.f32 %v11067, %v11109
    %11111 = vdwg.mxu0
    %v11112 = vtanh.pop %v11018
    %v11113 = vtanh.pop %v11020
    %v11114 = vtanh.pop %v11104
    %v11115 = vtanh.pop %v11106
    %v11116 = vtanh.pop %v11022
    %v11117 = vtanh.pop %v11024
    %v11118 = vtanh.pop %v11108
    %v11119 = vtanh.pop %v11110
    %11120 = vst [vmem:[%s15] sm:$0xff] %v11112
    %11121 = vst [vmem:[%s15 + $0x8] sm:$0xff] %v11113
    %11122 = vst [vmem:[%s15 + $0x10] sm:$0xff] %v11114
    %11123 = vst [vmem:[%s15 + $0x18] sm:$0xff] %v11115
    %11124 = vst [vmem:[%s15 + $0x20] sm:$0xf] %v11116
    %11125 = vst [vmem:[%s15 + $0x28] sm:$0xf] %v11117
    %11126 = vst [vmem:[%s15 + $0x30] sm:$0xf] %v11118
    %11127 = vst [vmem:[%s15 + $0x38] sm:$0xf] %v11119
    // Predicated region
    $region114: #{conditional_generator_forward.1} parent=1 // pred_check
      _
    $region115: #{conditional_generator_forward.1} parent=1 // pred_check_branch
      %11129 = sbr.rel (0) target = $region117
    $region116: #{conditional_generator_forward.1} parent=1 // pred_region
      _
    $region117: #{conditional_generator_forward.1} parent=1 // pred_fallthru
      _
    // Predicated region
    $region118: #{conditional_generator_forward.1} parent=1 // pred_check
      _
    $region119: #{conditional_generator_forward.1} parent=1 // pred_check_branch
      %11131 = sbr.rel (0) target = $region121
    $region120: #{conditional_generator_forward.1} parent=1 // pred_region
      _
    $region121: #{conditional_generator_forward.1} parent=1 // pred_fallthru
      _
    %11132 = vsyncpa [#allocation3], 1
    %11133 = vsyncpa [#allocation5], 1
    %11134 = vsyncpa [#allocation8], 1
    %11135 = vsyncpa [#allocation11], 1
    %11136 = vsyncpa [#allocation14], 1
    %11137 = vsyncpa [#allocation17], 1
    %11138 = vsyncpa [#allocation20], 1

</llo_original>
